<compile_context>
chip_gen: v5e
topology: v5e:2x2
jax: 0.10.0
libtpu: 0.0.40
codegen_flags: <defaults>
</compile_context>

<pallas_src>
import functools

import numpy as np

import jax
import jax.numpy as jnp
from jax.experimental import pallas as pl
from jax.experimental.pallas import tpu as pltpu

_ACT = jnp.bfloat16            # storage dtype of activations / MXU operands


# ----------------------------- static plan -----------------------------

def _conv_stage_plan(h, w):
    """Full-resolution (stride-1) 3x3 tap plan on a zero-padded flat slab."""
    pitch = w + 2
    return dict(h=h, w=w, pitch=pitch,
                lp=(h + 2) * pitch,                 # padded slab rows
                lout=(h - 1) * pitch + w,           # full-res output slab rows
                taps=tuple(ky * pitch + kx for ky in range(3) for kx in range(3)))


def _build_plan(H, W):
    assert H % 32 == 0 and W % 32 == 0, "spatial dims must be multiples of 32"
    Hs, Ws = H // 2, W // 2                         # stem output resolution
    H1, W1 = Hs // 2, Ws // 2                       # maxpool / layer1 / decoder res
    pp = Ws + 1                                     # stem parity-plane pitch
    stem = dict(pitch=pp,
                plane_rows=(Hs + 1) * pp,
                lout=(Hs - 1) * pp + Ws,
                taps=tuple(((ky % 2) * 2 + (kx % 2), (ky // 2) * pp + (kx // 2))
                           for ky in range(3) for kx in range(3)))
    pool = _conv_stage_plan(Hs, Ws)                 # maxpool input = stem output
    lyrs = (_conv_stage_plan(H1, W1),               # layer1 (stride 1)
            _conv_stage_plan(H1, W1),               # layer2 (stride 2)
            _conv_stage_plan(H1 // 2, W1 // 2),     # layer3 (stride 2)
            _conv_stage_plan(H1 // 4, W1 // 4))     # layer4 (stride 2)
    return dict(H=H, W=W, Hs=Hs, Ws=Ws, H1=H1, W1=W1,
                stem=stem, pool=pool, layers=lyrs)


def _sel(n_out, n_in, pairs):
    """0/1 scatter-select matrix (bf16): m[o, i] = 1 for (o, i) in pairs."""
    m = np.zeros((n_out, n_in), np.float32)
    for o, i in pairs:
        m[o, i] = 1.0
    return jnp.asarray(m, _ACT)


# ----------------------------- parameters -----------------------------

def init_params(key, c_in, widths, dec_dim, num_classes):
    # widths[0] = stem width, widths[1:] = encoder.layer_widths (layer1..layer4)
    keys = jax.random.split(key, 10)

    def conv_init(k, kh, kw, cin, cout):
        scale = 1.0 / jnp.sqrt(float(kh * kw * cin))
        kw_, kb_ = jax.random.split(k)
        w = jax.random.normal(kw_, (kh, kw, cin, cout), jnp.float32) * scale
        b = jax.random.normal(kb_, (cout,), jnp.float32) * 0.01
        return w, b

    params = {'stem': conv_init(keys[0], 3, 3, c_in, widths[0])}
    prev = widths[0]
    for i, wd in enumerate(widths[1:]):
        params[f'layer{i + 1}'] = conv_init(keys[1 + i], 3, 3, prev, wd)
        prev = wd
    for i, wd in enumerate(widths[1:]):
        params[f'lateral{i + 1}'] = conv_init(keys[5 + i], 1, 1, wd, dec_dim)
    params['head'] = conv_init(keys[9], 1, 1, dec_dim, num_classes)
    return params


# ----------------------------- constants (prepared once, outside jit) -----------------------------

def _build_consts(plan, params, mean, std, dec_dim, num_classes):
    stem, pool, lyrs = plan['stem'], plan['pool'], plan['layers']
    Hs, Ws, H1, W1 = plan['Hs'], plan['Ws'], plan['H1'], plan['W1']

    # ---- normalization folded into stem conv (exact: input border = mean) ----
    sw, sb = params['stem']                          # (3,3,Cin,C0), (C0,)
    cin = sw.shape[2]
    inv_std = (1.0 / std).reshape(1, 1, cin, 1)
    sw_f = sw * inv_std
    sb_f = sb - jnp.sum(sw * (mean.reshape(1, 1, cin, 1) * inv_std), axis=(0, 1, 2))

    def w9(w, b):
        ci, co = w.shape[2], w.shape[3]
        return (jnp.asarray(w, jnp.float32).reshape(9, ci, co).astype(_ACT),
                jnp.asarray(b, jnp.float32).reshape(1, co))

    sw9, sb1 = w9(sw_f, sb_f)
    conv_ws = [w9(*params[f'layer{i + 1}']) for i in range(4)]

    # ---- scatter / selection matrices (0/1, exact in bf16) ----
    l1p, l2p, l3p, l4p = lyrs
    # stem full slab (pitch Ws+1) -> maxpool zero-padded slab (pitch Ws+2)
    s0 = _sel(pool['lp'], stem['lout'],
              [((y + 1) * pool['pitch'] + (x + 1), y * stem['pitch'] + x)
               for y in range(Hs) for x in range(Ws)])
    # maxpool full slab, stride-2 subsample -> layer1 padded slab
    s1 = _sel(l1p['lp'], pool['lout'],
              [((y + 1) * l1p['pitch'] + (x + 1), (2 * y) * pool['pitch'] + 2 * x)
               for y in range(H1) for x in range(W1)])
    # layer1 full slab (stride 1) -> layer2 padded slab
    s2 = _sel(l2p['lp'], l1p['lout'],
              [((y + 1) * l2p['pitch'] + (x + 1), y * l1p['pitch'] + x)
               for y in range(H1) for x in range(W1)])
    # layer2 full slab, stride-2 subsample -> layer3 padded slab
    s3 = _sel(l3p['lp'], l2p['lout'],
              [((y + 1) * l3p['pitch'] + (x + 1), (2 * y) * l2p['pitch'] + 2 * x)
               for y in range(l3p['h']) for x in range(l3p['w'])])
    # layer3 full slab, stride-2 subsample -> layer4 padded slab
    s4 = _sel(l4p['lp'], l3p['lout'],
              [((y + 1) * l4p['pitch'] + (x + 1), (2 * y) * l3p['pitch'] + 2 * x)
               for y in range(l4p['h']) for x in range(l4p['w'])])

    # decoder gather matrices: fine (H1,W1) pixel -> producing full-slab row
    # (coarse pixel via nearest upsample, stride-s stage output = stride-1 slab
    #  row (s*cy)*pitch + s*cx)
    coarse = [(H1, W1), (H1 // 2, W1 // 2), (H1 // 4, W1 // 4), (H1 // 8, W1 // 8)]
    strides = (1, 2, 2, 2)
    r_mats = []
    for (hc, wc), s_, lp_ in zip(coarse, strides, lyrs):
        fy, fx = H1 // hc, W1 // wc
        r_mats.append(_sel(H1 * W1, lp_['lout'],
                           [(Y * W1 + X,
                             (s_ * (Y // fy)) * lp_['pitch'] + s_ * (X // fx))
                            for Y in range(H1) for X in range(W1)]))

    # ---- decoder weights ----
    lat_ws, lat_bs = [], []
    for i in range(4):
        lw, lb = params[f'lateral{i + 1}']           # (1,1,Ci,dec_dim), (dec_dim,)
        ci = lw.shape[2]
        lat_ws.append(jnp.asarray(lw, jnp.float32).reshape(ci, dec_dim).astype(_ACT))
        lat_bs.append(jnp.asarray(lb, jnp.float32).reshape(1, dec_dim))
    hw, hb = params['head']
    ncp = 128 * ((num_classes + 127) // 128)         # lane-dense padded head width
    hw_p = jnp.zeros((dec_dim, ncp), jnp.float32).at[:, :num_classes].set(
        jnp.asarray(hw, jnp.float32).reshape(dec_dim, num_classes)).astype(_ACT)
    hb_p = jnp.zeros((1, ncp), jnp.float32).at[:, :num_classes].set(
        jnp.asarray(hb, jnp.float32).reshape(1, num_classes))

    consts = (sw9, sb1, s0, s1,
              conv_ws[0][0], conv_ws[0][1], s2,
              conv_ws[1][0], conv_ws[1][1], s3,
              conv_ws[2][0], conv_ws[2][1], s4,
              conv_ws[3][0], conv_ws[3][1],
              r_mats[0], r_mats[1], r_mats[2], r_mats[3],
              lat_ws[0], lat_bs[0], lat_ws[1], lat_bs[1],
              lat_ws[2], lat_bs[2], lat_ws[3], lat_bs[3],
              hw_p, hb_p)
    return consts, ncp


# ----------------------------- fused kernel -----------------------------

def _fused_kernel(planes_ref,
                  sw_ref, sb_ref, s0_ref, s1_ref,
                  w1_ref, b1_ref, s2_ref,
                  w2_ref, b2_ref, s3_ref,
                  w3_ref, b3_ref, s4_ref,
                  w4_ref, b4_ref,
                  r1_ref, r2_ref, r3_ref, r4_ref,
                  lw1_ref, lb1_ref, lw2_ref, lb2_ref,
                  lw3_ref, lb3_ref, lw4_ref, lb4_ref,
                  hw_ref, hb_ref,
                  o_ref, *, plan):
    f32 = jnp.float32
    stem, pool, lyrs = plan['stem'], plan['pool'], plan['layers']

    def conv(slab, taps, lout, w_ref, b_ref):
        # 3x3 conv + bias + ReLU: 9 shifted unit-stride slices, f32 acc chain.
        acc = None
        for t, off in enumerate(taps):
            part = jnp.dot(slab[off:off + lout, :], w_ref[t],
                           preferred_element_type=f32)
            acc = part if acc is None else acc + part
        acc = acc + b_ref[...].astype(f32)
        return jnp.maximum(acc, 0.0).astype(_ACT)

    # ---- stem: stride-2 conv straight off the 4 input parity planes ----
    planes = planes_ref[0]                           # (4, plane_rows, Cin) bf16
    acc = None
    for t, (p_idx, off) in enumerate(stem['taps']):
        part = jnp.dot(planes[p_idx, off:off + stem['lout'], :], sw_ref[t],
                       preferred_element_type=f32)
        acc = part if acc is None else acc + part
    f0 = jnp.maximum(acc + sb_ref[...].astype(f32), 0.0).astype(_ACT)

    # ---- maxpool 3x3 / stride 2 (full-res f32 max + stride-2 scatter) ----
    p1 = jnp.dot(s0_ref[...], f0, preferred_element_type=f32)   # padded slab, f32
    mx = None
    for off in pool['taps']:
        tap = p1[off:off + pool['lout'], :]
        mx = tap if mx is None else jnp.maximum(mx, tap)
    mx = mx.astype(_ACT)
    p2 = jnp.dot(s1_ref[...], mx, preferred_element_type=f32).astype(_ACT)

    # ---- layer1 .. layer4 (full-res conv + scatter-select into next slab) ----
    f1 = conv(p2, lyrs[0]['taps'], lyrs[0]['lout'], w1_ref, b1_ref)
    p3 = jnp.dot(s2_ref[...], f1, preferred_element_type=f32).astype(_ACT)
    f2 = conv(p3, lyrs[1]['taps'], lyrs[1]['lout'], w2_ref, b2_ref)
    p4 = jnp.dot(s3_ref[...], f2, preferred_element_type=f32).astype(_ACT)
    f3 = conv(p4, lyrs[2]['taps'], lyrs[2]['lout'], w3_ref, b3_ref)
    p5 = jnp.dot(s4_ref[...], f3, preferred_element_type=f32).astype(_ACT)
    f4 = conv(p5, lyrs[3]['taps'], lyrs[3]['lout'], w4_ref, b4_ref)

    # ---- decoder: laterals + nearest upsample + sum + ReLU + 1x1 head ----
    def lat(r_ref, feat, lw_ref, lb_ref):
        e = jnp.dot(r_ref[...], feat, preferred_element_type=f32).astype(_ACT)
        return (jnp.dot(e, lw_ref[...], preferred_element_type=f32)
                + lb_ref[...].astype(f32))

    s = lat(r1_ref, f1, lw1_ref, lb1_ref)
    s = s + lat(r2_ref, f2, lw2_ref, lb2_ref)
    s = s + lat(r3_ref, f3, lw3_ref, lb3_ref)
    s = s + lat(r4_ref, f4, lw4_ref, lb4_ref)
    s = jnp.maximum(s, 0.0).astype(_ACT)
    out = jnp.dot(s, hw_ref[...], preferred_element_type=f32) + hb_ref[...]
    o_ref[0, :, :] = out                             # lane-dense (H1*W1, 128) f32


# ----------------------------- forward builder -----------------------------

def make_forward(params, mean, std, *, input_hw, dec_dim, num_classes):
    H, W = input_hw
    plan = _build_plan(H, W)
    consts, ncp = _build_consts(plan, params, mean, std, dec_dim, num_classes)
    stem, H1, W1 = plan['stem'], plan['H1'], plan['W1']
    cin = params['stem'][0].shape[2]
    mean_b = jnp.asarray(mean, jnp.float32).reshape(1, 1, 1, cin)

    kernel = functools.partial(_fused_kernel, plan=plan)

    # vmem budget derived from actual block sizes (doubled for pipelining) + slack
    const_bytes = sum(int(c.size) * c.dtype.itemsize for c in consts)
    vmem_limit = int(min(96 * 1024 * 1024, 6 * const_bytes + (8 << 20)))

    const_specs = [pl.BlockSpec(c.shape, lambda b, _n=c.ndim: (0,) * _n)
                   for c in consts]

    @jax.jit
    def forward(x_ncthw):
        N, C, T, Hx, Wx = x_ncthw.shape
        assert (Hx, Wx, C) == (H, W, cin)
        B = N * T
        # NCTHW -> (N*T, H, W, C)
        x = jnp.transpose(x_ncthw, (0, 2, 3, 4, 1)).reshape(B, H, W, C)
        # mean-padded border => the folded (x - mean)/std normalisation is exact
        xp = jnp.broadcast_to(mean_b, (B, H + 2, W + 2, C)).astype(_ACT)
        xp = xp.at[:, 1:H + 1, 1:W + 1, :].set(x.astype(_ACT))
        # space-to-depth: 4 parity planes, flattened, stacked on one axis
        planes = jnp.stack([xp[:, a::2, b::2, :]
                            for a in range(2) for b in range(2)], axis=1)
        planes = planes.reshape(B, 4, stem['plane_rows'], C)

        out = pl.pallas_call(
            kernel,
            out_shape=jax.ShapeDtypeStruct((B, H1 * W1, ncp), jnp.float32),
            grid=(B,),
            in_specs=[pl.BlockSpec((1, 4, stem['plane_rows'], C),
                                   lambda b: (b, 0, 0, 0))] + const_specs,
            out_specs=pl.BlockSpec((1, H1 * W1, ncp), lambda b: (b, 0, 0)),
            compiler_params=pltpu.CompilerParams(
                dimension_semantics=("parallel",),
                vmem_limit_bytes=vmem_limit),
        )(planes, *consts)

        out = out[:, :, :num_classes].reshape(N, T, H1, W1, num_classes)
        # back to PyTorch layout (N, num_classes, T, H1, W1)
        return jnp.transpose(out, (0, 4, 1, 2, 3))

    return forward


# ----------------------------- main -----------------------------

if __name__ == "__main__":
    C_IN = 3
    WIDTHS = (8, 8, 16, 32, 64)      # stem width + layer_widths[1:]
    DEC_DIM = 16
    NUM_CLASSES = 5
    N, T, H, W = 2, 2, 32, 32

    key = jax.random.PRNGKey(0)
    pkey, xkey = jax.random.split(key)
    params = init_params(pkey, C_IN, WIDTHS, DEC_DIM, NUM_CLASSES)

    mean = jnp.array([0.485, 0.456, 0.406], jnp.float32)
    std = jnp.array([0.229, 0.224, 0.225], jnp.float32)

    # x: [N, C, T, H, W]
    x = jax.random.normal(xkey, (N, C_IN, T, H, W), jnp.float32)

    forward = make_forward(params, mean, std, input_hw=(H, W),
                           dec_dim=DEC_DIM, num_classes=NUM_CLASSES)
    out = forward(x)
    jax.block_until_ready(out)
    assert out.shape == (N, NUM_CLASSES, T, H // 4, W // 4), out.shape
    assert bool(jnp.isfinite(out).all())
    print("KERNEL_OK")
</pallas_src>

<mosaic_0001>
module attributes {stable_mosaic.version = 11 : i64} {
  func.func @_fused_kernel(%arg0: i32, %arg1: memref<1x4x289x3xbf16, #tpu.memory_space<vmem>>, %arg2: memref<9x3x8xbf16, #tpu.memory_space<vmem>>, %arg3: memref<1x8xf32, #tpu.memory_space<vmem>>, %arg4: memref<324x271xbf16, #tpu.memory_space<vmem>>, %arg5: memref<100x286xbf16, #tpu.memory_space<vmem>>, %arg6: memref<9x8x8xbf16, #tpu.memory_space<vmem>>, %arg7: memref<1x8xf32, #tpu.memory_space<vmem>>, %arg8: memref<100x78xbf16, #tpu.memory_space<vmem>>, %arg9: memref<9x8x16xbf16, #tpu.memory_space<vmem>>, %arg10: memref<1x16xf32, #tpu.memory_space<vmem>>, %arg11: memref<36x78xbf16, #tpu.memory_space<vmem>>, %arg12: memref<9x16x32xbf16, #tpu.memory_space<vmem>>, %arg13: memref<1x32xf32, #tpu.memory_space<vmem>>, %arg14: memref<16x22xbf16, #tpu.memory_space<vmem>>, %arg15: memref<9x32x64xbf16, #tpu.memory_space<vmem>>, %arg16: memref<1x64xf32, #tpu.memory_space<vmem>>, %arg17: memref<64x78xbf16, #tpu.memory_space<vmem>>, %arg18: memref<64x78xbf16, #tpu.memory_space<vmem>>, %arg19: memref<64x22xbf16, #tpu.memory_space<vmem>>, %arg20: memref<64x6xbf16, #tpu.memory_space<vmem>>, %arg21: memref<8x16xbf16, #tpu.memory_space<vmem>>, %arg22: memref<1x16xf32, #tpu.memory_space<vmem>>, %arg23: memref<16x16xbf16, #tpu.memory_space<vmem>>, %arg24: memref<1x16xf32, #tpu.memory_space<vmem>>, %arg25: memref<32x16xbf16, #tpu.memory_space<vmem>>, %arg26: memref<1x16xf32, #tpu.memory_space<vmem>>, %arg27: memref<64x16xbf16, #tpu.memory_space<vmem>>, %arg28: memref<1x16xf32, #tpu.memory_space<vmem>>, %arg29: memref<16x128xbf16, #tpu.memory_space<vmem>>, %arg30: memref<1x128xf32, #tpu.memory_space<vmem>>, %arg31: memref<1x64x128xf32, #tpu.memory_space<vmem>>) attributes {dimension_semantics = [#tpu.dimension_semantics<parallel>], iteration_bounds = array<i64: 4>, scalar_prefetch = 0 : i64, scratch_operands = 0 : i64, tpu.core_type = #tpu.core_type<tc>, window_params = [{transform_indices = @transform_0, window_bounds = array<i64: 1, 4, 289, 3>}, {pipeline_mode = #tpu.pipeline_mode<synchronous>, transform_indices = @transform_1, window_bounds = array<i64: 9, 3, 8>}, {pipeline_mode = #tpu.pipeline_mode<synchronous>, transform_indices = @transform_2, window_bounds = array<i64: 1, 8>}, {pipeline_mode = #tpu.pipeline_mode<synchronous>, transform_indices = @transform_3, window_bounds = array<i64: 324, 271>}, {pipeline_mode = #tpu.pipeline_mode<synchronous>, transform_indices = @transform_4, window_bounds = array<i64: 100, 286>}, {pipeline_mode = #tpu.pipeline_mode<synchronous>, transform_indices = @transform_5, window_bounds = array<i64: 9, 8, 8>}, {pipeline_mode = #tpu.pipeline_mode<synchronous>, transform_indices = @transform_6, window_bounds = array<i64: 1, 8>}, {pipeline_mode = #tpu.pipeline_mode<synchronous>, transform_indices = @transform_7, window_bounds = array<i64: 100, 78>}, {pipeline_mode = #tpu.pipeline_mode<synchronous>, transform_indices = @transform_8, window_bounds = array<i64: 9, 8, 16>}, {pipeline_mode = #tpu.pipeline_mode<synchronous>, transform_indices = @transform_9, window_bounds = array<i64: 1, 16>}, {pipeline_mode = #tpu.pipeline_mode<synchronous>, transform_indices = @transform_10, window_bounds = array<i64: 36, 78>}, {pipeline_mode = #tpu.pipeline_mode<synchronous>, transform_indices = @transform_11, window_bounds = array<i64: 9, 16, 32>}, {pipeline_mode = #tpu.pipeline_mode<synchronous>, transform_indices = @transform_12, window_bounds = array<i64: 1, 32>}, {pipeline_mode = #tpu.pipeline_mode<synchronous>, transform_indices = @transform_13, window_bounds = array<i64: 16, 22>}, {pipeline_mode = #tpu.pipeline_mode<synchronous>, transform_indices = @transform_14, window_bounds = array<i64: 9, 32, 64>}, {pipeline_mode = #tpu.pipeline_mode<synchronous>, transform_indices = @transform_15, window_bounds = array<i64: 1, 64>}, {pipeline_mode = #tpu.pipeline_mode<synchronous>, transform_indices = @transform_16, window_bounds = array<i64: 64, 78>}, {pipeline_mode = #tpu.pipeline_mode<synchronous>, transform_indices = @transform_17, window_bounds = array<i64: 64, 78>}, {pipeline_mode = #tpu.pipeline_mode<synchronous>, transform_indices = @transform_18, window_bounds = array<i64: 64, 22>}, {pipeline_mode = #tpu.pipeline_mode<synchronous>, transform_indices = @transform_19, window_bounds = array<i64: 64, 6>}, {pipeline_mode = #tpu.pipeline_mode<synchronous>, transform_indices = @transform_20, window_bounds = array<i64: 8, 16>}, {pipeline_mode = #tpu.pipeline_mode<synchronous>, transform_indices = @transform_21, window_bounds = array<i64: 1, 16>}, {pipeline_mode = #tpu.pipeline_mode<synchronous>, transform_indices = @transform_22, window_bounds = array<i64: 16, 16>}, {pipeline_mode = #tpu.pipeline_mode<synchronous>, transform_indices = @transform_23, window_bounds = array<i64: 1, 16>}, {pipeline_mode = #tpu.pipeline_mode<synchronous>, transform_indices = @transform_24, window_bounds = array<i64: 32, 16>}, {pipeline_mode = #tpu.pipeline_mode<synchronous>, transform_indices = @transform_25, window_bounds = array<i64: 1, 16>}, {pipeline_mode = #tpu.pipeline_mode<synchronous>, transform_indices = @transform_26, window_bounds = array<i64: 64, 16>}, {pipeline_mode = #tpu.pipeline_mode<synchronous>, transform_indices = @transform_27, window_bounds = array<i64: 1, 16>}, {pipeline_mode = #tpu.pipeline_mode<synchronous>, transform_indices = @transform_28, window_bounds = array<i64: 16, 128>}, {pipeline_mode = #tpu.pipeline_mode<synchronous>, transform_indices = @transform_29, window_bounds = array<i64: 1, 128>}, {transform_indices = @transform_30, window_bounds = array<i64: 1, 64, 128>}]} {
    %c0 = arith.constant 0 : index
    %c0_0 = arith.constant 0 : index
    %c0_1 = arith.constant 0 : index
    %c0_2 = arith.constant 0 : index
    %0 = vector.load %arg1[%c0, %c0_0, %c0_1, %c0_2] : memref<1x4x289x3xbf16, #tpu.memory_space<vmem>>, vector<1x4x289x3xbf16>
    %1 = vector.shape_cast %0 : vector<1x4x289x3xbf16> to vector<4x289x3xbf16>
    %2 = vector.extract_strided_slice %1 {offsets = [0, 0, 0], sizes = [1, 271, 3], strides = [1, 1, 1]} : vector<4x289x3xbf16> to vector<1x271x3xbf16>
    %3 = vector.shape_cast %2 : vector<1x271x3xbf16> to vector<271x3xbf16>
    %c0_3 = arith.constant 0 : index
    %c0_4 = arith.constant 0 : index
    %c0_5 = arith.constant 0 : index
    %4 = vector.load %arg2[%c0_3, %c0_4, %c0_5] : memref<9x3x8xbf16, #tpu.memory_space<vmem>>, vector<1x3x8xbf16>
    %5 = vector.shape_cast %4 : vector<1x3x8xbf16> to vector<3x8xbf16>
    %cst = arith.constant dense<0.000000e+00> : vector<271x8xf32>
    %6 = tpu.matmul %3, %5, %cst {dimension_numbers = #tpu.dot_dimension_numbers<[1], [0], [0], [1], [0, 0, 1, 1], [], []>} : vector<271x3xbf16>, vector<3x8xbf16>, vector<271x8xf32> -> vector<271x8xf32>
    %7 = vector.extract_strided_slice %1 {offsets = [1, 0, 0], sizes = [1, 271, 3], strides = [1, 1, 1]} : vector<4x289x3xbf16> to vector<1x271x3xbf16>
    %8 = vector.shape_cast %7 : vector<1x271x3xbf16> to vector<271x3xbf16>
    %c1 = arith.constant 1 : index
    %c0_6 = arith.constant 0 : index
    %c0_7 = arith.constant 0 : index
    %9 = vector.load %arg2[%c1, %c0_6, %c0_7] : memref<9x3x8xbf16, #tpu.memory_space<vmem>>, vector<1x3x8xbf16>
    %10 = vector.shape_cast %9 : vector<1x3x8xbf16> to vector<3x8xbf16>
    %cst_8 = arith.constant dense<0.000000e+00> : vector<271x8xf32>
    %11 = tpu.matmul %8, %10, %cst_8 {dimension_numbers = #tpu.dot_dimension_numbers<[1], [0], [0], [1], [0, 0, 1, 1], [], []>} : vector<271x3xbf16>, vector<3x8xbf16>, vector<271x8xf32> -> vector<271x8xf32>
    %12 = arith.addf %6, %11 : vector<271x8xf32>
    %13 = vector.extract_strided_slice %1 {offsets = [0, 1, 0], sizes = [1, 271, 3], strides = [1, 1, 1]} : vector<4x289x3xbf16> to vector<1x271x3xbf16>
    %14 = vector.shape_cast %13 : vector<1x271x3xbf16> to vector<271x3xbf16>
    %c2 = arith.constant 2 : index
    %c0_9 = arith.constant 0 : index
    %c0_10 = arith.constant 0 : index
    %15 = vector.load %arg2[%c2, %c0_9, %c0_10] : memref<9x3x8xbf16, #tpu.memory_space<vmem>>, vector<1x3x8xbf16>
    %16 = vector.shape_cast %15 : vector<1x3x8xbf16> to vector<3x8xbf16>
    %cst_11 = arith.constant dense<0.000000e+00> : vector<271x8xf32>
    %17 = tpu.matmul %14, %16, %cst_11 {dimension_numbers = #tpu.dot_dimension_numbers<[1], [0], [0], [1], [0, 0, 1, 1], [], []>} : vector<271x3xbf16>, vector<3x8xbf16>, vector<271x8xf32> -> vector<271x8xf32>
    %18 = arith.addf %12, %17 : vector<271x8xf32>
    %19 = vector.extract_strided_slice %1 {offsets = [2, 0, 0], sizes = [1, 271, 3], strides = [1, 1, 1]} : vector<4x289x3xbf16> to vector<1x271x3xbf16>
    %20 = vector.shape_cast %19 : vector<1x271x3xbf16> to vector<271x3xbf16>
    %c3 = arith.constant 3 : index
    %c0_12 = arith.constant 0 : index
    %c0_13 = arith.constant 0 : index
    %21 = vector.load %arg2[%c3, %c0_12, %c0_13] : memref<9x3x8xbf16, #tpu.memory_space<vmem>>, vector<1x3x8xbf16>
    %22 = vector.shape_cast %21 : vector<1x3x8xbf16> to vector<3x8xbf16>
    %cst_14 = arith.constant dense<0.000000e+00> : vector<271x8xf32>
    %23 = tpu.matmul %20, %22, %cst_14 {dimension_numbers = #tpu.dot_dimension_numbers<[1], [0], [0], [1], [0, 0, 1, 1], [], []>} : vector<271x3xbf16>, vector<3x8xbf16>, vector<271x8xf32> -> vector<271x8xf32>
    %24 = arith.addf %18, %23 : vector<271x8xf32>
    %25 = vector.extract_strided_slice %1 {offsets = [3, 0, 0], sizes = [1, 271, 3], strides = [1, 1, 1]} : vector<4x289x3xbf16> to vector<1x271x3xbf16>
    %26 = vector.shape_cast %25 : vector<1x271x3xbf16> to vector<271x3xbf16>
    %c4 = arith.constant 4 : index
    %c0_15 = arith.constant 0 : index
    %c0_16 = arith.constant 0 : index
    %27 = vector.load %arg2[%c4, %c0_15, %c0_16] : memref<9x3x8xbf16, #tpu.memory_space<vmem>>, vector<1x3x8xbf16>
    %28 = vector.shape_cast %27 : vector<1x3x8xbf16> to vector<3x8xbf16>
    %cst_17 = arith.constant dense<0.000000e+00> : vector<271x8xf32>
    %29 = tpu.matmul %26, %28, %cst_17 {dimension_numbers = #tpu.dot_dimension_numbers<[1], [0], [0], [1], [0, 0, 1, 1], [], []>} : vector<271x3xbf16>, vector<3x8xbf16>, vector<271x8xf32> -> vector<271x8xf32>
    %30 = arith.addf %24, %29 : vector<271x8xf32>
    %31 = vector.extract_strided_slice %1 {offsets = [2, 1, 0], sizes = [1, 271, 3], strides = [1, 1, 1]} : vector<4x289x3xbf16> to vector<1x271x3xbf16>
    %32 = vector.shape_cast %31 : vector<1x271x3xbf16> to vector<271x3xbf16>
    %c5 = arith.constant 5 : index
    %c0_18 = arith.constant 0 : index
    %c0_19 = arith.constant 0 : index
    %33 = vector.load %arg2[%c5, %c0_18, %c0_19] : memref<9x3x8xbf16, #tpu.memory_space<vmem>>, vector<1x3x8xbf16>
    %34 = vector.shape_cast %33 : vector<1x3x8xbf16> to vector<3x8xbf16>
    %cst_20 = arith.constant dense<0.000000e+00> : vector<271x8xf32>
    %35 = tpu.matmul %32, %34, %cst_20 {dimension_numbers = #tpu.dot_dimension_numbers<[1], [0], [0], [1], [0, 0, 1, 1], [], []>} : vector<271x3xbf16>, vector<3x8xbf16>, vector<271x8xf32> -> vector<271x8xf32>
    %36 = arith.addf %30, %35 : vector<271x8xf32>
    %37 = vector.extract_strided_slice %1 {offsets = [0, 17, 0], sizes = [1, 271, 3], strides = [1, 1, 1]} : vector<4x289x3xbf16> to vector<1x271x3xbf16>
    %38 = vector.shape_cast %37 : vector<1x271x3xbf16> to vector<271x3xbf16>
    %c6 = arith.constant 6 : index
    %c0_21 = arith.constant 0 : index
    %c0_22 = arith.constant 0 : index
    %39 = vector.load %arg2[%c6, %c0_21, %c0_22] : memref<9x3x8xbf16, #tpu.memory_space<vmem>>, vector<1x3x8xbf16>
    %40 = vector.shape_cast %39 : vector<1x3x8xbf16> to vector<3x8xbf16>
    %cst_23 = arith.constant dense<0.000000e+00> : vector<271x8xf32>
    %41 = tpu.matmul %38, %40, %cst_23 {dimension_numbers = #tpu.dot_dimension_numbers<[1], [0], [0], [1], [0, 0, 1, 1], [], []>} : vector<271x3xbf16>, vector<3x8xbf16>, vector<271x8xf32> -> vector<271x8xf32>
    %42 = arith.addf %36, %41 : vector<271x8xf32>
    %43 = vector.extract_strided_slice %1 {offsets = [1, 17, 0], sizes = [1, 271, 3], strides = [1, 1, 1]} : vector<4x289x3xbf16> to vector<1x271x3xbf16>
    %44 = vector.shape_cast %43 : vector<1x271x3xbf16> to vector<271x3xbf16>
    %c7 = arith.constant 7 : index
    %c0_24 = arith.constant 0 : index
    %c0_25 = arith.constant 0 : index
    %45 = vector.load %arg2[%c7, %c0_24, %c0_25] : memref<9x3x8xbf16, #tpu.memory_space<vmem>>, vector<1x3x8xbf16>
    %46 = vector.shape_cast %45 : vector<1x3x8xbf16> to vector<3x8xbf16>
    %cst_26 = arith.constant dense<0.000000e+00> : vector<271x8xf32>
    %47 = tpu.matmul %44, %46, %cst_26 {dimension_numbers = #tpu.dot_dimension_numbers<[1], [0], [0], [1], [0, 0, 1, 1], [], []>} : vector<271x3xbf16>, vector<3x8xbf16>, vector<271x8xf32> -> vector<271x8xf32>
    %48 = arith.addf %42, %47 : vector<271x8xf32>
    %49 = vector.extract_strided_slice %1 {offsets = [0, 18, 0], sizes = [1, 271, 3], strides = [1, 1, 1]} : vector<4x289x3xbf16> to vector<1x271x3xbf16>
    %50 = vector.shape_cast %49 : vector<1x271x3xbf16> to vector<271x3xbf16>
    %c8 = arith.constant 8 : index
    %c0_27 = arith.constant 0 : index
    %c0_28 = arith.constant 0 : index
    %51 = vector.load %arg2[%c8, %c0_27, %c0_28] : memref<9x3x8xbf16, #tpu.memory_space<vmem>>, vector<1x3x8xbf16>
    %52 = vector.shape_cast %51 : vector<1x3x8xbf16> to vector<3x8xbf16>
    %cst_29 = arith.constant dense<0.000000e+00> : vector<271x8xf32>
    %53 = tpu.matmul %50, %52, %cst_29 {dimension_numbers = #tpu.dot_dimension_numbers<[1], [0], [0], [1], [0, 0, 1, 1], [], []>} : vector<271x3xbf16>, vector<3x8xbf16>, vector<271x8xf32> -> vector<271x8xf32>
    %54 = arith.addf %48, %53 : vector<271x8xf32>
    %c0_30 = arith.constant 0 : index
    %c0_31 = arith.constant 0 : index
    %55 = vector.load %arg3[%c0_30, %c0_31] : memref<1x8xf32, #tpu.memory_space<vmem>>, vector<1x8xf32>
    %56 = vector.broadcast %55 : vector<1x8xf32> to vector<271x8xf32>
    %57 = arith.addf %54, %56 : vector<271x8xf32>
    %cst_32 = arith.constant 0.000000e+00 : f32
    %58 = vector.broadcast %cst_32 : f32 to vector<271x8xf32>
    %59 = arith.maximumf %57, %58 : vector<271x8xf32>
    %60 = arith.truncf %59 : vector<271x8xf32> to vector<271x8xbf16>
    %c0_33 = arith.constant 0 : index
    %c0_34 = arith.constant 0 : index
    %61 = vector.load %arg4[%c0_33, %c0_34] : memref<324x271xbf16, #tpu.memory_space<vmem>>, vector<324x271xbf16>
    %cst_35 = arith.constant dense<0.000000e+00> : vector<324x8xf32>
    %62 = tpu.matmul %61, %60, %cst_35 {dimension_numbers = #tpu.dot_dimension_numbers<[1], [0], [0], [1], [0, 0, 1, 1], [], []>} : vector<324x271xbf16>, vector<271x8xbf16>, vector<324x8xf32> -> vector<324x8xf32>
    %63 = vector.extract_strided_slice %62 {offsets = [0, 0], sizes = [286, 8], strides = [1, 1]} : vector<324x8xf32> to vector<286x8xf32>
    %64 = vector.extract_strided_slice %62 {offsets = [1, 0], sizes = [286, 8], strides = [1, 1]} : vector<324x8xf32> to vector<286x8xf32>
    %65 = arith.maximumf %63, %64 : vector<286x8xf32>
    %66 = vector.extract_strided_slice %62 {offsets = [2, 0], sizes = [286, 8], strides = [1, 1]} : vector<324x8xf32> to vector<286x8xf32>
    %67 = arith.maximumf %65, %66 : vector<286x8xf32>
    %68 = vector.extract_strided_slice %62 {offsets = [18, 0], sizes = [286, 8], strides = [1, 1]} : vector<324x8xf32> to vector<286x8xf32>
    %69 = arith.maximumf %67, %68 : vector<286x8xf32>
    %70 = vector.extract_strided_slice %62 {offsets = [19, 0], sizes = [286, 8], strides = [1, 1]} : vector<324x8xf32> to vector<286x8xf32>
    %71 = arith.maximumf %69, %70 : vector<286x8xf32>
    %72 = vector.extract_strided_slice %62 {offsets = [20, 0], sizes = [286, 8], strides = [1, 1]} : vector<324x8xf32> to vector<286x8xf32>
    %73 = arith.maximumf %71, %72 : vector<286x8xf32>
    %74 = vector.extract_strided_slice %62 {offsets = [36, 0], sizes = [286, 8], strides = [1, 1]} : vector<324x8xf32> to vector<286x8xf32>
    %75 = arith.maximumf %73, %74 : vector<286x8xf32>
    %76 = vector.extract_strided_slice %62 {offsets = [37, 0], sizes = [286, 8], strides = [1, 1]} : vector<324x8xf32> to vector<286x8xf32>
    %77 = arith.maximumf %75, %76 : vector<286x8xf32>
    %78 = vector.extract_strided_slice %62 {offsets = [38, 0], sizes = [286, 8], strides = [1, 1]} : vector<324x8xf32> to vector<286x8xf32>
    %79 = arith.maximumf %77, %78 : vector<286x8xf32>
    %80 = arith.truncf %79 : vector<286x8xf32> to vector<286x8xbf16>
    %c0_36 = arith.constant 0 : index
    %c0_37 = arith.constant 0 : index
    %81 = vector.load %arg5[%c0_36, %c0_37] : memref<100x286xbf16, #tpu.memory_space<vmem>>, vector<100x286xbf16>
    %cst_38 = arith.constant dense<0.000000e+00> : vector<100x8xf32>
    %82 = tpu.matmul %81, %80, %cst_38 {dimension_numbers = #tpu.dot_dimension_numbers<[1], [0], [0], [1], [0, 0, 1, 1], [], []>} : vector<100x286xbf16>, vector<286x8xbf16>, vector<100x8xf32> -> vector<100x8xf32>
    %83 = arith.truncf %82 : vector<100x8xf32> to vector<100x8xbf16>
    %84 = vector.extract_strided_slice %83 {offsets = [0, 0], sizes = [78, 8], strides = [1, 1]} : vector<100x8xbf16> to vector<78x8xbf16>
    %c0_39 = arith.constant 0 : index
    %c0_40 = arith.constant 0 : index
    %c0_41 = arith.constant 0 : index
    %85 = vector.load %arg6[%c0_39, %c0_40, %c0_41] : memref<9x8x8xbf16, #tpu.memory_space<vmem>>, vector<1x8x8xbf16>
    %86 = vector.shape_cast %85 : vector<1x8x8xbf16> to vector<8x8xbf16>
    %cst_42 = arith.constant dense<0.000000e+00> : vector<78x8xf32>
    %87 = tpu.matmul %84, %86, %cst_42 {dimension_numbers = #tpu.dot_dimension_numbers<[1], [0], [0], [1], [0, 0, 1, 1], [], []>} : vector<78x8xbf16>, vector<8x8xbf16>, vector<78x8xf32> -> vector<78x8xf32>
    %88 = vector.extract_strided_slice %83 {offsets = [1, 0], sizes = [78, 8], strides = [1, 1]} : vector<100x8xbf16> to vector<78x8xbf16>
    %c1_43 = arith.constant 1 : index
    %c0_44 = arith.constant 0 : index
    %c0_45 = arith.constant 0 : index
    %89 = vector.load %arg6[%c1_43, %c0_44, %c0_45] : memref<9x8x8xbf16, #tpu.memory_space<vmem>>, vector<1x8x8xbf16>
    %90 = vector.shape_cast %89 : vector<1x8x8xbf16> to vector<8x8xbf16>
    %cst_46 = arith.constant dense<0.000000e+00> : vector<78x8xf32>
    %91 = tpu.matmul %88, %90, %cst_46 {dimension_numbers = #tpu.dot_dimension_numbers<[1], [0], [0], [1], [0, 0, 1, 1], [], []>} : vector<78x8xbf16>, vector<8x8xbf16>, vector<78x8xf32> -> vector<78x8xf32>
    %92 = arith.addf %87, %91 : vector<78x8xf32>
    %93 = vector.extract_strided_slice %83 {offsets = [2, 0], sizes = [78, 8], strides = [1, 1]} : vector<100x8xbf16> to vector<78x8xbf16>
    %c2_47 = arith.constant 2 : index
    %c0_48 = arith.constant 0 : index
    %c0_49 = arith.constant 0 : index
    %94 = vector.load %arg6[%c2_47, %c0_48, %c0_49] : memref<9x8x8xbf16, #tpu.memory_space<vmem>>, vector<1x8x8xbf16>
    %95 = vector.shape_cast %94 : vector<1x8x8xbf16> to vector<8x8xbf16>
    %cst_50 = arith.constant dense<0.000000e+00> : vector<78x8xf32>
    %96 = tpu.matmul %93, %95, %cst_50 {dimension_numbers = #tpu.dot_dimension_numbers<[1], [0], [0], [1], [0, 0, 1, 1], [], []>} : vector<78x8xbf16>, vector<8x8xbf16>, vector<78x8xf32> -> vector<78x8xf32>
    %97 = arith.addf %92, %96 : vector<78x8xf32>
    %98 = vector.extract_strided_slice %83 {offsets = [10, 0], sizes = [78, 8], strides = [1, 1]} : vector<100x8xbf16> to vector<78x8xbf16>
    %c3_51 = arith.constant 3 : index
    %c0_52 = arith.constant 0 : index
    %c0_53 = arith.constant 0 : index
    %99 = vector.load %arg6[%c3_51, %c0_52, %c0_53] : memref<9x8x8xbf16, #tpu.memory_space<vmem>>, vector<1x8x8xbf16>
    %100 = vector.shape_cast %99 : vector<1x8x8xbf16> to vector<8x8xbf16>
    %cst_54 = arith.constant dense<0.000000e+00> : vector<78x8xf32>
    %101 = tpu.matmul %98, %100, %cst_54 {dimension_numbers = #tpu.dot_dimension_numbers<[1], [0], [0], [1], [0, 0, 1, 1], [], []>} : vector<78x8xbf16>, vector<8x8xbf16>, vector<78x8xf32> -> vector<78x8xf32>
    %102 = arith.addf %97, %101 : vector<78x8xf32>
    %103 = vector.extract_strided_slice %83 {offsets = [11, 0], sizes = [78, 8], strides = [1, 1]} : vector<100x8xbf16> to vector<78x8xbf16>
    %c4_55 = arith.constant 4 : index
    %c0_56 = arith.constant 0 : index
    %c0_57 = arith.constant 0 : index
    %104 = vector.load %arg6[%c4_55, %c0_56, %c0_57] : memref<9x8x8xbf16, #tpu.memory_space<vmem>>, vector<1x8x8xbf16>
    %105 = vector.shape_cast %104 : vector<1x8x8xbf16> to vector<8x8xbf16>
    %cst_58 = arith.constant dense<0.000000e+00> : vector<78x8xf32>
    %106 = tpu.matmul %103, %105, %cst_58 {dimension_numbers = #tpu.dot_dimension_numbers<[1], [0], [0], [1], [0, 0, 1, 1], [], []>} : vector<78x8xbf16>, vector<8x8xbf16>, vector<78x8xf32> -> vector<78x8xf32>
    %107 = arith.addf %102, %106 : vector<78x8xf32>
    %108 = vector.extract_strided_slice %83 {offsets = [12, 0], sizes = [78, 8], strides = [1, 1]} : vector<100x8xbf16> to vector<78x8xbf16>
    %c5_59 = arith.constant 5 : index
    %c0_60 = arith.constant 0 : index
    %c0_61 = arith.constant 0 : index
    %109 = vector.load %arg6[%c5_59, %c0_60, %c0_61] : memref<9x8x8xbf16, #tpu.memory_space<vmem>>, vector<1x8x8xbf16>
    %110 = vector.shape_cast %109 : vector<1x8x8xbf16> to vector<8x8xbf16>
    %cst_62 = arith.constant dense<0.000000e+00> : vector<78x8xf32>
    %111 = tpu.matmul %108, %110, %cst_62 {dimension_numbers = #tpu.dot_dimension_numbers<[1], [0], [0], [1], [0, 0, 1, 1], [], []>} : vector<78x8xbf16>, vector<8x8xbf16>, vector<78x8xf32> -> vector<78x8xf32>
    %112 = arith.addf %107, %111 : vector<78x8xf32>
    %113 = vector.extract_strided_slice %83 {offsets = [20, 0], sizes = [78, 8], strides = [1, 1]} : vector<100x8xbf16> to vector<78x8xbf16>
    %c6_63 = arith.constant 6 : index
    %c0_64 = arith.constant 0 : index
    %c0_65 = arith.constant 0 : index
    %114 = vector.load %arg6[%c6_63, %c0_64, %c0_65] : memref<9x8x8xbf16, #tpu.memory_space<vmem>>, vector<1x8x8xbf16>
    %115 = vector.shape_cast %114 : vector<1x8x8xbf16> to vector<8x8xbf16>
    %cst_66 = arith.constant dense<0.000000e+00> : vector<78x8xf32>
    %116 = tpu.matmul %113, %115, %cst_66 {dimension_numbers = #tpu.dot_dimension_numbers<[1], [0], [0], [1], [0, 0, 1, 1], [], []>} : vector<78x8xbf16>, vector<8x8xbf16>, vector<78x8xf32> -> vector<78x8xf32>
    %117 = arith.addf %112, %116 : vector<78x8xf32>
    %118 = vector.extract_strided_slice %83 {offsets = [21, 0], sizes = [78, 8], strides = [1, 1]} : vector<100x8xbf16> to vector<78x8xbf16>
    %c7_67 = arith.constant 7 : index
    %c0_68 = arith.constant 0 : index
    %c0_69 = arith.constant 0 : index
    %119 = vector.load %arg6[%c7_67, %c0_68, %c0_69] : memref<9x8x8xbf16, #tpu.memory_space<vmem>>, vector<1x8x8xbf16>
    %120 = vector.shape_cast %119 : vector<1x8x8xbf16> to vector<8x8xbf16>
    %cst_70 = arith.constant dense<0.000000e+00> : vector<78x8xf32>
    %121 = tpu.matmul %118, %120, %cst_70 {dimension_numbers = #tpu.dot_dimension_numbers<[1], [0], [0], [1], [0, 0, 1, 1], [], []>} : vector<78x8xbf16>, vector<8x8xbf16>, vector<78x8xf32> -> vector<78x8xf32>
    %122 = arith.addf %117, %121 : vector<78x8xf32>
    %123 = vector.extract_strided_slice %83 {offsets = [22, 0], sizes = [78, 8], strides = [1, 1]} : vector<100x8xbf16> to vector<78x8xbf16>
    %c8_71 = arith.constant 8 : index
    %c0_72 = arith.constant 0 : index
    %c0_73 = arith.constant 0 : index
    %124 = vector.load %arg6[%c8_71, %c0_72, %c0_73] : memref<9x8x8xbf16, #tpu.memory_space<vmem>>, vector<1x8x8xbf16>
    %125 = vector.shape_cast %124 : vector<1x8x8xbf16> to vector<8x8xbf16>
    %cst_74 = arith.constant dense<0.000000e+00> : vector<78x8xf32>
    %126 = tpu.matmul %123, %125, %cst_74 {dimension_numbers = #tpu.dot_dimension_numbers<[1], [0], [0], [1], [0, 0, 1, 1], [], []>} : vector<78x8xbf16>, vector<8x8xbf16>, vector<78x8xf32> -> vector<78x8xf32>
    %127 = arith.addf %122, %126 : vector<78x8xf32>
    %c0_75 = arith.constant 0 : index
    %c0_76 = arith.constant 0 : index
    %128 = vector.load %arg7[%c0_75, %c0_76] : memref<1x8xf32, #tpu.memory_space<vmem>>, vector<1x8xf32>
    %129 = vector.broadcast %128 : vector<1x8xf32> to vector<78x8xf32>
    %130 = arith.addf %127, %129 : vector<78x8xf32>
    %cst_77 = arith.constant 0.000000e+00 : f32
    %131 = vector.broadcast %cst_77 : f32 to vector<78x8xf32>
    %132 = arith.maximumf %130, %131 : vector<78x8xf32>
    %133 = arith.truncf %132 : vector<78x8xf32> to vector<78x8xbf16>
    %c0_78 = arith.constant 0 : index
    %c0_79 = arith.constant 0 : index
    %134 = vector.load %arg8[%c0_78, %c0_79] : memref<100x78xbf16, #tpu.memory_space<vmem>>, vector<100x78xbf16>
    %cst_80 = arith.constant dense<0.000000e+00> : vector<100x8xf32>
    %135 = tpu.matmul %134, %133, %cst_80 {dimension_numbers = #tpu.dot_dimension_numbers<[1], [0], [0], [1], [0, 0, 1, 1], [], []>} : vector<100x78xbf16>, vector<78x8xbf16>, vector<100x8xf32> -> vector<100x8xf32>
    %136 = arith.truncf %135 : vector<100x8xf32> to vector<100x8xbf16>
    %137 = vector.extract_strided_slice %136 {offsets = [0, 0], sizes = [78, 8], strides = [1, 1]} : vector<100x8xbf16> to vector<78x8xbf16>
    %c0_81 = arith.constant 0 : index
    %c0_82 = arith.constant 0 : index
    %c0_83 = arith.constant 0 : index
    %138 = vector.load %arg9[%c0_81, %c0_82, %c0_83] : memref<9x8x16xbf16, #tpu.memory_space<vmem>>, vector<1x8x16xbf16>
    %139 = vector.shape_cast %138 : vector<1x8x16xbf16> to vector<8x16xbf16>
    %cst_84 = arith.constant dense<0.000000e+00> : vector<78x16xf32>
    %140 = tpu.matmul %137, %139, %cst_84 {dimension_numbers = #tpu.dot_dimension_numbers<[1], [0], [0], [1], [0, 0, 1, 1], [], []>} : vector<78x8xbf16>, vector<8x16xbf16>, vector<78x16xf32> -> vector<78x16xf32>
    %141 = vector.extract_strided_slice %136 {offsets = [1, 0], sizes = [78, 8], strides = [1, 1]} : vector<100x8xbf16> to vector<78x8xbf16>
    %c1_85 = arith.constant 1 : index
    %c0_86 = arith.constant 0 : index
    %c0_87 = arith.constant 0 : index
    %142 = vector.load %arg9[%c1_85, %c0_86, %c0_87] : memref<9x8x16xbf16, #tpu.memory_space<vmem>>, vector<1x8x16xbf16>
    %143 = vector.shape_cast %142 : vector<1x8x16xbf16> to vector<8x16xbf16>
    %cst_88 = arith.constant dense<0.000000e+00> : vector<78x16xf32>
    %144 = tpu.matmul %141, %143, %cst_88 {dimension_numbers = #tpu.dot_dimension_numbers<[1], [0], [0], [1], [0, 0, 1, 1], [], []>} : vector<78x8xbf16>, vector<8x16xbf16>, vector<78x16xf32> -> vector<78x16xf32>
    %145 = arith.addf %140, %144 : vector<78x16xf32>
    %146 = vector.extract_strided_slice %136 {offsets = [2, 0], sizes = [78, 8], strides = [1, 1]} : vector<100x8xbf16> to vector<78x8xbf16>
    %c2_89 = arith.constant 2 : index
    %c0_90 = arith.constant 0 : index
    %c0_91 = arith.constant 0 : index
    %147 = vector.load %arg9[%c2_89, %c0_90, %c0_91] : memref<9x8x16xbf16, #tpu.memory_space<vmem>>, vector<1x8x16xbf16>
    %148 = vector.shape_cast %147 : vector<1x8x16xbf16> to vector<8x16xbf16>
    %cst_92 = arith.constant dense<0.000000e+00> : vector<78x16xf32>
    %149 = tpu.matmul %146, %148, %cst_92 {dimension_numbers = #tpu.dot_dimension_numbers<[1], [0], [0], [1], [0, 0, 1, 1], [], []>} : vector<78x8xbf16>, vector<8x16xbf16>, vector<78x16xf32> -> vector<78x16xf32>
    %150 = arith.addf %145, %149 : vector<78x16xf32>
    %151 = vector.extract_strided_slice %136 {offsets = [10, 0], sizes = [78, 8], strides = [1, 1]} : vector<100x8xbf16> to vector<78x8xbf16>
    %c3_93 = arith.constant 3 : index
    %c0_94 = arith.constant 0 : index
    %c0_95 = arith.constant 0 : index
    %152 = vector.load %arg9[%c3_93, %c0_94, %c0_95] : memref<9x8x16xbf16, #tpu.memory_space<vmem>>, vector<1x8x16xbf16>
    %153 = vector.shape_cast %152 : vector<1x8x16xbf16> to vector<8x16xbf16>
    %cst_96 = arith.constant dense<0.000000e+00> : vector<78x16xf32>
    %154 = tpu.matmul %151, %153, %cst_96 {dimension_numbers = #tpu.dot_dimension_numbers<[1], [0], [0], [1], [0, 0, 1, 1], [], []>} : vector<78x8xbf16>, vector<8x16xbf16>, vector<78x16xf32> -> vector<78x16xf32>
    %155 = arith.addf %150, %154 : vector<78x16xf32>
    %156 = vector.extract_strided_slice %136 {offsets = [11, 0], sizes = [78, 8], strides = [1, 1]} : vector<100x8xbf16> to vector<78x8xbf16>
    %c4_97 = arith.constant 4 : index
    %c0_98 = arith.constant 0 : index
    %c0_99 = arith.constant 0 : index
    %157 = vector.load %arg9[%c4_97, %c0_98, %c0_99] : memref<9x8x16xbf16, #tpu.memory_space<vmem>>, vector<1x8x16xbf16>
    %158 = vector.shape_cast %157 : vector<1x8x16xbf16> to vector<8x16xbf16>
    %cst_100 = arith.constant dense<0.000000e+00> : vector<78x16xf32>
    %159 = tpu.matmul %156, %158, %cst_100 {dimension_numbers = #tpu.dot_dimension_numbers<[1], [0], [0], [1], [0, 0, 1, 1], [], []>} : vector<78x8xbf16>, vector<8x16xbf16>, vector<78x16xf32> -> vector<78x16xf32>
    %160 = arith.addf %155, %159 : vector<78x16xf32>
    %161 = vector.extract_strided_slice %136 {offsets = [12, 0], sizes = [78, 8], strides = [1, 1]} : vector<100x8xbf16> to vector<78x8xbf16>
    %c5_101 = arith.constant 5 : index
    %c0_102 = arith.constant 0 : index
    %c0_103 = arith.constant 0 : index
    %162 = vector.load %arg9[%c5_101, %c0_102, %c0_103] : memref<9x8x16xbf16, #tpu.memory_space<vmem>>, vector<1x8x16xbf16>
    %163 = vector.shape_cast %162 : vector<1x8x16xbf16> to vector<8x16xbf16>
    %cst_104 = arith.constant dense<0.000000e+00> : vector<78x16xf32>
    %164 = tpu.matmul %161, %163, %cst_104 {dimension_numbers = #tpu.dot_dimension_numbers<[1], [0], [0], [1], [0, 0, 1, 1], [], []>} : vector<78x8xbf16>, vector<8x16xbf16>, vector<78x16xf32> -> vector<78x16xf32>
    %165 = arith.addf %160, %164 : vector<78x16xf32>
    %166 = vector.extract_strided_slice %136 {offsets = [20, 0], sizes = [78, 8], strides = [1, 1]} : vector<100x8xbf16> to vector<78x8xbf16>
    %c6_105 = arith.constant 6 : index
    %c0_106 = arith.constant 0 : index
    %c0_107 = arith.constant 0 : index
    %167 = vector.load %arg9[%c6_105, %c0_106, %c0_107] : memref<9x8x16xbf16, #tpu.memory_space<vmem>>, vector<1x8x16xbf16>
    %168 = vector.shape_cast %167 : vector<1x8x16xbf16> to vector<8x16xbf16>
    %cst_108 = arith.constant dense<0.000000e+00> : vector<78x16xf32>
    %169 = tpu.matmul %166, %168, %cst_108 {dimension_numbers = #tpu.dot_dimension_numbers<[1], [0], [0], [1], [0, 0, 1, 1], [], []>} : vector<78x8xbf16>, vector<8x16xbf16>, vector<78x16xf32> -> vector<78x16xf32>
    %170 = arith.addf %165, %169 : vector<78x16xf32>
    %171 = vector.extract_strided_slice %136 {offsets = [21, 0], sizes = [78, 8], strides = [1, 1]} : vector<100x8xbf16> to vector<78x8xbf16>
    %c7_109 = arith.constant 7 : index
    %c0_110 = arith.constant 0 : index
    %c0_111 = arith.constant 0 : index
    %172 = vector.load %arg9[%c7_109, %c0_110, %c0_111] : memref<9x8x16xbf16, #tpu.memory_space<vmem>>, vector<1x8x16xbf16>
    %173 = vector.shape_cast %172 : vector<1x8x16xbf16> to vector<8x16xbf16>
    %cst_112 = arith.constant dense<0.000000e+00> : vector<78x16xf32>
    %174 = tpu.matmul %171, %173, %cst_112 {dimension_numbers = #tpu.dot_dimension_numbers<[1], [0], [0], [1], [0, 0, 1, 1], [], []>} : vector<78x8xbf16>, vector<8x16xbf16>, vector<78x16xf32> -> vector<78x16xf32>
    %175 = arith.addf %170, %174 : vector<78x16xf32>
    %176 = vector.extract_strided_slice %136 {offsets = [22, 0], sizes = [78, 8], strides = [1, 1]} : vector<100x8xbf16> to vector<78x8xbf16>
    %c8_113 = arith.constant 8 : index
    %c0_114 = arith.constant 0 : index
    %c0_115 = arith.constant 0 : index
    %177 = vector.load %arg9[%c8_113, %c0_114, %c0_115] : memref<9x8x16xbf16, #tpu.memory_space<vmem>>, vector<1x8x16xbf16>
    %178 = vector.shape_cast %177 : vector<1x8x16xbf16> to vector<8x16xbf16>
    %cst_116 = arith.constant dense<0.000000e+00> : vector<78x16xf32>
    %179 = tpu.matmul %176, %178, %cst_116 {dimension_numbers = #tpu.dot_dimension_numbers<[1], [0], [0], [1], [0, 0, 1, 1], [], []>} : vector<78x8xbf16>, vector<8x16xbf16>, vector<78x16xf32> -> vector<78x16xf32>
    %180 = arith.addf %175, %179 : vector<78x16xf32>
    %c0_117 = arith.constant 0 : index
    %c0_118 = arith.constant 0 : index
    %181 = vector.load %arg10[%c0_117, %c0_118] : memref<1x16xf32, #tpu.memory_space<vmem>>, vector<1x16xf32>
    %182 = vector.broadcast %181 : vector<1x16xf32> to vector<78x16xf32>
    %183 = arith.addf %180, %182 : vector<78x16xf32>
    %cst_119 = arith.constant 0.000000e+00 : f32
    %184 = vector.broadcast %cst_119 : f32 to vector<78x16xf32>
    %185 = arith.maximumf %183, %184 : vector<78x16xf32>
    %186 = arith.truncf %185 : vector<78x16xf32> to vector<78x16xbf16>
    %c0_120 = arith.constant 0 : index
    %c0_121 = arith.constant 0 : index
    %187 = vector.load %arg11[%c0_120, %c0_121] : memref<36x78xbf16, #tpu.memory_space<vmem>>, vector<36x78xbf16>
    %cst_122 = arith.constant dense<0.000000e+00> : vector<36x16xf32>
    %188 = tpu.matmul %187, %186, %cst_122 {dimension_numbers = #tpu.dot_dimension_numbers<[1], [0], [0], [1], [0, 0, 1, 1], [], []>} : vector<36x78xbf16>, vector<78x16xbf16>, vector<36x16xf32> -> vector<36x16xf32>
    %189 = arith.truncf %188 : vector<36x16xf32> to vector<36x16xbf16>
    %190 = vector.extract_strided_slice %189 {offsets = [0, 0], sizes = [22, 16], strides = [1, 1]} : vector<36x16xbf16> to vector<22x16xbf16>
    %c0_123 = arith.constant 0 : index
    %c0_124 = arith.constant 0 : index
    %c0_125 = arith.constant 0 : index
    %191 = vector.load %arg12[%c0_123, %c0_124, %c0_125] : memref<9x16x32xbf16, #tpu.memory_space<vmem>>, vector<1x16x32xbf16>
    %192 = vector.shape_cast %191 : vector<1x16x32xbf16> to vector<16x32xbf16>
    %cst_126 = arith.constant dense<0.000000e+00> : vector<22x32xf32>
    %193 = tpu.matmul %190, %192, %cst_126 {dimension_numbers = #tpu.dot_dimension_numbers<[1], [0], [0], [1], [0, 0, 1, 1], [], []>} : vector<22x16xbf16>, vector<16x32xbf16>, vector<22x32xf32> -> vector<22x32xf32>
    %194 = vector.extract_strided_slice %189 {offsets = [1, 0], sizes = [22, 16], strides = [1, 1]} : vector<36x16xbf16> to vector<22x16xbf16>
    %c1_127 = arith.constant 1 : index
    %c0_128 = arith.constant 0 : index
    %c0_129 = arith.constant 0 : index
    %195 = vector.load %arg12[%c1_127, %c0_128, %c0_129] : memref<9x16x32xbf16, #tpu.memory_space<vmem>>, vector<1x16x32xbf16>
    %196 = vector.shape_cast %195 : vector<1x16x32xbf16> to vector<16x32xbf16>
    %cst_130 = arith.constant dense<0.000000e+00> : vector<22x32xf32>
    %197 = tpu.matmul %194, %196, %cst_130 {dimension_numbers = #tpu.dot_dimension_numbers<[1], [0], [0], [1], [0, 0, 1, 1], [], []>} : vector<22x16xbf16>, vector<16x32xbf16>, vector<22x32xf32> -> vector<22x32xf32>
    %198 = arith.addf %193, %197 : vector<22x32xf32>
    %199 = vector.extract_strided_slice %189 {offsets = [2, 0], sizes = [22, 16], strides = [1, 1]} : vector<36x16xbf16> to vector<22x16xbf16>
    %c2_131 = arith.constant 2 : index
    %c0_132 = arith.constant 0 : index
    %c0_133 = arith.constant 0 : index
    %200 = vector.load %arg12[%c2_131, %c0_132, %c0_133] : memref<9x16x32xbf16, #tpu.memory_space<vmem>>, vector<1x16x32xbf16>
    %201 = vector.shape_cast %200 : vector<1x16x32xbf16> to vector<16x32xbf16>
    %cst_134 = arith.constant dense<0.000000e+00> : vector<22x32xf32>
    %202 = tpu.matmul %199, %201, %cst_134 {dimension_numbers = #tpu.dot_dimension_numbers<[1], [0], [0], [1], [0, 0, 1, 1], [], []>} : vector<22x16xbf16>, vector<16x32xbf16>, vector<22x32xf32> -> vector<22x32xf32>
    %203 = arith.addf %198, %202 : vector<22x32xf32>
    %204 = vector.extract_strided_slice %189 {offsets = [6, 0], sizes = [22, 16], strides = [1, 1]} : vector<36x16xbf16> to vector<22x16xbf16>
    %c3_135 = arith.constant 3 : index
    %c0_136 = arith.constant 0 : index
    %c0_137 = arith.constant 0 : index
    %205 = vector.load %arg12[%c3_135, %c0_136, %c0_137] : memref<9x16x32xbf16, #tpu.memory_space<vmem>>, vector<1x16x32xbf16>
    %206 = vector.shape_cast %205 : vector<1x16x32xbf16> to vector<16x32xbf16>
    %cst_138 = arith.constant dense<0.000000e+00> : vector<22x32xf32>
    %207 = tpu.matmul %204, %206, %cst_138 {dimension_numbers = #tpu.dot_dimension_numbers<[1], [0], [0], [1], [0, 0, 1, 1], [], []>} : vector<22x16xbf16>, vector<16x32xbf16>, vector<22x32xf32> -> vector<22x32xf32>
    %208 = arith.addf %203, %207 : vector<22x32xf32>
    %209 = vector.extract_strided_slice %189 {offsets = [7, 0], sizes = [22, 16], strides = [1, 1]} : vector<36x16xbf16> to vector<22x16xbf16>
    %c4_139 = arith.constant 4 : index
    %c0_140 = arith.constant 0 : index
    %c0_141 = arith.constant 0 : index
    %210 = vector.load %arg12[%c4_139, %c0_140, %c0_141] : memref<9x16x32xbf16, #tpu.memory_space<vmem>>, vector<1x16x32xbf16>
    %211 = vector.shape_cast %210 : vector<1x16x32xbf16> to vector<16x32xbf16>
    %cst_142 = arith.constant dense<0.000000e+00> : vector<22x32xf32>
    %212 = tpu.matmul %209, %211, %cst_142 {dimension_numbers = #tpu.dot_dimension_numbers<[1], [0], [0], [1], [0, 0, 1, 1], [], []>} : vector<22x16xbf16>, vector<16x32xbf16>, vector<22x32xf32> -> vector<22x32xf32>
    %213 = arith.addf %208, %212 : vector<22x32xf32>
    %214 = vector.extract_strided_slice %189 {offsets = [8, 0], sizes = [22, 16], strides = [1, 1]} : vector<36x16xbf16> to vector<22x16xbf16>
    %c5_143 = arith.constant 5 : index
    %c0_144 = arith.constant 0 : index
    %c0_145 = arith.constant 0 : index
    %215 = vector.load %arg12[%c5_143, %c0_144, %c0_145] : memref<9x16x32xbf16, #tpu.memory_space<vmem>>, vector<1x16x32xbf16>
    %216 = vector.shape_cast %215 : vector<1x16x32xbf16> to vector<16x32xbf16>
    %cst_146 = arith.constant dense<0.000000e+00> : vector<22x32xf32>
    %217 = tpu.matmul %214, %216, %cst_146 {dimension_numbers = #tpu.dot_dimension_numbers<[1], [0], [0], [1], [0, 0, 1, 1], [], []>} : vector<22x16xbf16>, vector<16x32xbf16>, vector<22x32xf32> -> vector<22x32xf32>
    %218 = arith.addf %213, %217 : vector<22x32xf32>
    %219 = vector.extract_strided_slice %189 {offsets = [12, 0], sizes = [22, 16], strides = [1, 1]} : vector<36x16xbf16> to vector<22x16xbf16>
    %c6_147 = arith.constant 6 : index
    %c0_148 = arith.constant 0 : index
    %c0_149 = arith.constant 0 : index
    %220 = vector.load %arg12[%c6_147, %c0_148, %c0_149] : memref<9x16x32xbf16, #tpu.memory_space<vmem>>, vector<1x16x32xbf16>
    %221 = vector.shape_cast %220 : vector<1x16x32xbf16> to vector<16x32xbf16>
    %cst_150 = arith.constant dense<0.000000e+00> : vector<22x32xf32>
    %222 = tpu.matmul %219, %221, %cst_150 {dimension_numbers = #tpu.dot_dimension_numbers<[1], [0], [0], [1], [0, 0, 1, 1], [], []>} : vector<22x16xbf16>, vector<16x32xbf16>, vector<22x32xf32> -> vector<22x32xf32>
    %223 = arith.addf %218, %222 : vector<22x32xf32>
    %224 = vector.extract_strided_slice %189 {offsets = [13, 0], sizes = [22, 16], strides = [1, 1]} : vector<36x16xbf16> to vector<22x16xbf16>
    %c7_151 = arith.constant 7 : index
    %c0_152 = arith.constant 0 : index
    %c0_153 = arith.constant 0 : index
    %225 = vector.load %arg12[%c7_151, %c0_152, %c0_153] : memref<9x16x32xbf16, #tpu.memory_space<vmem>>, vector<1x16x32xbf16>
    %226 = vector.shape_cast %225 : vector<1x16x32xbf16> to vector<16x32xbf16>
    %cst_154 = arith.constant dense<0.000000e+00> : vector<22x32xf32>
    %227 = tpu.matmul %224, %226, %cst_154 {dimension_numbers = #tpu.dot_dimension_numbers<[1], [0], [0], [1], [0, 0, 1, 1], [], []>} : vector<22x16xbf16>, vector<16x32xbf16>, vector<22x32xf32> -> vector<22x32xf32>
    %228 = arith.addf %223, %227 : vector<22x32xf32>
    %229 = vector.extract_strided_slice %189 {offsets = [14, 0], sizes = [22, 16], strides = [1, 1]} : vector<36x16xbf16> to vector<22x16xbf16>
    %c8_155 = arith.constant 8 : index
    %c0_156 = arith.constant 0 : index
    %c0_157 = arith.constant 0 : index
    %230 = vector.load %arg12[%c8_155, %c0_156, %c0_157] : memref<9x16x32xbf16, #tpu.memory_space<vmem>>, vector<1x16x32xbf16>
    %231 = vector.shape_cast %230 : vector<1x16x32xbf16> to vector<16x32xbf16>
    %cst_158 = arith.constant dense<0.000000e+00> : vector<22x32xf32>
    %232 = tpu.matmul %229, %231, %cst_158 {dimension_numbers = #tpu.dot_dimension_numbers<[1], [0], [0], [1], [0, 0, 1, 1], [], []>} : vector<22x16xbf16>, vector<16x32xbf16>, vector<22x32xf32> -> vector<22x32xf32>
    %233 = arith.addf %228, %232 : vector<22x32xf32>
    %c0_159 = arith.constant 0 : index
    %c0_160 = arith.constant 0 : index
    %234 = vector.load %arg13[%c0_159, %c0_160] : memref<1x32xf32, #tpu.memory_space<vmem>>, vector<1x32xf32>
    %235 = vector.broadcast %234 : vector<1x32xf32> to vector<22x32xf32>
    %236 = arith.addf %233, %235 : vector<22x32xf32>
    %cst_161 = arith.constant 0.000000e+00 : f32
    %237 = vector.broadcast %cst_161 : f32 to vector<22x32xf32>
    %238 = arith.maximumf %236, %237 : vector<22x32xf32>
    %239 = arith.truncf %238 : vector<22x32xf32> to vector<22x32xbf16>
    %c0_162 = arith.constant 0 : index
    %c0_163 = arith.constant 0 : index
    %240 = vector.load %arg14[%c0_162, %c0_163] : memref<16x22xbf16, #tpu.memory_space<vmem>>, vector<16x22xbf16>
    %cst_164 = arith.constant dense<0.000000e+00> : vector<16x32xf32>
    %241 = tpu.matmul %240, %239, %cst_164 {dimension_numbers = #tpu.dot_dimension_numbers<[1], [0], [0], [1], [0, 0, 1, 1], [], []>} : vector<16x22xbf16>, vector<22x32xbf16>, vector<16x32xf32> -> vector<16x32xf32>
    %242 = arith.truncf %241 : vector<16x32xf32> to vector<16x32xbf16>
    %243 = vector.extract_strided_slice %242 {offsets = [0, 0], sizes = [6, 32], strides = [1, 1]} : vector<16x32xbf16> to vector<6x32xbf16>
    %c0_165 = arith.constant 0 : index
    %c0_166 = arith.constant 0 : index
    %c0_167 = arith.constant 0 : index
    %244 = vector.load %arg15[%c0_165, %c0_166, %c0_167] : memref<9x32x64xbf16, #tpu.memory_space<vmem>>, vector<1x32x64xbf16>
    %245 = vector.shape_cast %244 : vector<1x32x64xbf16> to vector<32x64xbf16>
    %cst_168 = arith.constant dense<0.000000e+00> : vector<6x64xf32>
    %246 = tpu.matmul %243, %245, %cst_168 {dimension_numbers = #tpu.dot_dimension_numbers<[1], [0], [0], [1], [0, 0, 1, 1], [], []>} : vector<6x32xbf16>, vector<32x64xbf16>, vector<6x64xf32> -> vector<6x64xf32>
    %247 = vector.extract_strided_slice %242 {offsets = [1, 0], sizes = [6, 32], strides = [1, 1]} : vector<16x32xbf16> to vector<6x32xbf16>
    %c1_169 = arith.constant 1 : index
    %c0_170 = arith.constant 0 : index
    %c0_171 = arith.constant 0 : index
    %248 = vector.load %arg15[%c1_169, %c0_170, %c0_171] : memref<9x32x64xbf16, #tpu.memory_space<vmem>>, vector<1x32x64xbf16>
    %249 = vector.shape_cast %248 : vector<1x32x64xbf16> to vector<32x64xbf16>
    %cst_172 = arith.constant dense<0.000000e+00> : vector<6x64xf32>
    %250 = tpu.matmul %247, %249, %cst_172 {dimension_numbers = #tpu.dot_dimension_numbers<[1], [0], [0], [1], [0, 0, 1, 1], [], []>} : vector<6x32xbf16>, vector<32x64xbf16>, vector<6x64xf32> -> vector<6x64xf32>
    %251 = arith.addf %246, %250 : vector<6x64xf32>
    %252 = vector.extract_strided_slice %242 {offsets = [2, 0], sizes = [6, 32], strides = [1, 1]} : vector<16x32xbf16> to vector<6x32xbf16>
    %c2_173 = arith.constant 2 : index
    %c0_174 = arith.constant 0 : index
    %c0_175 = arith.constant 0 : index
    %253 = vector.load %arg15[%c2_173, %c0_174, %c0_175] : memref<9x32x64xbf16, #tpu.memory_space<vmem>>, vector<1x32x64xbf16>
    %254 = vector.shape_cast %253 : vector<1x32x64xbf16> to vector<32x64xbf16>
    %cst_176 = arith.constant dense<0.000000e+00> : vector<6x64xf32>
    %255 = tpu.matmul %252, %254, %cst_176 {dimension_numbers = #tpu.dot_dimension_numbers<[1], [0], [0], [1], [0, 0, 1, 1], [], []>} : vector<6x32xbf16>, vector<32x64xbf16>, vector<6x64xf32> -> vector<6x64xf32>
    %256 = arith.addf %251, %255 : vector<6x64xf32>
    %257 = vector.extract_strided_slice %242 {offsets = [4, 0], sizes = [6, 32], strides = [1, 1]} : vector<16x32xbf16> to vector<6x32xbf16>
    %c3_177 = arith.constant 3 : index
    %c0_178 = arith.constant 0 : index
    %c0_179 = arith.constant 0 : index
    %258 = vector.load %arg15[%c3_177, %c0_178, %c0_179] : memref<9x32x64xbf16, #tpu.memory_space<vmem>>, vector<1x32x64xbf16>
    %259 = vector.shape_cast %258 : vector<1x32x64xbf16> to vector<32x64xbf16>
    %cst_180 = arith.constant dense<0.000000e+00> : vector<6x64xf32>
    %260 = tpu.matmul %257, %259, %cst_180 {dimension_numbers = #tpu.dot_dimension_numbers<[1], [0], [0], [1], [0, 0, 1, 1], [], []>} : vector<6x32xbf16>, vector<32x64xbf16>, vector<6x64xf32> -> vector<6x64xf32>
    %261 = arith.addf %256, %260 : vector<6x64xf32>
    %262 = vector.extract_strided_slice %242 {offsets = [5, 0], sizes = [6, 32], strides = [1, 1]} : vector<16x32xbf16> to vector<6x32xbf16>
    %c4_181 = arith.constant 4 : index
    %c0_182 = arith.constant 0 : index
    %c0_183 = arith.constant 0 : index
    %263 = vector.load %arg15[%c4_181, %c0_182, %c0_183] : memref<9x32x64xbf16, #tpu.memory_space<vmem>>, vector<1x32x64xbf16>
    %264 = vector.shape_cast %263 : vector<1x32x64xbf16> to vector<32x64xbf16>
    %cst_184 = arith.constant dense<0.000000e+00> : vector<6x64xf32>
    %265 = tpu.matmul %262, %264, %cst_184 {dimension_numbers = #tpu.dot_dimension_numbers<[1], [0], [0], [1], [0, 0, 1, 1], [], []>} : vector<6x32xbf16>, vector<32x64xbf16>, vector<6x64xf32> -> vector<6x64xf32>
    %266 = arith.addf %261, %265 : vector<6x64xf32>
    %267 = vector.extract_strided_slice %242 {offsets = [6, 0], sizes = [6, 32], strides = [1, 1]} : vector<16x32xbf16> to vector<6x32xbf16>
    %c5_185 = arith.constant 5 : index
    %c0_186 = arith.constant 0 : index
    %c0_187 = arith.constant 0 : index
    %268 = vector.load %arg15[%c5_185, %c0_186, %c0_187] : memref<9x32x64xbf16, #tpu.memory_space<vmem>>, vector<1x32x64xbf16>
    %269 = vector.shape_cast %268 : vector<1x32x64xbf16> to vector<32x64xbf16>
    %cst_188 = arith.constant dense<0.000000e+00> : vector<6x64xf32>
    %270 = tpu.matmul %267, %269, %cst_188 {dimension_numbers = #tpu.dot_dimension_numbers<[1], [0], [0], [1], [0, 0, 1, 1], [], []>} : vector<6x32xbf16>, vector<32x64xbf16>, vector<6x64xf32> -> vector<6x64xf32>
    %271 = arith.addf %266, %270 : vector<6x64xf32>
    %272 = vector.extract_strided_slice %242 {offsets = [8, 0], sizes = [6, 32], strides = [1, 1]} : vector<16x32xbf16> to vector<6x32xbf16>
    %c6_189 = arith.constant 6 : index
    %c0_190 = arith.constant 0 : index
    %c0_191 = arith.constant 0 : index
    %273 = vector.load %arg15[%c6_189, %c0_190, %c0_191] : memref<9x32x64xbf16, #tpu.memory_space<vmem>>, vector<1x32x64xbf16>
    %274 = vector.shape_cast %273 : vector<1x32x64xbf16> to vector<32x64xbf16>
    %cst_192 = arith.constant dense<0.000000e+00> : vector<6x64xf32>
    %275 = tpu.matmul %272, %274, %cst_192 {dimension_numbers = #tpu.dot_dimension_numbers<[1], [0], [0], [1], [0, 0, 1, 1], [], []>} : vector<6x32xbf16>, vector<32x64xbf16>, vector<6x64xf32> -> vector<6x64xf32>
    %276 = arith.addf %271, %275 : vector<6x64xf32>
    %277 = vector.extract_strided_slice %242 {offsets = [9, 0], sizes = [6, 32], strides = [1, 1]} : vector<16x32xbf16> to vector<6x32xbf16>
    %c7_193 = arith.constant 7 : index
    %c0_194 = arith.constant 0 : index
    %c0_195 = arith.constant 0 : index
    %278 = vector.load %arg15[%c7_193, %c0_194, %c0_195] : memref<9x32x64xbf16, #tpu.memory_space<vmem>>, vector<1x32x64xbf16>
    %279 = vector.shape_cast %278 : vector<1x32x64xbf16> to vector<32x64xbf16>
    %cst_196 = arith.constant dense<0.000000e+00> : vector<6x64xf32>
    %280 = tpu.matmul %277, %279, %cst_196 {dimension_numbers = #tpu.dot_dimension_numbers<[1], [0], [0], [1], [0, 0, 1, 1], [], []>} : vector<6x32xbf16>, vector<32x64xbf16>, vector<6x64xf32> -> vector<6x64xf32>
    %281 = arith.addf %276, %280 : vector<6x64xf32>
    %282 = vector.extract_strided_slice %242 {offsets = [10, 0], sizes = [6, 32], strides = [1, 1]} : vector<16x32xbf16> to vector<6x32xbf16>
    %c8_197 = arith.constant 8 : index
    %c0_198 = arith.constant 0 : index
    %c0_199 = arith.constant 0 : index
    %283 = vector.load %arg15[%c8_197, %c0_198, %c0_199] : memref<9x32x64xbf16, #tpu.memory_space<vmem>>, vector<1x32x64xbf16>
    %284 = vector.shape_cast %283 : vector<1x32x64xbf16> to vector<32x64xbf16>
    %cst_200 = arith.constant dense<0.000000e+00> : vector<6x64xf32>
    %285 = tpu.matmul %282, %284, %cst_200 {dimension_numbers = #tpu.dot_dimension_numbers<[1], [0], [0], [1], [0, 0, 1, 1], [], []>} : vector<6x32xbf16>, vector<32x64xbf16>, vector<6x64xf32> -> vector<6x64xf32>
    %286 = arith.addf %281, %285 : vector<6x64xf32>
    %c0_201 = arith.constant 0 : index
    %c0_202 = arith.constant 0 : index
    %287 = vector.load %arg16[%c0_201, %c0_202] : memref<1x64xf32, #tpu.memory_space<vmem>>, vector<1x64xf32>
    %288 = vector.broadcast %287 : vector<1x64xf32> to vector<6x64xf32>
    %289 = arith.addf %286, %288 : vector<6x64xf32>
    %cst_203 = arith.constant 0.000000e+00 : f32
    %290 = vector.broadcast %cst_203 : f32 to vector<6x64xf32>
    %291 = arith.maximumf %289, %290 : vector<6x64xf32>
    %292 = arith.truncf %291 : vector<6x64xf32> to vector<6x64xbf16>
    %c0_204 = arith.constant 0 : index
    %c0_205 = arith.constant 0 : index
    %293 = vector.load %arg17[%c0_204, %c0_205] : memref<64x78xbf16, #tpu.memory_space<vmem>>, vector<64x78xbf16>
    %cst_206 = arith.constant dense<0.000000e+00> : vector<64x8xf32>
    %294 = tpu.matmul %293, %133, %cst_206 {dimension_numbers = #tpu.dot_dimension_numbers<[1], [0], [0], [1], [0, 0, 1, 1], [], []>} : vector<64x78xbf16>, vector<78x8xbf16>, vector<64x8xf32> -> vector<64x8xf32>
    %295 = arith.truncf %294 : vector<64x8xf32> to vector<64x8xbf16>
    %c0_207 = arith.constant 0 : index
    %c0_208 = arith.constant 0 : index
    %296 = vector.load %arg21[%c0_207, %c0_208] : memref<8x16xbf16, #tpu.memory_space<vmem>>, vector<8x16xbf16>
    %cst_209 = arith.constant dense<0.000000e+00> : vector<64x16xf32>
    %297 = tpu.matmul %295, %296, %cst_209 {dimension_numbers = #tpu.dot_dimension_numbers<[1], [0], [0], [1], [0, 0, 1, 1], [], []>} : vector<64x8xbf16>, vector<8x16xbf16>, vector<64x16xf32> -> vector<64x16xf32>
    %c0_210 = arith.constant 0 : index
    %c0_211 = arith.constant 0 : index
    %298 = vector.load %arg22[%c0_210, %c0_211] : memref<1x16xf32, #tpu.memory_space<vmem>>, vector<1x16xf32>
    %299 = vector.broadcast %298 : vector<1x16xf32> to vector<64x16xf32>
    %300 = arith.addf %297, %299 : vector<64x16xf32>
    %c0_212 = arith.constant 0 : index
    %c0_213 = arith.constant 0 : index
    %301 = vector.load %arg18[%c0_212, %c0_213] : memref<64x78xbf16, #tpu.memory_space<vmem>>, vector<64x78xbf16>
    %cst_214 = arith.constant dense<0.000000e+00> : vector<64x16xf32>
    %302 = tpu.matmul %301, %186, %cst_214 {dimension_numbers = #tpu.dot_dimension_numbers<[1], [0], [0], [1], [0, 0, 1, 1], [], []>} : vector<64x78xbf16>, vector<78x16xbf16>, vector<64x16xf32> -> vector<64x16xf32>
    %303 = arith.truncf %302 : vector<64x16xf32> to vector<64x16xbf16>
    %c0_215 = arith.constant 0 : index
    %c0_216 = arith.constant 0 : index
    %304 = vector.load %arg23[%c0_215, %c0_216] : memref<16x16xbf16, #tpu.memory_space<vmem>>, vector<16x16xbf16>
    %cst_217 = arith.constant dense<0.000000e+00> : vector<64x16xf32>
    %305 = tpu.matmul %303, %304, %cst_217 {dimension_numbers = #tpu.dot_dimension_numbers<[1], [0], [0], [1], [0, 0, 1, 1], [], []>} : vector<64x16xbf16>, vector<16x16xbf16>, vector<64x16xf32> -> vector<64x16xf32>
    %c0_218 = arith.constant 0 : index
    %c0_219 = arith.constant 0 : index
    %306 = vector.load %arg24[%c0_218, %c0_219] : memref<1x16xf32, #tpu.memory_space<vmem>>, vector<1x16xf32>
    %307 = vector.broadcast %306 : vector<1x16xf32> to vector<64x16xf32>
    %308 = arith.addf %305, %307 : vector<64x16xf32>
    %309 = arith.addf %300, %308 : vector<64x16xf32>
    %c0_220 = arith.constant 0 : index
    %c0_221 = arith.constant 0 : index
    %310 = vector.load %arg19[%c0_220, %c0_221] : memref<64x22xbf16, #tpu.memory_space<vmem>>, vector<64x22xbf16>
    %cst_222 = arith.constant dense<0.000000e+00> : vector<64x32xf32>
    %311 = tpu.matmul %310, %239, %cst_222 {dimension_numbers = #tpu.dot_dimension_numbers<[1], [0], [0], [1], [0, 0, 1, 1], [], []>} : vector<64x22xbf16>, vector<22x32xbf16>, vector<64x32xf32> -> vector<64x32xf32>
    %312 = arith.truncf %311 : vector<64x32xf32> to vector<64x32xbf16>
    %c0_223 = arith.constant 0 : index
    %c0_224 = arith.constant 0 : index
    %313 = vector.load %arg25[%c0_223, %c0_224] : memref<32x16xbf16, #tpu.memory_space<vmem>>, vector<32x16xbf16>
    %cst_225 = arith.constant dense<0.000000e+00> : vector<64x16xf32>
    %314 = tpu.matmul %312, %313, %cst_225 {dimension_numbers = #tpu.dot_dimension_numbers<[1], [0], [0], [1], [0, 0, 1, 1], [], []>} : vector<64x32xbf16>, vector<32x16xbf16>, vector<64x16xf32> -> vector<64x16xf32>
    %c0_226 = arith.constant 0 : index
    %c0_227 = arith.constant 0 : index
    %315 = vector.load %arg26[%c0_226, %c0_227] : memref<1x16xf32, #tpu.memory_space<vmem>>, vector<1x16xf32>
    %316 = vector.broadcast %315 : vector<1x16xf32> to vector<64x16xf32>
    %317 = arith.addf %314, %316 : vector<64x16xf32>
    %318 = arith.addf %309, %317 : vector<64x16xf32>
    %c0_228 = arith.constant 0 : index
    %c0_229 = arith.constant 0 : index
    %319 = vector.load %arg20[%c0_228, %c0_229] : memref<64x6xbf16, #tpu.memory_space<vmem>>, vector<64x6xbf16>
    %cst_230 = arith.constant dense<0.000000e+00> : vector<64x64xf32>
    %320 = tpu.matmul %319, %292, %cst_230 {dimension_numbers = #tpu.dot_dimension_numbers<[1], [0], [0], [1], [0, 0, 1, 1], [], []>} : vector<64x6xbf16>, vector<6x64xbf16>, vector<64x64xf32> -> vector<64x64xf32>
    %321 = arith.truncf %320 : vector<64x64xf32> to vector<64x64xbf16>
    %c0_231 = arith.constant 0 : index
    %c0_232 = arith.constant 0 : index
    %322 = vector.load %arg27[%c0_231, %c0_232] : memref<64x16xbf16, #tpu.memory_space<vmem>>, vector<64x16xbf16>
    %cst_233 = arith.constant dense<0.000000e+00> : vector<64x16xf32>
    %323 = tpu.matmul %321, %322, %cst_233 {dimension_numbers = #tpu.dot_dimension_numbers<[1], [0], [0], [1], [0, 0, 1, 1], [], []>} : vector<64x64xbf16>, vector<64x16xbf16>, vector<64x16xf32> -> vector<64x16xf32>
    %c0_234 = arith.constant 0 : index
    %c0_235 = arith.constant 0 : index
    %324 = vector.load %arg28[%c0_234, %c0_235] : memref<1x16xf32, #tpu.memory_space<vmem>>, vector<1x16xf32>
    %325 = vector.broadcast %324 : vector<1x16xf32> to vector<64x16xf32>
    %326 = arith.addf %323, %325 : vector<64x16xf32>
    %327 = arith.addf %318, %326 : vector<64x16xf32>
    %cst_236 = arith.constant 0.000000e+00 : f32
    %328 = vector.broadcast %cst_236 : f32 to vector<64x16xf32>
    %329 = arith.maximumf %327, %328 : vector<64x16xf32>
    %330 = arith.truncf %329 : vector<64x16xf32> to vector<64x16xbf16>
    %c0_237 = arith.constant 0 : index
    %c0_238 = arith.constant 0 : index
    %331 = vector.load %arg29[%c0_237, %c0_238] : memref<16x128xbf16, #tpu.memory_space<vmem>>, vector<16x128xbf16>
    %cst_239 = arith.constant dense<0.000000e+00> : vector<64x128xf32>
    %332 = tpu.matmul %330, %331, %cst_239 {dimension_numbers = #tpu.dot_dimension_numbers<[1], [0], [0], [1], [0, 0, 1, 1], [], []>} : vector<64x16xbf16>, vector<16x128xbf16>, vector<64x128xf32> -> vector<64x128xf32>
    %c0_240 = arith.constant 0 : index
    %c0_241 = arith.constant 0 : index
    %333 = vector.load %arg30[%c0_240, %c0_241] : memref<1x128xf32, #tpu.memory_space<vmem>>, vector<1x128xf32>
    %334 = vector.broadcast %333 : vector<1x128xf32> to vector<64x128xf32>
    %335 = arith.addf %332, %334 : vector<64x128xf32>
    %c0_242 = arith.constant 0 : index
    %c0_243 = arith.constant 0 : index
    %c0_244 = arith.constant 0 : index
    %336 = vector.load %arg31[%c0_242, %c0_243, %c0_244] : memref<1x64x128xf32, #tpu.memory_space<vmem>>, vector<1x64x128xf32>
    %337 = vector.shape_cast %336 : vector<1x64x128xf32> to vector<64x128xf32>
    %338 = vector.shape_cast %335 : vector<64x128xf32> to vector<1x64x128xf32>
    tpu.vector_store %arg31[%c0_242, %c0_243, %c0_244], %338 {strides = array<i32>} : memref<1x64x128xf32, #tpu.memory_space<vmem>>, vector<1x64x128xf32>,
    return
  }
  func.func @transform_0(%arg0: i32) -> (i32, i32, i32, i32) {
    %c0_i32 = arith.constant 0 : i32
    %c0_i32_0 = arith.constant 0 : i32
    %c0_i32_1 = arith.constant 0 : i32
    %c0_i32_2 = arith.constant 0 : i32
    return %arg0, %c0_i32, %c0_i32_0, %c0_i32_1 : i32, i32, i32, i32
  }
  func.func @transform_1(%arg0: i32) -> (i32, i32, i32) {
    %c0_i32 = arith.constant 0 : i32
    %c0_i32_0 = arith.constant 0 : i32
    %c0_i32_1 = arith.constant 0 : i32
    %c0_i32_2 = arith.constant 0 : i32
    return %c0_i32, %c0_i32_0, %c0_i32_1 : i32, i32, i32
  }
  func.func @transform_2(%arg0: i32) -> (i32, i32) {
    %c0_i32 = arith.constant 0 : i32
    %c0_i32_0 = arith.constant 0 : i32
    %c0_i32_1 = arith.constant 0 : i32
    return %c0_i32, %c0_i32_0 : i32, i32
  }
  func.func @transform_3(%arg0: i32) -> (i32, i32) {
    %c0_i32 = arith.constant 0 : i32
    %c0_i32_0 = arith.constant 0 : i32
    %c0_i32_1 = arith.constant 0 : i32
    return %c0_i32, %c0_i32_0 : i32, i32
  }
  func.func @transform_4(%arg0: i32) -> (i32, i32) {
    %c0_i32 = arith.constant 0 : i32
    %c0_i32_0 = arith.constant 0 : i32
    %c0_i32_1 = arith.constant 0 : i32
    return %c0_i32, %c0_i32_0 : i32, i32
  }
  func.func @transform_5(%arg0: i32) -> (i32, i32, i32) {
    %c0_i32 = arith.constant 0 : i32
    %c0_i32_0 = arith.constant 0 : i32
    %c0_i32_1 = arith.constant 0 : i32
    %c0_i32_2 = arith.constant 0 : i32
    return %c0_i32, %c0_i32_0, %c0_i32_1 : i32, i32, i32
  }
  func.func @transform_6(%arg0: i32) -> (i32, i32) {
    %c0_i32 = arith.constant 0 : i32
    %c0_i32_0 = arith.constant 0 : i32
    %c0_i32_1 = arith.constant 0 : i32
    return %c0_i32, %c0_i32_0 : i32, i32
  }
  func.func @transform_7(%arg0: i32) -> (i32, i32) {
    %c0_i32 = arith.constant 0 : i32
    %c0_i32_0 = arith.constant 0 : i32
    %c0_i32_1 = arith.constant 0 : i32
    return %c0_i32, %c0_i32_0 : i32, i32
  }
  func.func @transform_8(%arg0: i32) -> (i32, i32, i32) {
    %c0_i32 = arith.constant 0 : i32
    %c0_i32_0 = arith.constant 0 : i32
    %c0_i32_1 = arith.constant 0 : i32
    %c0_i32_2 = arith.constant 0 : i32
    return %c0_i32, %c0_i32_0, %c0_i32_1 : i32, i32, i32
  }
  func.func @transform_9(%arg0: i32) -> (i32, i32) {
    %c0_i32 = arith.constant 0 : i32
    %c0_i32_0 = arith.constant 0 : i32
    %c0_i32_1 = arith.constant 0 : i32
    return %c0_i32, %c0_i32_0 : i32, i32
  }
  func.func @transform_10(%arg0: i32) -> (i32, i32) {
    %c0_i32 = arith.constant 0 : i32
    %c0_i32_0 = arith.constant 0 : i32
    %c0_i32_1 = arith.constant 0 : i32
    return %c0_i32, %c0_i32_0 : i32, i32
  }
  func.func @transform_11(%arg0: i32) -> (i32, i32, i32) {
    %c0_i32 = arith.constant 0 : i32
    %c0_i32_0 = arith.constant 0 : i32
    %c0_i32_1 = arith.constant 0 : i32
    %c0_i32_2 = arith.constant 0 : i32
    return %c0_i32, %c0_i32_0, %c0_i32_1 : i32, i32, i32
  }
  func.func @transform_12(%arg0: i32) -> (i32, i32) {
    %c0_i32 = arith.constant 0 : i32
    %c0_i32_0 = arith.constant 0 : i32
    %c0_i32_1 = arith.constant 0 : i32
    return %c0_i32, %c0_i32_0 : i32, i32
  }
  func.func @transform_13(%arg0: i32) -> (i32, i32) {
    %c0_i32 = arith.constant 0 : i32
    %c0_i32_0 = arith.constant 0 : i32
    %c0_i32_1 = arith.constant 0 : i32
    return %c0_i32, %c0_i32_0 : i32, i32
  }
  func.func @transform_14(%arg0: i32) -> (i32, i32, i32) {
    %c0_i32 = arith.constant 0 : i32
    %c0_i32_0 = arith.constant 0 : i32
    %c0_i32_1 = arith.constant 0 : i32
    %c0_i32_2 = arith.constant 0 : i32
    return %c0_i32, %c0_i32_0, %c0_i32_1 : i32, i32, i32
  }
  func.func @transform_15(%arg0: i32) -> (i32, i32) {
    %c0_i32 = arith.constant 0 : i32
    %c0_i32_0 = arith.constant 0 : i32
    %c0_i32_1 = arith.constant 0 : i32
    return %c0_i32, %c0_i32_0 : i32, i32
  }
  func.func @transform_16(%arg0: i32) -> (i32, i32) {
    %c0_i32 = arith.constant 0 : i32
    %c0_i32_0 = arith.constant 0 : i32
    %c0_i32_1 = arith.constant 0 : i32
    return %c0_i32, %c0_i32_0 : i32, i32
  }
  func.func @transform_17(%arg0: i32) -> (i32, i32) {
    %c0_i32 = arith.constant 0 : i32
    %c0_i32_0 = arith.constant 0 : i32
    %c0_i32_1 = arith.constant 0 : i32
    return %c0_i32, %c0_i32_0 : i32, i32
  }
  func.func @transform_18(%arg0: i32) -> (i32, i32) {
    %c0_i32 = arith.constant 0 : i32
    %c0_i32_0 = arith.constant 0 : i32
    %c0_i32_1 = arith.constant 0 : i32
    return %c0_i32, %c0_i32_0 : i32, i32
  }
  func.func @transform_19(%arg0: i32) -> (i32, i32) {
    %c0_i32 = arith.constant 0 : i32
    %c0_i32_0 = arith.constant 0 : i32
    %c0_i32_1 = arith.constant 0 : i32
    return %c0_i32, %c0_i32_0 : i32, i32
  }
  func.func @transform_20(%arg0: i32) -> (i32, i32) {
    %c0_i32 = arith.constant 0 : i32
    %c0_i32_0 = arith.constant 0 : i32
    %c0_i32_1 = arith.constant 0 : i32
    return %c0_i32, %c0_i32_0 : i32, i32
  }
  func.func @transform_21(%arg0: i32) -> (i32, i32) {
    %c0_i32 = arith.constant 0 : i32
    %c0_i32_0 = arith.constant 0 : i32
    %c0_i32_1 = arith.constant 0 : i32
    return %c0_i32, %c0_i32_0 : i32, i32
  }
  func.func @transform_22(%arg0: i32) -> (i32, i32) {
    %c0_i32 = arith.constant 0 : i32
    %c0_i32_0 = arith.constant 0 : i32
    %c0_i32_1 = arith.constant 0 : i32
    return %c0_i32, %c0_i32_0 : i32, i32
  }
  func.func @transform_23(%arg0: i32) -> (i32, i32) {
    %c0_i32 = arith.constant 0 : i32
    %c0_i32_0 = arith.constant 0 : i32
    %c0_i32_1 = arith.constant 0 : i32
    return %c0_i32, %c0_i32_0 : i32, i32
  }
  func.func @transform_24(%arg0: i32) -> (i32, i32) {
    %c0_i32 = arith.constant 0 : i32
    %c0_i32_0 = arith.constant 0 : i32
    %c0_i32_1 = arith.constant 0 : i32
    return %c0_i32, %c0_i32_0 : i32, i32
  }
  func.func @transform_25(%arg0: i32) -> (i32, i32) {
    %c0_i32 = arith.constant 0 : i32
    %c0_i32_0 = arith.constant 0 : i32
    %c0_i32_1 = arith.constant 0 : i32
    return %c0_i32, %c0_i32_0 : i32, i32
  }
  func.func @transform_26(%arg0: i32) -> (i32, i32) {
    %c0_i32 = arith.constant 0 : i32
    %c0_i32_0 = arith.constant 0 : i32
    %c0_i32_1 = arith.constant 0 : i32
    return %c0_i32, %c0_i32_0 : i32, i32
  }
  func.func @transform_27(%arg0: i32) -> (i32, i32) {
    %c0_i32 = arith.constant 0 : i32
    %c0_i32_0 = arith.constant 0 : i32
    %c0_i32_1 = arith.constant 0 : i32
    return %c0_i32, %c0_i32_0 : i32, i32
  }
  func.func @transform_28(%arg0: i32) -> (i32, i32) {
    %c0_i32 = arith.constant 0 : i32
    %c0_i32_0 = arith.constant 0 : i32
    %c0_i32_1 = arith.constant 0 : i32
    return %c0_i32, %c0_i32_0 : i32, i32
  }
  func.func @transform_29(%arg0: i32) -> (i32, i32) {
    %c0_i32 = arith.constant 0 : i32
    %c0_i32_0 = arith.constant 0 : i32
    %c0_i32_1 = arith.constant 0 : i32
    return %c0_i32, %c0_i32_0 : i32, i32
  }
  func.func @transform_30(%arg0: i32) -> (i32, i32, i32) {
    %c0_i32 = arith.constant 0 : i32
    %c0_i32_0 = arith.constant 0 : i32
    %c0_i32_1 = arith.constant 0 : i32
    return %arg0, %c0_i32, %c0_i32_0 : i32, i32, i32
  }
}

</mosaic_0001>

<llo_original>
// kernel: forward.1
$region0: #{forward.1}
  #allocation0 [shape = 'u32[]', space=smem, size = 0x4, offset = 0x4, fixed_abs, tag = 'smem constant byte address 0x4 - core index']
  #allocation1 [shape = 'u32[72,128]{1,0:T(1,128)}', space=vmem, size = 0x9000, scoped, tag = 'internal scratch']
  %s0 = inlined_call_operand.smem [shape: u32[31], index: -1, kind: input, shape index: {}]
  %s1 = sld [smem:[%s0]]
  %s2 = scalar_lea.smem %s0, 1
  %s3 = sld [smem:[%s2]]
  %s4 = scalar_lea.smem %s0, 2
  %s5 = sld [smem:[%s4]]
  %s6 = scalar_lea.smem %s0, 3
  %s7 = sld [smem:[%s6]]
  %s8 = scalar_lea.smem %s0, 4
  %s9 = sld [smem:[%s8]]
  %s10 = scalar_lea.smem %s0, 5
  %s11 = sld [smem:[%s10]]
  %s12 = scalar_lea.smem %s0, 6
  %s13 = sld [smem:[%s12]]
  %s14 = scalar_lea.smem %s0, 7
  %s15 = sld [smem:[%s14]]
  %s16 = scalar_lea.smem %s0, 8
  %s17 = sld [smem:[%s16]]
  %s18 = scalar_lea.smem %s0, 9
  %s19 = sld [smem:[%s18]]
  %s20 = scalar_lea.smem %s0, 10
  %s21 = sld [smem:[%s20]]
  %s22 = scalar_lea.smem %s0, 11
  %s23 = sld [smem:[%s22]]
  %s24 = scalar_lea.smem %s0, 12
  %s25 = sld [smem:[%s24]]
  %s26 = scalar_lea.smem %s0, 13
  %s27 = sld [smem:[%s26]]
  %s28 = scalar_lea.smem %s0, 14
  %s29 = sld [smem:[%s28]]
  %s30 = scalar_lea.smem %s0, 15
  %s31 = sld [smem:[%s30]]
  %s32 = scalar_lea.smem %s0, 16
  %s33 = sld [smem:[%s32]]
  %s34 = scalar_lea.smem %s0, 17
  %s35 = sld [smem:[%s34]]
  %s36 = scalar_lea.smem %s0, 18
  %s37 = sld [smem:[%s36]]
  %s38 = scalar_lea.smem %s0, 19
  %s39 = sld [smem:[%s38]]
  %s40 = scalar_lea.smem %s0, 20
  %s41 = sld [smem:[%s40]]
  %s42 = scalar_lea.smem %s0, 21
  %s43 = sld [smem:[%s42]]
  %s44 = scalar_lea.smem %s0, 22
  %s45 = sld [smem:[%s44]]
  %s46 = scalar_lea.smem %s0, 23
  %s47 = sld [smem:[%s46]]
  %s48 = scalar_lea.smem %s0, 24
  %s49 = sld [smem:[%s48]]
  %s50 = scalar_lea.smem %s0, 25
  %s51 = sld [smem:[%s50]]
  %s52 = scalar_lea.smem %s0, 26
  %s53 = sld [smem:[%s52]]
  %s54 = scalar_lea.smem %s0, 27
  %s55 = sld [smem:[%s54]]
  %s56 = scalar_lea.smem %s0, 28
  %s57 = sld [smem:[%s56]]
  %s58 = scalar_lea.smem %s0, 29
  %s59 = sld [smem:[%s58]]
  %s60 = scalar_lea.smem %s0, 30
  %s61 = sld [smem:[%s60]]
  %s62 = sld [smem:[#allocation0]]
  $region153: #{forward.1} parent=0
    _
  %s64 = ssub.s32 1, %s62
  %s65 = scalar_select 0, %s64, %s62
  loop: start=0, step=1, limit=6
  $region2: #{forward.1} parent=0 // loop_pre_header
    _
  $region3: #{forward.1} parent=0 // loop_header
    %s67 = sphi 0, %s71
    %p68 = scmp.ge.s32.totalorder %s67, 6
    %s77 = sphi 0, %s79
    %s80 = sphi 0, %s77
    %s81 = sphi 0, %s80
    %s97 = sphi 0, %s81
    %s101 = sphi 0, %s101
    %s103 = sphi 0, %s101
    %s104 = sphi 0, %s103
    %s118 = sphi 0, %s104
    %s122 = sphi 0, %s122
    %s124 = sphi 0, %s122
    %s125 = sphi 0, %s124
    %s139 = sphi 0, %s125
    %s143 = sphi 0, %s143
    %s145 = sphi 0, %s143
    %s146 = sphi 0, %s145
    %s160 = sphi 0, %s146
    %s164 = sphi 0, %s164
    %s166 = sphi 0, %s164
    %s167 = sphi 0, %s166
    %s181 = sphi 0, %s167
    %s185 = sphi 0, %s185
    %s187 = sphi 0, %s185
    %s188 = sphi 0, %s187
    %s202 = sphi 0, %s188
    %s206 = sphi 0, %s206
    %s208 = sphi 0, %s206
    %s209 = sphi 0, %s208
    %s223 = sphi 0, %s209
    %s227 = sphi 0, %s227
    %s229 = sphi 0, %s227
    %s230 = sphi 0, %s229
    %s244 = sphi 0, %s230
    %s248 = sphi 0, %s248
    %s250 = sphi 0, %s248
    %s251 = sphi 0, %s250
    %s265 = sphi 0, %s251
    %s269 = sphi 0, %s269
    %s271 = sphi 0, %s269
    %s272 = sphi 0, %s271
    %s286 = sphi 0, %s272
    %s290 = sphi 0, %s290
    %s292 = sphi 0, %s290
    %s293 = sphi 0, %s292
    %s307 = sphi 0, %s293
    %s311 = sphi 0, %s311
    %s313 = sphi 0, %s311
    %s314 = sphi 0, %s313
    %s328 = sphi 0, %s314
    %s332 = sphi 0, %s332
    %s334 = sphi 0, %s332
    %s335 = sphi 0, %s334
    %s349 = sphi 0, %s335
    %s353 = sphi 0, %s353
    %s355 = sphi 0, %s353
    %s356 = sphi 0, %s355
    %s370 = sphi 0, %s356
    %s374 = sphi 0, %s374
    %s376 = sphi 0, %s374
    %s377 = sphi 0, %s376
    %s391 = sphi 0, %s377
    %s395 = sphi 0, %s395
    %s397 = sphi 0, %s395
    %s398 = sphi 0, %s397
    %s412 = sphi 0, %s398
    %s416 = sphi 0, %s416
    %s418 = sphi 0, %s416
    %s419 = sphi 0, %s418
    %s433 = sphi 0, %s419
    %s437 = sphi 0, %s437
    %s439 = sphi 0, %s437
    %s440 = sphi 0, %s439
    %s454 = sphi 0, %s440
    %s458 = sphi 0, %s458
    %s460 = sphi 0, %s458
    %s461 = sphi 0, %s460
    %s475 = sphi 0, %s461
    %s479 = sphi 0, %s479
    %s481 = sphi 0, %s479
    %s482 = sphi 0, %s481
    %s496 = sphi 0, %s482
    %s500 = sphi 0, %s500
    %s502 = sphi 0, %s500
    %s503 = sphi 0, %s502
    %s517 = sphi 0, %s503
    %s521 = sphi 0, %s521
    %s523 = sphi 0, %s521
    %s524 = sphi 0, %s523
    %s538 = sphi 0, %s524
    %s542 = sphi 0, %s542
    %s544 = sphi 0, %s542
    %s545 = sphi 0, %s544
    %s559 = sphi 0, %s545
    %s563 = sphi 0, %s563
    %s565 = sphi 0, %s563
    %s566 = sphi 0, %s565
    %s580 = sphi 0, %s566
    %s584 = sphi 0, %s584
    %s586 = sphi 0, %s584
    %s587 = sphi 0, %s586
    %s601 = sphi 0, %s587
    %s605 = sphi 0, %s605
    %s607 = sphi 0, %s605
    %s608 = sphi 0, %s607
    %s622 = sphi 0, %s608
    %s626 = sphi 0, %s626
    %s628 = sphi 0, %s626
    %s629 = sphi 0, %s628
    %s643 = sphi 0, %s629
    %s647 = sphi 0, %s647
    %s649 = sphi 0, %s647
    %s650 = sphi 0, %s649
    %s664 = sphi 0, %s650
    %s668 = sphi 0, %s668
    %s670 = sphi 0, %s668
    %s671 = sphi 0, %s670
    %s685 = sphi 0, %s671
    %s689 = sphi 0, %s689
    %s691 = sphi 0, %s689
    %s692 = sphi 0, %s691
    %s706 = sphi 0, %s692
    %s712 = sphi 0, %s714
    %s715 = sphi 0, %s712
    %s716 = sphi 0, %s715
    %s732 = sphi 0, %s716
  $region4: #{forward.1} parent=0 // loop_header_branch
    %70 = sbr.rel (%p68) target = $region8
  $region5: #{forward.1} parent=0 // loop_body
    %s72 = ssub.s32 %s67, 1
    %s73 = ssub.s32 %s67, 2
    %s74 = sadd.s32 %s67, 1
    %s75 = ssub.s32 %s67, %s74
    %p76 = scmp.eq.s32.totalorder %s75, 0
    %s78 = sadd.s32 %s77, 1
    %s79 = scalar_select %p76, %s77, %s78
    %p82 = pneg %p76
    %p83 = scmp.eq.s32.totalorder %s67, 3
    %p84 = por %p82, %p83
    %p85 = scmp.ne.s32.totalorder %s77, %s80
    %p86 = scmp.eq.s32.totalorder %s67, 0
    %p87 = por %p85, %p86
    %p88 = scmp.ne.s32.totalorder %s77, %s80
    %p89 = scmp.eq.s32.totalorder %s72, 3
    %p90 = por %p88, %p89
    %p91 = scmp.ne.s32.totalorder %s80, %s81
    %p92 = scmp.eq.s32.totalorder %s72, 0
    %p93 = por %p91, %p92
    %p94 = scmp.ne.s32.totalorder %s80, %s81
    %p95 = scmp.eq.s32.totalorder %s73, 3
    %p96 = por %p94, %p95
    %p98 = scmp.ne.s32.totalorder %s81, %s97
    %p99 = scmp.eq.s32.totalorder %s73, 0
    %p100 = por %p98, %p99
    %s102 = sadd.s32 %s101, 1
    %p105 = scmp.eq.s32.totalorder %s67, 3
    %p106 = scmp.ne.s32.totalorder %s101, %s103
    %p107 = scmp.eq.s32.totalorder %s67, 0
    %p108 = por %p106, %p107
    %p109 = scmp.ne.s32.totalorder %s101, %s103
    %p110 = scmp.eq.s32.totalorder %s72, 3
    %p111 = por %p109, %p110
    %p112 = scmp.ne.s32.totalorder %s103, %s104
    %p113 = scmp.eq.s32.totalorder %s72, 0
    %p114 = por %p112, %p113
    %p115 = scmp.ne.s32.totalorder %s103, %s104
    %p116 = scmp.eq.s32.totalorder %s73, 3
    %p117 = por %p115, %p116
    %p119 = scmp.ne.s32.totalorder %s104, %s118
    %p120 = scmp.eq.s32.totalorder %s73, 0
    %p121 = por %p119, %p120
    %s123 = sadd.s32 %s122, 1
    %p126 = scmp.eq.s32.totalorder %s67, 3
    %p127 = scmp.ne.s32.totalorder %s122, %s124
    %p128 = scmp.eq.s32.totalorder %s67, 0
    %p129 = por %p127, %p128
    %p130 = scmp.ne.s32.totalorder %s122, %s124
    %p131 = scmp.eq.s32.totalorder %s72, 3
    %p132 = por %p130, %p131
    %p133 = scmp.ne.s32.totalorder %s124, %s125
    %p134 = scmp.eq.s32.totalorder %s72, 0
    %p135 = por %p133, %p134
    %p136 = scmp.ne.s32.totalorder %s124, %s125
    %p137 = scmp.eq.s32.totalorder %s73, 3
    %p138 = por %p136, %p137
    %p140 = scmp.ne.s32.totalorder %s125, %s139
    %p141 = scmp.eq.s32.totalorder %s73, 0
    %p142 = por %p140, %p141
    %s144 = sadd.s32 %s143, 1
    %p147 = scmp.eq.s32.totalorder %s67, 3
    %p148 = scmp.ne.s32.totalorder %s143, %s145
    %p149 = scmp.eq.s32.totalorder %s67, 0
    %p150 = por %p148, %p149
    %p151 = scmp.ne.s32.totalorder %s143, %s145
    %p152 = scmp.eq.s32.totalorder %s72, 3
    %p153 = por %p151, %p152
    %p154 = scmp.ne.s32.totalorder %s145, %s146
    %p155 = scmp.eq.s32.totalorder %s72, 0
    %p156 = por %p154, %p155
    %p157 = scmp.ne.s32.totalorder %s145, %s146
    %p158 = scmp.eq.s32.totalorder %s73, 3
    %p159 = por %p157, %p158
    %p161 = scmp.ne.s32.totalorder %s146, %s160
    %p162 = scmp.eq.s32.totalorder %s73, 0
    %p163 = por %p161, %p162
    %s165 = sadd.s32 %s164, 1
    %p168 = scmp.eq.s32.totalorder %s67, 3
    %p169 = scmp.ne.s32.totalorder %s164, %s166
    %p170 = scmp.eq.s32.totalorder %s67, 0
    %p171 = por %p169, %p170
    %p172 = scmp.ne.s32.totalorder %s164, %s166
    %p173 = scmp.eq.s32.totalorder %s72, 3
    %p174 = por %p172, %p173
    %p175 = scmp.ne.s32.totalorder %s166, %s167
    %p176 = scmp.eq.s32.totalorder %s72, 0
    %p177 = por %p175, %p176
    %p178 = scmp.ne.s32.totalorder %s166, %s167
    %p179 = scmp.eq.s32.totalorder %s73, 3
    %p180 = por %p178, %p179
    %p182 = scmp.ne.s32.totalorder %s167, %s181
    %p183 = scmp.eq.s32.totalorder %s73, 0
    %p184 = por %p182, %p183
    %s186 = sadd.s32 %s185, 1
    %p189 = scmp.eq.s32.totalorder %s67, 3
    %p190 = scmp.ne.s32.totalorder %s185, %s187
    %p191 = scmp.eq.s32.totalorder %s67, 0
    %p192 = por %p190, %p191
    %p193 = scmp.ne.s32.totalorder %s185, %s187
    %p194 = scmp.eq.s32.totalorder %s72, 3
    %p195 = por %p193, %p194
    %p196 = scmp.ne.s32.totalorder %s187, %s188
    %p197 = scmp.eq.s32.totalorder %s72, 0
    %p198 = por %p196, %p197
    %p199 = scmp.ne.s32.totalorder %s187, %s188
    %p200 = scmp.eq.s32.totalorder %s73, 3
    %p201 = por %p199, %p200
    %p203 = scmp.ne.s32.totalorder %s188, %s202
    %p204 = scmp.eq.s32.totalorder %s73, 0
    %p205 = por %p203, %p204
    %s207 = sadd.s32 %s206, 1
    %p210 = scmp.eq.s32.totalorder %s67, 3
    %p211 = scmp.ne.s32.totalorder %s206, %s208
    %p212 = scmp.eq.s32.totalorder %s67, 0
    %p213 = por %p211, %p212
    %p214 = scmp.ne.s32.totalorder %s206, %s208
    %p215 = scmp.eq.s32.totalorder %s72, 3
    %p216 = por %p214, %p215
    %p217 = scmp.ne.s32.totalorder %s208, %s209
    %p218 = scmp.eq.s32.totalorder %s72, 0
    %p219 = por %p217, %p218
    %p220 = scmp.ne.s32.totalorder %s208, %s209
    %p221 = scmp.eq.s32.totalorder %s73, 3
    %p222 = por %p220, %p221
    %p224 = scmp.ne.s32.totalorder %s209, %s223
    %p225 = scmp.eq.s32.totalorder %s73, 0
    %p226 = por %p224, %p225
    %s228 = sadd.s32 %s227, 1
    %p231 = scmp.eq.s32.totalorder %s67, 3
    %p232 = scmp.ne.s32.totalorder %s227, %s229
    %p233 = scmp.eq.s32.totalorder %s67, 0
    %p234 = por %p232, %p233
    %p235 = scmp.ne.s32.totalorder %s227, %s229
    %p236 = scmp.eq.s32.totalorder %s72, 3
    %p237 = por %p235, %p236
    %p238 = scmp.ne.s32.totalorder %s229, %s230
    %p239 = scmp.eq.s32.totalorder %s72, 0
    %p240 = por %p238, %p239
    %p241 = scmp.ne.s32.totalorder %s229, %s230
    %p242 = scmp.eq.s32.totalorder %s73, 3
    %p243 = por %p241, %p242
    %p245 = scmp.ne.s32.totalorder %s230, %s244
    %p246 = scmp.eq.s32.totalorder %s73, 0
    %p247 = por %p245, %p246
    %s249 = sadd.s32 %s248, 1
    %p252 = scmp.eq.s32.totalorder %s67, 3
    %p253 = scmp.ne.s32.totalorder %s248, %s250
    %p254 = scmp.eq.s32.totalorder %s67, 0
    %p255 = por %p253, %p254
    %p256 = scmp.ne.s32.totalorder %s248, %s250
    %p257 = scmp.eq.s32.totalorder %s72, 3
    %p258 = por %p256, %p257
    %p259 = scmp.ne.s32.totalorder %s250, %s251
    %p260 = scmp.eq.s32.totalorder %s72, 0
    %p261 = por %p259, %p260
    %p262 = scmp.ne.s32.totalorder %s250, %s251
    %p263 = scmp.eq.s32.totalorder %s73, 3
    %p264 = por %p262, %p263
    %p266 = scmp.ne.s32.totalorder %s251, %s265
    %p267 = scmp.eq.s32.totalorder %s73, 0
    %p268 = por %p266, %p267
    %s270 = sadd.s32 %s269, 1
    %p273 = scmp.eq.s32.totalorder %s67, 3
    %p274 = scmp.ne.s32.totalorder %s269, %s271
    %p275 = scmp.eq.s32.totalorder %s67, 0
    %p276 = por %p274, %p275
    %p277 = scmp.ne.s32.totalorder %s269, %s271
    %p278 = scmp.eq.s32.totalorder %s72, 3
    %p279 = por %p277, %p278
    %p280 = scmp.ne.s32.totalorder %s271, %s272
    %p281 = scmp.eq.s32.totalorder %s72, 0
    %p282 = por %p280, %p281
    %p283 = scmp.ne.s32.totalorder %s271, %s272
    %p284 = scmp.eq.s32.totalorder %s73, 3
    %p285 = por %p283, %p284
    %p287 = scmp.ne.s32.totalorder %s272, %s286
    %p288 = scmp.eq.s32.totalorder %s73, 0
    %p289 = por %p287, %p288
    %s291 = sadd.s32 %s290, 1
    %p294 = scmp.eq.s32.totalorder %s67, 3
    %p295 = scmp.ne.s32.totalorder %s290, %s292
    %p296 = scmp.eq.s32.totalorder %s67, 0
    %p297 = por %p295, %p296
    %p298 = scmp.ne.s32.totalorder %s290, %s292
    %p299 = scmp.eq.s32.totalorder %s72, 3
    %p300 = por %p298, %p299
    %p301 = scmp.ne.s32.totalorder %s292, %s293
    %p302 = scmp.eq.s32.totalorder %s72, 0
    %p303 = por %p301, %p302
    %p304 = scmp.ne.s32.totalorder %s292, %s293
    %p305 = scmp.eq.s32.totalorder %s73, 3
    %p306 = por %p304, %p305
    %p308 = scmp.ne.s32.totalorder %s293, %s307
    %p309 = scmp.eq.s32.totalorder %s73, 0
    %p310 = por %p308, %p309
    %s312 = sadd.s32 %s311, 1
    %p315 = scmp.eq.s32.totalorder %s67, 3
    %p316 = scmp.ne.s32.totalorder %s311, %s313
    %p317 = scmp.eq.s32.totalorder %s67, 0
    %p318 = por %p316, %p317
    %p319 = scmp.ne.s32.totalorder %s311, %s313
    %p320 = scmp.eq.s32.totalorder %s72, 3
    %p321 = por %p319, %p320
    %p322 = scmp.ne.s32.totalorder %s313, %s314
    %p323 = scmp.eq.s32.totalorder %s72, 0
    %p324 = por %p322, %p323
    %p325 = scmp.ne.s32.totalorder %s313, %s314
    %p326 = scmp.eq.s32.totalorder %s73, 3
    %p327 = por %p325, %p326
    %p329 = scmp.ne.s32.totalorder %s314, %s328
    %p330 = scmp.eq.s32.totalorder %s73, 0
    %p331 = por %p329, %p330
    %s333 = sadd.s32 %s332, 1
    %p336 = scmp.eq.s32.totalorder %s67, 3
    %p337 = scmp.ne.s32.totalorder %s332, %s334
    %p338 = scmp.eq.s32.totalorder %s67, 0
    %p339 = por %p337, %p338
    %p340 = scmp.ne.s32.totalorder %s332, %s334
    %p341 = scmp.eq.s32.totalorder %s72, 3
    %p342 = por %p340, %p341
    %p343 = scmp.ne.s32.totalorder %s334, %s335
    %p344 = scmp.eq.s32.totalorder %s72, 0
    %p345 = por %p343, %p344
    %p346 = scmp.ne.s32.totalorder %s334, %s335
    %p347 = scmp.eq.s32.totalorder %s73, 3
    %p348 = por %p346, %p347
    %p350 = scmp.ne.s32.totalorder %s335, %s349
    %p351 = scmp.eq.s32.totalorder %s73, 0
    %p352 = por %p350, %p351
    %s354 = sadd.s32 %s353, 1
    %p357 = scmp.eq.s32.totalorder %s67, 3
    %p358 = scmp.ne.s32.totalorder %s353, %s355
    %p359 = scmp.eq.s32.totalorder %s67, 0
    %p360 = por %p358, %p359
    %p361 = scmp.ne.s32.totalorder %s353, %s355
    %p362 = scmp.eq.s32.totalorder %s72, 3
    %p363 = por %p361, %p362
    %p364 = scmp.ne.s32.totalorder %s355, %s356
    %p365 = scmp.eq.s32.totalorder %s72, 0
    %p366 = por %p364, %p365
    %p367 = scmp.ne.s32.totalorder %s355, %s356
    %p368 = scmp.eq.s32.totalorder %s73, 3
    %p369 = por %p367, %p368
    %p371 = scmp.ne.s32.totalorder %s356, %s370
    %p372 = scmp.eq.s32.totalorder %s73, 0
    %p373 = por %p371, %p372
    %s375 = sadd.s32 %s374, 1
    %p378 = scmp.eq.s32.totalorder %s67, 3
    %p379 = scmp.ne.s32.totalorder %s374, %s376
    %p380 = scmp.eq.s32.totalorder %s67, 0
    %p381 = por %p379, %p380
    %p382 = scmp.ne.s32.totalorder %s374, %s376
    %p383 = scmp.eq.s32.totalorder %s72, 3
    %p384 = por %p382, %p383
    %p385 = scmp.ne.s32.totalorder %s376, %s377
    %p386 = scmp.eq.s32.totalorder %s72, 0
    %p387 = por %p385, %p386
    %p388 = scmp.ne.s32.totalorder %s376, %s377
    %p389 = scmp.eq.s32.totalorder %s73, 3
    %p390 = por %p388, %p389
    %p392 = scmp.ne.s32.totalorder %s377, %s391
    %p393 = scmp.eq.s32.totalorder %s73, 0
    %p394 = por %p392, %p393
    %s396 = sadd.s32 %s395, 1
    %p399 = scmp.eq.s32.totalorder %s67, 3
    %p400 = scmp.ne.s32.totalorder %s395, %s397
    %p401 = scmp.eq.s32.totalorder %s67, 0
    %p402 = por %p400, %p401
    %p403 = scmp.ne.s32.totalorder %s395, %s397
    %p404 = scmp.eq.s32.totalorder %s72, 3
    %p405 = por %p403, %p404
    %p406 = scmp.ne.s32.totalorder %s397, %s398
    %p407 = scmp.eq.s32.totalorder %s72, 0
    %p408 = por %p406, %p407
    %p409 = scmp.ne.s32.totalorder %s397, %s398
    %p410 = scmp.eq.s32.totalorder %s73, 3
    %p411 = por %p409, %p410
    %p413 = scmp.ne.s32.totalorder %s398, %s412
    %p414 = scmp.eq.s32.totalorder %s73, 0
    %p415 = por %p413, %p414
    %s417 = sadd.s32 %s416, 1
    %p420 = scmp.eq.s32.totalorder %s67, 3
    %p421 = scmp.ne.s32.totalorder %s416, %s418
    %p422 = scmp.eq.s32.totalorder %s67, 0
    %p423 = por %p421, %p422
    %p424 = scmp.ne.s32.totalorder %s416, %s418
    %p425 = scmp.eq.s32.totalorder %s72, 3
    %p426 = por %p424, %p425
    %p427 = scmp.ne.s32.totalorder %s418, %s419
    %p428 = scmp.eq.s32.totalorder %s72, 0
    %p429 = por %p427, %p428
    %p430 = scmp.ne.s32.totalorder %s418, %s419
    %p431 = scmp.eq.s32.totalorder %s73, 3
    %p432 = por %p430, %p431
    %p434 = scmp.ne.s32.totalorder %s419, %s433
    %p435 = scmp.eq.s32.totalorder %s73, 0
    %p436 = por %p434, %p435
    %s438 = sadd.s32 %s437, 1
    %p441 = scmp.eq.s32.totalorder %s67, 3
    %p442 = scmp.ne.s32.totalorder %s437, %s439
    %p443 = scmp.eq.s32.totalorder %s67, 0
    %p444 = por %p442, %p443
    %p445 = scmp.ne.s32.totalorder %s437, %s439
    %p446 = scmp.eq.s32.totalorder %s72, 3
    %p447 = por %p445, %p446
    %p448 = scmp.ne.s32.totalorder %s439, %s440
    %p449 = scmp.eq.s32.totalorder %s72, 0
    %p450 = por %p448, %p449
    %p451 = scmp.ne.s32.totalorder %s439, %s440
    %p452 = scmp.eq.s32.totalorder %s73, 3
    %p453 = por %p451, %p452
    %p455 = scmp.ne.s32.totalorder %s440, %s454
    %p456 = scmp.eq.s32.totalorder %s73, 0
    %p457 = por %p455, %p456
    %s459 = sadd.s32 %s458, 1
    %p462 = scmp.eq.s32.totalorder %s67, 3
    %p463 = scmp.ne.s32.totalorder %s458, %s460
    %p464 = scmp.eq.s32.totalorder %s67, 0
    %p465 = por %p463, %p464
    %p466 = scmp.ne.s32.totalorder %s458, %s460
    %p467 = scmp.eq.s32.totalorder %s72, 3
    %p468 = por %p466, %p467
    %p469 = scmp.ne.s32.totalorder %s460, %s461
    %p470 = scmp.eq.s32.totalorder %s72, 0
    %p471 = por %p469, %p470
    %p472 = scmp.ne.s32.totalorder %s460, %s461
    %p473 = scmp.eq.s32.totalorder %s73, 3
    %p474 = por %p472, %p473
    %p476 = scmp.ne.s32.totalorder %s461, %s475
    %p477 = scmp.eq.s32.totalorder %s73, 0
    %p478 = por %p476, %p477
    %s480 = sadd.s32 %s479, 1
    %p483 = scmp.eq.s32.totalorder %s67, 3
    %p484 = scmp.ne.s32.totalorder %s479, %s481
    %p485 = scmp.eq.s32.totalorder %s67, 0
    %p486 = por %p484, %p485
    %p487 = scmp.ne.s32.totalorder %s479, %s481
    %p488 = scmp.eq.s32.totalorder %s72, 3
    %p489 = por %p487, %p488
    %p490 = scmp.ne.s32.totalorder %s481, %s482
    %p491 = scmp.eq.s32.totalorder %s72, 0
    %p492 = por %p490, %p491
    %p493 = scmp.ne.s32.totalorder %s481, %s482
    %p494 = scmp.eq.s32.totalorder %s73, 3
    %p495 = por %p493, %p494
    %p497 = scmp.ne.s32.totalorder %s482, %s496
    %p498 = scmp.eq.s32.totalorder %s73, 0
    %p499 = por %p497, %p498
    %s501 = sadd.s32 %s500, 1
    %p504 = scmp.eq.s32.totalorder %s67, 3
    %p505 = scmp.ne.s32.totalorder %s500, %s502
    %p506 = scmp.eq.s32.totalorder %s67, 0
    %p507 = por %p505, %p506
    %p508 = scmp.ne.s32.totalorder %s500, %s502
    %p509 = scmp.eq.s32.totalorder %s72, 3
    %p510 = por %p508, %p509
    %p511 = scmp.ne.s32.totalorder %s502, %s503
    %p512 = scmp.eq.s32.totalorder %s72, 0
    %p513 = por %p511, %p512
    %p514 = scmp.ne.s32.totalorder %s502, %s503
    %p515 = scmp.eq.s32.totalorder %s73, 3
    %p516 = por %p514, %p515
    %p518 = scmp.ne.s32.totalorder %s503, %s517
    %p519 = scmp.eq.s32.totalorder %s73, 0
    %p520 = por %p518, %p519
    %s522 = sadd.s32 %s521, 1
    %p525 = scmp.eq.s32.totalorder %s67, 3
    %p526 = scmp.ne.s32.totalorder %s521, %s523
    %p527 = scmp.eq.s32.totalorder %s67, 0
    %p528 = por %p526, %p527
    %p529 = scmp.ne.s32.totalorder %s521, %s523
    %p530 = scmp.eq.s32.totalorder %s72, 3
    %p531 = por %p529, %p530
    %p532 = scmp.ne.s32.totalorder %s523, %s524
    %p533 = scmp.eq.s32.totalorder %s72, 0
    %p534 = por %p532, %p533
    %p535 = scmp.ne.s32.totalorder %s523, %s524
    %p536 = scmp.eq.s32.totalorder %s73, 3
    %p537 = por %p535, %p536
    %p539 = scmp.ne.s32.totalorder %s524, %s538
    %p540 = scmp.eq.s32.totalorder %s73, 0
    %p541 = por %p539, %p540
    %s543 = sadd.s32 %s542, 1
    %p546 = scmp.eq.s32.totalorder %s67, 3
    %p547 = scmp.ne.s32.totalorder %s542, %s544
    %p548 = scmp.eq.s32.totalorder %s67, 0
    %p549 = por %p547, %p548
    %p550 = scmp.ne.s32.totalorder %s542, %s544
    %p551 = scmp.eq.s32.totalorder %s72, 3
    %p552 = por %p550, %p551
    %p553 = scmp.ne.s32.totalorder %s544, %s545
    %p554 = scmp.eq.s32.totalorder %s72, 0
    %p555 = por %p553, %p554
    %p556 = scmp.ne.s32.totalorder %s544, %s545
    %p557 = scmp.eq.s32.totalorder %s73, 3
    %p558 = por %p556, %p557
    %p560 = scmp.ne.s32.totalorder %s545, %s559
    %p561 = scmp.eq.s32.totalorder %s73, 0
    %p562 = por %p560, %p561
    %s564 = sadd.s32 %s563, 1
    %p567 = scmp.eq.s32.totalorder %s67, 3
    %p568 = scmp.ne.s32.totalorder %s563, %s565
    %p569 = scmp.eq.s32.totalorder %s67, 0
    %p570 = por %p568, %p569
    %p571 = scmp.ne.s32.totalorder %s563, %s565
    %p572 = scmp.eq.s32.totalorder %s72, 3
    %p573 = por %p571, %p572
    %p574 = scmp.ne.s32.totalorder %s565, %s566
    %p575 = scmp.eq.s32.totalorder %s72, 0
    %p576 = por %p574, %p575
    %p577 = scmp.ne.s32.totalorder %s565, %s566
    %p578 = scmp.eq.s32.totalorder %s73, 3
    %p579 = por %p577, %p578
    %p581 = scmp.ne.s32.totalorder %s566, %s580
    %p582 = scmp.eq.s32.totalorder %s73, 0
    %p583 = por %p581, %p582
    %s585 = sadd.s32 %s584, 1
    %p588 = scmp.eq.s32.totalorder %s67, 3
    %p589 = scmp.ne.s32.totalorder %s584, %s586
    %p590 = scmp.eq.s32.totalorder %s67, 0
    %p591 = por %p589, %p590
    %p592 = scmp.ne.s32.totalorder %s584, %s586
    %p593 = scmp.eq.s32.totalorder %s72, 3
    %p594 = por %p592, %p593
    %p595 = scmp.ne.s32.totalorder %s586, %s587
    %p596 = scmp.eq.s32.totalorder %s72, 0
    %p597 = por %p595, %p596
    %p598 = scmp.ne.s32.totalorder %s586, %s587
    %p599 = scmp.eq.s32.totalorder %s73, 3
    %p600 = por %p598, %p599
    %p602 = scmp.ne.s32.totalorder %s587, %s601
    %p603 = scmp.eq.s32.totalorder %s73, 0
    %p604 = por %p602, %p603
    %s606 = sadd.s32 %s605, 1
    %p609 = scmp.eq.s32.totalorder %s67, 3
    %p610 = scmp.ne.s32.totalorder %s605, %s607
    %p611 = scmp.eq.s32.totalorder %s67, 0
    %p612 = por %p610, %p611
    %p613 = scmp.ne.s32.totalorder %s605, %s607
    %p614 = scmp.eq.s32.totalorder %s72, 3
    %p615 = por %p613, %p614
    %p616 = scmp.ne.s32.totalorder %s607, %s608
    %p617 = scmp.eq.s32.totalorder %s72, 0
    %p618 = por %p616, %p617
    %p619 = scmp.ne.s32.totalorder %s607, %s608
    %p620 = scmp.eq.s32.totalorder %s73, 3
    %p621 = por %p619, %p620
    %p623 = scmp.ne.s32.totalorder %s608, %s622
    %p624 = scmp.eq.s32.totalorder %s73, 0
    %p625 = por %p623, %p624
    %s627 = sadd.s32 %s626, 1
    %p630 = scmp.eq.s32.totalorder %s67, 3
    %p631 = scmp.ne.s32.totalorder %s626, %s628
    %p632 = scmp.eq.s32.totalorder %s67, 0
    %p633 = por %p631, %p632
    %p634 = scmp.ne.s32.totalorder %s626, %s628
    %p635 = scmp.eq.s32.totalorder %s72, 3
    %p636 = por %p634, %p635
    %p637 = scmp.ne.s32.totalorder %s628, %s629
    %p638 = scmp.eq.s32.totalorder %s72, 0
    %p639 = por %p637, %p638
    %p640 = scmp.ne.s32.totalorder %s628, %s629
    %p641 = scmp.eq.s32.totalorder %s73, 3
    %p642 = por %p640, %p641
    %p644 = scmp.ne.s32.totalorder %s629, %s643
    %p645 = scmp.eq.s32.totalorder %s73, 0
    %p646 = por %p644, %p645
    %s648 = sadd.s32 %s647, 1
    %p651 = scmp.eq.s32.totalorder %s67, 3
    %p652 = scmp.ne.s32.totalorder %s647, %s649
    %p653 = scmp.eq.s32.totalorder %s67, 0
    %p654 = por %p652, %p653
    %p655 = scmp.ne.s32.totalorder %s647, %s649
    %p656 = scmp.eq.s32.totalorder %s72, 3
    %p657 = por %p655, %p656
    %p658 = scmp.ne.s32.totalorder %s649, %s650
    %p659 = scmp.eq.s32.totalorder %s72, 0
    %p660 = por %p658, %p659
    %p661 = scmp.ne.s32.totalorder %s649, %s650
    %p662 = scmp.eq.s32.totalorder %s73, 3
    %p663 = por %p661, %p662
    %p665 = scmp.ne.s32.totalorder %s650, %s664
    %p666 = scmp.eq.s32.totalorder %s73, 0
    %p667 = por %p665, %p666
    %s669 = sadd.s32 %s668, 1
    %p672 = scmp.eq.s32.totalorder %s67, 3
    %p673 = scmp.ne.s32.totalorder %s668, %s670
    %p674 = scmp.eq.s32.totalorder %s67, 0
    %p675 = por %p673, %p674
    %p676 = scmp.ne.s32.totalorder %s668, %s670
    %p677 = scmp.eq.s32.totalorder %s72, 3
    %p678 = por %p676, %p677
    %p679 = scmp.ne.s32.totalorder %s670, %s671
    %p680 = scmp.eq.s32.totalorder %s72, 0
    %p681 = por %p679, %p680
    %p682 = scmp.ne.s32.totalorder %s670, %s671
    %p683 = scmp.eq.s32.totalorder %s73, 3
    %p684 = por %p682, %p683
    %p686 = scmp.ne.s32.totalorder %s671, %s685
    %p687 = scmp.eq.s32.totalorder %s73, 0
    %p688 = por %p686, %p687
    %s690 = sadd.s32 %s689, 1
    %p693 = scmp.eq.s32.totalorder %s67, 3
    %p694 = scmp.ne.s32.totalorder %s689, %s691
    %p695 = scmp.eq.s32.totalorder %s67, 0
    %p696 = por %p694, %p695
    %p697 = scmp.ne.s32.totalorder %s689, %s691
    %p698 = scmp.eq.s32.totalorder %s72, 3
    %p699 = por %p697, %p698
    %p700 = scmp.ne.s32.totalorder %s691, %s692
    %p701 = scmp.eq.s32.totalorder %s72, 0
    %p702 = por %p700, %p701
    %p703 = scmp.ne.s32.totalorder %s691, %s692
    %p704 = scmp.eq.s32.totalorder %s73, 3
    %p705 = por %p703, %p704
    %p707 = scmp.ne.s32.totalorder %s692, %s706
    %p708 = scmp.eq.s32.totalorder %s73, 0
    %p709 = por %p707, %p708
    %s710 = ssub.s32 %s67, %s74
    %p711 = scmp.eq.s32.totalorder %s710, 0
    %s713 = sadd.s32 %s712, 1
    %s714 = scalar_select %p711, %s712, %s713
    %p717 = pneg %p711
    %p718 = scmp.eq.s32.totalorder %s67, 3
    %p719 = por %p717, %p718
    %p720 = scmp.ne.s32.totalorder %s712, %s715
    %p721 = scmp.eq.s32.totalorder %s67, 0
    %p722 = por %p720, %p721
    %p723 = scmp.ne.s32.totalorder %s712, %s715
    %p724 = scmp.eq.s32.totalorder %s72, 3
    %p725 = por %p723, %p724
    %p726 = scmp.ne.s32.totalorder %s715, %s716
    %p727 = scmp.eq.s32.totalorder %s72, 0
    %p728 = por %p726, %p727
    %p729 = scmp.ne.s32.totalorder %s715, %s716
    %p730 = scmp.eq.s32.totalorder %s73, 3
    %p731 = por %p729, %p730
    %p733 = scmp.ne.s32.totalorder %s716, %s732
    %p734 = scmp.eq.s32.totalorder %s73, 0
    %p735 = por %p733, %p734
    %p736 = scmp.le.s32.totalorder 1, %s67
    %p737 = scmp.lt.s32.totalorder %s67, 5
    %p738 = pnand %p736, %p737
    %p739 = pneg %p738
    // Predicated region
    $region9: #{forward.1} parent=5 // pred_check
      _
    $region10: #{forward.1} parent=5 // pred_check_branch
      %741 = sbr.rel (%p738) target = $region12
    $region11: #{forward.1} parent=5 // pred_region
      %s742 = ssub.s32 %s67, 1
      // Predicated region
      $region13: #{forward.1} parent=11 // pred_check
        %p743 = pneg %p114
      $region14: #{forward.1} parent=11 // pred_check_branch
        %745 = sbr.rel (%p743) target = $region16
      $region15: #{forward.1} parent=11 // pred_region
        _
      $region16: #{forward.1} parent=11 // pred_fallthru
        _
      // Predicated region
      $region17: #{forward.1} parent=11 // pred_check
        %p746 = pneg %p135
      $region18: #{forward.1} parent=11 // pred_check_branch
        %748 = sbr.rel (%p746) target = $region20
      $region19: #{forward.1} parent=11 // pred_region
        _
      $region20: #{forward.1} parent=11 // pred_fallthru
        _
      // Predicated region
      $region21: #{forward.1} parent=11 // pred_check
        %p749 = pneg %p156
      $region22: #{forward.1} parent=11 // pred_check_branch
        %751 = sbr.rel (%p749) target = $region24
      $region23: #{forward.1} parent=11 // pred_region
        _
      $region24: #{forward.1} parent=11 // pred_fallthru
        _
      // Predicated region
      $region25: #{forward.1} parent=11 // pred_check
        %p752 = pneg %p177
      $region26: #{forward.1} parent=11 // pred_check_branch
        %754 = sbr.rel (%p752) target = $region28
      $region27: #{forward.1} parent=11 // pred_region
        _
      $region28: #{forward.1} parent=11 // pred_fallthru
        _
      // Predicated region
      $region29: #{forward.1} parent=11 // pred_check
        %p755 = pneg %p198
      $region30: #{forward.1} parent=11 // pred_check_branch
        %757 = sbr.rel (%p755) target = $region32
      $region31: #{forward.1} parent=11 // pred_region
        _
      $region32: #{forward.1} parent=11 // pred_fallthru
        _
      // Predicated region
      $region33: #{forward.1} parent=11 // pred_check
        %p758 = pneg %p219
      $region34: #{forward.1} parent=11 // pred_check_branch
        %760 = sbr.rel (%p758) target = $region36
      $region35: #{forward.1} parent=11 // pred_region
        _
      $region36: #{forward.1} parent=11 // pred_fallthru
        _
      // Predicated region
      $region37: #{forward.1} parent=11 // pred_check
        %p761 = pneg %p240
      $region38: #{forward.1} parent=11 // pred_check_branch
        %763 = sbr.rel (%p761) target = $region40
      $region39: #{forward.1} parent=11 // pred_region
        _
      $region40: #{forward.1} parent=11 // pred_fallthru
        _
      // Predicated region
      $region41: #{forward.1} parent=11 // pred_check
        %p764 = pneg %p261
      $region42: #{forward.1} parent=11 // pred_check_branch
        %766 = sbr.rel (%p764) target = $region44
      $region43: #{forward.1} parent=11 // pred_region
        _
      $region44: #{forward.1} parent=11 // pred_fallthru
        _
      // Predicated region
      $region45: #{forward.1} parent=11 // pred_check
        %p767 = pneg %p282
      $region46: #{forward.1} parent=11 // pred_check_branch
        %769 = sbr.rel (%p767) target = $region48
      $region47: #{forward.1} parent=11 // pred_region
        _
      $region48: #{forward.1} parent=11 // pred_fallthru
        _
      // Predicated region
      $region49: #{forward.1} parent=11 // pred_check
        %p770 = pneg %p303
      $region50: #{forward.1} parent=11 // pred_check_branch
        %772 = sbr.rel (%p770) target = $region52
      $region51: #{forward.1} parent=11 // pred_region
        _
      $region52: #{forward.1} parent=11 // pred_fallthru
        _
      // Predicated region
      $region53: #{forward.1} parent=11 // pred_check
        %p773 = pneg %p324
      $region54: #{forward.1} parent=11 // pred_check_branch
        %775 = sbr.rel (%p773) target = $region56
      $region55: #{forward.1} parent=11 // pred_region
        _
      $region56: #{forward.1} parent=11 // pred_fallthru
        _
      // Predicated region
      $region57: #{forward.1} parent=11 // pred_check
        %p776 = pneg %p345
      $region58: #{forward.1} parent=11 // pred_check_branch
        %778 = sbr.rel (%p776) target = $region60
      $region59: #{forward.1} parent=11 // pred_region
        _
      $region60: #{forward.1} parent=11 // pred_fallthru
        _
      // Predicated region
      $region61: #{forward.1} parent=11 // pred_check
        %p779 = pneg %p366
      $region62: #{forward.1} parent=11 // pred_check_branch
        %781 = sbr.rel (%p779) target = $region64
      $region63: #{forward.1} parent=11 // pred_region
        _
      $region64: #{forward.1} parent=11 // pred_fallthru
        _
      // Predicated region
      $region65: #{forward.1} parent=11 // pred_check
        %p782 = pneg %p387
      $region66: #{forward.1} parent=11 // pred_check_branch
        %784 = sbr.rel (%p782) target = $region68
      $region67: #{forward.1} parent=11 // pred_region
        _
      $region68: #{forward.1} parent=11 // pred_fallthru
        _
      // Predicated region
      $region69: #{forward.1} parent=11 // pred_check
        %p785 = pneg %p408
      $region70: #{forward.1} parent=11 // pred_check_branch
        %787 = sbr.rel (%p785) target = $region72
      $region71: #{forward.1} parent=11 // pred_region
        _
      $region72: #{forward.1} parent=11 // pred_fallthru
        _
      // Predicated region
      $region73: #{forward.1} parent=11 // pred_check
        %p788 = pneg %p429
      $region74: #{forward.1} parent=11 // pred_check_branch
        %790 = sbr.rel (%p788) target = $region76
      $region75: #{forward.1} parent=11 // pred_region
        _
      $region76: #{forward.1} parent=11 // pred_fallthru
        _
      // Predicated region
      $region77: #{forward.1} parent=11 // pred_check
        %p791 = pneg %p450
      $region78: #{forward.1} parent=11 // pred_check_branch
        %793 = sbr.rel (%p791) target = $region80
      $region79: #{forward.1} parent=11 // pred_region
        _
      $region80: #{forward.1} parent=11 // pred_fallthru
        _
      // Predicated region
      $region81: #{forward.1} parent=11 // pred_check
        %p794 = pneg %p471
      $region82: #{forward.1} parent=11 // pred_check_branch
        %796 = sbr.rel (%p794) target = $region84
      $region83: #{forward.1} parent=11 // pred_region
        _
      $region84: #{forward.1} parent=11 // pred_fallthru
        _
      // Predicated region
      $region85: #{forward.1} parent=11 // pred_check
        %p797 = pneg %p492
      $region86: #{forward.1} parent=11 // pred_check_branch
        %799 = sbr.rel (%p797) target = $region88
      $region87: #{forward.1} parent=11 // pred_region
        _
      $region88: #{forward.1} parent=11 // pred_fallthru
        _
      // Predicated region
      $region89: #{forward.1} parent=11 // pred_check
        %p800 = pneg %p513
      $region90: #{forward.1} parent=11 // pred_check_branch
        %802 = sbr.rel (%p800) target = $region92
      $region91: #{forward.1} parent=11 // pred_region
        _
      $region92: #{forward.1} parent=11 // pred_fallthru
        _
      // Predicated region
      $region93: #{forward.1} parent=11 // pred_check
        %p803 = pneg %p534
      $region94: #{forward.1} parent=11 // pred_check_branch
        %805 = sbr.rel (%p803) target = $region96
      $region95: #{forward.1} parent=11 // pred_region
        _
      $region96: #{forward.1} parent=11 // pred_fallthru
        _
      // Predicated region
      $region97: #{forward.1} parent=11 // pred_check
        %p806 = pneg %p555
      $region98: #{forward.1} parent=11 // pred_check_branch
        %808 = sbr.rel (%p806) target = $region100
      $region99: #{forward.1} parent=11 // pred_region
        _
      $region100: #{forward.1} parent=11 // pred_fallthru
        _
      // Predicated region
      $region101: #{forward.1} parent=11 // pred_check
        %p809 = pneg %p576
      $region102: #{forward.1} parent=11 // pred_check_branch
        %811 = sbr.rel (%p809) target = $region104
      $region103: #{forward.1} parent=11 // pred_region
        _
      $region104: #{forward.1} parent=11 // pred_fallthru
        _
      // Predicated region
      $region105: #{forward.1} parent=11 // pred_check
        %p812 = pneg %p597
      $region106: #{forward.1} parent=11 // pred_check_branch
        %814 = sbr.rel (%p812) target = $region108
      $region107: #{forward.1} parent=11 // pred_region
        _
      $region108: #{forward.1} parent=11 // pred_fallthru
        _
      // Predicated region
      $region109: #{forward.1} parent=11 // pred_check
        %p815 = pneg %p618
      $region110: #{forward.1} parent=11 // pred_check_branch
        %817 = sbr.rel (%p815) target = $region112
      $region111: #{forward.1} parent=11 // pred_region
        _
      $region112: #{forward.1} parent=11 // pred_fallthru
        _
      // Predicated region
      $region113: #{forward.1} parent=11 // pred_check
        %p818 = pneg %p639
      $region114: #{forward.1} parent=11 // pred_check_branch
        %820 = sbr.rel (%p818) target = $region116
      $region115: #{forward.1} parent=11 // pred_region
        _
      $region116: #{forward.1} parent=11 // pred_fallthru
        _
      // Predicated region
      $region117: #{forward.1} parent=11 // pred_check
        %p821 = pneg %p660
      $region118: #{forward.1} parent=11 // pred_check_branch
        %823 = sbr.rel (%p821) target = $region120
      $region119: #{forward.1} parent=11 // pred_region
        _
      $region120: #{forward.1} parent=11 // pred_fallthru
        _
      // Predicated region
      $region121: #{forward.1} parent=11 // pred_check
        %p824 = pneg %p681
      $region122: #{forward.1} parent=11 // pred_check_branch
        %826 = sbr.rel (%p824) target = $region124
      $region123: #{forward.1} parent=11 // pred_region
        _
      $region124: #{forward.1} parent=11 // pred_fallthru
        _
      // Predicated region
      $region125: #{forward.1} parent=11 // pred_check
        %p827 = pneg %p702
      $region126: #{forward.1} parent=11 // pred_check_branch
        %829 = sbr.rel (%p827) target = $region128
      $region127: #{forward.1} parent=11 // pred_region
        _
      $region128: #{forward.1} parent=11 // pred_fallthru
        _
    $region12: #{forward.1} parent=5 // pred_fallthru
      _
    %p830 = scmp.lt.s32.totalorder %s67, 4
    // Predicated region
    $region129: #{forward.1} parent=5 // pred_check
      %p831 = pneg %p830
    $region130: #{forward.1} parent=5 // pred_check_branch
      %833 = sbr.rel (%p831) target = $region132
    $region131: #{forward.1} parent=5 // pred_region
      // Predicated region
      $region133: #{forward.1} parent=131 // pred_check
        %p834 = pneg %p87
      $region134: #{forward.1} parent=131 // pred_check_branch
        %836 = sbr.rel (%p834) target = $region136
      $region135: #{forward.1} parent=131 // pred_region
        %p837 = scmp.lt.s32.totalorder %s67, 3
        %s838 = scalar_select %p837, %s67, 3
        %s839 = smul.addr %s838, 148
        %s840 = smul.addr %s839, 4
        %s841 = scalar_lea.vmem %s1, %s840
      $region136: #{forward.1} parent=131 // pred_fallthru
        _
    $region132: #{forward.1} parent=5 // pred_fallthru
      _
    %p842 = scmp.le.s32.totalorder 1, %s67
    %p843 = scmp.lt.s32.totalorder %s67, 5
    %p844 = pnand %p842, %p843
    %p845 = pneg %p844
    // Predicated region
    $region137: #{forward.1} parent=5 // pred_check
      _
    $region138: #{forward.1} parent=5 // pred_check_branch
      %847 = sbr.rel (%p844) target = $region140
    $region139: #{forward.1} parent=5 // pred_region
      %s848 = ssub.s32 %s67, 1
      %p849 = scmp.lt.s32.totalorder %s72, 3
      %s850 = scalar_select %p849, %s72, 3
      %s851 = smul.addr %s850, 148
      %s852 = smul.addr %s851, 4
      %s853 = scalar_lea.vmem %s1, %s852
      %p854 = pneg %p93
      %p855 = pneg %p90
      %p856 = pneg %p114
      %p857 = pneg %p111
      %p858 = pneg %p135
      %p859 = pneg %p132
      %p860 = pneg %p156
      %p861 = pneg %p153
      %p862 = pneg %p177
      %p863 = pneg %p174
      %p864 = pneg %p198
      %p865 = pneg %p195
      %p866 = pneg %p219
      %p867 = pneg %p216
      %p868 = pneg %p240
      %p869 = pneg %p237
      %p870 = pneg %p261
      %p871 = pneg %p258
      %p872 = pneg %p282
      %p873 = pneg %p279
      %p874 = pneg %p303
      %p875 = pneg %p300
      %p876 = pneg %p324
      %p877 = pneg %p321
      %p878 = pneg %p345
      %p879 = pneg %p342
      %p880 = pneg %p366
      %p881 = pneg %p363
      %p882 = pneg %p387
      %p883 = pneg %p384
      %p884 = pneg %p408
      %p885 = pneg %p405
      %p886 = pneg %p429
      %p887 = pneg %p426
      %p888 = pneg %p450
      %p889 = pneg %p447
      %p890 = pneg %p471
      %p891 = pneg %p468
      %p892 = pneg %p492
      %p893 = pneg %p489
      %p894 = pneg %p513
      %p895 = pneg %p510
      %p896 = pneg %p534
      %p897 = pneg %p531
      %p898 = pneg %p555
      %p899 = pneg %p552
      %p900 = pneg %p576
      %p901 = pneg %p573
      %p902 = pneg %p597
      %p903 = pneg %p594
      %p904 = pneg %p618
      %p905 = pneg %p615
      %p906 = pneg %p639
      %p907 = pneg %p636
      %p908 = pneg %p660
      %p909 = pneg %p657
      %p910 = pneg %p681
      %p911 = pneg %p678
      %p912 = pneg %p702
      %p913 = pneg %p699
      %p914 = pneg %p728
      %p915 = pneg %p725
      %p916 = scmp.lt.s32.totalorder %s72, 3
      %s917 = scalar_select %p916, %s72, 3
      %s918 = smul.addr %s917, 8
      %s919 = smul.addr %s918, 8
      %s920 = scalar_lea.vmem %s61, %s919
      %p921 = scmp.lt.s32.totalorder %s72, 3
      %s922 = scalar_select %p921, %s72, 3
      %s923 = smul.addr %s922, 148
      %s924 = smul.addr %s923, 4
      %s925 = scalar_lea.vmem %s1, %s924
      %p926 = scmp.lt.s32.totalorder %s72, 3
      %s927 = scalar_select %p926, %s72, 3
      %s928 = smul.addr %s927, 8
      %s929 = smul.addr %s928, 8
      %s930 = scalar_lea.vmem %s61, %s929
      %v932 = vld [vmem:[%s925] sm:$0xf]
      %v933 = vld [vmem:[%s925 + $0x4] sm:$0xf]
      %v934 = vld [vmem:[%s925 + $0x8] sm:$0xf]
      %v935 = vld [vmem:[%s925 + $0xc] sm:$0xf]
      %v936 = vld [vmem:[%s925 + $0x10] sm:$0xf]
      %v937 = vld [vmem:[%s925 + $0x14] sm:$0xf]
      %v938 = vld [vmem:[%s925 + $0x18] sm:$0xf]
      %v939 = vld [vmem:[%s925 + $0x1c] sm:$0xf]
      %v940 = vld [vmem:[%s925 + $0x20] sm:$0xf]
      %v941 = vld [vmem:[%s925 + $0x24] sm:$0xf]
      %v942 = vld [vmem:[%s925 + $0x28] sm:$0xf]
      %v943 = vld [vmem:[%s925 + $0x2c] sm:$0xf]
      %v944 = vld [vmem:[%s925 + $0x30] sm:$0xf]
      %v945 = vld [vmem:[%s925 + $0x34] sm:$0xf]
      %v946 = vld [vmem:[%s925 + $0x38] sm:$0xf]
      %v947 = vld [vmem:[%s925 + $0x3c] sm:$0xf]
      %v948 = vld [vmem:[%s925 + $0x40] sm:$0xf]
      %v949 = vld [vmem:[%s925 + $0x44] sm:$0xf]
      %v950 = vld [vmem:[%s925 + $0x48] sm:$0xf]
      %v951 = vld [vmem:[%s925 + $0x4c] sm:$0xf]
      %v952 = vld [vmem:[%s925 + $0x50] sm:$0xf]
      %v953 = vld [vmem:[%s925 + $0x54] sm:$0xf]
      %v954 = vld [vmem:[%s925 + $0x58] sm:$0xf]
      %v955 = vld [vmem:[%s925 + $0x5c] sm:$0xf]
      %v956 = vld [vmem:[%s925 + $0x60] sm:$0xf]
      %v957 = vld [vmem:[%s925 + $0x64] sm:$0xf]
      %v958 = vld [vmem:[%s925 + $0x68] sm:$0xf]
      %v959 = vld [vmem:[%s925 + $0x6c] sm:$0xf]
      %v960 = vld [vmem:[%s925 + $0x70] sm:$0xf]
      %v961 = vld [vmem:[%s925 + $0x74] sm:$0xf]
      %v962 = vld [vmem:[%s925 + $0x78] sm:$0xf]
      %v963 = vld [vmem:[%s925 + $0x7c] sm:$0xf]
      %v964 = vld [vmem:[%s925 + $0x80] sm:$0xf]
      %v965 = vld [vmem:[%s925 + $0x84] sm:$0xf]
      %v966 = vld [vmem:[%s925 + $0x88] sm:$0xf]
      %v967 = vld [vmem:[%s925 + $0x8c] sm:$0xf]
      %v968 = vld [vmem:[%s925 + $0x90] sm:$0x1]
      %v969 = vld [vmem:[%s925 + $0x94] sm:$0xf]
      %v970 = vld [vmem:[%s925 + $0x98] sm:$0xf]
      %v971 = vld [vmem:[%s925 + $0x9c] sm:$0xf]
      %v972 = vld [vmem:[%s925 + $0xa0] sm:$0xf]
      %v973 = vld [vmem:[%s925 + $0xa4] sm:$0xf]
      %v974 = vld [vmem:[%s925 + $0xa8] sm:$0xf]
      %v975 = vld [vmem:[%s925 + $0xac] sm:$0xf]
      %v976 = vld [vmem:[%s925 + $0xb0] sm:$0xf]
      %v977 = vld [vmem:[%s925 + $0xb4] sm:$0xf]
      %v978 = vld [vmem:[%s925 + $0xb8] sm:$0xf]
      %v979 = vld [vmem:[%s925 + $0xbc] sm:$0xf]
      %v980 = vld [vmem:[%s925 + $0xc0] sm:$0xf]
      %v981 = vld [vmem:[%s925 + $0xc4] sm:$0xf]
      %v982 = vld [vmem:[%s925 + $0xc8] sm:$0xf]
      %v983 = vld [vmem:[%s925 + $0xcc] sm:$0xf]
      %v984 = vld [vmem:[%s925 + $0xd0] sm:$0xf]
      %v985 = vld [vmem:[%s925 + $0xd4] sm:$0xf]
      %v986 = vld [vmem:[%s925 + $0xd8] sm:$0xf]
      %v987 = vld [vmem:[%s925 + $0xdc] sm:$0xf]
      %v988 = vld [vmem:[%s925 + $0xe0] sm:$0xf]
      %v989 = vld [vmem:[%s925 + $0xe4] sm:$0xf]
      %v990 = vld [vmem:[%s925 + $0xe8] sm:$0xf]
      %v991 = vld [vmem:[%s925 + $0xec] sm:$0xf]
      %v992 = vld [vmem:[%s925 + $0xf0] sm:$0xf]
      %v993 = vld [vmem:[%s925 + $0xf4] sm:$0xf]
      %v994 = vld [vmem:[%s925 + $0xf8] sm:$0xf]
      %v995 = vld [vmem:[%s925 + $0xfc] sm:$0xf]
      %v996 = vld [vmem:[%s925 + $0x100] sm:$0xf]
      %v997 = vld [vmem:[%s925 + $0x104] sm:$0xf]
      %v998 = vld [vmem:[%s925 + $0x108] sm:$0xf]
      %v999 = vld [vmem:[%s925 + $0x10c] sm:$0xf]
      %v1000 = vld [vmem:[%s925 + $0x110] sm:$0xf]
      %v1001 = vld [vmem:[%s925 + $0x114] sm:$0xf]
      %v1002 = vld [vmem:[%s925 + $0x118] sm:$0xf]
      %v1003 = vld [vmem:[%s925 + $0x11c] sm:$0xf]
      %v1004 = vld [vmem:[%s925 + $0x120] sm:$0xf]
      %v1005 = vld [vmem:[%s925 + $0x128] sm:$0xf]
      %v1006 = vld [vmem:[%s925 + $0x12c] sm:$0xf]
      %v1007 = vld [vmem:[%s925 + $0x130] sm:$0xf]
      %v1008 = vld [vmem:[%s925 + $0x134] sm:$0xf]
      %v1009 = vld [vmem:[%s925 + $0x138] sm:$0xf]
      %v1010 = vld [vmem:[%s925 + $0x13c] sm:$0xf]
      %v1011 = vld [vmem:[%s925 + $0x140] sm:$0xf]
      %v1012 = vld [vmem:[%s925 + $0x144] sm:$0xf]
      %v1013 = vld [vmem:[%s925 + $0x148] sm:$0xf]
      %v1014 = vld [vmem:[%s925 + $0x14c] sm:$0xf]
      %v1015 = vld [vmem:[%s925 + $0x150] sm:$0xf]
      %v1016 = vld [vmem:[%s925 + $0x154] sm:$0xf]
      %v1017 = vld [vmem:[%s925 + $0x158] sm:$0xf]
      %v1018 = vld [vmem:[%s925 + $0x15c] sm:$0xf]
      %v1019 = vld [vmem:[%s925 + $0x160] sm:$0xf]
      %v1020 = vld [vmem:[%s925 + $0x164] sm:$0xf]
      %v1021 = vld [vmem:[%s925 + $0x168] sm:$0xf]
      %v1022 = vld [vmem:[%s925 + $0x16c] sm:$0xf]
      %v1023 = vld [vmem:[%s925 + $0x170] sm:$0xf]
      %v1024 = vld [vmem:[%s925 + $0x174] sm:$0xf]
      %v1025 = vld [vmem:[%s925 + $0x178] sm:$0xf]
      %v1026 = vld [vmem:[%s925 + $0x17c] sm:$0xf]
      %v1027 = vld [vmem:[%s925 + $0x180] sm:$0xf]
      %v1028 = vld [vmem:[%s925 + $0x184] sm:$0xf]
      %v1029 = vld [vmem:[%s925 + $0x188] sm:$0xf]
      %v1030 = vld [vmem:[%s925 + $0x18c] sm:$0xf]
      %v1031 = vld [vmem:[%s925 + $0x190] sm:$0xf]
      %v1032 = vld [vmem:[%s925 + $0x194] sm:$0xf]
      %v1033 = vld [vmem:[%s925 + $0x198] sm:$0xf]
      %v1034 = vld [vmem:[%s925 + $0x19c] sm:$0xf]
      %v1035 = vld [vmem:[%s925 + $0x1a0] sm:$0xf]
      %v1036 = vld [vmem:[%s925 + $0x1a4] sm:$0xf]
      %v1037 = vld [vmem:[%s925 + $0x1a8] sm:$0xf]
      %v1038 = vld [vmem:[%s925 + $0x1ac] sm:$0xf]
      %v1039 = vld [vmem:[%s925 + $0x1bc] sm:$0xf]
      %v1040 = vld [vmem:[%s925 + $0x1c0] sm:$0xf]
      %v1041 = vld [vmem:[%s925 + $0x1c4] sm:$0xf]
      %v1042 = vld [vmem:[%s925 + $0x1c8] sm:$0xf]
      %v1043 = vld [vmem:[%s925 + $0x1cc] sm:$0xf]
      %v1044 = vld [vmem:[%s925 + $0x1d0] sm:$0xf]
      %v1045 = vld [vmem:[%s925 + $0x1d4] sm:$0xf]
      %v1046 = vld [vmem:[%s925 + $0x1d8] sm:$0xf]
      %v1047 = vld [vmem:[%s925 + $0x1dc] sm:$0xf]
      %v1048 = vld [vmem:[%s925 + $0x1e0] sm:$0xf]
      %v1049 = vld [vmem:[%s925 + $0x1e4] sm:$0xf]
      %v1050 = vld [vmem:[%s925 + $0x1e8] sm:$0xf]
      %v1051 = vld [vmem:[%s925 + $0x1ec] sm:$0xf]
      %v1052 = vld [vmem:[%s925 + $0x1f0] sm:$0xf]
      %v1053 = vld [vmem:[%s925 + $0x1f4] sm:$0xf]
      %v1054 = vld [vmem:[%s925 + $0x1f8] sm:$0xf]
      %v1055 = vld [vmem:[%s925 + $0x1fc] sm:$0xf]
      %v1056 = vld [vmem:[%s925 + $0x200] sm:$0xf]
      %v1057 = vld [vmem:[%s925 + $0x204] sm:$0xf]
      %v1058 = vld [vmem:[%s925 + $0x208] sm:$0xf]
      %v1059 = vld [vmem:[%s925 + $0x20c] sm:$0xf]
      %v1060 = vld [vmem:[%s925 + $0x210] sm:$0xf]
      %v1061 = vld [vmem:[%s925 + $0x214] sm:$0xf]
      %v1062 = vld [vmem:[%s925 + $0x218] sm:$0xf]
      %v1063 = vld [vmem:[%s925 + $0x21c] sm:$0xf]
      %v1064 = vld [vmem:[%s925 + $0x220] sm:$0xf]
      %v1065 = vld [vmem:[%s925 + $0x224] sm:$0xf]
      %v1066 = vld [vmem:[%s925 + $0x228] sm:$0xf]
      %v1067 = vld [vmem:[%s925 + $0x22c] sm:$0xf]
      %v1068 = vld [vmem:[%s925 + $0x230] sm:$0xf]
      %v1069 = vld [vmem:[%s925 + $0x234] sm:$0xf]
      %v1070 = vld [vmem:[%s925 + $0x238] sm:$0xf]
      %v1071 = vld [vmem:[%s925 + $0x23c] sm:$0xf]
      %v1072 = vld [vmem:[%s925 + $0x240] sm:$0xf]
      %v1073 = vld [vmem:[%s3] sm:$0x3]
      %s1074 = scalar_lea.vmem %s3, 2
      %v1075 = vld [vmem:[%s1074] sm:$0x3]
      %v1110 = vunpack.c.l.b16 %v969
      %v1111 = vunpack.c.l.b16 %v970
      %v1112 = vunpack.c.l.b16 %v971
      %v1113 = vunpack.c.l.b16 %v972
      %v1114 = vunpack.c.l.b16 %v973
      %v1115 = vunpack.c.l.b16 %v974
      %v1116 = vunpack.c.l.b16 %v975
      %v1117 = vunpack.c.l.b16 %v976
      %v1118 = vunpack.c.l.b16 %v977
      %v1119 = vunpack.c.l.b16 %v978
      %v1120 = vunpack.c.l.b16 %v979
      %v1121 = vunpack.c.l.b16 %v980
      %v1122 = vunpack.c.l.b16 %v981
      %v1123 = vunpack.c.l.b16 %v982
      %v1124 = vunpack.c.l.b16 %v983
      %v1125 = vunpack.c.l.b16 %v984
      %v1126 = vunpack.c.l.b16 %v985
      %v1127 = vunpack.c.l.b16 %v986
      %v1128 = vunpack.c.l.b16 %v987
      %v1129 = vunpack.c.l.b16 %v988
      %v1130 = vunpack.c.l.b16 %v989
      %v1131 = vunpack.c.l.b16 %v990
      %v1132 = vunpack.c.l.b16 %v991
      %v1133 = vunpack.c.l.b16 %v992
      %v1134 = vunpack.c.l.b16 %v993
      %v1135 = vunpack.c.l.b16 %v994
      %v1136 = vunpack.c.l.b16 %v995
      %v1137 = vunpack.c.l.b16 %v996
      %v1138 = vunpack.c.l.b16 %v997
      %v1139 = vunpack.c.l.b16 %v998
      %v1140 = vunpack.c.l.b16 %v999
      %v1141 = vunpack.c.l.b16 %v1000
      %v1142 = vunpack.c.l.b16 %v1001
      %v1143 = vunpack.c.l.b16 %v1002
      %v1144 = vpack.c.b16 %v1111, %v1110
      %v1145 = vpack.c.b16 %v1113, %v1112
      %v1146 = vpack.c.b16 %v1115, %v1114
      %v1147 = vpack.c.b16 %v1117, %v1116
      %v1148 = vpack.c.b16 %v1119, %v1118
      %v1149 = vpack.c.b16 %v1121, %v1120
      %v1150 = vpack.c.b16 %v1123, %v1122
      %v1151 = vpack.c.b16 %v1125, %v1124
      %v1152 = vpack.c.b16 %v1127, %v1126
      %v1153 = vpack.c.b16 %v1129, %v1128
      %v1154 = vpack.c.b16 %v1131, %v1130
      %v1155 = vpack.c.b16 %v1133, %v1132
      %v1156 = vpack.c.b16 %v1135, %v1134
      %v1157 = vpack.c.b16 %v1137, %v1136
      %v1158 = vpack.c.b16 %v1139, %v1138
      %v1159 = vpack.c.b16 %v1141, %v1140
      %v1160 = vpack.c.b16 %v1143, %v1142
      %vm1161 = vcmask 23552
      %v1163 = vsel %vm1161, %v1144, 0
      %v1166 = vsel %vm1161, %v1145, 0
      %v1169 = vsel %vm1161, %v1146, 0
      %v1172 = vsel %vm1161, %v1147, 0
      %v1175 = vsel %vm1161, %v1148, 0
      %v1178 = vsel %vm1161, %v1149, 0
      %v1181 = vsel %vm1161, %v1150, 0
      %v1184 = vsel %vm1161, %v1151, 0
      %v1187 = vsel %vm1161, %v1152, 0
      %v1190 = vsel %vm1161, %v1153, 0
      %v1193 = vsel %vm1161, %v1154, 0
      %v1196 = vsel %vm1161, %v1155, 0
      %v1199 = vsel %vm1161, %v1156, 0
      %v1202 = vsel %vm1161, %v1157, 0
      %v1205 = vsel %vm1161, %v1158, 0
      %v1208 = vsel %vm1161, %v1159, 0
      %v1211 = vsel %vm1161, %v1160, 0
      %vm1213 = vcmask 1040384
      %vm1214 = vcmask 1041408
      %v1215 = vsel %vm1213, 4294967295, 65535
      %v1216 = vsel %vm1214, %v1215, 0
      %v1218 = vand.u32 %v1075, %v1216
      %1220 = vmatpush.bf16.msra.mxu0 0
      %1221 = vmatpush.bf16.msra.mxu0 0
      %1222 = vmatpush.bf16.msra.mxu0 0
      %1223 = vmatpush.bf16.msra.mxu0 0
      %1224 = vmatpush.bf16.msra.mxu0 0
      %1225 = vmatpush.bf16.msra.mxu0 0
      %1226 = vmatpush.bf16.msra.mxu0 0
      %1227 = vmatpush.bf16.msra.mxu0 %v1218
      %1228 = vmatmul.bf16.gmra.mxu0 %v1163
      %v1229 = vpop.f32.mrf.mxu0
      %v1230 = vadd.f32 0.0, %v1229
      %v1231 = vpop.f32.mrf.mxu0
      %v1232 = vadd.f32 0.0, %v1231
      %1233 = vmatmul.bf16.gmra.mxu0 %v1166
      %v1234 = vpop.f32.mrf.mxu0
      %v1235 = vadd.f32 0.0, %v1234
      %v1236 = vpop.f32.mrf.mxu0
      %v1237 = vadd.f32 0.0, %v1236
      %1238 = vmatmul.bf16.gmra.mxu0 %v1169
      %v1239 = vpop.f32.mrf.mxu0
      %v1240 = vadd.f32 0.0, %v1239
      %v1241 = vpop.f32.mrf.mxu0
      %v1242 = vadd.f32 0.0, %v1241
      %1243 = vmatmul.bf16.gmra.mxu0 %v1172
      %v1244 = vpop.f32.mrf.mxu0
      %v1245 = vadd.f32 0.0, %v1244
      %v1246 = vpop.f32.mrf.mxu0
      %v1247 = vadd.f32 0.0, %v1246
      %1248 = vmatmul.bf16.gmra.mxu0 %v1175
      %v1249 = vpop.f32.mrf.mxu0
      %v1250 = vadd.f32 0.0, %v1249
      %v1251 = vpop.f32.mrf.mxu0
      %v1252 = vadd.f32 0.0, %v1251
      %1253 = vmatmul.bf16.gmra.mxu0 %v1178
      %v1254 = vpop.f32.mrf.mxu0
      %v1255 = vadd.f32 0.0, %v1254
      %v1256 = vpop.f32.mrf.mxu0
      %v1257 = vadd.f32 0.0, %v1256
      %1258 = vmatmul.bf16.gmra.mxu0 %v1181
      %v1259 = vpop.f32.mrf.mxu0
      %v1260 = vadd.f32 0.0, %v1259
      %v1261 = vpop.f32.mrf.mxu0
      %v1262 = vadd.f32 0.0, %v1261
      %1263 = vmatmul.bf16.gmra.mxu0 %v1184
      %v1264 = vpop.f32.mrf.mxu0
      %v1265 = vadd.f32 0.0, %v1264
      %v1266 = vpop.f32.mrf.mxu0
      %v1267 = vadd.f32 0.0, %v1266
      %1268 = vmatmul.bf16.gmra.mxu0 %v1187
      %v1269 = vpop.f32.mrf.mxu0
      %v1270 = vadd.f32 0.0, %v1269
      %v1271 = vpop.f32.mrf.mxu0
      %v1272 = vadd.f32 0.0, %v1271
      %1273 = vmatmul.bf16.gmra.mxu0 %v1190
      %v1274 = vpop.f32.mrf.mxu0
      %v1275 = vadd.f32 0.0, %v1274
      %v1276 = vpop.f32.mrf.mxu0
      %v1277 = vadd.f32 0.0, %v1276
      %1278 = vmatmul.bf16.gmra.mxu0 %v1193
      %v1279 = vpop.f32.mrf.mxu0
      %v1280 = vadd.f32 0.0, %v1279
      %v1281 = vpop.f32.mrf.mxu0
      %v1282 = vadd.f32 0.0, %v1281
      %1283 = vmatmul.bf16.gmra.mxu0 %v1196
      %v1284 = vpop.f32.mrf.mxu0
      %v1285 = vadd.f32 0.0, %v1284
      %v1286 = vpop.f32.mrf.mxu0
      %v1287 = vadd.f32 0.0, %v1286
      %1288 = vmatmul.bf16.gmra.mxu0 %v1199
      %v1289 = vpop.f32.mrf.mxu0
      %v1290 = vadd.f32 0.0, %v1289
      %v1291 = vpop.f32.mrf.mxu0
      %v1292 = vadd.f32 0.0, %v1291
      %1293 = vmatmul.bf16.gmra.mxu0 %v1202
      %v1294 = vpop.f32.mrf.mxu0
      %v1295 = vadd.f32 0.0, %v1294
      %v1296 = vpop.f32.mrf.mxu0
      %v1297 = vadd.f32 0.0, %v1296
      %1298 = vmatmul.bf16.gmra.mxu0 %v1205
      %v1299 = vpop.f32.mrf.mxu0
      %v1300 = vadd.f32 0.0, %v1299
      %v1301 = vpop.f32.mrf.mxu0
      %v1302 = vadd.f32 0.0, %v1301
      %1303 = vmatmul.bf16.gmra.mxu0 %v1208
      %v1304 = vpop.f32.mrf.mxu0
      %v1305 = vadd.f32 0.0, %v1304
      %v1306 = vpop.f32.mrf.mxu0
      %v1307 = vadd.f32 0.0, %v1306
      %1308 = vmatmul.bf16.gmra.mxu0 %v1211
      %v1309 = vpop.f32.mrf.mxu0
      %v1310 = vadd.f32 0.0, %v1309
      %v1311 = vpop.f32.mrf.mxu0
      %v1312 = vadd.f32 0.0, %v1311
      %1313 = vdwg.mxu0
      %v1348 = vunpack.c.l.b16 %v932
      %v1349 = vunpack.c.l.b16 %v933
      %v1350 = vunpack.c.l.b16 %v934
      %v1351 = vunpack.c.l.b16 %v935
      %v1352 = vunpack.c.l.b16 %v936
      %v1353 = vunpack.c.l.b16 %v937
      %v1354 = vunpack.c.l.b16 %v938
      %v1355 = vunpack.c.l.b16 %v939
      %v1356 = vunpack.c.l.b16 %v940
      %v1357 = vunpack.c.l.b16 %v941
      %v1358 = vunpack.c.l.b16 %v942
      %v1359 = vunpack.c.l.b16 %v943
      %v1360 = vunpack.c.l.b16 %v944
      %v1361 = vunpack.c.l.b16 %v945
      %v1362 = vunpack.c.l.b16 %v946
      %v1363 = vunpack.c.l.b16 %v947
      %v1364 = vunpack.c.l.b16 %v948
      %v1365 = vunpack.c.l.b16 %v949
      %v1366 = vunpack.c.l.b16 %v950
      %v1367 = vunpack.c.l.b16 %v951
      %v1368 = vunpack.c.l.b16 %v952
      %v1369 = vunpack.c.l.b16 %v953
      %v1370 = vunpack.c.l.b16 %v954
      %v1371 = vunpack.c.l.b16 %v955
      %v1372 = vunpack.c.l.b16 %v956
      %v1373 = vunpack.c.l.b16 %v957
      %v1374 = vunpack.c.l.b16 %v958
      %v1375 = vunpack.c.l.b16 %v959
      %v1376 = vunpack.c.l.b16 %v960
      %v1377 = vunpack.c.l.b16 %v961
      %v1378 = vunpack.c.l.b16 %v962
      %v1379 = vunpack.c.l.b16 %v963
      %v1380 = vunpack.c.l.b16 %v964
      %v1381 = vunpack.c.l.b16 %v965
      %v1382 = vpack.c.b16 %v1349, %v1348
      %v1383 = vpack.c.b16 %v1351, %v1350
      %v1384 = vpack.c.b16 %v1353, %v1352
      %v1385 = vpack.c.b16 %v1355, %v1354
      %v1386 = vpack.c.b16 %v1357, %v1356
      %v1387 = vpack.c.b16 %v1359, %v1358
      %v1388 = vpack.c.b16 %v1361, %v1360
      %v1389 = vpack.c.b16 %v1363, %v1362
      %v1390 = vpack.c.b16 %v1365, %v1364
      %v1391 = vpack.c.b16 %v1367, %v1366
      %v1392 = vpack.c.b16 %v1369, %v1368
      %v1393 = vpack.c.b16 %v1371, %v1370
      %v1394 = vpack.c.b16 %v1373, %v1372
      %v1395 = vpack.c.b16 %v1375, %v1374
      %v1396 = vpack.c.b16 %v1377, %v1376
      %v1397 = vpack.c.b16 %v1379, %v1378
      %v1398 = vpack.c.b16 %v1381, %v1380
      %v1400 = vsel %vm1161, %v1382, 0
      %v1403 = vsel %vm1161, %v1383, 0
      %v1406 = vsel %vm1161, %v1384, 0
      %v1409 = vsel %vm1161, %v1385, 0
      %v1412 = vsel %vm1161, %v1386, 0
      %v1415 = vsel %vm1161, %v1387, 0
      %v1418 = vsel %vm1161, %v1388, 0
      %v1421 = vsel %vm1161, %v1389, 0
      %v1424 = vsel %vm1161, %v1390, 0
      %v1427 = vsel %vm1161, %v1391, 0
      %v1430 = vsel %vm1161, %v1392, 0
      %v1433 = vsel %vm1161, %v1393, 0
      %v1436 = vsel %vm1161, %v1394, 0
      %v1439 = vsel %vm1161, %v1395, 0
      %v1442 = vsel %vm1161, %v1396, 0
      %v1445 = vsel %vm1161, %v1397, 0
      %v1448 = vsel %vm1161, %v1398, 0
      %v1451 = vand.u32 %v1073, %v1216
      %1453 = vmatpush.bf16.msra.mxu0 0
      %1454 = vmatpush.bf16.msra.mxu0 0
      %1455 = vmatpush.bf16.msra.mxu0 0
      %1456 = vmatpush.bf16.msra.mxu0 0
      %1457 = vmatpush.bf16.msra.mxu0 0
      %1458 = vmatpush.bf16.msra.mxu0 0
      %1459 = vmatpush.bf16.msra.mxu0 0
      %1460 = vmatpush.bf16.msra.mxu0 %v1451
      %1461 = vmatmul.bf16.gmra.mxu0 %v1400
      %v1462 = vpop.f32.mrf.mxu0
      %v1463 = vadd.f32 %v1230, %v1462
      %v1464 = vpop.f32.mrf.mxu0
      %v1465 = vadd.f32 %v1232, %v1464
      %1466 = vmatmul.bf16.gmra.mxu0 %v1403
      %v1467 = vpop.f32.mrf.mxu0
      %v1468 = vadd.f32 %v1235, %v1467
      %v1469 = vpop.f32.mrf.mxu0
      %v1470 = vadd.f32 %v1237, %v1469
      %1471 = vmatmul.bf16.gmra.mxu0 %v1406
      %v1472 = vpop.f32.mrf.mxu0
      %v1473 = vadd.f32 %v1240, %v1472
      %v1474 = vpop.f32.mrf.mxu0
      %v1475 = vadd.f32 %v1242, %v1474
      %1476 = vmatmul.bf16.gmra.mxu0 %v1409
      %v1477 = vpop.f32.mrf.mxu0
      %v1478 = vadd.f32 %v1245, %v1477
      %v1479 = vpop.f32.mrf.mxu0
      %v1480 = vadd.f32 %v1247, %v1479
      %1481 = vmatmul.bf16.gmra.mxu0 %v1412
      %v1482 = vpop.f32.mrf.mxu0
      %v1483 = vadd.f32 %v1250, %v1482
      %v1484 = vpop.f32.mrf.mxu0
      %v1485 = vadd.f32 %v1252, %v1484
      %1486 = vmatmul.bf16.gmra.mxu0 %v1415
      %v1487 = vpop.f32.mrf.mxu0
      %v1488 = vadd.f32 %v1255, %v1487
      %v1489 = vpop.f32.mrf.mxu0
      %v1490 = vadd.f32 %v1257, %v1489
      %1491 = vmatmul.bf16.gmra.mxu0 %v1418
      %v1492 = vpop.f32.mrf.mxu0
      %v1493 = vadd.f32 %v1260, %v1492
      %v1494 = vpop.f32.mrf.mxu0
      %v1495 = vadd.f32 %v1262, %v1494
      %1496 = vmatmul.bf16.gmra.mxu0 %v1421
      %v1497 = vpop.f32.mrf.mxu0
      %v1498 = vadd.f32 %v1265, %v1497
      %v1499 = vpop.f32.mrf.mxu0
      %v1500 = vadd.f32 %v1267, %v1499
      %1501 = vmatmul.bf16.gmra.mxu0 %v1424
      %v1502 = vpop.f32.mrf.mxu0
      %v1503 = vadd.f32 %v1270, %v1502
      %v1504 = vpop.f32.mrf.mxu0
      %v1505 = vadd.f32 %v1272, %v1504
      %1506 = vmatmul.bf16.gmra.mxu0 %v1427
      %v1507 = vpop.f32.mrf.mxu0
      %v1508 = vadd.f32 %v1275, %v1507
      %v1509 = vpop.f32.mrf.mxu0
      %v1510 = vadd.f32 %v1277, %v1509
      %1511 = vmatmul.bf16.gmra.mxu0 %v1430
      %v1512 = vpop.f32.mrf.mxu0
      %v1513 = vadd.f32 %v1280, %v1512
      %v1514 = vpop.f32.mrf.mxu0
      %v1515 = vadd.f32 %v1282, %v1514
      %1516 = vmatmul.bf16.gmra.mxu0 %v1433
      %v1517 = vpop.f32.mrf.mxu0
      %v1518 = vadd.f32 %v1285, %v1517
      %v1519 = vpop.f32.mrf.mxu0
      %v1520 = vadd.f32 %v1287, %v1519
      %1521 = vmatmul.bf16.gmra.mxu0 %v1436
      %v1522 = vpop.f32.mrf.mxu0
      %v1523 = vadd.f32 %v1290, %v1522
      %v1524 = vpop.f32.mrf.mxu0
      %v1525 = vadd.f32 %v1292, %v1524
      %1526 = vmatmul.bf16.gmra.mxu0 %v1439
      %v1527 = vpop.f32.mrf.mxu0
      %v1528 = vadd.f32 %v1295, %v1527
      %v1529 = vpop.f32.mrf.mxu0
      %v1530 = vadd.f32 %v1297, %v1529
      %1531 = vmatmul.bf16.gmra.mxu0 %v1442
      %v1532 = vpop.f32.mrf.mxu0
      %v1533 = vadd.f32 %v1300, %v1532
      %v1534 = vpop.f32.mrf.mxu0
      %v1535 = vadd.f32 %v1302, %v1534
      %1536 = vmatmul.bf16.gmra.mxu0 %v1445
      %v1537 = vpop.f32.mrf.mxu0
      %v1538 = vadd.f32 %v1305, %v1537
      %v1539 = vpop.f32.mrf.mxu0
      %v1540 = vadd.f32 %v1307, %v1539
      %1541 = vmatmul.bf16.gmra.mxu0 %v1448
      %v1542 = vpop.f32.mrf.mxu0
      %v1543 = vadd.f32 %v1310, %v1542
      %v1544 = vpop.f32.mrf.mxu0
      %v1545 = vadd.f32 %v1312, %v1544
      %1546 = vdwg.mxu0
      %s1547 = scalar_lea.vmem %s3, 4
      %v1548 = vld [vmem:[%s1547] sm:$0x3]
      %vm1549 = vsmask.f32 7424
      %v1550 = vshrl.u32 %v1382, 16
      %v1552 = vshll.u32 %v1382, 16
      %v1554 = vrot.slane %v1552, 1
      %v1555 = vor.u32 %v1550, %v1554
      %v1556 = vshll.u32 %v1383, 16
      %v1558 = vrot.slane %v1556, 1
      %v1559 = vsel %vm1549, %v1555, %v1558
      %v1560 = vshrl.u32 %v1383, 16
      %v1562 = vor.u32 %v1560, %v1558
      %v1563 = vshll.u32 %v1384, 16
      %v1565 = vrot.slane %v1563, 1
      %v1566 = vsel %vm1549, %v1562, %v1565
      %v1567 = vshrl.u32 %v1384, 16
      %v1569 = vor.u32 %v1567, %v1565
      %v1570 = vshll.u32 %v1385, 16
      %v1572 = vrot.slane %v1570, 1
      %v1573 = vsel %vm1549, %v1569, %v1572
      %v1574 = vshrl.u32 %v1385, 16
      %v1576 = vor.u32 %v1574, %v1572
      %v1577 = vshll.u32 %v1386, 16
      %v1579 = vrot.slane %v1577, 1
      %v1580 = vsel %vm1549, %v1576, %v1579
      %v1581 = vshrl.u32 %v1386, 16
      %v1583 = vor.u32 %v1581, %v1579
      %v1584 = vshll.u32 %v1387, 16
      %v1586 = vrot.slane %v1584, 1
      %v1587 = vsel %vm1549, %v1583, %v1586
      %v1588 = vshrl.u32 %v1387, 16
      %v1590 = vor.u32 %v1588, %v1586
      %v1591 = vshll.u32 %v1388, 16
      %v1593 = vrot.slane %v1591, 1
      %v1594 = vsel %vm1549, %v1590, %v1593
      %v1595 = vshrl.u32 %v1388, 16
      %v1597 = vor.u32 %v1595, %v1593
      %v1598 = vshll.u32 %v1389, 16
      %v1600 = vrot.slane %v1598, 1
      %v1601 = vsel %vm1549, %v1597, %v1600
      %v1602 = vshrl.u32 %v1389, 16
      %v1604 = vor.u32 %v1602, %v1600
      %v1605 = vshll.u32 %v1390, 16
      %v1607 = vrot.slane %v1605, 1
      %v1608 = vsel %vm1549, %v1604, %v1607
      %v1609 = vshrl.u32 %v1390, 16
      %v1611 = vor.u32 %v1609, %v1607
      %v1612 = vshll.u32 %v1391, 16
      %v1614 = vrot.slane %v1612, 1
      %v1615 = vsel %vm1549, %v1611, %v1614
      %v1616 = vshrl.u32 %v1391, 16
      %v1618 = vor.u32 %v1616, %v1614
      %v1619 = vshll.u32 %v1392, 16
      %v1621 = vrot.slane %v1619, 1
      %v1622 = vsel %vm1549, %v1618, %v1621
      %v1623 = vshrl.u32 %v1392, 16
      %v1625 = vor.u32 %v1623, %v1621
      %v1626 = vshll.u32 %v1393, 16
      %v1628 = vrot.slane %v1626, 1
      %v1629 = vsel %vm1549, %v1625, %v1628
      %v1630 = vshrl.u32 %v1393, 16
      %v1632 = vor.u32 %v1630, %v1628
      %v1633 = vshll.u32 %v1394, 16
      %v1635 = vrot.slane %v1633, 1
      %v1636 = vsel %vm1549, %v1632, %v1635
      %v1637 = vshrl.u32 %v1394, 16
      %v1639 = vor.u32 %v1637, %v1635
      %v1640 = vshll.u32 %v1395, 16
      %v1642 = vrot.slane %v1640, 1
      %v1643 = vsel %vm1549, %v1639, %v1642
      %v1644 = vshrl.u32 %v1395, 16
      %v1646 = vor.u32 %v1644, %v1642
      %v1647 = vshll.u32 %v1396, 16
      %v1649 = vrot.slane %v1647, 1
      %v1650 = vsel %vm1549, %v1646, %v1649
      %v1651 = vshrl.u32 %v1396, 16
      %v1653 = vor.u32 %v1651, %v1649
      %v1654 = vshll.u32 %v1397, 16
      %v1656 = vrot.slane %v1654, 1
      %v1657 = vsel %vm1549, %v1653, %v1656
      %v1658 = vshrl.u32 %v1397, 16
      %v1660 = vor.u32 %v1658, %v1656
      %v1661 = vshll.u32 %v1398, 16
      %v1663 = vrot.slane %v1661, 1
      %v1664 = vsel %vm1549, %v1660, %v1663
      %v1665 = vshrl.u32 %v1398, 16
      %v1667 = vor.u32 %v1665, %v1663
      %v1669 = vsel %vm1161, %v1559, 0
      %v1672 = vsel %vm1161, %v1566, 0
      %v1675 = vsel %vm1161, %v1573, 0
      %v1678 = vsel %vm1161, %v1580, 0
      %v1681 = vsel %vm1161, %v1587, 0
      %v1684 = vsel %vm1161, %v1594, 0
      %v1687 = vsel %vm1161, %v1601, 0
      %v1690 = vsel %vm1161, %v1608, 0
      %v1693 = vsel %vm1161, %v1615, 0
      %v1696 = vsel %vm1161, %v1622, 0
      %v1699 = vsel %vm1161, %v1629, 0
      %v1702 = vsel %vm1161, %v1636, 0
      %v1705 = vsel %vm1161, %v1643, 0
      %v1708 = vsel %vm1161, %v1650, 0
      %v1711 = vsel %vm1161, %v1657, 0
      %v1714 = vsel %vm1161, %v1664, 0
      %v1717 = vsel %vm1161, %v1667, 0
      %v1720 = vand.u32 %v1548, %v1216
      %1722 = vmatpush.bf16.msra.mxu0 0
      %1723 = vmatpush.bf16.msra.mxu0 0
      %1724 = vmatpush.bf16.msra.mxu0 0
      %1725 = vmatpush.bf16.msra.mxu0 0
      %1726 = vmatpush.bf16.msra.mxu0 0
      %1727 = vmatpush.bf16.msra.mxu0 0
      %1728 = vmatpush.bf16.msra.mxu0 0
      %1729 = vmatpush.bf16.msra.mxu0 %v1720
      %1730 = vmatmul.bf16.gmra.mxu0 %v1669
      %v1731 = vpop.f32.mrf.mxu0
      %v1732 = vadd.f32 0.0, %v1731
      %v1733 = vpop.f32.mrf.mxu0
      %v1734 = vadd.f32 0.0, %v1733
      %1735 = vmatmul.bf16.gmra.mxu0 %v1672
      %v1736 = vpop.f32.mrf.mxu0
      %v1737 = vadd.f32 0.0, %v1736
      %v1738 = vpop.f32.mrf.mxu0
      %v1739 = vadd.f32 0.0, %v1738
      %1740 = vmatmul.bf16.gmra.mxu0 %v1675
      %v1741 = vpop.f32.mrf.mxu0
      %v1742 = vadd.f32 0.0, %v1741
      %v1743 = vpop.f32.mrf.mxu0
      %v1744 = vadd.f32 0.0, %v1743
      %1745 = vmatmul.bf16.gmra.mxu0 %v1678
      %v1746 = vpop.f32.mrf.mxu0
      %v1747 = vadd.f32 0.0, %v1746
      %v1748 = vpop.f32.mrf.mxu0
      %v1749 = vadd.f32 0.0, %v1748
      %1750 = vmatmul.bf16.gmra.mxu0 %v1681
      %v1751 = vpop.f32.mrf.mxu0
      %v1752 = vadd.f32 0.0, %v1751
      %v1753 = vpop.f32.mrf.mxu0
      %v1754 = vadd.f32 0.0, %v1753
      %1755 = vmatmul.bf16.gmra.mxu0 %v1684
      %v1756 = vpop.f32.mrf.mxu0
      %v1757 = vadd.f32 0.0, %v1756
      %v1758 = vpop.f32.mrf.mxu0
      %v1759 = vadd.f32 0.0, %v1758
      %1760 = vmatmul.bf16.gmra.mxu0 %v1687
      %v1761 = vpop.f32.mrf.mxu0
      %v1762 = vadd.f32 0.0, %v1761
      %v1763 = vpop.f32.mrf.mxu0
      %v1764 = vadd.f32 0.0, %v1763
      %1765 = vmatmul.bf16.gmra.mxu0 %v1690
      %v1766 = vpop.f32.mrf.mxu0
      %v1767 = vadd.f32 0.0, %v1766
      %v1768 = vpop.f32.mrf.mxu0
      %v1769 = vadd.f32 0.0, %v1768
      %1770 = vmatmul.bf16.gmra.mxu0 %v1693
      %v1771 = vpop.f32.mrf.mxu0
      %v1772 = vadd.f32 0.0, %v1771
      %v1773 = vpop.f32.mrf.mxu0
      %v1774 = vadd.f32 0.0, %v1773
      %1775 = vmatmul.bf16.gmra.mxu0 %v1696
      %v1776 = vpop.f32.mrf.mxu0
      %v1777 = vadd.f32 0.0, %v1776
      %v1778 = vpop.f32.mrf.mxu0
      %v1779 = vadd.f32 0.0, %v1778
      %1780 = vmatmul.bf16.gmra.mxu0 %v1699
      %v1781 = vpop.f32.mrf.mxu0
      %v1782 = vadd.f32 0.0, %v1781
      %v1783 = vpop.f32.mrf.mxu0
      %v1784 = vadd.f32 0.0, %v1783
      %1785 = vmatmul.bf16.gmra.mxu0 %v1702
      %v1786 = vpop.f32.mrf.mxu0
      %v1787 = vadd.f32 0.0, %v1786
      %v1788 = vpop.f32.mrf.mxu0
      %v1789 = vadd.f32 0.0, %v1788
      %1790 = vmatmul.bf16.gmra.mxu0 %v1705
      %v1791 = vpop.f32.mrf.mxu0
      %v1792 = vadd.f32 0.0, %v1791
      %v1793 = vpop.f32.mrf.mxu0
      %v1794 = vadd.f32 0.0, %v1793
      %1795 = vmatmul.bf16.gmra.mxu0 %v1708
      %v1796 = vpop.f32.mrf.mxu0
      %v1797 = vadd.f32 0.0, %v1796
      %v1798 = vpop.f32.mrf.mxu0
      %v1799 = vadd.f32 0.0, %v1798
      %1800 = vmatmul.bf16.gmra.mxu0 %v1711
      %v1801 = vpop.f32.mrf.mxu0
      %v1802 = vadd.f32 0.0, %v1801
      %v1803 = vpop.f32.mrf.mxu0
      %v1804 = vadd.f32 0.0, %v1803
      %1805 = vmatmul.bf16.gmra.mxu0 %v1714
      %v1806 = vpop.f32.mrf.mxu0
      %v1807 = vadd.f32 0.0, %v1806
      %v1808 = vpop.f32.mrf.mxu0
      %v1809 = vadd.f32 0.0, %v1808
      %1810 = vmatmul.bf16.gmra.mxu0 %v1717
      %v1811 = vpop.f32.mrf.mxu0
      %v1812 = vadd.f32 0.0, %v1811
      %v1813 = vpop.f32.mrf.mxu0
      %v1814 = vadd.f32 0.0, %v1813
      %1815 = vdwg.mxu0
      %v1816 = vadd.f32 %v1463, %v1732
      %v1817 = vadd.f32 %v1465, %v1734
      %v1818 = vadd.f32 %v1468, %v1737
      %v1819 = vadd.f32 %v1470, %v1739
      %v1820 = vadd.f32 %v1473, %v1742
      %v1821 = vadd.f32 %v1475, %v1744
      %v1822 = vadd.f32 %v1478, %v1747
      %v1823 = vadd.f32 %v1480, %v1749
      %v1824 = vadd.f32 %v1483, %v1752
      %v1825 = vadd.f32 %v1485, %v1754
      %v1826 = vadd.f32 %v1488, %v1757
      %v1827 = vadd.f32 %v1490, %v1759
      %v1828 = vadd.f32 %v1493, %v1762
      %v1829 = vadd.f32 %v1495, %v1764
      %v1830 = vadd.f32 %v1498, %v1767
      %v1831 = vadd.f32 %v1500, %v1769
      %v1832 = vadd.f32 %v1503, %v1772
      %v1833 = vadd.f32 %v1505, %v1774
      %v1834 = vadd.f32 %v1508, %v1777
      %v1835 = vadd.f32 %v1510, %v1779
      %v1836 = vadd.f32 %v1513, %v1782
      %v1837 = vadd.f32 %v1515, %v1784
      %v1838 = vadd.f32 %v1518, %v1787
      %v1839 = vadd.f32 %v1520, %v1789
      %v1840 = vadd.f32 %v1523, %v1792
      %v1841 = vadd.f32 %v1525, %v1794
      %v1842 = vadd.f32 %v1528, %v1797
      %v1843 = vadd.f32 %v1530, %v1799
      %v1844 = vadd.f32 %v1533, %v1802
      %v1845 = vadd.f32 %v1535, %v1804
      %v1846 = vadd.f32 %v1538, %v1807
      %v1847 = vadd.f32 %v1540, %v1809
      %v1848 = vadd.f32 %v1543, %v1812
      %v1849 = vadd.f32 %v1545, %v1814
      %s1850 = scalar_lea.vmem %s3, 6
      %v1851 = vld [vmem:[%s1850] sm:$0x3]
      %v1886 = vunpack.c.l.b16 %v1005
      %v1887 = vunpack.c.l.b16 %v1006
      %v1888 = vunpack.c.l.b16 %v1007
      %v1889 = vunpack.c.l.b16 %v1008
      %v1890 = vunpack.c.l.b16 %v1009
      %v1891 = vunpack.c.l.b16 %v1010
      %v1892 = vunpack.c.l.b16 %v1011
      %v1893 = vunpack.c.l.b16 %v1012
      %v1894 = vunpack.c.l.b16 %v1013
      %v1895 = vunpack.c.l.b16 %v1014
      %v1896 = vunpack.c.l.b16 %v1015
      %v1897 = vunpack.c.l.b16 %v1016
      %v1898 = vunpack.c.l.b16 %v1017
      %v1899 = vunpack.c.l.b16 %v1018
      %v1900 = vunpack.c.l.b16 %v1019
      %v1901 = vunpack.c.l.b16 %v1020
      %v1902 = vunpack.c.l.b16 %v1021
      %v1903 = vunpack.c.l.b16 %v1022
      %v1904 = vunpack.c.l.b16 %v1023
      %v1905 = vunpack.c.l.b16 %v1024
      %v1906 = vunpack.c.l.b16 %v1025
      %v1907 = vunpack.c.l.b16 %v1026
      %v1908 = vunpack.c.l.b16 %v1027
      %v1909 = vunpack.c.l.b16 %v1028
      %v1910 = vunpack.c.l.b16 %v1029
      %v1911 = vunpack.c.l.b16 %v1030
      %v1912 = vunpack.c.l.b16 %v1031
      %v1913 = vunpack.c.l.b16 %v1032
      %v1914 = vunpack.c.l.b16 %v1033
      %v1915 = vunpack.c.l.b16 %v1034
      %v1916 = vunpack.c.l.b16 %v1035
      %v1917 = vunpack.c.l.b16 %v1036
      %v1918 = vunpack.c.l.b16 %v1037
      %v1919 = vunpack.c.l.b16 %v1038
      %v1920 = vpack.c.b16 %v1887, %v1886
      %v1921 = vpack.c.b16 %v1889, %v1888
      %v1922 = vpack.c.b16 %v1891, %v1890
      %v1923 = vpack.c.b16 %v1893, %v1892
      %v1924 = vpack.c.b16 %v1895, %v1894
      %v1925 = vpack.c.b16 %v1897, %v1896
      %v1926 = vpack.c.b16 %v1899, %v1898
      %v1927 = vpack.c.b16 %v1901, %v1900
      %v1928 = vpack.c.b16 %v1903, %v1902
      %v1929 = vpack.c.b16 %v1905, %v1904
      %v1930 = vpack.c.b16 %v1907, %v1906
      %v1931 = vpack.c.b16 %v1909, %v1908
      %v1932 = vpack.c.b16 %v1911, %v1910
      %v1933 = vpack.c.b16 %v1913, %v1912
      %v1934 = vpack.c.b16 %v1915, %v1914
      %v1935 = vpack.c.b16 %v1917, %v1916
      %v1936 = vpack.c.b16 %v1919, %v1918
      %v1938 = vsel %vm1161, %v1920, 0
      %v1941 = vsel %vm1161, %v1921, 0
      %v1944 = vsel %vm1161, %v1922, 0
      %v1947 = vsel %vm1161, %v1923, 0
      %v1950 = vsel %vm1161, %v1924, 0
      %v1953 = vsel %vm1161, %v1925, 0
      %v1956 = vsel %vm1161, %v1926, 0
      %v1959 = vsel %vm1161, %v1927, 0
      %v1962 = vsel %vm1161, %v1928, 0
      %v1965 = vsel %vm1161, %v1929, 0
      %v1968 = vsel %vm1161, %v1930, 0
      %v1971 = vsel %vm1161, %v1931, 0
      %v1974 = vsel %vm1161, %v1932, 0
      %v1977 = vsel %vm1161, %v1933, 0
      %v1980 = vsel %vm1161, %v1934, 0
      %v1983 = vsel %vm1161, %v1935, 0
      %v1986 = vsel %vm1161, %v1936, 0
      %v1989 = vand.u32 %v1851, %v1216
      %1991 = vmatpush.bf16.msra.mxu0 0
      %1992 = vmatpush.bf16.msra.mxu0 0
      %1993 = vmatpush.bf16.msra.mxu0 0
      %1994 = vmatpush.bf16.msra.mxu0 0
      %1995 = vmatpush.bf16.msra.mxu0 0
      %1996 = vmatpush.bf16.msra.mxu0 0
      %1997 = vmatpush.bf16.msra.mxu0 0
      %1998 = vmatpush.bf16.msra.mxu0 %v1989
      %1999 = vmatmul.bf16.gmra.mxu0 %v1938
      %v2000 = vpop.f32.mrf.mxu0
      %v2001 = vadd.f32 0.0, %v2000
      %v2002 = vpop.f32.mrf.mxu0
      %v2003 = vadd.f32 0.0, %v2002
      %2004 = vmatmul.bf16.gmra.mxu0 %v1941
      %v2005 = vpop.f32.mrf.mxu0
      %v2006 = vadd.f32 0.0, %v2005
      %v2007 = vpop.f32.mrf.mxu0
      %v2008 = vadd.f32 0.0, %v2007
      %2009 = vmatmul.bf16.gmra.mxu0 %v1944
      %v2010 = vpop.f32.mrf.mxu0
      %v2011 = vadd.f32 0.0, %v2010
      %v2012 = vpop.f32.mrf.mxu0
      %v2013 = vadd.f32 0.0, %v2012
      %2014 = vmatmul.bf16.gmra.mxu0 %v1947
      %v2015 = vpop.f32.mrf.mxu0
      %v2016 = vadd.f32 0.0, %v2015
      %v2017 = vpop.f32.mrf.mxu0
      %v2018 = vadd.f32 0.0, %v2017
      %2019 = vmatmul.bf16.gmra.mxu0 %v1950
      %v2020 = vpop.f32.mrf.mxu0
      %v2021 = vadd.f32 0.0, %v2020
      %v2022 = vpop.f32.mrf.mxu0
      %v2023 = vadd.f32 0.0, %v2022
      %2024 = vmatmul.bf16.gmra.mxu0 %v1953
      %v2025 = vpop.f32.mrf.mxu0
      %v2026 = vadd.f32 0.0, %v2025
      %v2027 = vpop.f32.mrf.mxu0
      %v2028 = vadd.f32 0.0, %v2027
      %2029 = vmatmul.bf16.gmra.mxu0 %v1956
      %v2030 = vpop.f32.mrf.mxu0
      %v2031 = vadd.f32 0.0, %v2030
      %v2032 = vpop.f32.mrf.mxu0
      %v2033 = vadd.f32 0.0, %v2032
      %2034 = vmatmul.bf16.gmra.mxu0 %v1959
      %v2035 = vpop.f32.mrf.mxu0
      %v2036 = vadd.f32 0.0, %v2035
      %v2037 = vpop.f32.mrf.mxu0
      %v2038 = vadd.f32 0.0, %v2037
      %2039 = vmatmul.bf16.gmra.mxu0 %v1962
      %v2040 = vpop.f32.mrf.mxu0
      %v2041 = vadd.f32 0.0, %v2040
      %v2042 = vpop.f32.mrf.mxu0
      %v2043 = vadd.f32 0.0, %v2042
      %2044 = vmatmul.bf16.gmra.mxu0 %v1965
      %v2045 = vpop.f32.mrf.mxu0
      %v2046 = vadd.f32 0.0, %v2045
      %v2047 = vpop.f32.mrf.mxu0
      %v2048 = vadd.f32 0.0, %v2047
      %2049 = vmatmul.bf16.gmra.mxu0 %v1968
      %v2050 = vpop.f32.mrf.mxu0
      %v2051 = vadd.f32 0.0, %v2050
      %v2052 = vpop.f32.mrf.mxu0
      %v2053 = vadd.f32 0.0, %v2052
      %2054 = vmatmul.bf16.gmra.mxu0 %v1971
      %v2055 = vpop.f32.mrf.mxu0
      %v2056 = vadd.f32 0.0, %v2055
      %v2057 = vpop.f32.mrf.mxu0
      %v2058 = vadd.f32 0.0, %v2057
      %2059 = vmatmul.bf16.gmra.mxu0 %v1974
      %v2060 = vpop.f32.mrf.mxu0
      %v2061 = vadd.f32 0.0, %v2060
      %v2062 = vpop.f32.mrf.mxu0
      %v2063 = vadd.f32 0.0, %v2062
      %2064 = vmatmul.bf16.gmra.mxu0 %v1977
      %v2065 = vpop.f32.mrf.mxu0
      %v2066 = vadd.f32 0.0, %v2065
      %v2067 = vpop.f32.mrf.mxu0
      %v2068 = vadd.f32 0.0, %v2067
      %2069 = vmatmul.bf16.gmra.mxu0 %v1980
      %v2070 = vpop.f32.mrf.mxu0
      %v2071 = vadd.f32 0.0, %v2070
      %v2072 = vpop.f32.mrf.mxu0
      %v2073 = vadd.f32 0.0, %v2072
      %2074 = vmatmul.bf16.gmra.mxu0 %v1983
      %v2075 = vpop.f32.mrf.mxu0
      %v2076 = vadd.f32 0.0, %v2075
      %v2077 = vpop.f32.mrf.mxu0
      %v2078 = vadd.f32 0.0, %v2077
      %2079 = vmatmul.bf16.gmra.mxu0 %v1986
      %v2080 = vpop.f32.mrf.mxu0
      %v2081 = vadd.f32 0.0, %v2080
      %v2082 = vpop.f32.mrf.mxu0
      %v2083 = vadd.f32 0.0, %v2082
      %2084 = vdwg.mxu0
      %v2085 = vadd.f32 %v1816, %v2001
      %v2086 = vadd.f32 %v1817, %v2003
      %v2087 = vadd.f32 %v1818, %v2006
      %v2088 = vadd.f32 %v1819, %v2008
      %v2089 = vadd.f32 %v1820, %v2011
      %v2090 = vadd.f32 %v1821, %v2013
      %v2091 = vadd.f32 %v1822, %v2016
      %v2092 = vadd.f32 %v1823, %v2018
      %v2093 = vadd.f32 %v1824, %v2021
      %v2094 = vadd.f32 %v1825, %v2023
      %v2095 = vadd.f32 %v1826, %v2026
      %v2096 = vadd.f32 %v1827, %v2028
      %v2097 = vadd.f32 %v1828, %v2031
      %v2098 = vadd.f32 %v1829, %v2033
      %v2099 = vadd.f32 %v1830, %v2036
      %v2100 = vadd.f32 %v1831, %v2038
      %v2101 = vadd.f32 %v1832, %v2041
      %v2102 = vadd.f32 %v1833, %v2043
      %v2103 = vadd.f32 %v1834, %v2046
      %v2104 = vadd.f32 %v1835, %v2048
      %v2105 = vadd.f32 %v1836, %v2051
      %v2106 = vadd.f32 %v1837, %v2053
      %v2107 = vadd.f32 %v1838, %v2056
      %v2108 = vadd.f32 %v1839, %v2058
      %v2109 = vadd.f32 %v1840, %v2061
      %v2110 = vadd.f32 %v1841, %v2063
      %v2111 = vadd.f32 %v1842, %v2066
      %v2112 = vadd.f32 %v1843, %v2068
      %v2113 = vadd.f32 %v1844, %v2071
      %v2114 = vadd.f32 %v1845, %v2073
      %v2115 = vadd.f32 %v1846, %v2076
      %v2116 = vadd.f32 %v1847, %v2078
      %v2117 = vadd.f32 %v1848, %v2081
      %v2118 = vadd.f32 %v1849, %v2083
      %s2119 = scalar_lea.vmem %s3, 8
      %v2120 = vld [vmem:[%s2119] sm:$0x3]
      %v2155 = vunpack.c.l.b16 %v1039
      %v2156 = vunpack.c.l.b16 %v1040
      %v2157 = vunpack.c.l.b16 %v1041
      %v2158 = vunpack.c.l.b16 %v1042
      %v2159 = vunpack.c.l.b16 %v1043
      %v2160 = vunpack.c.l.b16 %v1044
      %v2161 = vunpack.c.l.b16 %v1045
      %v2162 = vunpack.c.l.b16 %v1046
      %v2163 = vunpack.c.l.b16 %v1047
      %v2164 = vunpack.c.l.b16 %v1048
      %v2165 = vunpack.c.l.b16 %v1049
      %v2166 = vunpack.c.l.b16 %v1050
      %v2167 = vunpack.c.l.b16 %v1051
      %v2168 = vunpack.c.l.b16 %v1052
      %v2169 = vunpack.c.l.b16 %v1053
      %v2170 = vunpack.c.l.b16 %v1054
      %v2171 = vunpack.c.l.b16 %v1055
      %v2172 = vunpack.c.l.b16 %v1056
      %v2173 = vunpack.c.l.b16 %v1057
      %v2174 = vunpack.c.l.b16 %v1058
      %v2175 = vunpack.c.l.b16 %v1059
      %v2176 = vunpack.c.l.b16 %v1060
      %v2177 = vunpack.c.l.b16 %v1061
      %v2178 = vunpack.c.l.b16 %v1062
      %v2179 = vunpack.c.l.b16 %v1063
      %v2180 = vunpack.c.l.b16 %v1064
      %v2181 = vunpack.c.l.b16 %v1065
      %v2182 = vunpack.c.l.b16 %v1066
      %v2183 = vunpack.c.l.b16 %v1067
      %v2184 = vunpack.c.l.b16 %v1068
      %v2185 = vunpack.c.l.b16 %v1069
      %v2186 = vunpack.c.l.b16 %v1070
      %v2187 = vunpack.c.l.b16 %v1071
      %v2188 = vunpack.c.l.b16 %v1072
      %v2189 = vpack.c.b16 %v2156, %v2155
      %v2190 = vpack.c.b16 %v2158, %v2157
      %v2191 = vpack.c.b16 %v2160, %v2159
      %v2192 = vpack.c.b16 %v2162, %v2161
      %v2193 = vpack.c.b16 %v2164, %v2163
      %v2194 = vpack.c.b16 %v2166, %v2165
      %v2195 = vpack.c.b16 %v2168, %v2167
      %v2196 = vpack.c.b16 %v2170, %v2169
      %v2197 = vpack.c.b16 %v2172, %v2171
      %v2198 = vpack.c.b16 %v2174, %v2173
      %v2199 = vpack.c.b16 %v2176, %v2175
      %v2200 = vpack.c.b16 %v2178, %v2177
      %v2201 = vpack.c.b16 %v2180, %v2179
      %v2202 = vpack.c.b16 %v2182, %v2181
      %v2203 = vpack.c.b16 %v2184, %v2183
      %v2204 = vpack.c.b16 %v2186, %v2185
      %v2205 = vpack.c.b16 %v2188, %v2187
      %v2207 = vsel %vm1161, %v2189, 0
      %v2210 = vsel %vm1161, %v2190, 0
      %v2213 = vsel %vm1161, %v2191, 0
      %v2216 = vsel %vm1161, %v2192, 0
      %v2219 = vsel %vm1161, %v2193, 0
      %v2222 = vsel %vm1161, %v2194, 0
      %v2225 = vsel %vm1161, %v2195, 0
      %v2228 = vsel %vm1161, %v2196, 0
      %v2231 = vsel %vm1161, %v2197, 0
      %v2234 = vsel %vm1161, %v2198, 0
      %v2237 = vsel %vm1161, %v2199, 0
      %v2240 = vsel %vm1161, %v2200, 0
      %v2243 = vsel %vm1161, %v2201, 0
      %v2246 = vsel %vm1161, %v2202, 0
      %v2249 = vsel %vm1161, %v2203, 0
      %v2252 = vsel %vm1161, %v2204, 0
      %v2255 = vsel %vm1161, %v2205, 0
      %v2258 = vand.u32 %v2120, %v1216
      %2260 = vmatpush.bf16.msra.mxu0 0
      %2261 = vmatpush.bf16.msra.mxu0 0
      %2262 = vmatpush.bf16.msra.mxu0 0
      %2263 = vmatpush.bf16.msra.mxu0 0
      %2264 = vmatpush.bf16.msra.mxu0 0
      %2265 = vmatpush.bf16.msra.mxu0 0
      %2266 = vmatpush.bf16.msra.mxu0 0
      %2267 = vmatpush.bf16.msra.mxu0 %v2258
      %2268 = vmatmul.bf16.gmra.mxu0 %v2207
      %v2269 = vpop.f32.mrf.mxu0
      %v2270 = vadd.f32 0.0, %v2269
      %v2271 = vpop.f32.mrf.mxu0
      %v2272 = vadd.f32 0.0, %v2271
      %2273 = vmatmul.bf16.gmra.mxu0 %v2210
      %v2274 = vpop.f32.mrf.mxu0
      %v2275 = vadd.f32 0.0, %v2274
      %v2276 = vpop.f32.mrf.mxu0
      %v2277 = vadd.f32 0.0, %v2276
      %2278 = vmatmul.bf16.gmra.mxu0 %v2213
      %v2279 = vpop.f32.mrf.mxu0
      %v2280 = vadd.f32 0.0, %v2279
      %v2281 = vpop.f32.mrf.mxu0
      %v2282 = vadd.f32 0.0, %v2281
      %2283 = vmatmul.bf16.gmra.mxu0 %v2216
      %v2284 = vpop.f32.mrf.mxu0
      %v2285 = vadd.f32 0.0, %v2284
      %v2286 = vpop.f32.mrf.mxu0
      %v2287 = vadd.f32 0.0, %v2286
      %2288 = vmatmul.bf16.gmra.mxu0 %v2219
      %v2289 = vpop.f32.mrf.mxu0
      %v2290 = vadd.f32 0.0, %v2289
      %v2291 = vpop.f32.mrf.mxu0
      %v2292 = vadd.f32 0.0, %v2291
      %2293 = vmatmul.bf16.gmra.mxu0 %v2222
      %v2294 = vpop.f32.mrf.mxu0
      %v2295 = vadd.f32 0.0, %v2294
      %v2296 = vpop.f32.mrf.mxu0
      %v2297 = vadd.f32 0.0, %v2296
      %2298 = vmatmul.bf16.gmra.mxu0 %v2225
      %v2299 = vpop.f32.mrf.mxu0
      %v2300 = vadd.f32 0.0, %v2299
      %v2301 = vpop.f32.mrf.mxu0
      %v2302 = vadd.f32 0.0, %v2301
      %2303 = vmatmul.bf16.gmra.mxu0 %v2228
      %v2304 = vpop.f32.mrf.mxu0
      %v2305 = vadd.f32 0.0, %v2304
      %v2306 = vpop.f32.mrf.mxu0
      %v2307 = vadd.f32 0.0, %v2306
      %2308 = vmatmul.bf16.gmra.mxu0 %v2231
      %v2309 = vpop.f32.mrf.mxu0
      %v2310 = vadd.f32 0.0, %v2309
      %v2311 = vpop.f32.mrf.mxu0
      %v2312 = vadd.f32 0.0, %v2311
      %2313 = vmatmul.bf16.gmra.mxu0 %v2234
      %v2314 = vpop.f32.mrf.mxu0
      %v2315 = vadd.f32 0.0, %v2314
      %v2316 = vpop.f32.mrf.mxu0
      %v2317 = vadd.f32 0.0, %v2316
      %2318 = vmatmul.bf16.gmra.mxu0 %v2237
      %v2319 = vpop.f32.mrf.mxu0
      %v2320 = vadd.f32 0.0, %v2319
      %v2321 = vpop.f32.mrf.mxu0
      %v2322 = vadd.f32 0.0, %v2321
      %2323 = vmatmul.bf16.gmra.mxu0 %v2240
      %v2324 = vpop.f32.mrf.mxu0
      %v2325 = vadd.f32 0.0, %v2324
      %v2326 = vpop.f32.mrf.mxu0
      %v2327 = vadd.f32 0.0, %v2326
      %2328 = vmatmul.bf16.gmra.mxu0 %v2243
      %v2329 = vpop.f32.mrf.mxu0
      %v2330 = vadd.f32 0.0, %v2329
      %v2331 = vpop.f32.mrf.mxu0
      %v2332 = vadd.f32 0.0, %v2331
      %2333 = vmatmul.bf16.gmra.mxu0 %v2246
      %v2334 = vpop.f32.mrf.mxu0
      %v2335 = vadd.f32 0.0, %v2334
      %v2336 = vpop.f32.mrf.mxu0
      %v2337 = vadd.f32 0.0, %v2336
      %2338 = vmatmul.bf16.gmra.mxu0 %v2249
      %v2339 = vpop.f32.mrf.mxu0
      %v2340 = vadd.f32 0.0, %v2339
      %v2341 = vpop.f32.mrf.mxu0
      %v2342 = vadd.f32 0.0, %v2341
      %2343 = vmatmul.bf16.gmra.mxu0 %v2252
      %v2344 = vpop.f32.mrf.mxu0
      %v2345 = vadd.f32 0.0, %v2344
      %v2346 = vpop.f32.mrf.mxu0
      %v2347 = vadd.f32 0.0, %v2346
      %2348 = vmatmul.bf16.gmra.mxu0 %v2255
      %v2349 = vpop.f32.mrf.mxu0
      %v2350 = vadd.f32 0.0, %v2349
      %v2351 = vpop.f32.mrf.mxu0
      %v2352 = vadd.f32 0.0, %v2351
      %2353 = vdwg.mxu0
      %v2354 = vadd.f32 %v2085, %v2270
      %v2355 = vadd.f32 %v2086, %v2272
      %v2356 = vadd.f32 %v2087, %v2275
      %v2357 = vadd.f32 %v2088, %v2277
      %v2358 = vadd.f32 %v2089, %v2280
      %v2359 = vadd.f32 %v2090, %v2282
      %v2360 = vadd.f32 %v2091, %v2285
      %v2361 = vadd.f32 %v2092, %v2287
      %v2362 = vadd.f32 %v2093, %v2290
      %v2363 = vadd.f32 %v2094, %v2292
      %v2364 = vadd.f32 %v2095, %v2295
      %v2365 = vadd.f32 %v2096, %v2297
      %v2366 = vadd.f32 %v2097, %v2300
      %v2367 = vadd.f32 %v2098, %v2302
      %v2368 = vadd.f32 %v2099, %v2305
      %v2369 = vadd.f32 %v2100, %v2307
      %v2370 = vadd.f32 %v2101, %v2310
      %v2371 = vadd.f32 %v2102, %v2312
      %v2372 = vadd.f32 %v2103, %v2315
      %v2373 = vadd.f32 %v2104, %v2317
      %v2374 = vadd.f32 %v2105, %v2320
      %v2375 = vadd.f32 %v2106, %v2322
      %v2376 = vadd.f32 %v2107, %v2325
      %v2377 = vadd.f32 %v2108, %v2327
      %v2378 = vadd.f32 %v2109, %v2330
      %v2379 = vadd.f32 %v2110, %v2332
      %v2380 = vadd.f32 %v2111, %v2335
      %v2381 = vadd.f32 %v2112, %v2337
      %v2382 = vadd.f32 %v2113, %v2340
      %v2383 = vadd.f32 %v2114, %v2342
      %v2384 = vadd.f32 %v2115, %v2345
      %v2385 = vadd.f32 %v2116, %v2347
      %v2386 = vadd.f32 %v2117, %v2350
      %v2387 = vadd.f32 %v2118, %v2352
      %s2388 = scalar_lea.vmem %s3, 10
      %v2389 = vld [vmem:[%s2388] sm:$0x3]
      %v2390 = vshrl.u32 %v1920, 16
      %v2392 = vshll.u32 %v1920, 16
      %v2394 = vrot.slane %v2392, 1
      %v2395 = vor.u32 %v2390, %v2394
      %v2396 = vshll.u32 %v1921, 16
      %v2398 = vrot.slane %v2396, 1
      %v2399 = vsel %vm1549, %v2395, %v2398
      %v2400 = vshrl.u32 %v1921, 16
      %v2402 = vor.u32 %v2400, %v2398
      %v2403 = vshll.u32 %v1922, 16
      %v2405 = vrot.slane %v2403, 1
      %v2406 = vsel %vm1549, %v2402, %v2405
      %v2407 = vshrl.u32 %v1922, 16
      %v2409 = vor.u32 %v2407, %v2405
      %v2410 = vshll.u32 %v1923, 16
      %v2412 = vrot.slane %v2410, 1
      %v2413 = vsel %vm1549, %v2409, %v2412
      %v2414 = vshrl.u32 %v1923, 16
      %v2416 = vor.u32 %v2414, %v2412
      %v2417 = vshll.u32 %v1924, 16
      %v2419 = vrot.slane %v2417, 1
      %v2420 = vsel %vm1549, %v2416, %v2419
      %v2421 = vshrl.u32 %v1924, 16
      %v2423 = vor.u32 %v2421, %v2419
      %v2424 = vshll.u32 %v1925, 16
      %v2426 = vrot.slane %v2424, 1
      %v2427 = vsel %vm1549, %v2423, %v2426
      %v2428 = vshrl.u32 %v1925, 16
      %v2430 = vor.u32 %v2428, %v2426
      %v2431 = vshll.u32 %v1926, 16
      %v2433 = vrot.slane %v2431, 1
      %v2434 = vsel %vm1549, %v2430, %v2433
      %v2435 = vshrl.u32 %v1926, 16
      %v2437 = vor.u32 %v2435, %v2433
      %v2438 = vshll.u32 %v1927, 16
      %v2440 = vrot.slane %v2438, 1
      %v2441 = vsel %vm1549, %v2437, %v2440
      %v2442 = vshrl.u32 %v1927, 16
      %v2444 = vor.u32 %v2442, %v2440
      %v2445 = vshll.u32 %v1928, 16
      %v2447 = vrot.slane %v2445, 1
      %v2448 = vsel %vm1549, %v2444, %v2447
      %v2449 = vshrl.u32 %v1928, 16
      %v2451 = vor.u32 %v2449, %v2447
      %v2452 = vshll.u32 %v1929, 16
      %v2454 = vrot.slane %v2452, 1
      %v2455 = vsel %vm1549, %v2451, %v2454
      %v2456 = vshrl.u32 %v1929, 16
      %v2458 = vor.u32 %v2456, %v2454
      %v2459 = vshll.u32 %v1930, 16
      %v2461 = vrot.slane %v2459, 1
      %v2462 = vsel %vm1549, %v2458, %v2461
      %v2463 = vshrl.u32 %v1930, 16
      %v2465 = vor.u32 %v2463, %v2461
      %v2466 = vshll.u32 %v1931, 16
      %v2468 = vrot.slane %v2466, 1
      %v2469 = vsel %vm1549, %v2465, %v2468
      %v2470 = vshrl.u32 %v1931, 16
      %v2472 = vor.u32 %v2470, %v2468
      %v2473 = vshll.u32 %v1932, 16
      %v2475 = vrot.slane %v2473, 1
      %v2476 = vsel %vm1549, %v2472, %v2475
      %v2477 = vshrl.u32 %v1932, 16
      %v2479 = vor.u32 %v2477, %v2475
      %v2480 = vshll.u32 %v1933, 16
      %v2482 = vrot.slane %v2480, 1
      %v2483 = vsel %vm1549, %v2479, %v2482
      %v2484 = vshrl.u32 %v1933, 16
      %v2486 = vor.u32 %v2484, %v2482
      %v2487 = vshll.u32 %v1934, 16
      %v2489 = vrot.slane %v2487, 1
      %v2490 = vsel %vm1549, %v2486, %v2489
      %v2491 = vshrl.u32 %v1934, 16
      %v2493 = vor.u32 %v2491, %v2489
      %v2494 = vshll.u32 %v1935, 16
      %v2496 = vrot.slane %v2494, 1
      %v2497 = vsel %vm1549, %v2493, %v2496
      %v2498 = vshrl.u32 %v1935, 16
      %v2500 = vor.u32 %v2498, %v2496
      %v2501 = vshll.u32 %v1936, 16
      %v2503 = vrot.slane %v2501, 1
      %v2504 = vsel %vm1549, %v2500, %v2503
      %v2505 = vshrl.u32 %v1936, 16
      %v2507 = vor.u32 %v2505, %v2503
      %v2509 = vsel %vm1161, %v2399, 0
      %v2512 = vsel %vm1161, %v2406, 0
      %v2515 = vsel %vm1161, %v2413, 0
      %v2518 = vsel %vm1161, %v2420, 0
      %v2521 = vsel %vm1161, %v2427, 0
      %v2524 = vsel %vm1161, %v2434, 0
      %v2527 = vsel %vm1161, %v2441, 0
      %v2530 = vsel %vm1161, %v2448, 0
      %v2533 = vsel %vm1161, %v2455, 0
      %v2536 = vsel %vm1161, %v2462, 0
      %v2539 = vsel %vm1161, %v2469, 0
      %v2542 = vsel %vm1161, %v2476, 0
      %v2545 = vsel %vm1161, %v2483, 0
      %v2548 = vsel %vm1161, %v2490, 0
      %v2551 = vsel %vm1161, %v2497, 0
      %v2554 = vsel %vm1161, %v2504, 0
      %v2557 = vsel %vm1161, %v2507, 0
      %v2560 = vand.u32 %v2389, %v1216
      %2562 = vmatpush.bf16.msra.mxu0 0
      %2563 = vmatpush.bf16.msra.mxu0 0
      %2564 = vmatpush.bf16.msra.mxu0 0
      %2565 = vmatpush.bf16.msra.mxu0 0
      %2566 = vmatpush.bf16.msra.mxu0 0
      %2567 = vmatpush.bf16.msra.mxu0 0
      %2568 = vmatpush.bf16.msra.mxu0 0
      %2569 = vmatpush.bf16.msra.mxu0 %v2560
      %2570 = vmatmul.bf16.gmra.mxu0 %v2509
      %v2571 = vpop.f32.mrf.mxu0
      %v2572 = vadd.f32 0.0, %v2571
      %v2573 = vpop.f32.mrf.mxu0
      %v2574 = vadd.f32 0.0, %v2573
      %2575 = vmatmul.bf16.gmra.mxu0 %v2512
      %v2576 = vpop.f32.mrf.mxu0
      %v2577 = vadd.f32 0.0, %v2576
      %v2578 = vpop.f32.mrf.mxu0
      %v2579 = vadd.f32 0.0, %v2578
      %2580 = vmatmul.bf16.gmra.mxu0 %v2515
      %v2581 = vpop.f32.mrf.mxu0
      %v2582 = vadd.f32 0.0, %v2581
      %v2583 = vpop.f32.mrf.mxu0
      %v2584 = vadd.f32 0.0, %v2583
      %2585 = vmatmul.bf16.gmra.mxu0 %v2518
      %v2586 = vpop.f32.mrf.mxu0
      %v2587 = vadd.f32 0.0, %v2586
      %v2588 = vpop.f32.mrf.mxu0
      %v2589 = vadd.f32 0.0, %v2588
      %2590 = vmatmul.bf16.gmra.mxu0 %v2521
      %v2591 = vpop.f32.mrf.mxu0
      %v2592 = vadd.f32 0.0, %v2591
      %v2593 = vpop.f32.mrf.mxu0
      %v2594 = vadd.f32 0.0, %v2593
      %2595 = vmatmul.bf16.gmra.mxu0 %v2524
      %v2596 = vpop.f32.mrf.mxu0
      %v2597 = vadd.f32 0.0, %v2596
      %v2598 = vpop.f32.mrf.mxu0
      %v2599 = vadd.f32 0.0, %v2598
      %2600 = vmatmul.bf16.gmra.mxu0 %v2527
      %v2601 = vpop.f32.mrf.mxu0
      %v2602 = vadd.f32 0.0, %v2601
      %v2603 = vpop.f32.mrf.mxu0
      %v2604 = vadd.f32 0.0, %v2603
      %2605 = vmatmul.bf16.gmra.mxu0 %v2530
      %v2606 = vpop.f32.mrf.mxu0
      %v2607 = vadd.f32 0.0, %v2606
      %v2608 = vpop.f32.mrf.mxu0
      %v2609 = vadd.f32 0.0, %v2608
      %2610 = vmatmul.bf16.gmra.mxu0 %v2533
      %v2611 = vpop.f32.mrf.mxu0
      %v2612 = vadd.f32 0.0, %v2611
      %v2613 = vpop.f32.mrf.mxu0
      %v2614 = vadd.f32 0.0, %v2613
      %2615 = vmatmul.bf16.gmra.mxu0 %v2536
      %v2616 = vpop.f32.mrf.mxu0
      %v2617 = vadd.f32 0.0, %v2616
      %v2618 = vpop.f32.mrf.mxu0
      %v2619 = vadd.f32 0.0, %v2618
      %2620 = vmatmul.bf16.gmra.mxu0 %v2539
      %v2621 = vpop.f32.mrf.mxu0
      %v2622 = vadd.f32 0.0, %v2621
      %v2623 = vpop.f32.mrf.mxu0
      %v2624 = vadd.f32 0.0, %v2623
      %2625 = vmatmul.bf16.gmra.mxu0 %v2542
      %v2626 = vpop.f32.mrf.mxu0
      %v2627 = vadd.f32 0.0, %v2626
      %v2628 = vpop.f32.mrf.mxu0
      %v2629 = vadd.f32 0.0, %v2628
      %2630 = vmatmul.bf16.gmra.mxu0 %v2545
      %v2631 = vpop.f32.mrf.mxu0
      %v2632 = vadd.f32 0.0, %v2631
      %v2633 = vpop.f32.mrf.mxu0
      %v2634 = vadd.f32 0.0, %v2633
      %2635 = vmatmul.bf16.gmra.mxu0 %v2548
      %v2636 = vpop.f32.mrf.mxu0
      %v2637 = vadd.f32 0.0, %v2636
      %v2638 = vpop.f32.mrf.mxu0
      %v2639 = vadd.f32 0.0, %v2638
      %2640 = vmatmul.bf16.gmra.mxu0 %v2551
      %v2641 = vpop.f32.mrf.mxu0
      %v2642 = vadd.f32 0.0, %v2641
      %v2643 = vpop.f32.mrf.mxu0
      %v2644 = vadd.f32 0.0, %v2643
      %2645 = vmatmul.bf16.gmra.mxu0 %v2554
      %v2646 = vpop.f32.mrf.mxu0
      %v2647 = vadd.f32 0.0, %v2646
      %v2648 = vpop.f32.mrf.mxu0
      %v2649 = vadd.f32 0.0, %v2648
      %2650 = vmatmul.bf16.gmra.mxu0 %v2557
      %v2651 = vpop.f32.mrf.mxu0
      %v2652 = vadd.f32 0.0, %v2651
      %v2653 = vpop.f32.mrf.mxu0
      %v2654 = vadd.f32 0.0, %v2653
      %2655 = vdwg.mxu0
      %v2656 = vadd.f32 %v2354, %v2572
      %v2657 = vadd.f32 %v2355, %v2574
      %v2658 = vadd.f32 %v2356, %v2577
      %v2659 = vadd.f32 %v2357, %v2579
      %v2660 = vadd.f32 %v2358, %v2582
      %v2661 = vadd.f32 %v2359, %v2584
      %v2662 = vadd.f32 %v2360, %v2587
      %v2663 = vadd.f32 %v2361, %v2589
      %v2664 = vadd.f32 %v2362, %v2592
      %v2665 = vadd.f32 %v2363, %v2594
      %v2666 = vadd.f32 %v2364, %v2597
      %v2667 = vadd.f32 %v2365, %v2599
      %v2668 = vadd.f32 %v2366, %v2602
      %v2669 = vadd.f32 %v2367, %v2604
      %v2670 = vadd.f32 %v2368, %v2607
      %v2671 = vadd.f32 %v2369, %v2609
      %v2672 = vadd.f32 %v2370, %v2612
      %v2673 = vadd.f32 %v2371, %v2614
      %v2674 = vadd.f32 %v2372, %v2617
      %v2675 = vadd.f32 %v2373, %v2619
      %v2676 = vadd.f32 %v2374, %v2622
      %v2677 = vadd.f32 %v2375, %v2624
      %v2678 = vadd.f32 %v2376, %v2627
      %v2679 = vadd.f32 %v2377, %v2629
      %v2680 = vadd.f32 %v2378, %v2632
      %v2681 = vadd.f32 %v2379, %v2634
      %v2682 = vadd.f32 %v2380, %v2637
      %v2683 = vadd.f32 %v2381, %v2639
      %v2684 = vadd.f32 %v2382, %v2642
      %v2685 = vadd.f32 %v2383, %v2644
      %v2686 = vadd.f32 %v2384, %v2647
      %v2687 = vadd.f32 %v2385, %v2649
      %v2688 = vadd.f32 %v2386, %v2652
      %v2689 = vadd.f32 %v2387, %v2654
      %s2690 = scalar_lea.vmem %s3, 12
      %v2691 = vld [vmem:[%s2690] sm:$0x3]
      %v2694 = vunpack.c.l.b16 %v966
      %v2695 = vunpack.c.l.b16 %v967
      %v2696 = vpack.c.b16 %v2695, %v2694
      %v2698 = vshll.u32 %v2696, 16
      %v2700 = vrot.slane %v2698, 1
      %v2701 = vsel %vm1549, %v1667, %v2700
      %v2702 = vshrl.u32 %v2696, 16
      %v2704 = vor.u32 %v2702, %v2700
      %v2706 = vsel %vm1161, %v2701, 0
      %v2709 = vsel %vm1161, %v2704, 0
      %v2712 = vand.u32 %v2691, %v1216
      %2714 = vmatpush.bf16.msra.mxu0 0
      %2715 = vmatpush.bf16.msra.mxu0 0
      %2716 = vmatpush.bf16.msra.mxu0 0
      %2717 = vmatpush.bf16.msra.mxu0 0
      %2718 = vmatpush.bf16.msra.mxu0 0
      %2719 = vmatpush.bf16.msra.mxu0 0
      %2720 = vmatpush.bf16.msra.mxu0 0
      %2721 = vmatpush.bf16.msra.mxu0 %v2712
      %2722 = vmatmul.bf16.gmra.mxu0 %v1672
      %v2723 = vpop.f32.mrf.mxu0
      %v2724 = vadd.f32 0.0, %v2723
      %v2725 = vpop.f32.mrf.mxu0
      %v2726 = vadd.f32 0.0, %v2725
      %2727 = vmatmul.bf16.gmra.mxu0 %v1675
      %v2728 = vpop.f32.mrf.mxu0
      %v2729 = vadd.f32 0.0, %v2728
      %v2730 = vpop.f32.mrf.mxu0
      %v2731 = vadd.f32 0.0, %v2730
      %2732 = vmatmul.bf16.gmra.mxu0 %v1678
      %v2733 = vpop.f32.mrf.mxu0
      %v2734 = vadd.f32 0.0, %v2733
      %v2735 = vpop.f32.mrf.mxu0
      %v2736 = vadd.f32 0.0, %v2735
      %2737 = vmatmul.bf16.gmra.mxu0 %v1681
      %v2738 = vpop.f32.mrf.mxu0
      %v2739 = vadd.f32 0.0, %v2738
      %v2740 = vpop.f32.mrf.mxu0
      %v2741 = vadd.f32 0.0, %v2740
      %2742 = vmatmul.bf16.gmra.mxu0 %v1684
      %v2743 = vpop.f32.mrf.mxu0
      %v2744 = vadd.f32 0.0, %v2743
      %v2745 = vpop.f32.mrf.mxu0
      %v2746 = vadd.f32 0.0, %v2745
      %2747 = vmatmul.bf16.gmra.mxu0 %v1687
      %v2748 = vpop.f32.mrf.mxu0
      %v2749 = vadd.f32 0.0, %v2748
      %v2750 = vpop.f32.mrf.mxu0
      %v2751 = vadd.f32 0.0, %v2750
      %2752 = vmatmul.bf16.gmra.mxu0 %v1690
      %v2753 = vpop.f32.mrf.mxu0
      %v2754 = vadd.f32 0.0, %v2753
      %v2755 = vpop.f32.mrf.mxu0
      %v2756 = vadd.f32 0.0, %v2755
      %2757 = vmatmul.bf16.gmra.mxu0 %v1693
      %v2758 = vpop.f32.mrf.mxu0
      %v2759 = vadd.f32 0.0, %v2758
      %v2760 = vpop.f32.mrf.mxu0
      %v2761 = vadd.f32 0.0, %v2760
      %2762 = vmatmul.bf16.gmra.mxu0 %v1696
      %v2763 = vpop.f32.mrf.mxu0
      %v2764 = vadd.f32 0.0, %v2763
      %v2765 = vpop.f32.mrf.mxu0
      %v2766 = vadd.f32 0.0, %v2765
      %2767 = vmatmul.bf16.gmra.mxu0 %v1699
      %v2768 = vpop.f32.mrf.mxu0
      %v2769 = vadd.f32 0.0, %v2768
      %v2770 = vpop.f32.mrf.mxu0
      %v2771 = vadd.f32 0.0, %v2770
      %2772 = vmatmul.bf16.gmra.mxu0 %v1702
      %v2773 = vpop.f32.mrf.mxu0
      %v2774 = vadd.f32 0.0, %v2773
      %v2775 = vpop.f32.mrf.mxu0
      %v2776 = vadd.f32 0.0, %v2775
      %2777 = vmatmul.bf16.gmra.mxu0 %v1705
      %v2778 = vpop.f32.mrf.mxu0
      %v2779 = vadd.f32 0.0, %v2778
      %v2780 = vpop.f32.mrf.mxu0
      %v2781 = vadd.f32 0.0, %v2780
      %2782 = vmatmul.bf16.gmra.mxu0 %v1708
      %v2783 = vpop.f32.mrf.mxu0
      %v2784 = vadd.f32 0.0, %v2783
      %v2785 = vpop.f32.mrf.mxu0
      %v2786 = vadd.f32 0.0, %v2785
      %2787 = vmatmul.bf16.gmra.mxu0 %v1711
      %v2788 = vpop.f32.mrf.mxu0
      %v2789 = vadd.f32 0.0, %v2788
      %v2790 = vpop.f32.mrf.mxu0
      %v2791 = vadd.f32 0.0, %v2790
      %2792 = vmatmul.bf16.gmra.mxu0 %v1714
      %v2793 = vpop.f32.mrf.mxu0
      %v2794 = vadd.f32 0.0, %v2793
      %v2795 = vpop.f32.mrf.mxu0
      %v2796 = vadd.f32 0.0, %v2795
      %2797 = vmatmul.bf16.gmra.mxu0 %v2706
      %v2798 = vpop.f32.mrf.mxu0
      %v2799 = vadd.f32 0.0, %v2798
      %v2800 = vpop.f32.mrf.mxu0
      %v2801 = vadd.f32 0.0, %v2800
      %2802 = vmatmul.bf16.gmra.mxu0 %v2709
      %v2803 = vpop.f32.mrf.mxu0
      %v2804 = vadd.f32 0.0, %v2803
      %v2805 = vpop.f32.mrf.mxu0
      %v2806 = vadd.f32 0.0, %v2805
      %2807 = vdwg.mxu0
      %v2808 = vadd.f32 %v2656, %v2724
      %v2809 = vadd.f32 %v2657, %v2726
      %v2810 = vadd.f32 %v2658, %v2729
      %v2811 = vadd.f32 %v2659, %v2731
      %v2812 = vadd.f32 %v2660, %v2734
      %v2813 = vadd.f32 %v2661, %v2736
      %v2814 = vadd.f32 %v2662, %v2739
      %v2815 = vadd.f32 %v2663, %v2741
      %v2816 = vadd.f32 %v2664, %v2744
      %v2817 = vadd.f32 %v2665, %v2746
      %v2818 = vadd.f32 %v2666, %v2749
      %v2819 = vadd.f32 %v2667, %v2751
      %v2820 = vadd.f32 %v2668, %v2754
      %v2821 = vadd.f32 %v2669, %v2756
      %v2822 = vadd.f32 %v2670, %v2759
      %v2823 = vadd.f32 %v2671, %v2761
      %v2824 = vadd.f32 %v2672, %v2764
      %v2825 = vadd.f32 %v2673, %v2766
      %v2826 = vadd.f32 %v2674, %v2769
      %v2827 = vadd.f32 %v2675, %v2771
      %v2828 = vadd.f32 %v2676, %v2774
      %v2829 = vadd.f32 %v2677, %v2776
      %v2830 = vadd.f32 %v2678, %v2779
      %v2831 = vadd.f32 %v2679, %v2781
      %v2832 = vadd.f32 %v2680, %v2784
      %v2833 = vadd.f32 %v2681, %v2786
      %v2834 = vadd.f32 %v2682, %v2789
      %v2835 = vadd.f32 %v2683, %v2791
      %v2836 = vadd.f32 %v2684, %v2794
      %v2837 = vadd.f32 %v2685, %v2796
      %v2838 = vadd.f32 %v2686, %v2799
      %v2839 = vadd.f32 %v2687, %v2801
      %v2840 = vadd.f32 %v2688, %v2804
      %v2841 = vadd.f32 %v2689, %v2806
      %s2842 = scalar_lea.vmem %s3, 14
      %v2843 = vld [vmem:[%s2842] sm:$0x3]
      %v2846 = vunpack.c.l.b16 %v1003
      %v2847 = vunpack.c.l.b16 %v1004
      %v2848 = vpack.c.b16 %v2847, %v2846
      %v2849 = vshrl.u32 %v1145, 16
      %v2851 = vshll.u32 %v1145, 16
      %v2853 = vrot.slane %v2851, 1
      %v2854 = vor.u32 %v2849, %v2853
      %v2855 = vshll.u32 %v1146, 16
      %v2857 = vrot.slane %v2855, 1
      %v2858 = vsel %vm1549, %v2854, %v2857
      %v2859 = vshrl.u32 %v1146, 16
      %v2861 = vor.u32 %v2859, %v2857
      %v2862 = vshll.u32 %v1147, 16
      %v2864 = vrot.slane %v2862, 1
      %v2865 = vsel %vm1549, %v2861, %v2864
      %v2866 = vshrl.u32 %v1147, 16
      %v2868 = vor.u32 %v2866, %v2864
      %v2869 = vshll.u32 %v1148, 16
      %v2871 = vrot.slane %v2869, 1
      %v2872 = vsel %vm1549, %v2868, %v2871
      %v2873 = vshrl.u32 %v1148, 16
      %v2875 = vor.u32 %v2873, %v2871
      %v2876 = vshll.u32 %v1149, 16
      %v2878 = vrot.slane %v2876, 1
      %v2879 = vsel %vm1549, %v2875, %v2878
      %v2880 = vshrl.u32 %v1149, 16
      %v2882 = vor.u32 %v2880, %v2878
      %v2883 = vshll.u32 %v1150, 16
      %v2885 = vrot.slane %v2883, 1
      %v2886 = vsel %vm1549, %v2882, %v2885
      %v2887 = vshrl.u32 %v1150, 16
      %v2889 = vor.u32 %v2887, %v2885
      %v2890 = vshll.u32 %v1151, 16
      %v2892 = vrot.slane %v2890, 1
      %v2893 = vsel %vm1549, %v2889, %v2892
      %v2894 = vshrl.u32 %v1151, 16
      %v2896 = vor.u32 %v2894, %v2892
      %v2897 = vshll.u32 %v1152, 16
      %v2899 = vrot.slane %v2897, 1
      %v2900 = vsel %vm1549, %v2896, %v2899
      %v2901 = vshrl.u32 %v1152, 16
      %v2903 = vor.u32 %v2901, %v2899
      %v2904 = vshll.u32 %v1153, 16
      %v2906 = vrot.slane %v2904, 1
      %v2907 = vsel %vm1549, %v2903, %v2906
      %v2908 = vshrl.u32 %v1153, 16
      %v2910 = vor.u32 %v2908, %v2906
      %v2911 = vshll.u32 %v1154, 16
      %v2913 = vrot.slane %v2911, 1
      %v2914 = vsel %vm1549, %v2910, %v2913
      %v2915 = vshrl.u32 %v1154, 16
      %v2917 = vor.u32 %v2915, %v2913
      %v2918 = vshll.u32 %v1155, 16
      %v2920 = vrot.slane %v2918, 1
      %v2921 = vsel %vm1549, %v2917, %v2920
      %v2922 = vshrl.u32 %v1155, 16
      %v2924 = vor.u32 %v2922, %v2920
      %v2925 = vshll.u32 %v1156, 16
      %v2927 = vrot.slane %v2925, 1
      %v2928 = vsel %vm1549, %v2924, %v2927
      %v2929 = vshrl.u32 %v1156, 16
      %v2931 = vor.u32 %v2929, %v2927
      %v2932 = vshll.u32 %v1157, 16
      %v2934 = vrot.slane %v2932, 1
      %v2935 = vsel %vm1549, %v2931, %v2934
      %v2936 = vshrl.u32 %v1157, 16
      %v2938 = vor.u32 %v2936, %v2934
      %v2939 = vshll.u32 %v1158, 16
      %v2941 = vrot.slane %v2939, 1
      %v2942 = vsel %vm1549, %v2938, %v2941
      %v2943 = vshrl.u32 %v1158, 16
      %v2945 = vor.u32 %v2943, %v2941
      %v2946 = vshll.u32 %v1159, 16
      %v2948 = vrot.slane %v2946, 1
      %v2949 = vsel %vm1549, %v2945, %v2948
      %v2950 = vshrl.u32 %v1159, 16
      %v2952 = vor.u32 %v2950, %v2948
      %v2953 = vshll.u32 %v1160, 16
      %v2955 = vrot.slane %v2953, 1
      %v2956 = vsel %vm1549, %v2952, %v2955
      %v2957 = vshrl.u32 %v1160, 16
      %v2959 = vor.u32 %v2957, %v2955
      %v2961 = vshll.u32 %v2848, 16
      %v2963 = vrot.slane %v2961, 1
      %v2964 = vsel %vm1549, %v2959, %v2963
      %v2965 = vshrl.u32 %v2848, 16
      %v2967 = vor.u32 %v2965, %v2963
      %v2969 = vsel %vm1161, %v2858, 0
      %v2972 = vsel %vm1161, %v2865, 0
      %v2975 = vsel %vm1161, %v2872, 0
      %v2978 = vsel %vm1161, %v2879, 0
      %v2981 = vsel %vm1161, %v2886, 0
      %v2984 = vsel %vm1161, %v2893, 0
      %v2987 = vsel %vm1161, %v2900, 0
      %v2990 = vsel %vm1161, %v2907, 0
      %v2993 = vsel %vm1161, %v2914, 0
      %v2996 = vsel %vm1161, %v2921, 0
      %v2999 = vsel %vm1161, %v2928, 0
      %v3002 = vsel %vm1161, %v2935, 0
      %v3005 = vsel %vm1161, %v2942, 0
      %v3008 = vsel %vm1161, %v2949, 0
      %v3011 = vsel %vm1161, %v2956, 0
      %v3014 = vsel %vm1161, %v2964, 0
      %v3017 = vsel %vm1161, %v2967, 0
      %v3020 = vand.u32 %v2843, %v1216
      %3022 = vmatpush.bf16.msra.mxu0 0
      %3023 = vmatpush.bf16.msra.mxu0 0
      %3024 = vmatpush.bf16.msra.mxu0 0
      %3025 = vmatpush.bf16.msra.mxu0 0
      %3026 = vmatpush.bf16.msra.mxu0 0
      %3027 = vmatpush.bf16.msra.mxu0 0
      %3028 = vmatpush.bf16.msra.mxu0 0
      %3029 = vmatpush.bf16.msra.mxu0 %v3020
      %3030 = vmatmul.bf16.gmra.mxu0 %v2969
      %v3031 = vpop.f32.mrf.mxu0
      %v3032 = vadd.f32 0.0, %v3031
      %v3033 = vpop.f32.mrf.mxu0
      %v3034 = vadd.f32 0.0, %v3033
      %3035 = vmatmul.bf16.gmra.mxu0 %v2972
      %v3036 = vpop.f32.mrf.mxu0
      %v3037 = vadd.f32 0.0, %v3036
      %v3038 = vpop.f32.mrf.mxu0
      %v3039 = vadd.f32 0.0, %v3038
      %3040 = vmatmul.bf16.gmra.mxu0 %v2975
      %v3041 = vpop.f32.mrf.mxu0
      %v3042 = vadd.f32 0.0, %v3041
      %v3043 = vpop.f32.mrf.mxu0
      %v3044 = vadd.f32 0.0, %v3043
      %3045 = vmatmul.bf16.gmra.mxu0 %v2978
      %v3046 = vpop.f32.mrf.mxu0
      %v3047 = vadd.f32 0.0, %v3046
      %v3048 = vpop.f32.mrf.mxu0
      %v3049 = vadd.f32 0.0, %v3048
      %3050 = vmatmul.bf16.gmra.mxu0 %v2981
      %v3051 = vpop.f32.mrf.mxu0
      %v3052 = vadd.f32 0.0, %v3051
      %v3053 = vpop.f32.mrf.mxu0
      %v3054 = vadd.f32 0.0, %v3053
      %3055 = vmatmul.bf16.gmra.mxu0 %v2984
      %v3056 = vpop.f32.mrf.mxu0
      %v3057 = vadd.f32 0.0, %v3056
      %v3058 = vpop.f32.mrf.mxu0
      %v3059 = vadd.f32 0.0, %v3058
      %3060 = vmatmul.bf16.gmra.mxu0 %v2987
      %v3061 = vpop.f32.mrf.mxu0
      %v3062 = vadd.f32 0.0, %v3061
      %v3063 = vpop.f32.mrf.mxu0
      %v3064 = vadd.f32 0.0, %v3063
      %3065 = vmatmul.bf16.gmra.mxu0 %v2990
      %v3066 = vpop.f32.mrf.mxu0
      %v3067 = vadd.f32 0.0, %v3066
      %v3068 = vpop.f32.mrf.mxu0
      %v3069 = vadd.f32 0.0, %v3068
      %3070 = vmatmul.bf16.gmra.mxu0 %v2993
      %v3071 = vpop.f32.mrf.mxu0
      %v3072 = vadd.f32 0.0, %v3071
      %v3073 = vpop.f32.mrf.mxu0
      %v3074 = vadd.f32 0.0, %v3073
      %3075 = vmatmul.bf16.gmra.mxu0 %v2996
      %v3076 = vpop.f32.mrf.mxu0
      %v3077 = vadd.f32 0.0, %v3076
      %v3078 = vpop.f32.mrf.mxu0
      %v3079 = vadd.f32 0.0, %v3078
      %3080 = vmatmul.bf16.gmra.mxu0 %v2999
      %v3081 = vpop.f32.mrf.mxu0
      %v3082 = vadd.f32 0.0, %v3081
      %v3083 = vpop.f32.mrf.mxu0
      %v3084 = vadd.f32 0.0, %v3083
      %3085 = vmatmul.bf16.gmra.mxu0 %v3002
      %v3086 = vpop.f32.mrf.mxu0
      %v3087 = vadd.f32 0.0, %v3086
      %v3088 = vpop.f32.mrf.mxu0
      %v3089 = vadd.f32 0.0, %v3088
      %3090 = vmatmul.bf16.gmra.mxu0 %v3005
      %v3091 = vpop.f32.mrf.mxu0
      %v3092 = vadd.f32 0.0, %v3091
      %v3093 = vpop.f32.mrf.mxu0
      %v3094 = vadd.f32 0.0, %v3093
      %3095 = vmatmul.bf16.gmra.mxu0 %v3008
      %v3096 = vpop.f32.mrf.mxu0
      %v3097 = vadd.f32 0.0, %v3096
      %v3098 = vpop.f32.mrf.mxu0
      %v3099 = vadd.f32 0.0, %v3098
      %3100 = vmatmul.bf16.gmra.mxu0 %v3011
      %v3101 = vpop.f32.mrf.mxu0
      %v3102 = vadd.f32 0.0, %v3101
      %v3103 = vpop.f32.mrf.mxu0
      %v3104 = vadd.f32 0.0, %v3103
      %3105 = vmatmul.bf16.gmra.mxu0 %v3014
      %v3106 = vpop.f32.mrf.mxu0
      %v3107 = vadd.f32 0.0, %v3106
      %v3108 = vpop.f32.mrf.mxu0
      %v3109 = vadd.f32 0.0, %v3108
      %3110 = vmatmul.bf16.gmra.mxu0 %v3017
      %v3111 = vpop.f32.mrf.mxu0
      %v3112 = vadd.f32 0.0, %v3111
      %v3113 = vpop.f32.mrf.mxu0
      %v3114 = vadd.f32 0.0, %v3113
      %3115 = vdwg.mxu0
      %v3116 = vadd.f32 %v2808, %v3032
      %v3117 = vadd.f32 %v2809, %v3034
      %v3118 = vadd.f32 %v2810, %v3037
      %v3119 = vadd.f32 %v2811, %v3039
      %v3120 = vadd.f32 %v2812, %v3042
      %v3121 = vadd.f32 %v2813, %v3044
      %v3122 = vadd.f32 %v2814, %v3047
      %v3123 = vadd.f32 %v2815, %v3049
      %v3124 = vadd.f32 %v2816, %v3052
      %v3125 = vadd.f32 %v2817, %v3054
      %v3126 = vadd.f32 %v2818, %v3057
      %v3127 = vadd.f32 %v2819, %v3059
      %v3128 = vadd.f32 %v2820, %v3062
      %v3129 = vadd.f32 %v2821, %v3064
      %v3130 = vadd.f32 %v2822, %v3067
      %v3131 = vadd.f32 %v2823, %v3069
      %v3132 = vadd.f32 %v2824, %v3072
      %v3133 = vadd.f32 %v2825, %v3074
      %v3134 = vadd.f32 %v2826, %v3077
      %v3135 = vadd.f32 %v2827, %v3079
      %v3136 = vadd.f32 %v2828, %v3082
      %v3137 = vadd.f32 %v2829, %v3084
      %v3138 = vadd.f32 %v2830, %v3087
      %v3139 = vadd.f32 %v2831, %v3089
      %v3140 = vadd.f32 %v2832, %v3092
      %v3141 = vadd.f32 %v2833, %v3094
      %v3142 = vadd.f32 %v2834, %v3097
      %v3143 = vadd.f32 %v2835, %v3099
      %v3144 = vadd.f32 %v2836, %v3102
      %v3145 = vadd.f32 %v2837, %v3104
      %v3146 = vadd.f32 %v2838, %v3107
      %v3147 = vadd.f32 %v2839, %v3109
      %v3148 = vadd.f32 %v2840, %v3112
      %v3149 = vadd.f32 %v2841, %v3114
      %s3150 = scalar_lea.vmem %s3, 16
      %v3151 = vld [vmem:[%s3150] sm:$0x3]
      %v3153 = vunpack.c.l.b16 %v968
      %v3154 = vpack.c.b16 %v3153, %v3153
      %vm3155 = vcmask 1046528
      %v3156 = vrot.slane %v1383, 1
      %v3157 = vrot.slane %v1384, 1
      %v3158 = vsel %vm3155, %v3156, %v3157
      %v3159 = vrot.slane %v1385, 1
      %v3160 = vsel %vm3155, %v3157, %v3159
      %v3161 = vrot.slane %v1386, 1
      %v3162 = vsel %vm3155, %v3159, %v3161
      %v3163 = vrot.slane %v1387, 1
      %v3164 = vsel %vm3155, %v3161, %v3163
      %v3165 = vrot.slane %v1388, 1
      %v3166 = vsel %vm3155, %v3163, %v3165
      %v3167 = vrot.slane %v1389, 1
      %v3168 = vsel %vm3155, %v3165, %v3167
      %v3169 = vrot.slane %v1390, 1
      %v3170 = vsel %vm3155, %v3167, %v3169
      %v3171 = vrot.slane %v1391, 1
      %v3172 = vsel %vm3155, %v3169, %v3171
      %v3173 = vrot.slane %v1392, 1
      %v3174 = vsel %vm3155, %v3171, %v3173
      %v3175 = vrot.slane %v1393, 1
      %v3176 = vsel %vm3155, %v3173, %v3175
      %v3177 = vrot.slane %v1394, 1
      %v3178 = vsel %vm3155, %v3175, %v3177
      %v3179 = vrot.slane %v1395, 1
      %v3180 = vsel %vm3155, %v3177, %v3179
      %v3181 = vrot.slane %v1396, 1
      %v3182 = vsel %vm3155, %v3179, %v3181
      %v3183 = vrot.slane %v1397, 1
      %v3184 = vsel %vm3155, %v3181, %v3183
      %v3185 = vrot.slane %v1398, 1
      %v3186 = vsel %vm3155, %v3183, %v3185
      %v3187 = vrot.slane %v2696, 1
      %v3188 = vsel %vm3155, %v3185, %v3187
      %v3189 = vrot.slane %v3154, 1
      %v3190 = vsel %vm3155, %v3187, %v3189
      %v3192 = vsel %vm1161, %v3158, 0
      %v3195 = vsel %vm1161, %v3160, 0
      %v3198 = vsel %vm1161, %v3162, 0
      %v3201 = vsel %vm1161, %v3164, 0
      %v3204 = vsel %vm1161, %v3166, 0
      %v3207 = vsel %vm1161, %v3168, 0
      %v3210 = vsel %vm1161, %v3170, 0
      %v3213 = vsel %vm1161, %v3172, 0
      %v3216 = vsel %vm1161, %v3174, 0
      %v3219 = vsel %vm1161, %v3176, 0
      %v3222 = vsel %vm1161, %v3178, 0
      %v3225 = vsel %vm1161, %v3180, 0
      %v3228 = vsel %vm1161, %v3182, 0
      %v3231 = vsel %vm1161, %v3184, 0
      %v3234 = vsel %vm1161, %v3186, 0
      %v3237 = vsel %vm1161, %v3188, 0
      %v3240 = vsel %vm1161, %v3190, 0
      %v3243 = vand.u32 %v3151, %v1216
      %3245 = vmatpush.bf16.msra.mxu0 0
      %3246 = vmatpush.bf16.msra.mxu0 0
      %3247 = vmatpush.bf16.msra.mxu0 0
      %3248 = vmatpush.bf16.msra.mxu0 0
      %3249 = vmatpush.bf16.msra.mxu0 0
      %3250 = vmatpush.bf16.msra.mxu0 0
      %3251 = vmatpush.bf16.msra.mxu0 0
      %3252 = vmatpush.bf16.msra.mxu0 %v3243
      %3253 = vmatmul.bf16.gmra.mxu0 %v3192
      %v3254 = vpop.f32.mrf.mxu0
      %v3255 = vadd.f32 0.0, %v3254
      %v3256 = vpop.f32.mrf.mxu0
      %v3257 = vadd.f32 0.0, %v3256
      %3258 = vmatmul.bf16.gmra.mxu0 %v3195
      %v3259 = vpop.f32.mrf.mxu0
      %v3260 = vadd.f32 0.0, %v3259
      %v3261 = vpop.f32.mrf.mxu0
      %v3262 = vadd.f32 0.0, %v3261
      %3263 = vmatmul.bf16.gmra.mxu0 %v3198
      %v3264 = vpop.f32.mrf.mxu0
      %v3265 = vadd.f32 0.0, %v3264
      %v3266 = vpop.f32.mrf.mxu0
      %v3267 = vadd.f32 0.0, %v3266
      %3268 = vmatmul.bf16.gmra.mxu0 %v3201
      %v3269 = vpop.f32.mrf.mxu0
      %v3270 = vadd.f32 0.0, %v3269
      %v3271 = vpop.f32.mrf.mxu0
      %v3272 = vadd.f32 0.0, %v3271
      %3273 = vmatmul.bf16.gmra.mxu0 %v3204
      %v3274 = vpop.f32.mrf.mxu0
      %v3275 = vadd.f32 0.0, %v3274
      %v3276 = vpop.f32.mrf.mxu0
      %v3277 = vadd.f32 0.0, %v3276
      %3278 = vmatmul.bf16.gmra.mxu0 %v3207
      %v3279 = vpop.f32.mrf.mxu0
      %v3280 = vadd.f32 0.0, %v3279
      %v3281 = vpop.f32.mrf.mxu0
      %v3282 = vadd.f32 0.0, %v3281
      %3283 = vmatmul.bf16.gmra.mxu0 %v3210
      %v3284 = vpop.f32.mrf.mxu0
      %v3285 = vadd.f32 0.0, %v3284
      %v3286 = vpop.f32.mrf.mxu0
      %v3287 = vadd.f32 0.0, %v3286
      %3288 = vmatmul.bf16.gmra.mxu0 %v3213
      %v3289 = vpop.f32.mrf.mxu0
      %v3290 = vadd.f32 0.0, %v3289
      %v3291 = vpop.f32.mrf.mxu0
      %v3292 = vadd.f32 0.0, %v3291
      %3293 = vmatmul.bf16.gmra.mxu0 %v3216
      %v3294 = vpop.f32.mrf.mxu0
      %v3295 = vadd.f32 0.0, %v3294
      %v3296 = vpop.f32.mrf.mxu0
      %v3297 = vadd.f32 0.0, %v3296
      %3298 = vmatmul.bf16.gmra.mxu0 %v3219
      %v3299 = vpop.f32.mrf.mxu0
      %v3300 = vadd.f32 0.0, %v3299
      %v3301 = vpop.f32.mrf.mxu0
      %v3302 = vadd.f32 0.0, %v3301
      %3303 = vmatmul.bf16.gmra.mxu0 %v3222
      %v3304 = vpop.f32.mrf.mxu0
      %v3305 = vadd.f32 0.0, %v3304
      %v3306 = vpop.f32.mrf.mxu0
      %v3307 = vadd.f32 0.0, %v3306
      %3308 = vmatmul.bf16.gmra.mxu0 %v3225
      %v3309 = vpop.f32.mrf.mxu0
      %v3310 = vadd.f32 0.0, %v3309
      %v3311 = vpop.f32.mrf.mxu0
      %v3312 = vadd.f32 0.0, %v3311
      %3313 = vmatmul.bf16.gmra.mxu0 %v3228
      %v3314 = vpop.f32.mrf.mxu0
      %v3315 = vadd.f32 0.0, %v3314
      %v3316 = vpop.f32.mrf.mxu0
      %v3317 = vadd.f32 0.0, %v3316
      %3318 = vmatmul.bf16.gmra.mxu0 %v3231
      %v3319 = vpop.f32.mrf.mxu0
      %v3320 = vadd.f32 0.0, %v3319
      %v3321 = vpop.f32.mrf.mxu0
      %v3322 = vadd.f32 0.0, %v3321
      %3323 = vmatmul.bf16.gmra.mxu0 %v3234
      %v3324 = vpop.f32.mrf.mxu0
      %v3325 = vadd.f32 0.0, %v3324
      %v3326 = vpop.f32.mrf.mxu0
      %v3327 = vadd.f32 0.0, %v3326
      %3328 = vmatmul.bf16.gmra.mxu0 %v3237
      %v3329 = vpop.f32.mrf.mxu0
      %v3330 = vadd.f32 0.0, %v3329
      %v3331 = vpop.f32.mrf.mxu0
      %v3332 = vadd.f32 0.0, %v3331
      %3333 = vmatmul.bf16.gmra.mxu0 %v3240
      %v3334 = vpop.f32.mrf.mxu0
      %v3335 = vadd.f32 0.0, %v3334
      %v3336 = vpop.f32.mrf.mxu0
      %v3337 = vadd.f32 0.0, %v3336
      %3338 = vdwg.mxu0
      %v3339 = vadd.f32 %v3116, %v3255
      %v3340 = vadd.f32 %v3117, %v3257
      %v3341 = vadd.f32 %v3118, %v3260
      %v3342 = vadd.f32 %v3119, %v3262
      %v3343 = vadd.f32 %v3120, %v3265
      %v3344 = vadd.f32 %v3121, %v3267
      %v3345 = vadd.f32 %v3122, %v3270
      %v3346 = vadd.f32 %v3123, %v3272
      %v3347 = vadd.f32 %v3124, %v3275
      %v3348 = vadd.f32 %v3125, %v3277
      %v3349 = vadd.f32 %v3126, %v3280
      %v3350 = vadd.f32 %v3127, %v3282
      %v3351 = vadd.f32 %v3128, %v3285
      %v3352 = vadd.f32 %v3129, %v3287
      %v3353 = vadd.f32 %v3130, %v3290
      %v3354 = vadd.f32 %v3131, %v3292
      %v3355 = vadd.f32 %v3132, %v3295
      %v3356 = vadd.f32 %v3133, %v3297
      %v3357 = vadd.f32 %v3134, %v3300
      %v3358 = vadd.f32 %v3135, %v3302
      %v3359 = vadd.f32 %v3136, %v3305
      %v3360 = vadd.f32 %v3137, %v3307
      %v3361 = vadd.f32 %v3138, %v3310
      %v3362 = vadd.f32 %v3139, %v3312
      %v3363 = vadd.f32 %v3140, %v3315
      %v3364 = vadd.f32 %v3141, %v3317
      %v3365 = vadd.f32 %v3142, %v3320
      %v3366 = vadd.f32 %v3143, %v3322
      %v3367 = vadd.f32 %v3144, %v3325
      %v3368 = vadd.f32 %v3145, %v3327
      %v3369 = vadd.f32 %v3146, %v3330
      %v3370 = vadd.f32 %v3147, %v3332
      %v3371 = vadd.f32 %v3148, %v3335
      %v3372 = vadd.f32 %v3149, %v3337
      %v3373 = vld [vmem:[%s5] sm:$0x1]
      %v3375 = vperm.slane %v3373, 0
      %v3377 = vadd.f32 %v3339, %v3375
      %v3378 = vadd.f32 %v3340, %v3375
      %v3379 = vadd.f32 %v3341, %v3375
      %v3380 = vadd.f32 %v3342, %v3375
      %v3381 = vadd.f32 %v3343, %v3375
      %v3382 = vadd.f32 %v3344, %v3375
      %v3383 = vadd.f32 %v3345, %v3375
      %v3384 = vadd.f32 %v3346, %v3375
      %v3385 = vadd.f32 %v3347, %v3375
      %v3386 = vadd.f32 %v3348, %v3375
      %v3387 = vadd.f32 %v3349, %v3375
      %v3388 = vadd.f32 %v3350, %v3375
      %v3389 = vadd.f32 %v3351, %v3375
      %v3390 = vadd.f32 %v3352, %v3375
      %v3391 = vadd.f32 %v3353, %v3375
      %v3392 = vadd.f32 %v3354, %v3375
      %v3393 = vadd.f32 %v3355, %v3375
      %v3394 = vadd.f32 %v3356, %v3375
      %v3395 = vadd.f32 %v3357, %v3375
      %v3396 = vadd.f32 %v3358, %v3375
      %v3397 = vadd.f32 %v3359, %v3375
      %v3398 = vadd.f32 %v3360, %v3375
      %v3399 = vadd.f32 %v3361, %v3375
      %v3400 = vadd.f32 %v3362, %v3375
      %v3401 = vadd.f32 %v3363, %v3375
      %v3402 = vadd.f32 %v3364, %v3375
      %v3403 = vadd.f32 %v3365, %v3375
      %v3404 = vadd.f32 %v3366, %v3375
      %v3405 = vadd.f32 %v3367, %v3375
      %v3406 = vadd.f32 %v3368, %v3375
      %v3407 = vadd.f32 %v3369, %v3375
      %v3408 = vadd.f32 %v3370, %v3375
      %v3409 = vadd.f32 %v3371, %v3375
      %v3410 = vadd.f32 %v3372, %v3375
      %v3411 = vmax.f32 %v3377, 0.0
      %v3412 = vmax.f32 %v3378, 0.0
      %v3413 = vmax.f32 %v3379, 0.0
      %v3414 = vmax.f32 %v3380, 0.0
      %v3415 = vmax.f32 %v3381, 0.0
      %v3416 = vmax.f32 %v3382, 0.0
      %v3417 = vmax.f32 %v3383, 0.0
      %v3418 = vmax.f32 %v3384, 0.0
      %v3419 = vmax.f32 %v3385, 0.0
      %v3420 = vmax.f32 %v3386, 0.0
      %v3421 = vmax.f32 %v3387, 0.0
      %v3422 = vmax.f32 %v3388, 0.0
      %v3423 = vmax.f32 %v3389, 0.0
      %v3424 = vmax.f32 %v3390, 0.0
      %v3425 = vmax.f32 %v3391, 0.0
      %v3426 = vmax.f32 %v3392, 0.0
      %v3427 = vmax.f32 %v3393, 0.0
      %v3428 = vmax.f32 %v3394, 0.0
      %v3429 = vmax.f32 %v3395, 0.0
      %v3430 = vmax.f32 %v3396, 0.0
      %v3431 = vmax.f32 %v3397, 0.0
      %v3432 = vmax.f32 %v3398, 0.0
      %v3433 = vmax.f32 %v3399, 0.0
      %v3434 = vmax.f32 %v3400, 0.0
      %v3435 = vmax.f32 %v3401, 0.0
      %v3436 = vmax.f32 %v3402, 0.0
      %v3437 = vmax.f32 %v3403, 0.0
      %v3438 = vmax.f32 %v3404, 0.0
      %v3439 = vmax.f32 %v3405, 0.0
      %v3440 = vmax.f32 %v3406, 0.0
      %v3441 = vmax.f32 %v3407, 0.0
      %v3442 = vmax.f32 %v3408, 0.0
      %v3443 = vmax.f32 %v3409, 0.0
      %v3444 = vmax.f32 %v3410, 0.0
      %v3445 = vpack.c.bf16 %v3412, %v3411
      %v3446 = vpack.c.bf16 %v3414, %v3413
      %v3447 = vpack.c.bf16 %v3416, %v3415
      %v3448 = vpack.c.bf16 %v3418, %v3417
      %v3449 = vpack.c.bf16 %v3420, %v3419
      %v3450 = vpack.c.bf16 %v3422, %v3421
      %v3451 = vpack.c.bf16 %v3424, %v3423
      %v3452 = vpack.c.bf16 %v3426, %v3425
      %v3453 = vpack.c.bf16 %v3428, %v3427
      %v3454 = vpack.c.bf16 %v3430, %v3429
      %v3455 = vpack.c.bf16 %v3432, %v3431
      %v3456 = vpack.c.bf16 %v3434, %v3433
      %v3457 = vpack.c.bf16 %v3436, %v3435
      %v3458 = vpack.c.bf16 %v3438, %v3437
      %v3459 = vpack.c.bf16 %v3440, %v3439
      %v3460 = vpack.c.bf16 %v3442, %v3441
      %v3461 = vpack.c.bf16 %v3444, %v3443
      %v3462 = vld [vmem:[%s7] sm:$0xff]
      %v3463 = vld [vmem:[%s7 + $0x8] sm:$0xf]
      %v3464 = vld [vmem:[%s7 + $0xc] sm:$0xff]
      %v3465 = vld [vmem:[%s7 + $0x14] sm:$0xf]
      %v3466 = vld [vmem:[%s7 + $0x18] sm:$0xff]
      %v3467 = vld [vmem:[%s7 + $0x20] sm:$0xf]
      %v3468 = vld [vmem:[%s7 + $0x24] sm:$0xff]
      %v3469 = vld [vmem:[%s7 + $0x2c] sm:$0xf]
      %v3470 = vld [vmem:[%s7 + $0x30] sm:$0xff]
      %v3471 = vld [vmem:[%s7 + $0x38] sm:$0xf]
      %v3472 = vld [vmem:[%s7 + $0x3c] sm:$0xff]
      %v3473 = vld [vmem:[%s7 + $0x44] sm:$0xf]
      %v3474 = vld [vmem:[%s7 + $0x48] sm:$0xff]
      %v3475 = vld [vmem:[%s7 + $0x50] sm:$0xf]
      %v3476 = vld [vmem:[%s7 + $0x54] sm:$0xff]
      %v3477 = vld [vmem:[%s7 + $0x5c] sm:$0xf]
      %v3478 = vld [vmem:[%s7 + $0x60] sm:$0xff]
      %v3479 = vld [vmem:[%s7 + $0x68] sm:$0xf]
      %v3480 = vld [vmem:[%s7 + $0x6c] sm:$0xff]
      %v3481 = vld [vmem:[%s7 + $0x74] sm:$0xf]
      %v3482 = vld [vmem:[%s7 + $0x78] sm:$0xff]
      %v3483 = vld [vmem:[%s7 + $0x80] sm:$0xf]
      %v3484 = vld [vmem:[%s7 + $0x84] sm:$0xff]
      %v3485 = vld [vmem:[%s7 + $0x8c] sm:$0xf]
      %v3486 = vld [vmem:[%s7 + $0x90] sm:$0xff]
      %v3487 = vld [vmem:[%s7 + $0x98] sm:$0xf]
      %v3488 = vld [vmem:[%s7 + $0x9c] sm:$0xff]
      %v3489 = vld [vmem:[%s7 + $0xa4] sm:$0xf]
      %v3490 = vld [vmem:[%s7 + $0xa8] sm:$0xff]
      %v3491 = vld [vmem:[%s7 + $0xb0] sm:$0xf]
      %v3492 = vld [vmem:[%s7 + $0xb4] sm:$0xff]
      %v3493 = vld [vmem:[%s7 + $0xbc] sm:$0xf]
      %v3494 = vld [vmem:[%s7 + $0xc0] sm:$0xff]
      %v3495 = vld [vmem:[%s7 + $0xc8] sm:$0xf]
      %v3496 = vld [vmem:[%s7 + $0xcc] sm:$0xff]
      %v3497 = vld [vmem:[%s7 + $0xd4] sm:$0xf]
      %v3498 = vld [vmem:[%s7 + $0xd8] sm:$0xff]
      %v3499 = vld [vmem:[%s7 + $0xe0] sm:$0xf]
      %v3500 = vld [vmem:[%s7 + $0xe4] sm:$0xff]
      %v3501 = vld [vmem:[%s7 + $0xec] sm:$0xf]
      %v3502 = vld [vmem:[%s7 + $0xf0] sm:$0xff]
      %v3503 = vld [vmem:[%s7 + $0xf8] sm:$0xf]
      %v3504 = vld [vmem:[%s7 + $0xfc] sm:$0xff]
      %v3505 = vld [vmem:[%s7 + $0x104] sm:$0xf]
      %v3506 = vld [vmem:[%s7 + $0x108] sm:$0xff]
      %v3507 = vld [vmem:[%s7 + $0x110] sm:$0xf]
      %v3508 = vld [vmem:[%s7 + $0x114] sm:$0xff]
      %v3509 = vld [vmem:[%s7 + $0x11c] sm:$0xf]
      %v3510 = vld [vmem:[%s7 + $0x120] sm:$0xff]
      %v3511 = vld [vmem:[%s7 + $0x128] sm:$0xf]
      %v3512 = vld [vmem:[%s7 + $0x12c] sm:$0xff]
      %v3513 = vld [vmem:[%s7 + $0x134] sm:$0xf]
      %v3514 = vld [vmem:[%s7 + $0x138] sm:$0xff]
      %v3515 = vld [vmem:[%s7 + $0x140] sm:$0xf]
      %v3516 = vld [vmem:[%s7 + $0x144] sm:$0xff]
      %v3517 = vld [vmem:[%s7 + $0x14c] sm:$0xf]
      %v3518 = vld [vmem:[%s7 + $0x150] sm:$0xff]
      %v3519 = vld [vmem:[%s7 + $0x158] sm:$0xf]
      %v3520 = vld [vmem:[%s7 + $0x15c] sm:$0xff]
      %v3521 = vld [vmem:[%s7 + $0x164] sm:$0xf]
      %v3522 = vld [vmem:[%s7 + $0x168] sm:$0xff]
      %v3523 = vld [vmem:[%s7 + $0x170] sm:$0xf]
      %v3524 = vld [vmem:[%s7 + $0x174] sm:$0xff]
      %v3525 = vld [vmem:[%s7 + $0x17c] sm:$0xf]
      %v3526 = vld [vmem:[%s7 + $0x180] sm:$0xff]
      %v3527 = vld [vmem:[%s7 + $0x188] sm:$0xf]
      %v3528 = vld [vmem:[%s7 + $0x18c] sm:$0xff]
      %v3529 = vld [vmem:[%s7 + $0x194] sm:$0xf]
      %v3530 = vld [vmem:[%s7 + $0x198] sm:$0xff]
      %v3531 = vld [vmem:[%s7 + $0x1a0] sm:$0xf]
      %v3532 = vld [vmem:[%s7 + $0x1a4] sm:$0xff]
      %v3533 = vld [vmem:[%s7 + $0x1ac] sm:$0xf]
      %v3534 = vld [vmem:[%s7 + $0x1b0] sm:$0xff]
      %v3535 = vld [vmem:[%s7 + $0x1b8] sm:$0xf]
      %v3536 = vld [vmem:[%s7 + $0x1bc] sm:$0xff]
      %v3537 = vld [vmem:[%s7 + $0x1c4] sm:$0xf]
      %v3538 = vld [vmem:[%s7 + $0x1c8] sm:$0xff]
      %v3539 = vld [vmem:[%s7 + $0x1d0] sm:$0xf]
      %v3540 = vld [vmem:[%s7 + $0x1d4] sm:$0xff]
      %v3541 = vld [vmem:[%s7 + $0x1dc] sm:$0xf]
      %v3542 = vld [vmem:[%s7 + $0x1e0] sm:$0x33]
      %v3543 = vld [vmem:[%s7 + $0x1e8] sm:$0x3]
      %v3626 = vunpack.c.l.b16 %v3462
      %v3627 = vunpack.c.h.b16 %v3462
      %v3628 = vunpack.c.l.b16 %v3463
      %v3629 = vunpack.c.l.b16 %v3464
      %v3630 = vunpack.c.h.b16 %v3464
      %v3631 = vunpack.c.l.b16 %v3465
      %v3632 = vunpack.c.l.b16 %v3466
      %v3633 = vunpack.c.h.b16 %v3466
      %v3634 = vunpack.c.l.b16 %v3467
      %v3635 = vunpack.c.l.b16 %v3468
      %v3636 = vunpack.c.h.b16 %v3468
      %v3637 = vunpack.c.l.b16 %v3469
      %v3638 = vunpack.c.l.b16 %v3470
      %v3639 = vunpack.c.h.b16 %v3470
      %v3640 = vunpack.c.l.b16 %v3471
      %v3641 = vunpack.c.l.b16 %v3472
      %v3642 = vunpack.c.h.b16 %v3472
      %v3643 = vunpack.c.l.b16 %v3473
      %v3644 = vunpack.c.l.b16 %v3474
      %v3645 = vunpack.c.h.b16 %v3474
      %v3646 = vunpack.c.l.b16 %v3475
      %v3647 = vunpack.c.l.b16 %v3476
      %v3648 = vunpack.c.h.b16 %v3476
      %v3649 = vunpack.c.l.b16 %v3477
      %v3650 = vunpack.c.l.b16 %v3478
      %v3651 = vunpack.c.h.b16 %v3478
      %v3652 = vunpack.c.l.b16 %v3479
      %v3653 = vunpack.c.l.b16 %v3480
      %v3654 = vunpack.c.h.b16 %v3480
      %v3655 = vunpack.c.l.b16 %v3481
      %v3656 = vunpack.c.l.b16 %v3482
      %v3657 = vunpack.c.h.b16 %v3482
      %v3658 = vunpack.c.l.b16 %v3483
      %v3659 = vunpack.c.l.b16 %v3484
      %v3660 = vunpack.c.h.b16 %v3484
      %v3661 = vunpack.c.l.b16 %v3485
      %v3662 = vunpack.c.l.b16 %v3486
      %v3663 = vunpack.c.h.b16 %v3486
      %v3664 = vunpack.c.l.b16 %v3487
      %v3665 = vunpack.c.l.b16 %v3488
      %v3666 = vunpack.c.h.b16 %v3488
      %v3667 = vunpack.c.l.b16 %v3489
      %v3668 = vunpack.c.l.b16 %v3490
      %v3669 = vunpack.c.h.b16 %v3490
      %v3670 = vunpack.c.l.b16 %v3491
      %v3671 = vunpack.c.l.b16 %v3492
      %v3672 = vunpack.c.h.b16 %v3492
      %v3673 = vunpack.c.l.b16 %v3493
      %v3674 = vunpack.c.l.b16 %v3494
      %v3675 = vunpack.c.h.b16 %v3494
      %v3676 = vunpack.c.l.b16 %v3495
      %v3677 = vunpack.c.l.b16 %v3496
      %v3678 = vunpack.c.h.b16 %v3496
      %v3679 = vunpack.c.l.b16 %v3497
      %v3680 = vunpack.c.l.b16 %v3498
      %v3681 = vunpack.c.h.b16 %v3498
      %v3682 = vunpack.c.l.b16 %v3499
      %v3683 = vunpack.c.l.b16 %v3500
      %v3684 = vunpack.c.h.b16 %v3500
      %v3685 = vunpack.c.l.b16 %v3501
      %v3686 = vunpack.c.l.b16 %v3502
      %v3687 = vunpack.c.h.b16 %v3502
      %v3688 = vunpack.c.l.b16 %v3503
      %v3689 = vunpack.c.l.b16 %v3504
      %v3690 = vunpack.c.h.b16 %v3504
      %v3691 = vunpack.c.l.b16 %v3505
      %v3692 = vunpack.c.l.b16 %v3506
      %v3693 = vunpack.c.h.b16 %v3506
      %v3694 = vunpack.c.l.b16 %v3507
      %v3695 = vunpack.c.l.b16 %v3508
      %v3696 = vunpack.c.h.b16 %v3508
      %v3697 = vunpack.c.l.b16 %v3509
      %v3698 = vunpack.c.l.b16 %v3510
      %v3699 = vunpack.c.h.b16 %v3510
      %v3700 = vunpack.c.l.b16 %v3511
      %v3701 = vunpack.c.l.b16 %v3512
      %v3702 = vunpack.c.h.b16 %v3512
      %v3703 = vunpack.c.l.b16 %v3513
      %v3704 = vunpack.c.l.b16 %v3514
      %v3705 = vunpack.c.h.b16 %v3514
      %v3706 = vunpack.c.l.b16 %v3515
      %v3707 = vunpack.c.l.b16 %v3516
      %v3708 = vunpack.c.h.b16 %v3516
      %v3709 = vunpack.c.l.b16 %v3517
      %v3710 = vunpack.c.l.b16 %v3518
      %v3711 = vunpack.c.h.b16 %v3518
      %v3712 = vunpack.c.l.b16 %v3519
      %v3713 = vunpack.c.l.b16 %v3520
      %v3714 = vunpack.c.h.b16 %v3520
      %v3715 = vunpack.c.l.b16 %v3521
      %v3716 = vunpack.c.l.b16 %v3522
      %v3717 = vunpack.c.h.b16 %v3522
      %v3718 = vunpack.c.l.b16 %v3523
      %v3719 = vunpack.c.l.b16 %v3524
      %v3720 = vunpack.c.h.b16 %v3524
      %v3721 = vunpack.c.l.b16 %v3525
      %v3722 = vunpack.c.l.b16 %v3526
      %v3723 = vunpack.c.h.b16 %v3526
      %v3724 = vunpack.c.l.b16 %v3527
      %v3725 = vunpack.c.l.b16 %v3528
      %v3726 = vunpack.c.h.b16 %v3528
      %v3727 = vunpack.c.l.b16 %v3529
      %v3728 = vunpack.c.l.b16 %v3530
      %v3729 = vunpack.c.h.b16 %v3530
      %v3730 = vunpack.c.l.b16 %v3531
      %v3731 = vunpack.c.l.b16 %v3532
      %v3732 = vunpack.c.h.b16 %v3532
      %v3733 = vunpack.c.l.b16 %v3533
      %v3734 = vunpack.c.l.b16 %v3534
      %v3735 = vunpack.c.h.b16 %v3534
      %v3736 = vunpack.c.l.b16 %v3535
      %v3737 = vunpack.c.l.b16 %v3536
      %v3738 = vunpack.c.h.b16 %v3536
      %v3739 = vunpack.c.l.b16 %v3537
      %v3740 = vunpack.c.l.b16 %v3538
      %v3741 = vunpack.c.h.b16 %v3538
      %v3742 = vunpack.c.l.b16 %v3539
      %v3743 = vunpack.c.l.b16 %v3540
      %v3744 = vunpack.c.h.b16 %v3540
      %v3745 = vunpack.c.l.b16 %v3541
      %v3746 = vunpack.c.l.b16 %v3542
      %v3747 = vunpack.c.h.b16 %v3542
      %v3748 = vunpack.c.l.b16 %v3543
      %v3749 = vpack.c.b16 %v3629, %v3626
      %v3750 = vpack.c.b16 %v3630, %v3627
      %v3751 = vpack.c.b16 %v3631, %v3628
      %v3752 = vpack.c.b16 %v3635, %v3632
      %v3753 = vpack.c.b16 %v3636, %v3633
      %v3754 = vpack.c.b16 %v3637, %v3634
      %v3755 = vpack.c.b16 %v3641, %v3638
      %v3756 = vpack.c.b16 %v3642, %v3639
      %v3757 = vpack.c.b16 %v3643, %v3640
      %v3758 = vpack.c.b16 %v3647, %v3644
      %v3759 = vpack.c.b16 %v3648, %v3645
      %v3760 = vpack.c.b16 %v3649, %v3646
      %v3761 = vpack.c.b16 %v3653, %v3650
      %v3762 = vpack.c.b16 %v3654, %v3651
      %v3763 = vpack.c.b16 %v3655, %v3652
      %v3764 = vpack.c.b16 %v3659, %v3656
      %v3765 = vpack.c.b16 %v3660, %v3657
      %v3766 = vpack.c.b16 %v3661, %v3658
      %v3767 = vpack.c.b16 %v3665, %v3662
      %v3768 = vpack.c.b16 %v3666, %v3663
      %v3769 = vpack.c.b16 %v3667, %v3664
      %v3770 = vpack.c.b16 %v3671, %v3668
      %v3771 = vpack.c.b16 %v3672, %v3669
      %v3772 = vpack.c.b16 %v3673, %v3670
      %v3773 = vpack.c.b16 %v3677, %v3674
      %v3774 = vpack.c.b16 %v3678, %v3675
      %v3775 = vpack.c.b16 %v3679, %v3676
      %v3776 = vpack.c.b16 %v3683, %v3680
      %v3777 = vpack.c.b16 %v3684, %v3681
      %v3778 = vpack.c.b16 %v3685, %v3682
      %v3779 = vpack.c.b16 %v3689, %v3686
      %v3780 = vpack.c.b16 %v3690, %v3687
      %v3781 = vpack.c.b16 %v3691, %v3688
      %v3782 = vpack.c.b16 %v3695, %v3692
      %v3783 = vpack.c.b16 %v3696, %v3693
      %v3784 = vpack.c.b16 %v3697, %v3694
      %v3785 = vpack.c.b16 %v3701, %v3698
      %v3786 = vpack.c.b16 %v3702, %v3699
      %v3787 = vpack.c.b16 %v3703, %v3700
      %v3788 = vpack.c.b16 %v3707, %v3704
      %v3789 = vpack.c.b16 %v3708, %v3705
      %v3790 = vpack.c.b16 %v3709, %v3706
      %v3791 = vpack.c.b16 %v3713, %v3710
      %v3792 = vpack.c.b16 %v3714, %v3711
      %v3793 = vpack.c.b16 %v3715, %v3712
      %v3794 = vpack.c.b16 %v3719, %v3716
      %v3795 = vpack.c.b16 %v3720, %v3717
      %v3796 = vpack.c.b16 %v3721, %v3718
      %v3797 = vpack.c.b16 %v3725, %v3722
      %v3798 = vpack.c.b16 %v3726, %v3723
      %v3799 = vpack.c.b16 %v3727, %v3724
      %v3800 = vpack.c.b16 %v3731, %v3728
      %v3801 = vpack.c.b16 %v3732, %v3729
      %v3802 = vpack.c.b16 %v3733, %v3730
      %v3803 = vpack.c.b16 %v3737, %v3734
      %v3804 = vpack.c.b16 %v3738, %v3735
      %v3805 = vpack.c.b16 %v3739, %v3736
      %v3806 = vpack.c.b16 %v3743, %v3740
      %v3807 = vpack.c.b16 %v3744, %v3741
      %v3808 = vpack.c.b16 %v3745, %v3742
      %v3809 = vpack.c.b16 %v3746, %v3746
      %v3810 = vpack.c.b16 %v3747, %v3747
      %v3811 = vpack.c.b16 %v3748, %v3748
      %vm3854 = vcmask 121856
      %v3856 = vsel %vm3854, %v3751, 0
      %v3859 = vsel %vm3854, %v3754, 0
      %v3862 = vsel %vm3854, %v3757, 0
      %v3865 = vsel %vm3854, %v3760, 0
      %v3868 = vsel %vm3854, %v3763, 0
      %v3871 = vsel %vm3854, %v3766, 0
      %v3874 = vsel %vm3854, %v3769, 0
      %v3877 = vsel %vm3854, %v3772, 0
      %v3880 = vsel %vm3854, %v3775, 0
      %v3883 = vsel %vm3854, %v3778, 0
      %v3886 = vsel %vm3854, %v3781, 0
      %v3889 = vsel %vm3854, %v3784, 0
      %v3892 = vsel %vm3854, %v3787, 0
      %v3895 = vsel %vm3854, %v3790, 0
      %v3898 = vsel %vm3854, %v3793, 0
      %v3901 = vsel %vm3854, %v3796, 0
      %v3904 = vsel %vm3854, %v3799, 0
      %v3907 = vsel %vm3854, %v3802, 0
      %v3910 = vsel %vm3854, %v3805, 0
      %v3913 = vsel %vm3854, %v3808, 0
      %v3916 = vsel %vm3854, %v3811, 0
      %vm3918 = vcmask 1046528
      %vm3919 = vcmask 1047552
      %v3920 = vsel %vm3918, 4294967295, 65535
      %v3921 = vsel %vm3919, %v3920, 0
      %v3923 = vand.u32 %v3461, %v3921
      %3925 = vmatpush.bf16.msra.mxu0 %v3452
      %3926 = vmatpush.bf16.msra.mxu0 %v3451
      %3927 = vmatpush.bf16.msra.mxu0 %v3450
      %3928 = vmatpush.bf16.msra.mxu0 %v3449
      %3929 = vmatpush.bf16.msra.mxu0 %v3448
      %3930 = vmatpush.bf16.msra.mxu0 %v3447
      %3931 = vmatpush.bf16.msra.mxu0 %v3446
      %3932 = vmatpush.bf16.msra.mxu0 %v3445
      %3933 = vmatmul.bf16.gmra.mxu0 %v3749
      %v3934 = vpop.f32.mrf.mxu0
      %v3935 = vadd.f32 0.0, %v3934
      %v3936 = vpop.f32.mrf.mxu0
      %v3937 = vadd.f32 0.0, %v3936
      %3938 = vmatmul.bf16.gmra.mxu0 %v3752
      %v3939 = vpop.f32.mrf.mxu0
      %v3940 = vadd.f32 0.0, %v3939
      %v3941 = vpop.f32.mrf.mxu0
      %v3942 = vadd.f32 0.0, %v3941
      %3943 = vmatmul.bf16.gmra.mxu0 %v3755
      %v3944 = vpop.f32.mrf.mxu0
      %v3945 = vadd.f32 0.0, %v3944
      %v3946 = vpop.f32.mrf.mxu0
      %v3947 = vadd.f32 0.0, %v3946
      %3948 = vmatmul.bf16.gmra.mxu0 %v3758
      %v3949 = vpop.f32.mrf.mxu0
      %v3950 = vadd.f32 0.0, %v3949
      %v3951 = vpop.f32.mrf.mxu0
      %v3952 = vadd.f32 0.0, %v3951
      %3953 = vmatmul.bf16.gmra.mxu0 %v3761
      %v3954 = vpop.f32.mrf.mxu0
      %v3955 = vadd.f32 0.0, %v3954
      %v3956 = vpop.f32.mrf.mxu0
      %v3957 = vadd.f32 0.0, %v3956
      %3958 = vmatmul.bf16.gmra.mxu0 %v3764
      %v3959 = vpop.f32.mrf.mxu0
      %v3960 = vadd.f32 0.0, %v3959
      %v3961 = vpop.f32.mrf.mxu0
      %v3962 = vadd.f32 0.0, %v3961
      %3963 = vmatmul.bf16.gmra.mxu0 %v3767
      %v3964 = vpop.f32.mrf.mxu0
      %v3965 = vadd.f32 0.0, %v3964
      %v3966 = vpop.f32.mrf.mxu0
      %v3967 = vadd.f32 0.0, %v3966
      %3968 = vmatmul.bf16.gmra.mxu0 %v3770
      %v3969 = vpop.f32.mrf.mxu0
      %v3970 = vadd.f32 0.0, %v3969
      %v3971 = vpop.f32.mrf.mxu0
      %v3972 = vadd.f32 0.0, %v3971
      %3973 = vmatmul.bf16.gmra.mxu0 %v3773
      %v3974 = vpop.f32.mrf.mxu0
      %v3975 = vadd.f32 0.0, %v3974
      %v3976 = vpop.f32.mrf.mxu0
      %v3977 = vadd.f32 0.0, %v3976
      %3978 = vmatmul.bf16.gmra.mxu0 %v3776
      %v3979 = vpop.f32.mrf.mxu0
      %v3980 = vadd.f32 0.0, %v3979
      %v3981 = vpop.f32.mrf.mxu0
      %v3982 = vadd.f32 0.0, %v3981
      %3983 = vmatmul.bf16.gmra.mxu0 %v3779
      %v3984 = vpop.f32.mrf.mxu0
      %v3985 = vadd.f32 0.0, %v3984
      %v3986 = vpop.f32.mrf.mxu0
      %v3987 = vadd.f32 0.0, %v3986
      %3988 = vmatmul.bf16.gmra.mxu0 %v3782
      %v3989 = vpop.f32.mrf.mxu0
      %v3990 = vadd.f32 0.0, %v3989
      %v3991 = vpop.f32.mrf.mxu0
      %v3992 = vadd.f32 0.0, %v3991
      %3993 = vmatmul.bf16.gmra.mxu0 %v3785
      %v3994 = vpop.f32.mrf.mxu0
      %v3995 = vadd.f32 0.0, %v3994
      %v3996 = vpop.f32.mrf.mxu0
      %v3997 = vadd.f32 0.0, %v3996
      %3998 = vmatmul.bf16.gmra.mxu0 %v3788
      %v3999 = vpop.f32.mrf.mxu0
      %v4000 = vadd.f32 0.0, %v3999
      %v4001 = vpop.f32.mrf.mxu0
      %v4002 = vadd.f32 0.0, %v4001
      %4003 = vmatmul.bf16.gmra.mxu0 %v3791
      %v4004 = vpop.f32.mrf.mxu0
      %v4005 = vadd.f32 0.0, %v4004
      %v4006 = vpop.f32.mrf.mxu0
      %v4007 = vadd.f32 0.0, %v4006
      %4008 = vmatmul.bf16.gmra.mxu0 %v3794
      %v4009 = vpop.f32.mrf.mxu0
      %v4010 = vadd.f32 0.0, %v4009
      %v4011 = vpop.f32.mrf.mxu0
      %v4012 = vadd.f32 0.0, %v4011
      %4013 = vmatmul.bf16.gmra.mxu0 %v3797
      %v4014 = vpop.f32.mrf.mxu0
      %v4015 = vadd.f32 0.0, %v4014
      %v4016 = vpop.f32.mrf.mxu0
      %v4017 = vadd.f32 0.0, %v4016
      %4018 = vmatmul.bf16.gmra.mxu0 %v3800
      %v4019 = vpop.f32.mrf.mxu0
      %v4020 = vadd.f32 0.0, %v4019
      %v4021 = vpop.f32.mrf.mxu0
      %v4022 = vadd.f32 0.0, %v4021
      %4023 = vmatmul.bf16.gmra.mxu0 %v3803
      %v4024 = vpop.f32.mrf.mxu0
      %v4025 = vadd.f32 0.0, %v4024
      %v4026 = vpop.f32.mrf.mxu0
      %v4027 = vadd.f32 0.0, %v4026
      %4028 = vmatmul.bf16.gmra.mxu0 %v3806
      %v4029 = vpop.f32.mrf.mxu0
      %v4030 = vadd.f32 0.0, %v4029
      %v4031 = vpop.f32.mrf.mxu0
      %v4032 = vadd.f32 0.0, %v4031
      %4033 = vmatmul.bf16.gmra.mxu0 %v3809
      %v4034 = vpop.f32.mrf.mxu0
      %v4035 = vadd.f32 0.0, %v4034
      %v4036 = vpop.f32.mrf.mxu0
      %4037 = vdwg.mxu0
      %4038 = vmatpush.bf16.msra.mxu0 %v3460
      %4039 = vmatpush.bf16.msra.mxu0 %v3459
      %4040 = vmatpush.bf16.msra.mxu0 %v3458
      %4041 = vmatpush.bf16.msra.mxu0 %v3457
      %4042 = vmatpush.bf16.msra.mxu0 %v3456
      %4043 = vmatpush.bf16.msra.mxu0 %v3455
      %4044 = vmatpush.bf16.msra.mxu0 %v3454
      %4045 = vmatpush.bf16.msra.mxu0 %v3453
      %4046 = vmatmul.bf16.gmra.mxu0 %v3750
      %v4047 = vpop.f32.mrf.mxu0
      %v4048 = vadd.f32 %v3935, %v4047
      %v4049 = vpop.f32.mrf.mxu0
      %v4050 = vadd.f32 %v3937, %v4049
      %4051 = vmatmul.bf16.gmra.mxu0 %v3753
      %v4052 = vpop.f32.mrf.mxu0
      %v4053 = vadd.f32 %v3940, %v4052
      %v4054 = vpop.f32.mrf.mxu0
      %v4055 = vadd.f32 %v3942, %v4054
      %4056 = vmatmul.bf16.gmra.mxu0 %v3756
      %v4057 = vpop.f32.mrf.mxu0
      %v4058 = vadd.f32 %v3945, %v4057
      %v4059 = vpop.f32.mrf.mxu0
      %v4060 = vadd.f32 %v3947, %v4059
      %4061 = vmatmul.bf16.gmra.mxu0 %v3759
      %v4062 = vpop.f32.mrf.mxu0
      %v4063 = vadd.f32 %v3950, %v4062
      %v4064 = vpop.f32.mrf.mxu0
      %v4065 = vadd.f32 %v3952, %v4064
      %4066 = vmatmul.bf16.gmra.mxu0 %v3762
      %v4067 = vpop.f32.mrf.mxu0
      %v4068 = vadd.f32 %v3955, %v4067
      %v4069 = vpop.f32.mrf.mxu0
      %v4070 = vadd.f32 %v3957, %v4069
      %4071 = vmatmul.bf16.gmra.mxu0 %v3765
      %v4072 = vpop.f32.mrf.mxu0
      %v4073 = vadd.f32 %v3960, %v4072
      %v4074 = vpop.f32.mrf.mxu0
      %v4075 = vadd.f32 %v3962, %v4074
      %4076 = vmatmul.bf16.gmra.mxu0 %v3768
      %v4077 = vpop.f32.mrf.mxu0
      %v4078 = vadd.f32 %v3965, %v4077
      %v4079 = vpop.f32.mrf.mxu0
      %v4080 = vadd.f32 %v3967, %v4079
      %4081 = vmatmul.bf16.gmra.mxu0 %v3771
      %v4082 = vpop.f32.mrf.mxu0
      %v4083 = vadd.f32 %v3970, %v4082
      %v4084 = vpop.f32.mrf.mxu0
      %v4085 = vadd.f32 %v3972, %v4084
      %4086 = vmatmul.bf16.gmra.mxu0 %v3774
      %v4087 = vpop.f32.mrf.mxu0
      %v4088 = vadd.f32 %v3975, %v4087
      %v4089 = vpop.f32.mrf.mxu0
      %v4090 = vadd.f32 %v3977, %v4089
      %4091 = vmatmul.bf16.gmra.mxu0 %v3777
      %v4092 = vpop.f32.mrf.mxu0
      %v4093 = vadd.f32 %v3980, %v4092
      %v4094 = vpop.f32.mrf.mxu0
      %v4095 = vadd.f32 %v3982, %v4094
      %4096 = vmatmul.bf16.gmra.mxu0 %v3780
      %v4097 = vpop.f32.mrf.mxu0
      %v4098 = vadd.f32 %v3985, %v4097
      %v4099 = vpop.f32.mrf.mxu0
      %v4100 = vadd.f32 %v3987, %v4099
      %4101 = vmatmul.bf16.gmra.mxu0 %v3783
      %v4102 = vpop.f32.mrf.mxu0
      %v4103 = vadd.f32 %v3990, %v4102
      %v4104 = vpop.f32.mrf.mxu0
      %v4105 = vadd.f32 %v3992, %v4104
      %4106 = vmatmul.bf16.gmra.mxu0 %v3786
      %v4107 = vpop.f32.mrf.mxu0
      %v4108 = vadd.f32 %v3995, %v4107
      %v4109 = vpop.f32.mrf.mxu0
      %v4110 = vadd.f32 %v3997, %v4109
      %4111 = vmatmul.bf16.gmra.mxu0 %v3789
      %v4112 = vpop.f32.mrf.mxu0
      %v4113 = vadd.f32 %v4000, %v4112
      %v4114 = vpop.f32.mrf.mxu0
      %v4115 = vadd.f32 %v4002, %v4114
      %4116 = vmatmul.bf16.gmra.mxu0 %v3792
      %v4117 = vpop.f32.mrf.mxu0
      %v4118 = vadd.f32 %v4005, %v4117
      %v4119 = vpop.f32.mrf.mxu0
      %v4120 = vadd.f32 %v4007, %v4119
      %4121 = vmatmul.bf16.gmra.mxu0 %v3795
      %v4122 = vpop.f32.mrf.mxu0
      %v4123 = vadd.f32 %v4010, %v4122
      %v4124 = vpop.f32.mrf.mxu0
      %v4125 = vadd.f32 %v4012, %v4124
      %4126 = vmatmul.bf16.gmra.mxu0 %v3798
      %v4127 = vpop.f32.mrf.mxu0
      %v4128 = vadd.f32 %v4015, %v4127
      %v4129 = vpop.f32.mrf.mxu0
      %v4130 = vadd.f32 %v4017, %v4129
      %4131 = vmatmul.bf16.gmra.mxu0 %v3801
      %v4132 = vpop.f32.mrf.mxu0
      %v4133 = vadd.f32 %v4020, %v4132
      %v4134 = vpop.f32.mrf.mxu0
      %v4135 = vadd.f32 %v4022, %v4134
      %4136 = vmatmul.bf16.gmra.mxu0 %v3804
      %v4137 = vpop.f32.mrf.mxu0
      %v4138 = vadd.f32 %v4025, %v4137
      %v4139 = vpop.f32.mrf.mxu0
      %v4140 = vadd.f32 %v4027, %v4139
      %4141 = vmatmul.bf16.gmra.mxu0 %v3807
      %v4142 = vpop.f32.mrf.mxu0
      %v4143 = vadd.f32 %v4030, %v4142
      %v4144 = vpop.f32.mrf.mxu0
      %v4145 = vadd.f32 %v4032, %v4144
      %4146 = vmatmul.bf16.gmra.mxu0 %v3810
      %v4147 = vpop.f32.mrf.mxu0
      %v4148 = vadd.f32 %v4035, %v4147
      %v4149 = vpop.f32.mrf.mxu0
      %4150 = vdwg.mxu0
      %4151 = vmatpush.bf16.msra.mxu0 0
      %4152 = vmatpush.bf16.msra.mxu0 0
      %4153 = vmatpush.bf16.msra.mxu0 0
      %4154 = vmatpush.bf16.msra.mxu0 0
      %4155 = vmatpush.bf16.msra.mxu0 0
      %4156 = vmatpush.bf16.msra.mxu0 0
      %4157 = vmatpush.bf16.msra.mxu0 0
      %4158 = vmatpush.bf16.msra.mxu0 %v3923
      %4159 = vmatmul.bf16.gmra.mxu0 %v3856
      %v4160 = vpop.f32.mrf.mxu0
      %v4161 = vadd.f32 %v4048, %v4160
      %v4162 = vpop.f32.mrf.mxu0
      %v4163 = vadd.f32 %v4050, %v4162
      %4164 = vmatmul.bf16.gmra.mxu0 %v3859
      %v4165 = vpop.f32.mrf.mxu0
      %v4166 = vadd.f32 %v4053, %v4165
      %v4167 = vpop.f32.mrf.mxu0
      %v4168 = vadd.f32 %v4055, %v4167
      %4169 = vmatmul.bf16.gmra.mxu0 %v3862
      %v4170 = vpop.f32.mrf.mxu0
      %v4171 = vadd.f32 %v4058, %v4170
      %v4172 = vpop.f32.mrf.mxu0
      %v4173 = vadd.f32 %v4060, %v4172
      %4174 = vmatmul.bf16.gmra.mxu0 %v3865
      %v4175 = vpop.f32.mrf.mxu0
      %v4176 = vadd.f32 %v4063, %v4175
      %v4177 = vpop.f32.mrf.mxu0
      %v4178 = vadd.f32 %v4065, %v4177
      %4179 = vmatmul.bf16.gmra.mxu0 %v3868
      %v4180 = vpop.f32.mrf.mxu0
      %v4181 = vadd.f32 %v4068, %v4180
      %v4182 = vpop.f32.mrf.mxu0
      %v4183 = vadd.f32 %v4070, %v4182
      %4184 = vmatmul.bf16.gmra.mxu0 %v3871
      %v4185 = vpop.f32.mrf.mxu0
      %v4186 = vadd.f32 %v4073, %v4185
      %v4187 = vpop.f32.mrf.mxu0
      %v4188 = vadd.f32 %v4075, %v4187
      %4189 = vmatmul.bf16.gmra.mxu0 %v3874
      %v4190 = vpop.f32.mrf.mxu0
      %v4191 = vadd.f32 %v4078, %v4190
      %v4192 = vpop.f32.mrf.mxu0
      %v4193 = vadd.f32 %v4080, %v4192
      %4194 = vmatmul.bf16.gmra.mxu0 %v3877
      %v4195 = vpop.f32.mrf.mxu0
      %v4196 = vadd.f32 %v4083, %v4195
      %v4197 = vpop.f32.mrf.mxu0
      %v4198 = vadd.f32 %v4085, %v4197
      %4199 = vmatmul.bf16.gmra.mxu0 %v3880
      %v4200 = vpop.f32.mrf.mxu0
      %v4201 = vadd.f32 %v4088, %v4200
      %v4202 = vpop.f32.mrf.mxu0
      %v4203 = vadd.f32 %v4090, %v4202
      %4204 = vmatmul.bf16.gmra.mxu0 %v3883
      %v4205 = vpop.f32.mrf.mxu0
      %v4206 = vadd.f32 %v4093, %v4205
      %v4207 = vpop.f32.mrf.mxu0
      %v4208 = vadd.f32 %v4095, %v4207
      %4209 = vmatmul.bf16.gmra.mxu0 %v3886
      %v4210 = vpop.f32.mrf.mxu0
      %v4211 = vadd.f32 %v4098, %v4210
      %v4212 = vpop.f32.mrf.mxu0
      %v4213 = vadd.f32 %v4100, %v4212
      %4214 = vmatmul.bf16.gmra.mxu0 %v3889
      %v4215 = vpop.f32.mrf.mxu0
      %v4216 = vadd.f32 %v4103, %v4215
      %v4217 = vpop.f32.mrf.mxu0
      %v4218 = vadd.f32 %v4105, %v4217
      %4219 = vmatmul.bf16.gmra.mxu0 %v3892
      %v4220 = vpop.f32.mrf.mxu0
      %v4221 = vadd.f32 %v4108, %v4220
      %v4222 = vpop.f32.mrf.mxu0
      %v4223 = vadd.f32 %v4110, %v4222
      %4224 = vmatmul.bf16.gmra.mxu0 %v3895
      %v4225 = vpop.f32.mrf.mxu0
      %v4226 = vadd.f32 %v4113, %v4225
      %v4227 = vpop.f32.mrf.mxu0
      %v4228 = vadd.f32 %v4115, %v4227
      %4229 = vmatmul.bf16.gmra.mxu0 %v3898
      %v4230 = vpop.f32.mrf.mxu0
      %v4231 = vadd.f32 %v4118, %v4230
      %v4232 = vpop.f32.mrf.mxu0
      %v4233 = vadd.f32 %v4120, %v4232
      %4234 = vmatmul.bf16.gmra.mxu0 %v3901
      %v4235 = vpop.f32.mrf.mxu0
      %v4236 = vadd.f32 %v4123, %v4235
      %v4237 = vpop.f32.mrf.mxu0
      %v4238 = vadd.f32 %v4125, %v4237
      %4239 = vmatmul.bf16.gmra.mxu0 %v3904
      %v4240 = vpop.f32.mrf.mxu0
      %v4241 = vadd.f32 %v4128, %v4240
      %v4242 = vpop.f32.mrf.mxu0
      %v4243 = vadd.f32 %v4130, %v4242
      %4244 = vmatmul.bf16.gmra.mxu0 %v3907
      %v4245 = vpop.f32.mrf.mxu0
      %v4246 = vadd.f32 %v4133, %v4245
      %v4247 = vpop.f32.mrf.mxu0
      %v4248 = vadd.f32 %v4135, %v4247
      %4249 = vmatmul.bf16.gmra.mxu0 %v3910
      %v4250 = vpop.f32.mrf.mxu0
      %v4251 = vadd.f32 %v4138, %v4250
      %v4252 = vpop.f32.mrf.mxu0
      %v4253 = vadd.f32 %v4140, %v4252
      %4254 = vmatmul.bf16.gmra.mxu0 %v3913
      %v4255 = vpop.f32.mrf.mxu0
      %v4256 = vadd.f32 %v4143, %v4255
      %v4257 = vpop.f32.mrf.mxu0
      %v4258 = vadd.f32 %v4145, %v4257
      %4259 = vmatmul.bf16.gmra.mxu0 %v3916
      %v4260 = vpop.f32.mrf.mxu0
      %v4261 = vadd.f32 %v4148, %v4260
      %v4262 = vpop.f32.mrf.mxu0
      %4263 = vdwg.mxu0
      %v4300 = vrot.slane %v4161, 1
      %v4301 = vrot.slane %v4163, 1
      %v4302 = vsel %vm3918, %v4300, %v4301
      %v4303 = vrot.slane %v4166, 1
      %v4304 = vsel %vm3918, %v4301, %v4303
      %v4305 = vrot.slane %v4168, 1
      %v4306 = vsel %vm3918, %v4303, %v4305
      %v4307 = vrot.slane %v4171, 1
      %v4308 = vsel %vm3918, %v4305, %v4307
      %v4309 = vrot.slane %v4173, 1
      %v4310 = vsel %vm3918, %v4307, %v4309
      %v4311 = vrot.slane %v4176, 1
      %v4312 = vsel %vm3918, %v4309, %v4311
      %v4313 = vrot.slane %v4178, 1
      %v4314 = vsel %vm3918, %v4311, %v4313
      %v4315 = vrot.slane %v4181, 1
      %v4316 = vsel %vm3918, %v4313, %v4315
      %v4317 = vrot.slane %v4183, 1
      %v4318 = vsel %vm3918, %v4315, %v4317
      %v4319 = vrot.slane %v4186, 1
      %v4320 = vsel %vm3918, %v4317, %v4319
      %v4321 = vrot.slane %v4188, 1
      %v4322 = vsel %vm3918, %v4319, %v4321
      %v4323 = vrot.slane %v4191, 1
      %v4324 = vsel %vm3918, %v4321, %v4323
      %v4325 = vrot.slane %v4193, 1
      %v4326 = vsel %vm3918, %v4323, %v4325
      %v4327 = vrot.slane %v4196, 1
      %v4328 = vsel %vm3918, %v4325, %v4327
      %v4329 = vrot.slane %v4198, 1
      %v4330 = vsel %vm3918, %v4327, %v4329
      %v4331 = vrot.slane %v4201, 1
      %v4332 = vsel %vm3918, %v4329, %v4331
      %v4333 = vrot.slane %v4203, 1
      %v4334 = vsel %vm3918, %v4331, %v4333
      %v4335 = vrot.slane %v4206, 1
      %v4336 = vsel %vm3918, %v4333, %v4335
      %v4337 = vrot.slane %v4208, 1
      %v4338 = vsel %vm3918, %v4335, %v4337
      %v4339 = vrot.slane %v4211, 1
      %v4340 = vsel %vm3918, %v4337, %v4339
      %v4341 = vrot.slane %v4213, 1
      %v4342 = vsel %vm3918, %v4339, %v4341
      %v4343 = vrot.slane %v4216, 1
      %v4344 = vsel %vm3918, %v4341, %v4343
      %v4345 = vrot.slane %v4218, 1
      %v4346 = vsel %vm3918, %v4343, %v4345
      %v4347 = vrot.slane %v4221, 1
      %v4348 = vsel %vm3918, %v4345, %v4347
      %v4349 = vrot.slane %v4223, 1
      %v4350 = vsel %vm3918, %v4347, %v4349
      %v4351 = vrot.slane %v4226, 1
      %v4352 = vsel %vm3918, %v4349, %v4351
      %v4353 = vrot.slane %v4228, 1
      %v4354 = vsel %vm3918, %v4351, %v4353
      %v4355 = vrot.slane %v4231, 1
      %v4356 = vsel %vm3918, %v4353, %v4355
      %v4357 = vrot.slane %v4233, 1
      %v4358 = vsel %vm3918, %v4355, %v4357
      %v4359 = vrot.slane %v4236, 1
      %v4360 = vsel %vm3918, %v4357, %v4359
      %v4361 = vrot.slane %v4238, 1
      %v4362 = vsel %vm3918, %v4359, %v4361
      %v4363 = vrot.slane %v4241, 1
      %v4364 = vsel %vm3918, %v4361, %v4363
      %v4365 = vrot.slane %v4243, 1
      %v4366 = vsel %vm3918, %v4363, %v4365
      %v4367 = vrot.slane %v4246, 1
      %v4368 = vsel %vm3918, %v4365, %v4367
      %v4369 = vrot.slane %v4248, 1
      %v4370 = vsel %vm3918, %v4367, %v4369
      %v4407 = vmax.f32 %v4161, %v4302
      %v4408 = vmax.f32 %v4163, %v4304
      %v4409 = vmax.f32 %v4166, %v4306
      %v4410 = vmax.f32 %v4168, %v4308
      %v4411 = vmax.f32 %v4171, %v4310
      %v4412 = vmax.f32 %v4173, %v4312
      %v4413 = vmax.f32 %v4176, %v4314
      %v4414 = vmax.f32 %v4178, %v4316
      %v4415 = vmax.f32 %v4181, %v4318
      %v4416 = vmax.f32 %v4183, %v4320
      %v4417 = vmax.f32 %v4186, %v4322
      %v4418 = vmax.f32 %v4188, %v4324
      %v4419 = vmax.f32 %v4191, %v4326
      %v4420 = vmax.f32 %v4193, %v4328
      %v4421 = vmax.f32 %v4196, %v4330
      %v4422 = vmax.f32 %v4198, %v4332
      %v4423 = vmax.f32 %v4201, %v4334
      %v4424 = vmax.f32 %v4203, %v4336
      %v4425 = vmax.f32 %v4206, %v4338
      %v4426 = vmax.f32 %v4208, %v4340
      %v4427 = vmax.f32 %v4211, %v4342
      %v4428 = vmax.f32 %v4213, %v4344
      %v4429 = vmax.f32 %v4216, %v4346
      %v4430 = vmax.f32 %v4218, %v4348
      %v4431 = vmax.f32 %v4221, %v4350
      %v4432 = vmax.f32 %v4223, %v4352
      %v4433 = vmax.f32 %v4226, %v4354
      %v4434 = vmax.f32 %v4228, %v4356
      %v4435 = vmax.f32 %v4231, %v4358
      %v4436 = vmax.f32 %v4233, %v4360
      %v4437 = vmax.f32 %v4236, %v4362
      %v4438 = vmax.f32 %v4238, %v4364
      %v4439 = vmax.f32 %v4241, %v4366
      %v4440 = vmax.f32 %v4243, %v4368
      %v4441 = vmax.f32 %v4246, %v4370
      %v4442 = vmax.f32 %v4248, %v4369
      %vm4443 = vcmask 1045504
      %v4444 = vrot.slane %v4161, 2
      %v4445 = vrot.slane %v4163, 2
      %v4446 = vsel %vm4443, %v4444, %v4445
      %v4447 = vrot.slane %v4166, 2
      %v4448 = vsel %vm4443, %v4445, %v4447
      %v4449 = vrot.slane %v4168, 2
      %v4450 = vsel %vm4443, %v4447, %v4449
      %v4451 = vrot.slane %v4171, 2
      %v4452 = vsel %vm4443, %v4449, %v4451
      %v4453 = vrot.slane %v4173, 2
      %v4454 = vsel %vm4443, %v4451, %v4453
      %v4455 = vrot.slane %v4176, 2
      %v4456 = vsel %vm4443, %v4453, %v4455
      %v4457 = vrot.slane %v4178, 2
      %v4458 = vsel %vm4443, %v4455, %v4457
      %v4459 = vrot.slane %v4181, 2
      %v4460 = vsel %vm4443, %v4457, %v4459
      %v4461 = vrot.slane %v4183, 2
      %v4462 = vsel %vm4443, %v4459, %v4461
      %v4463 = vrot.slane %v4186, 2
      %v4464 = vsel %vm4443, %v4461, %v4463
      %v4465 = vrot.slane %v4188, 2
      %v4466 = vsel %vm4443, %v4463, %v4465
      %v4467 = vrot.slane %v4191, 2
      %v4468 = vsel %vm4443, %v4465, %v4467
      %v4469 = vrot.slane %v4193, 2
      %v4470 = vsel %vm4443, %v4467, %v4469
      %v4471 = vrot.slane %v4196, 2
      %v4472 = vsel %vm4443, %v4469, %v4471
      %v4473 = vrot.slane %v4198, 2
      %v4474 = vsel %vm4443, %v4471, %v4473
      %v4475 = vrot.slane %v4201, 2
      %v4476 = vsel %vm4443, %v4473, %v4475
      %v4477 = vrot.slane %v4203, 2
      %v4478 = vsel %vm4443, %v4475, %v4477
      %v4479 = vrot.slane %v4206, 2
      %v4480 = vsel %vm4443, %v4477, %v4479
      %v4481 = vrot.slane %v4208, 2
      %v4482 = vsel %vm4443, %v4479, %v4481
      %v4483 = vrot.slane %v4211, 2
      %v4484 = vsel %vm4443, %v4481, %v4483
      %v4485 = vrot.slane %v4213, 2
      %v4486 = vsel %vm4443, %v4483, %v4485
      %v4487 = vrot.slane %v4216, 2
      %v4488 = vsel %vm4443, %v4485, %v4487
      %v4489 = vrot.slane %v4218, 2
      %v4490 = vsel %vm4443, %v4487, %v4489
      %v4491 = vrot.slane %v4221, 2
      %v4492 = vsel %vm4443, %v4489, %v4491
      %v4493 = vrot.slane %v4223, 2
      %v4494 = vsel %vm4443, %v4491, %v4493
      %v4495 = vrot.slane %v4226, 2
      %v4496 = vsel %vm4443, %v4493, %v4495
      %v4497 = vrot.slane %v4228, 2
      %v4498 = vsel %vm4443, %v4495, %v4497
      %v4499 = vrot.slane %v4231, 2
      %v4500 = vsel %vm4443, %v4497, %v4499
      %v4501 = vrot.slane %v4233, 2
      %v4502 = vsel %vm4443, %v4499, %v4501
      %v4503 = vrot.slane %v4236, 2
      %v4504 = vsel %vm4443, %v4501, %v4503
      %v4505 = vrot.slane %v4238, 2
      %v4506 = vsel %vm4443, %v4503, %v4505
      %v4507 = vrot.slane %v4241, 2
      %v4508 = vsel %vm4443, %v4505, %v4507
      %v4509 = vrot.slane %v4243, 2
      %v4510 = vsel %vm4443, %v4507, %v4509
      %v4511 = vrot.slane %v4246, 2
      %v4512 = vsel %vm4443, %v4509, %v4511
      %v4513 = vrot.slane %v4248, 2
      %v4514 = vsel %vm4443, %v4511, %v4513
      %v4551 = vmax.f32 %v4407, %v4446
      %v4552 = vmax.f32 %v4408, %v4448
      %v4553 = vmax.f32 %v4409, %v4450
      %v4554 = vmax.f32 %v4410, %v4452
      %v4555 = vmax.f32 %v4411, %v4454
      %v4556 = vmax.f32 %v4412, %v4456
      %v4557 = vmax.f32 %v4413, %v4458
      %v4558 = vmax.f32 %v4414, %v4460
      %v4559 = vmax.f32 %v4415, %v4462
      %v4560 = vmax.f32 %v4416, %v4464
      %v4561 = vmax.f32 %v4417, %v4466
      %v4562 = vmax.f32 %v4418, %v4468
      %v4563 = vmax.f32 %v4419, %v4470
      %v4564 = vmax.f32 %v4420, %v4472
      %v4565 = vmax.f32 %v4421, %v4474
      %v4566 = vmax.f32 %v4422, %v4476
      %v4567 = vmax.f32 %v4423, %v4478
      %v4568 = vmax.f32 %v4424, %v4480
      %v4569 = vmax.f32 %v4425, %v4482
      %v4570 = vmax.f32 %v4426, %v4484
      %v4571 = vmax.f32 %v4427, %v4486
      %v4572 = vmax.f32 %v4428, %v4488
      %v4573 = vmax.f32 %v4429, %v4490
      %v4574 = vmax.f32 %v4430, %v4492
      %v4575 = vmax.f32 %v4431, %v4494
      %v4576 = vmax.f32 %v4432, %v4496
      %v4577 = vmax.f32 %v4433, %v4498
      %v4578 = vmax.f32 %v4434, %v4500
      %v4579 = vmax.f32 %v4435, %v4502
      %v4580 = vmax.f32 %v4436, %v4504
      %v4581 = vmax.f32 %v4437, %v4506
      %v4582 = vmax.f32 %v4438, %v4508
      %v4583 = vmax.f32 %v4439, %v4510
      %v4584 = vmax.f32 %v4440, %v4512
      %v4585 = vmax.f32 %v4441, %v4514
      %v4586 = vmax.f32 %v4442, %v4513
      %v4589 = vrot.slane %v4251, 2
      %v4590 = vsel %vm4443, %v4513, %v4589
      %v4591 = vrot.slane %v4253, 2
      %v4592 = vsel %vm4443, %v4589, %v4591
      %v4596 = vmax.f32 %v4551, %v4450
      %v4597 = vmax.f32 %v4552, %v4452
      %v4598 = vmax.f32 %v4553, %v4454
      %v4599 = vmax.f32 %v4554, %v4456
      %v4600 = vmax.f32 %v4555, %v4458
      %v4601 = vmax.f32 %v4556, %v4460
      %v4602 = vmax.f32 %v4557, %v4462
      %v4603 = vmax.f32 %v4558, %v4464
      %v4604 = vmax.f32 %v4559, %v4466
      %v4605 = vmax.f32 %v4560, %v4468
      %v4606 = vmax.f32 %v4561, %v4470
      %v4607 = vmax.f32 %v4562, %v4472
      %v4608 = vmax.f32 %v4563, %v4474
      %v4609 = vmax.f32 %v4564, %v4476
      %v4610 = vmax.f32 %v4565, %v4478
      %v4611 = vmax.f32 %v4566, %v4480
      %v4612 = vmax.f32 %v4567, %v4482
      %v4613 = vmax.f32 %v4568, %v4484
      %v4614 = vmax.f32 %v4569, %v4486
      %v4615 = vmax.f32 %v4570, %v4488
      %v4616 = vmax.f32 %v4571, %v4490
      %v4617 = vmax.f32 %v4572, %v4492
      %v4618 = vmax.f32 %v4573, %v4494
      %v4619 = vmax.f32 %v4574, %v4496
      %v4620 = vmax.f32 %v4575, %v4498
      %v4621 = vmax.f32 %v4576, %v4500
      %v4622 = vmax.f32 %v4577, %v4502
      %v4623 = vmax.f32 %v4578, %v4504
      %v4624 = vmax.f32 %v4579, %v4506
      %v4625 = vmax.f32 %v4580, %v4508
      %v4626 = vmax.f32 %v4581, %v4510
      %v4627 = vmax.f32 %v4582, %v4512
      %v4628 = vmax.f32 %v4583, %v4514
      %v4629 = vmax.f32 %v4584, %v4590
      %v4630 = vmax.f32 %v4585, %v4592
      %v4631 = vmax.f32 %v4586, %v4591
      %vm4633 = vcmask 1044480
      %v4634 = vrot.slane %v4166, 3
      %v4635 = vrot.slane %v4168, 3
      %v4636 = vsel %vm4633, %v4634, %v4635
      %v4637 = vrot.slane %v4171, 3
      %v4638 = vsel %vm4633, %v4635, %v4637
      %v4639 = vrot.slane %v4173, 3
      %v4640 = vsel %vm4633, %v4637, %v4639
      %v4641 = vrot.slane %v4176, 3
      %v4642 = vsel %vm4633, %v4639, %v4641
      %v4643 = vrot.slane %v4178, 3
      %v4644 = vsel %vm4633, %v4641, %v4643
      %v4645 = vrot.slane %v4181, 3
      %v4646 = vsel %vm4633, %v4643, %v4645
      %v4647 = vrot.slane %v4183, 3
      %v4648 = vsel %vm4633, %v4645, %v4647
      %v4649 = vrot.slane %v4186, 3
      %v4650 = vsel %vm4633, %v4647, %v4649
      %v4651 = vrot.slane %v4188, 3
      %v4652 = vsel %vm4633, %v4649, %v4651
      %v4653 = vrot.slane %v4191, 3
      %v4654 = vsel %vm4633, %v4651, %v4653
      %v4655 = vrot.slane %v4193, 3
      %v4656 = vsel %vm4633, %v4653, %v4655
      %v4657 = vrot.slane %v4196, 3
      %v4658 = vsel %vm4633, %v4655, %v4657
      %v4659 = vrot.slane %v4198, 3
      %v4660 = vsel %vm4633, %v4657, %v4659
      %v4661 = vrot.slane %v4201, 3
      %v4662 = vsel %vm4633, %v4659, %v4661
      %v4663 = vrot.slane %v4203, 3
      %v4664 = vsel %vm4633, %v4661, %v4663
      %v4665 = vrot.slane %v4206, 3
      %v4666 = vsel %vm4633, %v4663, %v4665
      %v4667 = vrot.slane %v4208, 3
      %v4668 = vsel %vm4633, %v4665, %v4667
      %v4669 = vrot.slane %v4211, 3
      %v4670 = vsel %vm4633, %v4667, %v4669
      %v4671 = vrot.slane %v4213, 3
      %v4672 = vsel %vm4633, %v4669, %v4671
      %v4673 = vrot.slane %v4216, 3
      %v4674 = vsel %vm4633, %v4671, %v4673
      %v4675 = vrot.slane %v4218, 3
      %v4676 = vsel %vm4633, %v4673, %v4675
      %v4677 = vrot.slane %v4221, 3
      %v4678 = vsel %vm4633, %v4675, %v4677
      %v4679 = vrot.slane %v4223, 3
      %v4680 = vsel %vm4633, %v4677, %v4679
      %v4681 = vrot.slane %v4226, 3
      %v4682 = vsel %vm4633, %v4679, %v4681
      %v4683 = vrot.slane %v4228, 3
      %v4684 = vsel %vm4633, %v4681, %v4683
      %v4685 = vrot.slane %v4231, 3
      %v4686 = vsel %vm4633, %v4683, %v4685
      %v4687 = vrot.slane %v4233, 3
      %v4688 = vsel %vm4633, %v4685, %v4687
      %v4689 = vrot.slane %v4236, 3
      %v4690 = vsel %vm4633, %v4687, %v4689
      %v4691 = vrot.slane %v4238, 3
      %v4692 = vsel %vm4633, %v4689, %v4691
      %v4693 = vrot.slane %v4241, 3
      %v4694 = vsel %vm4633, %v4691, %v4693
      %v4695 = vrot.slane %v4243, 3
      %v4696 = vsel %vm4633, %v4693, %v4695
      %v4697 = vrot.slane %v4246, 3
      %v4698 = vsel %vm4633, %v4695, %v4697
      %v4699 = vrot.slane %v4248, 3
      %v4700 = vsel %vm4633, %v4697, %v4699
      %v4701 = vrot.slane %v4251, 3
      %v4702 = vsel %vm4633, %v4699, %v4701
      %v4703 = vrot.slane %v4253, 3
      %v4704 = vsel %vm4633, %v4701, %v4703
      %v4705 = vrot.slane %v4256, 3
      %v4706 = vsel %vm4633, %v4703, %v4705
      %v4743 = vmax.f32 %v4596, %v4636
      %v4744 = vmax.f32 %v4597, %v4638
      %v4745 = vmax.f32 %v4598, %v4640
      %v4746 = vmax.f32 %v4599, %v4642
      %v4747 = vmax.f32 %v4600, %v4644
      %v4748 = vmax.f32 %v4601, %v4646
      %v4749 = vmax.f32 %v4602, %v4648
      %v4750 = vmax.f32 %v4603, %v4650
      %v4751 = vmax.f32 %v4604, %v4652
      %v4752 = vmax.f32 %v4605, %v4654
      %v4753 = vmax.f32 %v4606, %v4656
      %v4754 = vmax.f32 %v4607, %v4658
      %v4755 = vmax.f32 %v4608, %v4660
      %v4756 = vmax.f32 %v4609, %v4662
      %v4757 = vmax.f32 %v4610, %v4664
      %v4758 = vmax.f32 %v4611, %v4666
      %v4759 = vmax.f32 %v4612, %v4668
      %v4760 = vmax.f32 %v4613, %v4670
      %v4761 = vmax.f32 %v4614, %v4672
      %v4762 = vmax.f32 %v4615, %v4674
      %v4763 = vmax.f32 %v4616, %v4676
      %v4764 = vmax.f32 %v4617, %v4678
      %v4765 = vmax.f32 %v4618, %v4680
      %v4766 = vmax.f32 %v4619, %v4682
      %v4767 = vmax.f32 %v4620, %v4684
      %v4768 = vmax.f32 %v4621, %v4686
      %v4769 = vmax.f32 %v4622, %v4688
      %v4770 = vmax.f32 %v4623, %v4690
      %v4771 = vmax.f32 %v4624, %v4692
      %v4772 = vmax.f32 %v4625, %v4694
      %v4773 = vmax.f32 %v4626, %v4696
      %v4774 = vmax.f32 %v4627, %v4698
      %v4775 = vmax.f32 %v4628, %v4700
      %v4776 = vmax.f32 %v4629, %v4702
      %v4777 = vmax.f32 %v4630, %v4704
      %v4778 = vmax.f32 %v4631, %v4706
      %vm4779 = vcmask 1043456
      %v4780 = vrot.slane %v4166, 4
      %v4781 = vrot.slane %v4168, 4
      %v4782 = vsel %vm4779, %v4780, %v4781
      %v4783 = vrot.slane %v4171, 4
      %v4784 = vsel %vm4779, %v4781, %v4783
      %v4785 = vrot.slane %v4173, 4
      %v4786 = vsel %vm4779, %v4783, %v4785
      %v4787 = vrot.slane %v4176, 4
      %v4788 = vsel %vm4779, %v4785, %v4787
      %v4789 = vrot.slane %v4178, 4
      %v4790 = vsel %vm4779, %v4787, %v4789
      %v4791 = vrot.slane %v4181, 4
      %v4792 = vsel %vm4779, %v4789, %v4791
      %v4793 = vrot.slane %v4183, 4
      %v4794 = vsel %vm4779, %v4791, %v4793
      %v4795 = vrot.slane %v4186, 4
      %v4796 = vsel %vm4779, %v4793, %v4795
      %v4797 = vrot.slane %v4188, 4
      %v4798 = vsel %vm4779, %v4795, %v4797
      %v4799 = vrot.slane %v4191, 4
      %v4800 = vsel %vm4779, %v4797, %v4799
      %v4801 = vrot.slane %v4193, 4
      %v4802 = vsel %vm4779, %v4799, %v4801
      %v4803 = vrot.slane %v4196, 4
      %v4804 = vsel %vm4779, %v4801, %v4803
      %v4805 = vrot.slane %v4198, 4
      %v4806 = vsel %vm4779, %v4803, %v4805
      %v4807 = vrot.slane %v4201, 4
      %v4808 = vsel %vm4779, %v4805, %v4807
      %v4809 = vrot.slane %v4203, 4
      %v4810 = vsel %vm4779, %v4807, %v4809
      %v4811 = vrot.slane %v4206, 4
      %v4812 = vsel %vm4779, %v4809, %v4811
      %v4813 = vrot.slane %v4208, 4
      %v4814 = vsel %vm4779, %v4811, %v4813
      %v4815 = vrot.slane %v4211, 4
      %v4816 = vsel %vm4779, %v4813, %v4815
      %v4817 = vrot.slane %v4213, 4
      %v4818 = vsel %vm4779, %v4815, %v4817
      %v4819 = vrot.slane %v4216, 4
      %v4820 = vsel %vm4779, %v4817, %v4819
      %v4821 = vrot.slane %v4218, 4
      %v4822 = vsel %vm4779, %v4819, %v4821
      %v4823 = vrot.slane %v4221, 4
      %v4824 = vsel %vm4779, %v4821, %v4823
      %v4825 = vrot.slane %v4223, 4
      %v4826 = vsel %vm4779, %v4823, %v4825
      %v4827 = vrot.slane %v4226, 4
      %v4828 = vsel %vm4779, %v4825, %v4827
      %v4829 = vrot.slane %v4228, 4
      %v4830 = vsel %vm4779, %v4827, %v4829
      %v4831 = vrot.slane %v4231, 4
      %v4832 = vsel %vm4779, %v4829, %v4831
      %v4833 = vrot.slane %v4233, 4
      %v4834 = vsel %vm4779, %v4831, %v4833
      %v4835 = vrot.slane %v4236, 4
      %v4836 = vsel %vm4779, %v4833, %v4835
      %v4837 = vrot.slane %v4238, 4
      %v4838 = vsel %vm4779, %v4835, %v4837
      %v4839 = vrot.slane %v4241, 4
      %v4840 = vsel %vm4779, %v4837, %v4839
      %v4841 = vrot.slane %v4243, 4
      %v4842 = vsel %vm4779, %v4839, %v4841
      %v4843 = vrot.slane %v4246, 4
      %v4844 = vsel %vm4779, %v4841, %v4843
      %v4845 = vrot.slane %v4248, 4
      %v4846 = vsel %vm4779, %v4843, %v4845
      %v4847 = vrot.slane %v4251, 4
      %v4848 = vsel %vm4779, %v4845, %v4847
      %v4849 = vrot.slane %v4253, 4
      %v4850 = vsel %vm4779, %v4847, %v4849
      %v4851 = vrot.slane %v4256, 4
      %v4852 = vsel %vm4779, %v4849, %v4851
      %v4889 = vmax.f32 %v4743, %v4782
      %v4890 = vmax.f32 %v4744, %v4784
      %v4891 = vmax.f32 %v4745, %v4786
      %v4892 = vmax.f32 %v4746, %v4788
      %v4893 = vmax.f32 %v4747, %v4790
      %v4894 = vmax.f32 %v4748, %v4792
      %v4895 = vmax.f32 %v4749, %v4794
      %v4896 = vmax.f32 %v4750, %v4796
      %v4897 = vmax.f32 %v4751, %v4798
      %v4898 = vmax.f32 %v4752, %v4800
      %v4899 = vmax.f32 %v4753, %v4802
      %v4900 = vmax.f32 %v4754, %v4804
      %v4901 = vmax.f32 %v4755, %v4806
      %v4902 = vmax.f32 %v4756, %v4808
      %v4903 = vmax.f32 %v4757, %v4810
      %v4904 = vmax.f32 %v4758, %v4812
      %v4905 = vmax.f32 %v4759, %v4814
      %v4906 = vmax.f32 %v4760, %v4816
      %v4907 = vmax.f32 %v4761, %v4818
      %v4908 = vmax.f32 %v4762, %v4820
      %v4909 = vmax.f32 %v4763, %v4822
      %v4910 = vmax.f32 %v4764, %v4824
      %v4911 = vmax.f32 %v4765, %v4826
      %v4912 = vmax.f32 %v4766, %v4828
      %v4913 = vmax.f32 %v4767, %v4830
      %v4914 = vmax.f32 %v4768, %v4832
      %v4915 = vmax.f32 %v4769, %v4834
      %v4916 = vmax.f32 %v4770, %v4836
      %v4917 = vmax.f32 %v4771, %v4838
      %v4918 = vmax.f32 %v4772, %v4840
      %v4919 = vmax.f32 %v4773, %v4842
      %v4920 = vmax.f32 %v4774, %v4844
      %v4921 = vmax.f32 %v4775, %v4846
      %v4922 = vmax.f32 %v4776, %v4848
      %v4923 = vmax.f32 %v4777, %v4850
      %v4924 = vmax.f32 %v4778, %v4852
      %v4927 = vrot.slane %v4258, 4
      %v4928 = vsel %vm4779, %v4851, %v4927
      %v4929 = vrot.slane %v4261, 4
      %v4930 = vsel %vm4779, %v4927, %v4929
      %v4933 = vmax.f32 %v4889, %v4786
      %v4934 = vmax.f32 %v4890, %v4788
      %v4935 = vmax.f32 %v4891, %v4790
      %v4936 = vmax.f32 %v4892, %v4792
      %v4937 = vmax.f32 %v4893, %v4794
      %v4938 = vmax.f32 %v4894, %v4796
      %v4939 = vmax.f32 %v4895, %v4798
      %v4940 = vmax.f32 %v4896, %v4800
      %v4941 = vmax.f32 %v4897, %v4802
      %v4942 = vmax.f32 %v4898, %v4804
      %v4943 = vmax.f32 %v4899, %v4806
      %v4944 = vmax.f32 %v4900, %v4808
      %v4945 = vmax.f32 %v4901, %v4810
      %v4946 = vmax.f32 %v4902, %v4812
      %v4947 = vmax.f32 %v4903, %v4814
      %v4948 = vmax.f32 %v4904, %v4816
      %v4949 = vmax.f32 %v4905, %v4818
      %v4950 = vmax.f32 %v4906, %v4820
      %v4951 = vmax.f32 %v4907, %v4822
      %v4952 = vmax.f32 %v4908, %v4824
      %v4953 = vmax.f32 %v4909, %v4826
      %v4954 = vmax.f32 %v4910, %v4828
      %v4955 = vmax.f32 %v4911, %v4830
      %v4956 = vmax.f32 %v4912, %v4832
      %v4957 = vmax.f32 %v4913, %v4834
      %v4958 = vmax.f32 %v4914, %v4836
      %v4959 = vmax.f32 %v4915, %v4838
      %v4960 = vmax.f32 %v4916, %v4840
      %v4961 = vmax.f32 %v4917, %v4842
      %v4962 = vmax.f32 %v4918, %v4844
      %v4963 = vmax.f32 %v4919, %v4846
      %v4964 = vmax.f32 %v4920, %v4848
      %v4965 = vmax.f32 %v4921, %v4850
      %v4966 = vmax.f32 %v4922, %v4852
      %v4967 = vmax.f32 %v4923, %v4928
      %v4968 = vmax.f32 %v4924, %v4930
      %vm4969 = vcmask 1042432
      %v4970 = vrot.slane %v4171, 5
      %v4971 = vrot.slane %v4173, 5
      %v4972 = vsel %vm4969, %v4970, %v4971
      %v4973 = vrot.slane %v4176, 5
      %v4974 = vsel %vm4969, %v4971, %v4973
      %v4975 = vrot.slane %v4178, 5
      %v4976 = vsel %vm4969, %v4973, %v4975
      %v4977 = vrot.slane %v4181, 5
      %v4978 = vsel %vm4969, %v4975, %v4977
      %v4979 = vrot.slane %v4183, 5
      %v4980 = vsel %vm4969, %v4977, %v4979
      %v4981 = vrot.slane %v4186, 5
      %v4982 = vsel %vm4969, %v4979, %v4981
      %v4983 = vrot.slane %v4188, 5
      %v4984 = vsel %vm4969, %v4981, %v4983
      %v4985 = vrot.slane %v4191, 5
      %v4986 = vsel %vm4969, %v4983, %v4985
      %v4987 = vrot.slane %v4193, 5
      %v4988 = vsel %vm4969, %v4985, %v4987
      %v4989 = vrot.slane %v4196, 5
      %v4990 = vsel %vm4969, %v4987, %v4989
      %v4991 = vrot.slane %v4198, 5
      %v4992 = vsel %vm4969, %v4989, %v4991
      %v4993 = vrot.slane %v4201, 5
      %v4994 = vsel %vm4969, %v4991, %v4993
      %v4995 = vrot.slane %v4203, 5
      %v4996 = vsel %vm4969, %v4993, %v4995
      %v4997 = vrot.slane %v4206, 5
      %v4998 = vsel %vm4969, %v4995, %v4997
      %v4999 = vrot.slane %v4208, 5
      %v5000 = vsel %vm4969, %v4997, %v4999
      %v5001 = vrot.slane %v4211, 5
      %v5002 = vsel %vm4969, %v4999, %v5001
      %v5003 = vrot.slane %v4213, 5
      %v5004 = vsel %vm4969, %v5001, %v5003
      %v5005 = vrot.slane %v4216, 5
      %v5006 = vsel %vm4969, %v5003, %v5005
      %v5007 = vrot.slane %v4218, 5
      %v5008 = vsel %vm4969, %v5005, %v5007
      %v5009 = vrot.slane %v4221, 5
      %v5010 = vsel %vm4969, %v5007, %v5009
      %v5011 = vrot.slane %v4223, 5
      %v5012 = vsel %vm4969, %v5009, %v5011
      %v5013 = vrot.slane %v4226, 5
      %v5014 = vsel %vm4969, %v5011, %v5013
      %v5015 = vrot.slane %v4228, 5
      %v5016 = vsel %vm4969, %v5013, %v5015
      %v5017 = vrot.slane %v4231, 5
      %v5018 = vsel %vm4969, %v5015, %v5017
      %v5019 = vrot.slane %v4233, 5
      %v5020 = vsel %vm4969, %v5017, %v5019
      %v5021 = vrot.slane %v4236, 5
      %v5022 = vsel %vm4969, %v5019, %v5021
      %v5023 = vrot.slane %v4238, 5
      %v5024 = vsel %vm4969, %v5021, %v5023
      %v5025 = vrot.slane %v4241, 5
      %v5026 = vsel %vm4969, %v5023, %v5025
      %v5027 = vrot.slane %v4243, 5
      %v5028 = vsel %vm4969, %v5025, %v5027
      %v5029 = vrot.slane %v4246, 5
      %v5030 = vsel %vm4969, %v5027, %v5029
      %v5031 = vrot.slane %v4248, 5
      %v5032 = vsel %vm4969, %v5029, %v5031
      %v5033 = vrot.slane %v4251, 5
      %v5034 = vsel %vm4969, %v5031, %v5033
      %v5035 = vrot.slane %v4253, 5
      %v5036 = vsel %vm4969, %v5033, %v5035
      %v5037 = vrot.slane %v4256, 5
      %v5038 = vsel %vm4969, %v5035, %v5037
      %v5039 = vrot.slane %v4258, 5
      %v5040 = vsel %vm4969, %v5037, %v5039
      %v5041 = vrot.slane %v4261, 5
      %v5042 = vsel %vm4969, %v5039, %v5041
      %v5079 = vmax.f32 %v4933, %v4972
      %v5080 = vmax.f32 %v4934, %v4974
      %v5081 = vmax.f32 %v4935, %v4976
      %v5082 = vmax.f32 %v4936, %v4978
      %v5083 = vmax.f32 %v4937, %v4980
      %v5084 = vmax.f32 %v4938, %v4982
      %v5085 = vmax.f32 %v4939, %v4984
      %v5086 = vmax.f32 %v4940, %v4986
      %v5087 = vmax.f32 %v4941, %v4988
      %v5088 = vmax.f32 %v4942, %v4990
      %v5089 = vmax.f32 %v4943, %v4992
      %v5090 = vmax.f32 %v4944, %v4994
      %v5091 = vmax.f32 %v4945, %v4996
      %v5092 = vmax.f32 %v4946, %v4998
      %v5093 = vmax.f32 %v4947, %v5000
      %v5094 = vmax.f32 %v4948, %v5002
      %v5095 = vmax.f32 %v4949, %v5004
      %v5096 = vmax.f32 %v4950, %v5006
      %v5097 = vmax.f32 %v4951, %v5008
      %v5098 = vmax.f32 %v4952, %v5010
      %v5099 = vmax.f32 %v4953, %v5012
      %v5100 = vmax.f32 %v4954, %v5014
      %v5101 = vmax.f32 %v4955, %v5016
      %v5102 = vmax.f32 %v4956, %v5018
      %v5103 = vmax.f32 %v4957, %v5020
      %v5104 = vmax.f32 %v4958, %v5022
      %v5105 = vmax.f32 %v4959, %v5024
      %v5106 = vmax.f32 %v4960, %v5026
      %v5107 = vmax.f32 %v4961, %v5028
      %v5108 = vmax.f32 %v4962, %v5030
      %v5109 = vmax.f32 %v4963, %v5032
      %v5110 = vmax.f32 %v4964, %v5034
      %v5111 = vmax.f32 %v4965, %v5036
      %v5112 = vmax.f32 %v4966, %v5038
      %v5113 = vmax.f32 %v4967, %v5040
      %v5114 = vmax.f32 %v4968, %v5042
      %v5115 = vrot.slane %v4171, 6
      %v5116 = vrot.slane %v4173, 6
      %v5117 = vsel %vm1214, %v5115, %v5116
      %v5118 = vrot.slane %v4176, 6
      %v5119 = vsel %vm1214, %v5116, %v5118
      %v5120 = vrot.slane %v4178, 6
      %v5121 = vsel %vm1214, %v5118, %v5120
      %v5122 = vrot.slane %v4181, 6
      %v5123 = vsel %vm1214, %v5120, %v5122
      %v5124 = vrot.slane %v4183, 6
      %v5125 = vsel %vm1214, %v5122, %v5124
      %v5126 = vrot.slane %v4186, 6
      %v5127 = vsel %vm1214, %v5124, %v5126
      %v5128 = vrot.slane %v4188, 6
      %v5129 = vsel %vm1214, %v5126, %v5128
      %v5130 = vrot.slane %v4191, 6
      %v5131 = vsel %vm1214, %v5128, %v5130
      %v5132 = vrot.slane %v4193, 6
      %v5133 = vsel %vm1214, %v5130, %v5132
      %v5134 = vrot.slane %v4196, 6
      %v5135 = vsel %vm1214, %v5132, %v5134
      %v5136 = vrot.slane %v4198, 6
      %v5137 = vsel %vm1214, %v5134, %v5136
      %v5138 = vrot.slane %v4201, 6
      %v5139 = vsel %vm1214, %v5136, %v5138
      %v5140 = vrot.slane %v4203, 6
      %v5141 = vsel %vm1214, %v5138, %v5140
      %v5142 = vrot.slane %v4206, 6
      %v5143 = vsel %vm1214, %v5140, %v5142
      %v5144 = vrot.slane %v4208, 6
      %v5145 = vsel %vm1214, %v5142, %v5144
      %v5146 = vrot.slane %v4211, 6
      %v5147 = vsel %vm1214, %v5144, %v5146
      %v5148 = vrot.slane %v4213, 6
      %v5149 = vsel %vm1214, %v5146, %v5148
      %v5150 = vrot.slane %v4216, 6
      %v5151 = vsel %vm1214, %v5148, %v5150
      %v5152 = vrot.slane %v4218, 6
      %v5153 = vsel %vm1214, %v5150, %v5152
      %v5154 = vrot.slane %v4221, 6
      %v5155 = vsel %vm1214, %v5152, %v5154
      %v5156 = vrot.slane %v4223, 6
      %v5157 = vsel %vm1214, %v5154, %v5156
      %v5158 = vrot.slane %v4226, 6
      %v5159 = vsel %vm1214, %v5156, %v5158
      %v5160 = vrot.slane %v4228, 6
      %v5161 = vsel %vm1214, %v5158, %v5160
      %v5162 = vrot.slane %v4231, 6
      %v5163 = vsel %vm1214, %v5160, %v5162
      %v5164 = vrot.slane %v4233, 6
      %v5165 = vsel %vm1214, %v5162, %v5164
      %v5166 = vrot.slane %v4236, 6
      %v5167 = vsel %vm1214, %v5164, %v5166
      %v5168 = vrot.slane %v4238, 6
      %v5169 = vsel %vm1214, %v5166, %v5168
      %v5170 = vrot.slane %v4241, 6
      %v5171 = vsel %vm1214, %v5168, %v5170
      %v5172 = vrot.slane %v4243, 6
      %v5173 = vsel %vm1214, %v5170, %v5172
      %v5174 = vrot.slane %v4246, 6
      %v5175 = vsel %vm1214, %v5172, %v5174
      %v5176 = vrot.slane %v4248, 6
      %v5177 = vsel %vm1214, %v5174, %v5176
      %v5178 = vrot.slane %v4251, 6
      %v5179 = vsel %vm1214, %v5176, %v5178
      %v5180 = vrot.slane %v4253, 6
      %v5181 = vsel %vm1214, %v5178, %v5180
      %v5182 = vrot.slane %v4256, 6
      %v5183 = vsel %vm1214, %v5180, %v5182
      %v5184 = vrot.slane %v4258, 6
      %v5185 = vsel %vm1214, %v5182, %v5184
      %v5186 = vrot.slane %v4261, 6
      %v5187 = vsel %vm1214, %v5184, %v5186
      %v5224 = vmax.f32 %v5079, %v5117
      %v5225 = vmax.f32 %v5080, %v5119
      %v5226 = vmax.f32 %v5081, %v5121
      %v5227 = vmax.f32 %v5082, %v5123
      %v5228 = vmax.f32 %v5083, %v5125
      %v5229 = vmax.f32 %v5084, %v5127
      %v5230 = vmax.f32 %v5085, %v5129
      %v5231 = vmax.f32 %v5086, %v5131
      %v5232 = vmax.f32 %v5087, %v5133
      %v5233 = vmax.f32 %v5088, %v5135
      %v5234 = vmax.f32 %v5089, %v5137
      %v5235 = vmax.f32 %v5090, %v5139
      %v5236 = vmax.f32 %v5091, %v5141
      %v5237 = vmax.f32 %v5092, %v5143
      %v5238 = vmax.f32 %v5093, %v5145
      %v5239 = vmax.f32 %v5094, %v5147
      %v5240 = vmax.f32 %v5095, %v5149
      %v5241 = vmax.f32 %v5096, %v5151
      %v5242 = vmax.f32 %v5097, %v5153
      %v5243 = vmax.f32 %v5098, %v5155
      %v5244 = vmax.f32 %v5099, %v5157
      %v5245 = vmax.f32 %v5100, %v5159
      %v5246 = vmax.f32 %v5101, %v5161
      %v5247 = vmax.f32 %v5102, %v5163
      %v5248 = vmax.f32 %v5103, %v5165
      %v5249 = vmax.f32 %v5104, %v5167
      %v5250 = vmax.f32 %v5105, %v5169
      %v5251 = vmax.f32 %v5106, %v5171
      %v5252 = vmax.f32 %v5107, %v5173
      %v5253 = vmax.f32 %v5108, %v5175
      %v5254 = vmax.f32 %v5109, %v5177
      %v5255 = vmax.f32 %v5110, %v5179
      %v5256 = vmax.f32 %v5111, %v5181
      %v5257 = vmax.f32 %v5112, %v5183
      %v5258 = vmax.f32 %v5113, %v5185
      %v5259 = vmax.f32 %v5114, %v5187
      %v5260 = vpack.c.bf16 %v5225, %v5224
      %v5261 = vpack.c.bf16 %v5227, %v5226
      %v5262 = vpack.c.bf16 %v5229, %v5228
      %v5263 = vpack.c.bf16 %v5231, %v5230
      %v5264 = vpack.c.bf16 %v5233, %v5232
      %v5265 = vpack.c.bf16 %v5235, %v5234
      %v5266 = vpack.c.bf16 %v5237, %v5236
      %v5267 = vpack.c.bf16 %v5239, %v5238
      %v5268 = vpack.c.bf16 %v5241, %v5240
      %v5269 = vpack.c.bf16 %v5243, %v5242
      %v5270 = vpack.c.bf16 %v5245, %v5244
      %v5271 = vpack.c.bf16 %v5247, %v5246
      %v5272 = vpack.c.bf16 %v5249, %v5248
      %v5273 = vpack.c.bf16 %v5251, %v5250
      %v5274 = vpack.c.bf16 %v5253, %v5252
      %v5275 = vpack.c.bf16 %v5255, %v5254
      %v5276 = vpack.c.bf16 %v5257, %v5256
      %v5277 = vpack.c.bf16 %v5259, %v5258
      %v5278 = vld [vmem:[%s9] sm:$0xff]
      %v5279 = vld [vmem:[%s9 + $0x8] sm:$0xf]
      %v5280 = vld [vmem:[%s9 + $0xc] sm:$0xff]
      %v5281 = vld [vmem:[%s9 + $0x14] sm:$0xf]
      %v5282 = vld [vmem:[%s9 + $0x18] sm:$0xff]
      %v5283 = vld [vmem:[%s9 + $0x20] sm:$0xf]
      %v5284 = vld [vmem:[%s9 + $0x24] sm:$0xff]
      %v5285 = vld [vmem:[%s9 + $0x2c] sm:$0xf]
      %v5286 = vld [vmem:[%s9 + $0x30] sm:$0xff]
      %v5287 = vld [vmem:[%s9 + $0x38] sm:$0xf]
      %v5288 = vld [vmem:[%s9 + $0x3c] sm:$0xff]
      %v5289 = vld [vmem:[%s9 + $0x44] sm:$0xf]
      %v5290 = vld [vmem:[%s9 + $0x48] sm:$0xff]
      %v5291 = vld [vmem:[%s9 + $0x50] sm:$0xf]
      %v5292 = vld [vmem:[%s9 + $0x54] sm:$0xff]
      %v5293 = vld [vmem:[%s9 + $0x5c] sm:$0xf]
      %v5294 = vld [vmem:[%s9 + $0x60] sm:$0xff]
      %v5295 = vld [vmem:[%s9 + $0x68] sm:$0xf]
      %v5296 = vld [vmem:[%s9 + $0x6c] sm:$0xff]
      %v5297 = vld [vmem:[%s9 + $0x74] sm:$0xf]
      %v5298 = vld [vmem:[%s9 + $0x78] sm:$0xff]
      %v5299 = vld [vmem:[%s9 + $0x80] sm:$0xf]
      %v5300 = vld [vmem:[%s9 + $0x84] sm:$0xff]
      %v5301 = vld [vmem:[%s9 + $0x8c] sm:$0xf]
      %v5302 = vld [vmem:[%s9 + $0x90] sm:$0x33]
      %v5303 = vld [vmem:[%s9 + $0x98] sm:$0x3]
      %v5330 = vunpack.c.l.b16 %v5278
      %v5331 = vunpack.c.h.b16 %v5278
      %v5332 = vunpack.c.l.b16 %v5279
      %v5333 = vunpack.c.l.b16 %v5280
      %v5334 = vunpack.c.h.b16 %v5280
      %v5335 = vunpack.c.l.b16 %v5281
      %v5336 = vunpack.c.l.b16 %v5282
      %v5337 = vunpack.c.h.b16 %v5282
      %v5338 = vunpack.c.l.b16 %v5283
      %v5339 = vunpack.c.l.b16 %v5284
      %v5340 = vunpack.c.h.b16 %v5284
      %v5341 = vunpack.c.l.b16 %v5285
      %v5342 = vunpack.c.l.b16 %v5286
      %v5343 = vunpack.c.h.b16 %v5286
      %v5344 = vunpack.c.l.b16 %v5287
      %v5345 = vunpack.c.l.b16 %v5288
      %v5346 = vunpack.c.h.b16 %v5288
      %v5347 = vunpack.c.l.b16 %v5289
      %v5348 = vunpack.c.l.b16 %v5290
      %v5349 = vunpack.c.h.b16 %v5290
      %v5350 = vunpack.c.l.b16 %v5291
      %v5351 = vunpack.c.l.b16 %v5292
      %v5352 = vunpack.c.h.b16 %v5292
      %v5353 = vunpack.c.l.b16 %v5293
      %v5354 = vunpack.c.l.b16 %v5294
      %v5355 = vunpack.c.h.b16 %v5294
      %v5356 = vunpack.c.l.b16 %v5295
      %v5357 = vunpack.c.l.b16 %v5296
      %v5358 = vunpack.c.h.b16 %v5296
      %v5359 = vunpack.c.l.b16 %v5297
      %v5360 = vunpack.c.l.b16 %v5298
      %v5361 = vunpack.c.h.b16 %v5298
      %v5362 = vunpack.c.l.b16 %v5299
      %v5363 = vunpack.c.l.b16 %v5300
      %v5364 = vunpack.c.h.b16 %v5300
      %v5365 = vunpack.c.l.b16 %v5301
      %v5366 = vunpack.c.l.b16 %v5302
      %v5367 = vunpack.c.h.b16 %v5302
      %v5368 = vunpack.c.l.b16 %v5303
      %v5369 = vpack.c.b16 %v5333, %v5330
      %v5370 = vpack.c.b16 %v5334, %v5331
      %v5371 = vpack.c.b16 %v5335, %v5332
      %v5372 = vpack.c.b16 %v5339, %v5336
      %v5373 = vpack.c.b16 %v5340, %v5337
      %v5374 = vpack.c.b16 %v5341, %v5338
      %v5375 = vpack.c.b16 %v5345, %v5342
      %v5376 = vpack.c.b16 %v5346, %v5343
      %v5377 = vpack.c.b16 %v5347, %v5344
      %v5378 = vpack.c.b16 %v5351, %v5348
      %v5379 = vpack.c.b16 %v5352, %v5349
      %v5380 = vpack.c.b16 %v5353, %v5350
      %v5381 = vpack.c.b16 %v5357, %v5354
      %v5382 = vpack.c.b16 %v5358, %v5355
      %v5383 = vpack.c.b16 %v5359, %v5356
      %v5384 = vpack.c.b16 %v5363, %v5360
      %v5385 = vpack.c.b16 %v5364, %v5361
      %v5386 = vpack.c.b16 %v5365, %v5362
      %v5387 = vpack.c.b16 %v5366, %v5366
      %v5388 = vpack.c.b16 %v5367, %v5367
      %v5389 = vpack.c.b16 %v5368, %v5368
      %vm5404 = vcmask 244736
      %v5406 = vsel %vm5404, %v5371, 0
      %v5409 = vsel %vm5404, %v5374, 0
      %v5412 = vsel %vm5404, %v5377, 0
      %v5415 = vsel %vm5404, %v5380, 0
      %v5418 = vsel %vm5404, %v5383, 0
      %v5421 = vsel %vm5404, %v5386, 0
      %v5424 = vsel %vm5404, %v5389, 0
      %v5427 = vsel %vm3918, %v5277, 0
      %5429 = vmatpush.bf16.msra.mxu0 %v5267
      %5430 = vmatpush.bf16.msra.mxu0 %v5266
      %5431 = vmatpush.bf16.msra.mxu0 %v5265
      %5432 = vmatpush.bf16.msra.mxu0 %v5264
      %5433 = vmatpush.bf16.msra.mxu0 %v5263
      %5434 = vmatpush.bf16.msra.mxu0 %v5262
      %5435 = vmatpush.bf16.msra.mxu0 %v5261
      %5436 = vmatpush.bf16.msra.mxu0 %v5260
      %5437 = vmatmul.bf16.gmra.mxu0 %v5369
      %v5438 = vpop.f32.mrf.mxu0
      %v5439 = vadd.f32 0.0, %v5438
      %v5440 = vpop.f32.mrf.mxu0
      %v5441 = vadd.f32 0.0, %v5440
      %5442 = vmatmul.bf16.gmra.mxu0 %v5372
      %v5443 = vpop.f32.mrf.mxu0
      %v5444 = vadd.f32 0.0, %v5443
      %v5445 = vpop.f32.mrf.mxu0
      %v5446 = vadd.f32 0.0, %v5445
      %5447 = vmatmul.bf16.gmra.mxu0 %v5375
      %v5448 = vpop.f32.mrf.mxu0
      %v5449 = vadd.f32 0.0, %v5448
      %v5450 = vpop.f32.mrf.mxu0
      %v5451 = vadd.f32 0.0, %v5450
      %5452 = vmatmul.bf16.gmra.mxu0 %v5378
      %v5453 = vpop.f32.mrf.mxu0
      %v5454 = vadd.f32 0.0, %v5453
      %v5455 = vpop.f32.mrf.mxu0
      %v5456 = vadd.f32 0.0, %v5455
      %5457 = vmatmul.bf16.gmra.mxu0 %v5381
      %v5458 = vpop.f32.mrf.mxu0
      %v5459 = vadd.f32 0.0, %v5458
      %v5460 = vpop.f32.mrf.mxu0
      %v5461 = vadd.f32 0.0, %v5460
      %5462 = vmatmul.bf16.gmra.mxu0 %v5384
      %v5463 = vpop.f32.mrf.mxu0
      %v5464 = vadd.f32 0.0, %v5463
      %v5465 = vpop.f32.mrf.mxu0
      %v5466 = vadd.f32 0.0, %v5465
      %5467 = vmatmul.bf16.gmra.mxu0 %v5387
      %v5468 = vpop.f32.mrf.mxu0
      %v5469 = vadd.f32 0.0, %v5468
      %v5470 = vpop.f32.mrf.mxu0
      %5471 = vdwg.mxu0
      %5472 = vmatpush.bf16.msra.mxu0 %v5275
      %5473 = vmatpush.bf16.msra.mxu0 %v5274
      %5474 = vmatpush.bf16.msra.mxu0 %v5273
      %5475 = vmatpush.bf16.msra.mxu0 %v5272
      %5476 = vmatpush.bf16.msra.mxu0 %v5271
      %5477 = vmatpush.bf16.msra.mxu0 %v5270
      %5478 = vmatpush.bf16.msra.mxu0 %v5269
      %5479 = vmatpush.bf16.msra.mxu0 %v5268
      %5480 = vmatmul.bf16.gmra.mxu0 %v5370
      %v5481 = vpop.f32.mrf.mxu0
      %v5482 = vadd.f32 %v5439, %v5481
      %v5483 = vpop.f32.mrf.mxu0
      %v5484 = vadd.f32 %v5441, %v5483
      %5485 = vmatmul.bf16.gmra.mxu0 %v5373
      %v5486 = vpop.f32.mrf.mxu0
      %v5487 = vadd.f32 %v5444, %v5486
      %v5488 = vpop.f32.mrf.mxu0
      %v5489 = vadd.f32 %v5446, %v5488
      %5490 = vmatmul.bf16.gmra.mxu0 %v5376
      %v5491 = vpop.f32.mrf.mxu0
      %v5492 = vadd.f32 %v5449, %v5491
      %v5493 = vpop.f32.mrf.mxu0
      %v5494 = vadd.f32 %v5451, %v5493
      %5495 = vmatmul.bf16.gmra.mxu0 %v5379
      %v5496 = vpop.f32.mrf.mxu0
      %v5497 = vadd.f32 %v5454, %v5496
      %v5498 = vpop.f32.mrf.mxu0
      %v5499 = vadd.f32 %v5456, %v5498
      %5500 = vmatmul.bf16.gmra.mxu0 %v5382
      %v5501 = vpop.f32.mrf.mxu0
      %v5502 = vadd.f32 %v5459, %v5501
      %v5503 = vpop.f32.mrf.mxu0
      %v5504 = vadd.f32 %v5461, %v5503
      %5505 = vmatmul.bf16.gmra.mxu0 %v5385
      %v5506 = vpop.f32.mrf.mxu0
      %v5507 = vadd.f32 %v5464, %v5506
      %v5508 = vpop.f32.mrf.mxu0
      %v5509 = vadd.f32 %v5466, %v5508
      %5510 = vmatmul.bf16.gmra.mxu0 %v5388
      %v5511 = vpop.f32.mrf.mxu0
      %v5512 = vadd.f32 %v5469, %v5511
      %v5513 = vpop.f32.mrf.mxu0
      %5514 = vdwg.mxu0
      %5515 = vmatpush.bf16.msra.mxu0 0
      %5516 = vmatpush.bf16.msra.mxu0 0
      %5517 = vmatpush.bf16.msra.mxu0 0
      %5518 = vmatpush.bf16.msra.mxu0 0
      %5519 = vmatpush.bf16.msra.mxu0 0
      %5520 = vmatpush.bf16.msra.mxu0 0
      %5521 = vmatpush.bf16.msra.mxu0 %v5427
      %5522 = vmatpush.bf16.msra.mxu0 %v5276
      %5523 = vmatmul.bf16.gmra.mxu0 %v5406
      %v5524 = vpop.f32.mrf.mxu0
      %v5525 = vadd.f32 %v5482, %v5524
      %v5526 = vpop.f32.mrf.mxu0
      %v5527 = vadd.f32 %v5484, %v5526
      %5528 = vmatmul.bf16.gmra.mxu0 %v5409
      %v5529 = vpop.f32.mrf.mxu0
      %v5530 = vadd.f32 %v5487, %v5529
      %v5531 = vpop.f32.mrf.mxu0
      %v5532 = vadd.f32 %v5489, %v5531
      %5533 = vmatmul.bf16.gmra.mxu0 %v5412
      %v5534 = vpop.f32.mrf.mxu0
      %v5535 = vadd.f32 %v5492, %v5534
      %v5536 = vpop.f32.mrf.mxu0
      %v5537 = vadd.f32 %v5494, %v5536
      %5538 = vmatmul.bf16.gmra.mxu0 %v5415
      %v5539 = vpop.f32.mrf.mxu0
      %v5540 = vadd.f32 %v5497, %v5539
      %v5541 = vpop.f32.mrf.mxu0
      %v5542 = vadd.f32 %v5499, %v5541
      %5543 = vmatmul.bf16.gmra.mxu0 %v5418
      %v5544 = vpop.f32.mrf.mxu0
      %v5545 = vadd.f32 %v5502, %v5544
      %v5546 = vpop.f32.mrf.mxu0
      %v5547 = vadd.f32 %v5504, %v5546
      %5548 = vmatmul.bf16.gmra.mxu0 %v5421
      %v5549 = vpop.f32.mrf.mxu0
      %v5550 = vadd.f32 %v5507, %v5549
      %v5551 = vpop.f32.mrf.mxu0
      %v5552 = vadd.f32 %v5509, %v5551
      %5553 = vmatmul.bf16.gmra.mxu0 %v5424
      %v5554 = vpop.f32.mrf.mxu0
      %v5555 = vadd.f32 %v5512, %v5554
      %v5556 = vpop.f32.mrf.mxu0
      %5557 = vdwg.mxu0
      %v5558 = vpack.c.bf16 %v5525, %v5525
      %v5559 = vpack.c.bf16 %v5527, %v5527
      %v5560 = vpack.c.bf16 %v5530, %v5530
      %v5561 = vpack.c.bf16 %v5532, %v5532
      %v5562 = vpack.c.bf16 %v5535, %v5535
      %v5563 = vpack.c.bf16 %v5537, %v5537
      %v5564 = vpack.c.bf16 %v5540, %v5540
      %v5565 = vpack.c.bf16 %v5542, %v5542
      %v5566 = vpack.c.bf16 %v5545, %v5545
      %v5567 = vpack.c.bf16 %v5547, %v5547
      %v5568 = vpack.c.bf16 %v5550, %v5550
      %v5569 = vpack.c.bf16 %v5552, %v5552
      %v5570 = vpack.c.bf16 %v5555, %v5555
      %v5571 = vld [vmem:[%s11] sm:$0xf]
      %s5572 = scalar_lea.vmem %s11, 4
      %v5573 = vld [vmem:[%s5572] sm:$0xf]
      %v5584 = vunpack.c.l.b16 %v5558
      %v5585 = vunpack.c.l.b16 %v5559
      %v5586 = vunpack.c.l.b16 %v5560
      %v5587 = vunpack.c.l.b16 %v5561
      %v5588 = vunpack.c.l.b16 %v5562
      %v5589 = vunpack.c.l.b16 %v5563
      %v5590 = vunpack.c.l.b16 %v5564
      %v5591 = vunpack.c.l.b16 %v5565
      %v5592 = vunpack.c.l.b16 %v5566
      %v5593 = vunpack.c.l.b16 %v5567
      %v5594 = vpack.c.b16 %v5585, %v5584
      %v5595 = vpack.c.b16 %v5587, %v5586
      %v5596 = vpack.c.b16 %v5589, %v5588
      %v5597 = vpack.c.b16 %v5591, %v5590
      %v5598 = vpack.c.b16 %v5593, %v5592
      %v5600 = vshrl.u32 %v5594, 16
      %v5602 = vshll.u32 %v5594, 16
      %v5604 = vrot.slane %v5602, 1
      %v5605 = vor.u32 %v5600, %v5604
      %v5607 = vshll.u32 %v5595, 16
      %v5609 = vrot.slane %v5607, 1
      %v5610 = vsel %vm1549, %v5605, %v5609
      %v5611 = vshrl.u32 %v5595, 16
      %v5613 = vor.u32 %v5611, %v5609
      %v5615 = vshll.u32 %v5596, 16
      %v5617 = vrot.slane %v5615, 1
      %v5618 = vsel %vm1549, %v5613, %v5617
      %v5619 = vshrl.u32 %v5596, 16
      %v5621 = vor.u32 %v5619, %v5617
      %v5623 = vshll.u32 %v5597, 16
      %v5625 = vrot.slane %v5623, 1
      %v5626 = vsel %vm1549, %v5621, %v5625
      %v5627 = vshrl.u32 %v5597, 16
      %v5629 = vor.u32 %v5627, %v5625
      %v5631 = vshll.u32 %v5598, 16
      %v5633 = vrot.slane %v5631, 1
      %v5634 = vsel %vm1549, %v5629, %v5633
      %v5635 = vshrl.u32 %v5598, 16
      %v5637 = vor.u32 %v5635, %v5633
      %vm5638 = vcmask 64512
      %v5640 = vsel %vm5638, %v5610, 0
      %v5643 = vsel %vm5638, %v5618, 0
      %v5646 = vsel %vm5638, %v5626, 0
      %v5649 = vsel %vm5638, %v5634, 0
      %v5652 = vsel %vm5638, %v5637, 0
      %v5655 = vsel %vm4779, %v5573, 0
      %5657 = vmatpush.bf16.msra.mxu0 0
      %5658 = vmatpush.bf16.msra.mxu0 0
      %5659 = vmatpush.bf16.msra.mxu0 0
      %5660 = vmatpush.bf16.msra.mxu0 0
      %5661 = vmatpush.bf16.msra.mxu0 0
      %5662 = vmatpush.bf16.msra.mxu0 0
      %5663 = vmatpush.bf16.msra.mxu0 0
      %5664 = vmatpush.bf16.msra.mxu0 %v5655
      %5665 = vmatmul.bf16.gmra.mxu0 %v5640
      %v5666 = vpop.f32.mrf.mxu0
      %v5667 = vadd.f32 0.0, %v5666
      %v5668 = vpop.f32.mrf.mxu0
      %v5669 = vadd.f32 0.0, %v5668
      %5670 = vmatmul.bf16.gmra.mxu0 %v5643
      %v5671 = vpop.f32.mrf.mxu0
      %v5672 = vadd.f32 0.0, %v5671
      %v5673 = vpop.f32.mrf.mxu0
      %v5674 = vadd.f32 0.0, %v5673
      %5675 = vmatmul.bf16.gmra.mxu0 %v5646
      %v5676 = vpop.f32.mrf.mxu0
      %v5677 = vadd.f32 0.0, %v5676
      %v5678 = vpop.f32.mrf.mxu0
      %v5679 = vadd.f32 0.0, %v5678
      %5680 = vmatmul.bf16.gmra.mxu0 %v5649
      %v5681 = vpop.f32.mrf.mxu0
      %v5682 = vadd.f32 0.0, %v5681
      %v5683 = vpop.f32.mrf.mxu0
      %v5684 = vadd.f32 0.0, %v5683
      %5685 = vmatmul.bf16.gmra.mxu0 %v5652
      %v5686 = vpop.f32.mrf.mxu0
      %v5687 = vadd.f32 0.0, %v5686
      %v5688 = vpop.f32.mrf.mxu0
      %v5689 = vadd.f32 0.0, %v5688
      %5690 = vdwg.mxu0
      %v5691 = vsel %vm5638, %v5594, 0
      %v5693 = vsel %vm5638, %v5595, 0
      %v5695 = vsel %vm5638, %v5596, 0
      %v5697 = vsel %vm5638, %v5597, 0
      %v5699 = vsel %vm5638, %v5598, 0
      %v5702 = vsel %vm4779, %v5571, 0
      %5704 = vmatpush.bf16.msra.mxu0 0
      %5705 = vmatpush.bf16.msra.mxu0 0
      %5706 = vmatpush.bf16.msra.mxu0 0
      %5707 = vmatpush.bf16.msra.mxu0 0
      %5708 = vmatpush.bf16.msra.mxu0 0
      %5709 = vmatpush.bf16.msra.mxu0 0
      %5710 = vmatpush.bf16.msra.mxu0 0
      %5711 = vmatpush.bf16.msra.mxu0 %v5702
      %5712 = vmatmul.bf16.gmra.mxu0 %v5691
      %v5713 = vpop.f32.mrf.mxu0
      %v5714 = vadd.f32 %v5667, %v5713
      %v5715 = vpop.f32.mrf.mxu0
      %v5716 = vadd.f32 %v5669, %v5715
      %5717 = vmatmul.bf16.gmra.mxu0 %v5693
      %v5718 = vpop.f32.mrf.mxu0
      %v5719 = vadd.f32 %v5672, %v5718
      %v5720 = vpop.f32.mrf.mxu0
      %v5721 = vadd.f32 %v5674, %v5720
      %5722 = vmatmul.bf16.gmra.mxu0 %v5695
      %v5723 = vpop.f32.mrf.mxu0
      %v5724 = vadd.f32 %v5677, %v5723
      %v5725 = vpop.f32.mrf.mxu0
      %v5726 = vadd.f32 %v5679, %v5725
      %5727 = vmatmul.bf16.gmra.mxu0 %v5697
      %v5728 = vpop.f32.mrf.mxu0
      %v5729 = vadd.f32 %v5682, %v5728
      %v5730 = vpop.f32.mrf.mxu0
      %v5731 = vadd.f32 %v5684, %v5730
      %5732 = vmatmul.bf16.gmra.mxu0 %v5699
      %v5733 = vpop.f32.mrf.mxu0
      %v5734 = vadd.f32 %v5687, %v5733
      %v5735 = vpop.f32.mrf.mxu0
      %v5736 = vadd.f32 %v5689, %v5735
      %5737 = vdwg.mxu0
      %s5738 = scalar_lea.vmem %s11, 8
      %v5739 = vld [vmem:[%s5738] sm:$0xf]
      %v5740 = vrot.slane %v5594, 1
      %v5741 = vrot.slane %v5595, 1
      %v5742 = vsel %vm3155, %v5740, %v5741
      %v5743 = vrot.slane %v5596, 1
      %v5744 = vsel %vm3155, %v5741, %v5743
      %v5745 = vrot.slane %v5597, 1
      %v5746 = vsel %vm3155, %v5743, %v5745
      %v5747 = vrot.slane %v5598, 1
      %v5748 = vsel %vm3155, %v5745, %v5747
      %v5750 = vsel %vm5638, %v5742, 0
      %v5753 = vsel %vm5638, %v5744, 0
      %v5756 = vsel %vm5638, %v5746, 0
      %v5759 = vsel %vm5638, %v5748, 0
      %v5762 = vsel %vm5638, %v5747, 0
      %v5765 = vsel %vm4779, %v5739, 0
      %5767 = vmatpush.bf16.msra.mxu0 0
      %5768 = vmatpush.bf16.msra.mxu0 0
      %5769 = vmatpush.bf16.msra.mxu0 0
      %5770 = vmatpush.bf16.msra.mxu0 0
      %5771 = vmatpush.bf16.msra.mxu0 0
      %5772 = vmatpush.bf16.msra.mxu0 0
      %5773 = vmatpush.bf16.msra.mxu0 0
      %5774 = vmatpush.bf16.msra.mxu0 %v5765
      %5775 = vmatmul.bf16.gmra.mxu0 %v5750
      %v5776 = vpop.f32.mrf.mxu0
      %v5777 = vadd.f32 0.0, %v5776
      %v5778 = vpop.f32.mrf.mxu0
      %v5779 = vadd.f32 0.0, %v5778
      %5780 = vmatmul.bf16.gmra.mxu0 %v5753
      %v5781 = vpop.f32.mrf.mxu0
      %v5782 = vadd.f32 0.0, %v5781
      %v5783 = vpop.f32.mrf.mxu0
      %v5784 = vadd.f32 0.0, %v5783
      %5785 = vmatmul.bf16.gmra.mxu0 %v5756
      %v5786 = vpop.f32.mrf.mxu0
      %v5787 = vadd.f32 0.0, %v5786
      %v5788 = vpop.f32.mrf.mxu0
      %v5789 = vadd.f32 0.0, %v5788
      %5790 = vmatmul.bf16.gmra.mxu0 %v5759
      %v5791 = vpop.f32.mrf.mxu0
      %v5792 = vadd.f32 0.0, %v5791
      %v5793 = vpop.f32.mrf.mxu0
      %v5794 = vadd.f32 0.0, %v5793
      %5795 = vmatmul.bf16.gmra.mxu0 %v5762
      %v5796 = vpop.f32.mrf.mxu0
      %v5797 = vadd.f32 0.0, %v5796
      %v5798 = vpop.f32.mrf.mxu0
      %v5799 = vadd.f32 0.0, %v5798
      %5800 = vdwg.mxu0
      %v5801 = vadd.f32 %v5714, %v5777
      %v5802 = vadd.f32 %v5716, %v5779
      %v5803 = vadd.f32 %v5719, %v5782
      %v5804 = vadd.f32 %v5721, %v5784
      %v5805 = vadd.f32 %v5724, %v5787
      %v5806 = vadd.f32 %v5726, %v5789
      %v5807 = vadd.f32 %v5729, %v5792
      %v5808 = vadd.f32 %v5731, %v5794
      %v5809 = vadd.f32 %v5734, %v5797
      %v5810 = vadd.f32 %v5736, %v5799
      %s5811 = scalar_lea.vmem %s11, 12
      %v5812 = vld [vmem:[%s5811] sm:$0xf]
      %v5814 = vunpack.c.l.b16 %v5568
      %v5815 = vpack.c.b16 %v5586, %v5585
      %v5816 = vpack.c.b16 %v5588, %v5587
      %v5817 = vpack.c.b16 %v5590, %v5589
      %v5818 = vpack.c.b16 %v5592, %v5591
      %v5819 = vpack.c.b16 %v5814, %v5593
      %v5820 = vrot.slane %v5815, 1
      %v5821 = vrot.slane %v5816, 1
      %v5822 = vsel %vm3155, %v5820, %v5821
      %v5823 = vrot.slane %v5817, 1
      %v5824 = vsel %vm3155, %v5821, %v5823
      %v5825 = vrot.slane %v5818, 1
      %v5826 = vsel %vm3155, %v5823, %v5825
      %v5827 = vrot.slane %v5819, 1
      %v5828 = vsel %vm3155, %v5825, %v5827
      %v5830 = vsel %vm5638, %v5822, 0
      %v5833 = vsel %vm5638, %v5824, 0
      %v5836 = vsel %vm5638, %v5826, 0
      %v5839 = vsel %vm5638, %v5828, 0
      %v5842 = vsel %vm5638, %v5827, 0
      %v5845 = vsel %vm4779, %v5812, 0
      %5847 = vmatpush.bf16.msra.mxu0 0
      %5848 = vmatpush.bf16.msra.mxu0 0
      %5849 = vmatpush.bf16.msra.mxu0 0
      %5850 = vmatpush.bf16.msra.mxu0 0
      %5851 = vmatpush.bf16.msra.mxu0 0
      %5852 = vmatpush.bf16.msra.mxu0 0
      %5853 = vmatpush.bf16.msra.mxu0 0
      %5854 = vmatpush.bf16.msra.mxu0 %v5845
      %5855 = vmatmul.bf16.gmra.mxu0 %v5830
      %v5856 = vpop.f32.mrf.mxu0
      %v5857 = vadd.f32 0.0, %v5856
      %v5858 = vpop.f32.mrf.mxu0
      %v5859 = vadd.f32 0.0, %v5858
      %5860 = vmatmul.bf16.gmra.mxu0 %v5833
      %v5861 = vpop.f32.mrf.mxu0
      %v5862 = vadd.f32 0.0, %v5861
      %v5863 = vpop.f32.mrf.mxu0
      %v5864 = vadd.f32 0.0, %v5863
      %5865 = vmatmul.bf16.gmra.mxu0 %v5836
      %v5866 = vpop.f32.mrf.mxu0
      %v5867 = vadd.f32 0.0, %v5866
      %v5868 = vpop.f32.mrf.mxu0
      %v5869 = vadd.f32 0.0, %v5868
      %5870 = vmatmul.bf16.gmra.mxu0 %v5839
      %v5871 = vpop.f32.mrf.mxu0
      %v5872 = vadd.f32 0.0, %v5871
      %v5873 = vpop.f32.mrf.mxu0
      %v5874 = vadd.f32 0.0, %v5873
      %5875 = vmatmul.bf16.gmra.mxu0 %v5842
      %v5876 = vpop.f32.mrf.mxu0
      %v5877 = vadd.f32 0.0, %v5876
      %v5878 = vpop.f32.mrf.mxu0
      %v5879 = vadd.f32 0.0, %v5878
      %5880 = vdwg.mxu0
      %v5881 = vadd.f32 %v5801, %v5857
      %v5882 = vadd.f32 %v5802, %v5859
      %v5883 = vadd.f32 %v5803, %v5862
      %v5884 = vadd.f32 %v5804, %v5864
      %v5885 = vadd.f32 %v5805, %v5867
      %v5886 = vadd.f32 %v5806, %v5869
      %v5887 = vadd.f32 %v5807, %v5872
      %v5888 = vadd.f32 %v5808, %v5874
      %v5889 = vadd.f32 %v5809, %v5877
      %v5890 = vadd.f32 %v5810, %v5879
      %s5891 = scalar_lea.vmem %s11, 16
      %v5892 = vld [vmem:[%s5891] sm:$0xf]
      %v5894 = vunpack.c.l.b16 %v5569
      %v5895 = vpack.c.b16 %v5894, %v5894
      %vm5896 = vsmask.f32 6400
      %v5898 = vshrl.u32 %v5815, 16
      %v5900 = vrot.slane %v5898, 1
      %v5901 = vshll.u32 %v5815, 16
      %v5903 = vrot.slane %v5901, 2
      %v5904 = vor.u32 %v5900, %v5903
      %v5906 = vshrl.u32 %v5816, 16
      %v5908 = vrot.slane %v5906, 1
      %v5909 = vshll.u32 %v5816, 16
      %v5911 = vrot.slane %v5909, 2
      %v5912 = vor.u32 %v5908, %v5911
      %v5913 = vsel %vm5896, %v5904, %v5912
      %v5915 = vshrl.u32 %v5817, 16
      %v5917 = vrot.slane %v5915, 1
      %v5918 = vshll.u32 %v5817, 16
      %v5920 = vrot.slane %v5918, 2
      %v5921 = vor.u32 %v5917, %v5920
      %v5922 = vsel %vm5896, %v5912, %v5921
      %v5924 = vshrl.u32 %v5818, 16
      %v5926 = vrot.slane %v5924, 1
      %v5927 = vshll.u32 %v5818, 16
      %v5929 = vrot.slane %v5927, 2
      %v5930 = vor.u32 %v5926, %v5929
      %v5931 = vsel %vm5896, %v5921, %v5930
      %v5933 = vshrl.u32 %v5819, 16
      %v5935 = vrot.slane %v5933, 1
      %v5936 = vshll.u32 %v5819, 16
      %v5938 = vrot.slane %v5936, 2
      %v5939 = vor.u32 %v5935, %v5938
      %v5940 = vsel %vm5896, %v5930, %v5939
      %v5942 = vshll.u32 %v5895, 16
      %v5944 = vrot.slane %v5942, 2
      %v5945 = vsel %vm5896, %v5939, %v5944
      %v5947 = vsel %vm5638, %v5913, 0
      %v5950 = vsel %vm5638, %v5922, 0
      %v5953 = vsel %vm5638, %v5931, 0
      %v5956 = vsel %vm5638, %v5940, 0
      %v5959 = vsel %vm5638, %v5945, 0
      %v5962 = vsel %vm4779, %v5892, 0
      %5964 = vmatpush.bf16.msra.mxu0 0
      %5965 = vmatpush.bf16.msra.mxu0 0
      %5966 = vmatpush.bf16.msra.mxu0 0
      %5967 = vmatpush.bf16.msra.mxu0 0
      %5968 = vmatpush.bf16.msra.mxu0 0
      %5969 = vmatpush.bf16.msra.mxu0 0
      %5970 = vmatpush.bf16.msra.mxu0 0
      %5971 = vmatpush.bf16.msra.mxu0 %v5962
      %5972 = vmatmul.bf16.gmra.mxu0 %v5947
      %v5973 = vpop.f32.mrf.mxu0
      %v5974 = vadd.f32 0.0, %v5973
      %v5975 = vpop.f32.mrf.mxu0
      %v5976 = vadd.f32 0.0, %v5975
      %5977 = vmatmul.bf16.gmra.mxu0 %v5950
      %v5978 = vpop.f32.mrf.mxu0
      %v5979 = vadd.f32 0.0, %v5978
      %v5980 = vpop.f32.mrf.mxu0
      %v5981 = vadd.f32 0.0, %v5980
      %5982 = vmatmul.bf16.gmra.mxu0 %v5953
      %v5983 = vpop.f32.mrf.mxu0
      %v5984 = vadd.f32 0.0, %v5983
      %v5985 = vpop.f32.mrf.mxu0
      %v5986 = vadd.f32 0.0, %v5985
      %5987 = vmatmul.bf16.gmra.mxu0 %v5956
      %v5988 = vpop.f32.mrf.mxu0
      %v5989 = vadd.f32 0.0, %v5988
      %v5990 = vpop.f32.mrf.mxu0
      %v5991 = vadd.f32 0.0, %v5990
      %5992 = vmatmul.bf16.gmra.mxu0 %v5959
      %v5993 = vpop.f32.mrf.mxu0
      %v5994 = vadd.f32 0.0, %v5993
      %v5995 = vpop.f32.mrf.mxu0
      %v5996 = vadd.f32 0.0, %v5995
      %5997 = vdwg.mxu0
      %v5998 = vadd.f32 %v5881, %v5974
      %v5999 = vadd.f32 %v5882, %v5976
      %v6000 = vadd.f32 %v5883, %v5979
      %v6001 = vadd.f32 %v5884, %v5981
      %v6002 = vadd.f32 %v5885, %v5984
      %v6003 = vadd.f32 %v5886, %v5986
      %v6004 = vadd.f32 %v5887, %v5989
      %v6005 = vadd.f32 %v5888, %v5991
      %v6006 = vadd.f32 %v5889, %v5994
      %v6007 = vadd.f32 %v5890, %v5996
      %s6008 = scalar_lea.vmem %s11, 20
      %v6009 = vld [vmem:[%s6008] sm:$0xf]
      %vm6010 = vcmask 1045504
      %v6011 = vrot.slane %v5815, 2
      %v6012 = vrot.slane %v5816, 2
      %v6013 = vsel %vm6010, %v6011, %v6012
      %v6014 = vrot.slane %v5817, 2
      %v6015 = vsel %vm6010, %v6012, %v6014
      %v6016 = vrot.slane %v5818, 2
      %v6017 = vsel %vm6010, %v6014, %v6016
      %v6018 = vrot.slane %v5819, 2
      %v6019 = vsel %vm6010, %v6016, %v6018
      %v6020 = vrot.slane %v5895, 2
      %v6021 = vsel %vm6010, %v6018, %v6020
      %v6023 = vsel %vm5638, %v6013, 0
      %v6026 = vsel %vm5638, %v6015, 0
      %v6029 = vsel %vm5638, %v6017, 0
      %v6032 = vsel %vm5638, %v6019, 0
      %v6035 = vsel %vm5638, %v6021, 0
      %v6038 = vsel %vm4779, %v6009, 0
      %6040 = vmatpush.bf16.msra.mxu0 0
      %6041 = vmatpush.bf16.msra.mxu0 0
      %6042 = vmatpush.bf16.msra.mxu0 0
      %6043 = vmatpush.bf16.msra.mxu0 0
      %6044 = vmatpush.bf16.msra.mxu0 0
      %6045 = vmatpush.bf16.msra.mxu0 0
      %6046 = vmatpush.bf16.msra.mxu0 0
      %6047 = vmatpush.bf16.msra.mxu0 %v6038
      %6048 = vmatmul.bf16.gmra.mxu0 %v6023
      %v6049 = vpop.f32.mrf.mxu0
      %v6050 = vadd.f32 0.0, %v6049
      %v6051 = vpop.f32.mrf.mxu0
      %v6052 = vadd.f32 0.0, %v6051
      %6053 = vmatmul.bf16.gmra.mxu0 %v6026
      %v6054 = vpop.f32.mrf.mxu0
      %v6055 = vadd.f32 0.0, %v6054
      %v6056 = vpop.f32.mrf.mxu0
      %v6057 = vadd.f32 0.0, %v6056
      %6058 = vmatmul.bf16.gmra.mxu0 %v6029
      %v6059 = vpop.f32.mrf.mxu0
      %v6060 = vadd.f32 0.0, %v6059
      %v6061 = vpop.f32.mrf.mxu0
      %v6062 = vadd.f32 0.0, %v6061
      %6063 = vmatmul.bf16.gmra.mxu0 %v6032
      %v6064 = vpop.f32.mrf.mxu0
      %v6065 = vadd.f32 0.0, %v6064
      %v6066 = vpop.f32.mrf.mxu0
      %v6067 = vadd.f32 0.0, %v6066
      %6068 = vmatmul.bf16.gmra.mxu0 %v6035
      %v6069 = vpop.f32.mrf.mxu0
      %v6070 = vadd.f32 0.0, %v6069
      %v6071 = vpop.f32.mrf.mxu0
      %v6072 = vadd.f32 0.0, %v6071
      %6073 = vdwg.mxu0
      %v6074 = vadd.f32 %v5998, %v6050
      %v6075 = vadd.f32 %v5999, %v6052
      %v6076 = vadd.f32 %v6000, %v6055
      %v6077 = vadd.f32 %v6001, %v6057
      %v6078 = vadd.f32 %v6002, %v6060
      %v6079 = vadd.f32 %v6003, %v6062
      %v6080 = vadd.f32 %v6004, %v6065
      %v6081 = vadd.f32 %v6005, %v6067
      %v6082 = vadd.f32 %v6006, %v6070
      %v6083 = vadd.f32 %v6007, %v6072
      %s6084 = scalar_lea.vmem %s11, 24
      %v6085 = vld [vmem:[%s6084] sm:$0xf]
      %v6087 = vunpack.c.l.b16 %v5570
      %v6088 = vpack.c.b16 %v5894, %v5814
      %v6089 = vpack.c.b16 %v6087, %v6087
      %v6090 = vrot.slane %v5595, 2
      %v6091 = vrot.slane %v5596, 2
      %v6092 = vsel %vm6010, %v6090, %v6091
      %v6093 = vrot.slane %v5597, 2
      %v6094 = vsel %vm6010, %v6091, %v6093
      %v6095 = vrot.slane %v5598, 2
      %v6096 = vsel %vm6010, %v6093, %v6095
      %v6097 = vrot.slane %v6088, 2
      %v6098 = vsel %vm6010, %v6095, %v6097
      %v6099 = vrot.slane %v6089, 2
      %v6100 = vsel %vm6010, %v6097, %v6099
      %v6102 = vsel %vm5638, %v6092, 0
      %v6105 = vsel %vm5638, %v6094, 0
      %v6108 = vsel %vm5638, %v6096, 0
      %v6111 = vsel %vm5638, %v6098, 0
      %v6114 = vsel %vm5638, %v6100, 0
      %v6117 = vsel %vm4779, %v6085, 0
      %6119 = vmatpush.bf16.msra.mxu0 0
      %6120 = vmatpush.bf16.msra.mxu0 0
      %6121 = vmatpush.bf16.msra.mxu0 0
      %6122 = vmatpush.bf16.msra.mxu0 0
      %6123 = vmatpush.bf16.msra.mxu0 0
      %6124 = vmatpush.bf16.msra.mxu0 0
      %6125 = vmatpush.bf16.msra.mxu0 0
      %6126 = vmatpush.bf16.msra.mxu0 %v6117
      %6127 = vmatmul.bf16.gmra.mxu0 %v6102
      %v6128 = vpop.f32.mrf.mxu0
      %v6129 = vadd.f32 0.0, %v6128
      %v6130 = vpop.f32.mrf.mxu0
      %v6131 = vadd.f32 0.0, %v6130
      %6132 = vmatmul.bf16.gmra.mxu0 %v6105
      %v6133 = vpop.f32.mrf.mxu0
      %v6134 = vadd.f32 0.0, %v6133
      %v6135 = vpop.f32.mrf.mxu0
      %v6136 = vadd.f32 0.0, %v6135
      %6137 = vmatmul.bf16.gmra.mxu0 %v6108
      %v6138 = vpop.f32.mrf.mxu0
      %v6139 = vadd.f32 0.0, %v6138
      %v6140 = vpop.f32.mrf.mxu0
      %v6141 = vadd.f32 0.0, %v6140
      %6142 = vmatmul.bf16.gmra.mxu0 %v6111
      %v6143 = vpop.f32.mrf.mxu0
      %v6144 = vadd.f32 0.0, %v6143
      %v6145 = vpop.f32.mrf.mxu0
      %v6146 = vadd.f32 0.0, %v6145
      %6147 = vmatmul.bf16.gmra.mxu0 %v6114
      %v6148 = vpop.f32.mrf.mxu0
      %v6149 = vadd.f32 0.0, %v6148
      %v6150 = vpop.f32.mrf.mxu0
      %v6151 = vadd.f32 0.0, %v6150
      %6152 = vdwg.mxu0
      %v6153 = vadd.f32 %v6074, %v6129
      %v6154 = vadd.f32 %v6075, %v6131
      %v6155 = vadd.f32 %v6076, %v6134
      %v6156 = vadd.f32 %v6077, %v6136
      %v6157 = vadd.f32 %v6078, %v6139
      %v6158 = vadd.f32 %v6079, %v6141
      %v6159 = vadd.f32 %v6080, %v6144
      %v6160 = vadd.f32 %v6081, %v6146
      %v6161 = vadd.f32 %v6082, %v6149
      %v6162 = vadd.f32 %v6083, %v6151
      %s6163 = scalar_lea.vmem %s11, 28
      %v6164 = vld [vmem:[%s6163] sm:$0xf]
      %vm6165 = vsmask.f32 5376
      %v6166 = vrot.slane %v5611, 2
      %v6167 = vrot.slane %v5607, 3
      %v6168 = vor.u32 %v6166, %v6167
      %v6169 = vrot.slane %v5619, 2
      %v6170 = vrot.slane %v5615, 3
      %v6171 = vor.u32 %v6169, %v6170
      %v6172 = vsel %vm6165, %v6168, %v6171
      %v6173 = vrot.slane %v5627, 2
      %v6174 = vrot.slane %v5623, 3
      %v6175 = vor.u32 %v6173, %v6174
      %v6176 = vsel %vm6165, %v6171, %v6175
      %v6177 = vrot.slane %v5635, 2
      %v6178 = vrot.slane %v5631, 3
      %v6179 = vor.u32 %v6177, %v6178
      %v6180 = vsel %vm6165, %v6175, %v6179
      %v6182 = vshrl.u32 %v6088, 16
      %v6184 = vrot.slane %v6182, 2
      %v6185 = vshll.u32 %v6088, 16
      %v6187 = vrot.slane %v6185, 3
      %v6188 = vor.u32 %v6184, %v6187
      %v6189 = vsel %vm6165, %v6179, %v6188
      %v6191 = vshrl.u32 %v6089, 16
      %v6193 = vrot.slane %v6191, 2
      %v6194 = vshll.u32 %v6089, 16
      %v6196 = vrot.slane %v6194, 3
      %v6197 = vor.u32 %v6193, %v6196
      %v6198 = vsel %vm6165, %v6188, %v6197
      %v6200 = vsel %vm5638, %v6172, 0
      %v6203 = vsel %vm5638, %v6176, 0
      %v6206 = vsel %vm5638, %v6180, 0
      %v6209 = vsel %vm5638, %v6189, 0
      %v6212 = vsel %vm5638, %v6198, 0
      %v6215 = vsel %vm4779, %v6164, 0
      %6217 = vmatpush.bf16.msra.mxu0 0
      %6218 = vmatpush.bf16.msra.mxu0 0
      %6219 = vmatpush.bf16.msra.mxu0 0
      %6220 = vmatpush.bf16.msra.mxu0 0
      %6221 = vmatpush.bf16.msra.mxu0 0
      %6222 = vmatpush.bf16.msra.mxu0 0
      %6223 = vmatpush.bf16.msra.mxu0 0
      %6224 = vmatpush.bf16.msra.mxu0 %v6215
      %6225 = vmatmul.bf16.gmra.mxu0 %v6200
      %v6226 = vpop.f32.mrf.mxu0
      %v6227 = vadd.f32 0.0, %v6226
      %v6228 = vpop.f32.mrf.mxu0
      %v6229 = vadd.f32 0.0, %v6228
      %6230 = vmatmul.bf16.gmra.mxu0 %v6203
      %v6231 = vpop.f32.mrf.mxu0
      %v6232 = vadd.f32 0.0, %v6231
      %v6233 = vpop.f32.mrf.mxu0
      %v6234 = vadd.f32 0.0, %v6233
      %6235 = vmatmul.bf16.gmra.mxu0 %v6206
      %v6236 = vpop.f32.mrf.mxu0
      %v6237 = vadd.f32 0.0, %v6236
      %v6238 = vpop.f32.mrf.mxu0
      %v6239 = vadd.f32 0.0, %v6238
      %6240 = vmatmul.bf16.gmra.mxu0 %v6209
      %v6241 = vpop.f32.mrf.mxu0
      %v6242 = vadd.f32 0.0, %v6241
      %v6243 = vpop.f32.mrf.mxu0
      %v6244 = vadd.f32 0.0, %v6243
      %6245 = vmatmul.bf16.gmra.mxu0 %v6212
      %v6246 = vpop.f32.mrf.mxu0
      %v6247 = vadd.f32 0.0, %v6246
      %v6248 = vpop.f32.mrf.mxu0
      %v6249 = vadd.f32 0.0, %v6248
      %6250 = vdwg.mxu0
      %v6251 = vadd.f32 %v6153, %v6227
      %v6252 = vadd.f32 %v6154, %v6229
      %v6253 = vadd.f32 %v6155, %v6232
      %v6254 = vadd.f32 %v6156, %v6234
      %v6255 = vadd.f32 %v6157, %v6237
      %v6256 = vadd.f32 %v6158, %v6239
      %v6257 = vadd.f32 %v6159, %v6242
      %v6258 = vadd.f32 %v6160, %v6244
      %v6259 = vadd.f32 %v6161, %v6247
      %v6260 = vadd.f32 %v6162, %v6249
      %s6261 = scalar_lea.vmem %s11, 32
      %v6262 = vld [vmem:[%s6261] sm:$0xf]
      %vm6263 = vcmask 1044480
      %v6264 = vrot.slane %v5595, 3
      %v6265 = vrot.slane %v5596, 3
      %v6266 = vsel %vm6263, %v6264, %v6265
      %v6267 = vrot.slane %v5597, 3
      %v6268 = vsel %vm6263, %v6265, %v6267
      %v6269 = vrot.slane %v5598, 3
      %v6270 = vsel %vm6263, %v6267, %v6269
      %v6271 = vrot.slane %v6088, 3
      %v6272 = vsel %vm6263, %v6269, %v6271
      %v6273 = vrot.slane %v6089, 3
      %v6274 = vsel %vm6263, %v6271, %v6273
      %v6276 = vsel %vm5638, %v6266, 0
      %v6279 = vsel %vm5638, %v6268, 0
      %v6282 = vsel %vm5638, %v6270, 0
      %v6285 = vsel %vm5638, %v6272, 0
      %v6288 = vsel %vm5638, %v6274, 0
      %v6291 = vsel %vm4779, %v6262, 0
      %6293 = vmatpush.bf16.msra.mxu0 0
      %6294 = vmatpush.bf16.msra.mxu0 0
      %6295 = vmatpush.bf16.msra.mxu0 0
      %6296 = vmatpush.bf16.msra.mxu0 0
      %6297 = vmatpush.bf16.msra.mxu0 0
      %6298 = vmatpush.bf16.msra.mxu0 0
      %6299 = vmatpush.bf16.msra.mxu0 0
      %6300 = vmatpush.bf16.msra.mxu0 %v6291
      %6301 = vmatmul.bf16.gmra.mxu0 %v6276
      %v6302 = vpop.f32.mrf.mxu0
      %v6303 = vadd.f32 0.0, %v6302
      %v6304 = vpop.f32.mrf.mxu0
      %v6305 = vadd.f32 0.0, %v6304
      %6306 = vmatmul.bf16.gmra.mxu0 %v6279
      %v6307 = vpop.f32.mrf.mxu0
      %v6308 = vadd.f32 0.0, %v6307
      %v6309 = vpop.f32.mrf.mxu0
      %v6310 = vadd.f32 0.0, %v6309
      %6311 = vmatmul.bf16.gmra.mxu0 %v6282
      %v6312 = vpop.f32.mrf.mxu0
      %v6313 = vadd.f32 0.0, %v6312
      %v6314 = vpop.f32.mrf.mxu0
      %v6315 = vadd.f32 0.0, %v6314
      %6316 = vmatmul.bf16.gmra.mxu0 %v6285
      %v6317 = vpop.f32.mrf.mxu0
      %v6318 = vadd.f32 0.0, %v6317
      %v6319 = vpop.f32.mrf.mxu0
      %v6320 = vadd.f32 0.0, %v6319
      %6321 = vmatmul.bf16.gmra.mxu0 %v6288
      %v6322 = vpop.f32.mrf.mxu0
      %v6323 = vadd.f32 0.0, %v6322
      %v6324 = vpop.f32.mrf.mxu0
      %v6325 = vadd.f32 0.0, %v6324
      %6326 = vdwg.mxu0
      %v6327 = vadd.f32 %v6251, %v6303
      %v6328 = vadd.f32 %v6252, %v6305
      %v6329 = vadd.f32 %v6253, %v6308
      %v6330 = vadd.f32 %v6254, %v6310
      %v6331 = vadd.f32 %v6255, %v6313
      %v6332 = vadd.f32 %v6256, %v6315
      %v6333 = vadd.f32 %v6257, %v6318
      %v6334 = vadd.f32 %v6258, %v6320
      %v6335 = vadd.f32 %v6259, %v6323
      %v6336 = vadd.f32 %v6260, %v6325
      %v6337 = vld [vmem:[%s13] sm:$0x1]
      %v6339 = vperm.slane %v6337, 0
      %v6341 = vadd.f32 %v6327, %v6339
      %v6342 = vadd.f32 %v6328, %v6339
      %v6343 = vadd.f32 %v6329, %v6339
      %v6344 = vadd.f32 %v6330, %v6339
      %v6345 = vadd.f32 %v6331, %v6339
      %v6346 = vadd.f32 %v6332, %v6339
      %v6347 = vadd.f32 %v6333, %v6339
      %v6348 = vadd.f32 %v6334, %v6339
      %v6349 = vadd.f32 %v6335, %v6339
      %v6350 = vadd.f32 %v6336, %v6339
      %v6351 = vmax.f32 %v6341, 0.0
      %v6352 = vmax.f32 %v6342, 0.0
      %v6353 = vmax.f32 %v6343, 0.0
      %v6354 = vmax.f32 %v6344, 0.0
      %v6355 = vmax.f32 %v6345, 0.0
      %v6356 = vmax.f32 %v6346, 0.0
      %v6357 = vmax.f32 %v6347, 0.0
      %v6358 = vmax.f32 %v6348, 0.0
      %v6359 = vmax.f32 %v6349, 0.0
      %v6360 = vmax.f32 %v6350, 0.0
      %v6361 = vpack.c.bf16 %v6352, %v6351
      %v6362 = vpack.c.bf16 %v6354, %v6353
      %v6363 = vpack.c.bf16 %v6356, %v6355
      %v6364 = vpack.c.bf16 %v6358, %v6357
      %v6365 = vpack.c.bf16 %v6360, %v6359
      %v6366 = vld [vmem:[%s15] sm:$0xf]
      %v6367 = vld [vmem:[%s15 + $0x4] sm:$0xf]
      %v6368 = vld [vmem:[%s15 + $0x8] sm:$0xf]
      %v6369 = vld [vmem:[%s15 + $0xc] sm:$0xf]
      %v6370 = vld [vmem:[%s15 + $0x10] sm:$0xf]
      %v6371 = vld [vmem:[%s15 + $0x14] sm:$0xf]
      %v6372 = vld [vmem:[%s15 + $0x18] sm:$0xf]
      %v6373 = vld [vmem:[%s15 + $0x1c] sm:$0xf]
      %v6374 = vld [vmem:[%s15 + $0x20] sm:$0xf]
      %v6375 = vld [vmem:[%s15 + $0x24] sm:$0xf]
      %v6376 = vld [vmem:[%s15 + $0x28] sm:$0xf]
      %v6377 = vld [vmem:[%s15 + $0x2c] sm:$0xf]
      %v6378 = vld [vmem:[%s15 + $0x30] sm:$0x3]
      %v6392 = vunpack.c.l.b16 %v6366
      %v6393 = vunpack.c.l.b16 %v6367
      %v6394 = vunpack.c.l.b16 %v6368
      %v6395 = vunpack.c.l.b16 %v6369
      %v6396 = vunpack.c.l.b16 %v6370
      %v6397 = vunpack.c.l.b16 %v6371
      %v6398 = vunpack.c.l.b16 %v6372
      %v6399 = vunpack.c.l.b16 %v6373
      %v6400 = vunpack.c.l.b16 %v6374
      %v6401 = vunpack.c.l.b16 %v6375
      %v6402 = vunpack.c.l.b16 %v6376
      %v6403 = vunpack.c.l.b16 %v6377
      %v6404 = vunpack.c.l.b16 %v6378
      %v6405 = vpack.c.b16 %v6393, %v6392
      %v6406 = vpack.c.b16 %v6395, %v6394
      %v6407 = vpack.c.b16 %v6397, %v6396
      %v6408 = vpack.c.b16 %v6399, %v6398
      %v6409 = vpack.c.b16 %v6401, %v6400
      %v6410 = vpack.c.b16 %v6403, %v6402
      %v6411 = vpack.c.b16 %v6404, %v6404
      %vm6412 = vcmask 637952
      %v6414 = vsel %vm6412, %v6405, 0
      %v6417 = vsel %vm6412, %v6406, 0
      %v6420 = vsel %vm6412, %v6407, 0
      %v6423 = vsel %vm6412, %v6408, 0
      %v6426 = vsel %vm6412, %v6409, 0
      %v6429 = vsel %vm6412, %v6410, 0
      %v6432 = vsel %vm6412, %v6411, 0
      %v6435 = vsel %vm3918, %v6365, 0
      %6437 = vmatpush.bf16.msra.mxu0 0
      %6438 = vmatpush.bf16.msra.mxu0 0
      %6439 = vmatpush.bf16.msra.mxu0 0
      %6440 = vmatpush.bf16.msra.mxu0 %v6435
      %6441 = vmatpush.bf16.msra.mxu0 %v6364
      %6442 = vmatpush.bf16.msra.mxu0 %v6363
      %6443 = vmatpush.bf16.msra.mxu0 %v6362
      %6444 = vmatpush.bf16.msra.mxu0 %v6361
      %6445 = vmatmul.bf16.gmra.mxu0 %v6414
      %v6446 = vpop.f32.mrf.mxu0
      %v6447 = vadd.f32 0.0, %v6446
      %v6448 = vpop.f32.mrf.mxu0
      %v6449 = vadd.f32 0.0, %v6448
      %6450 = vmatmul.bf16.gmra.mxu0 %v6417
      %v6451 = vpop.f32.mrf.mxu0
      %v6452 = vadd.f32 0.0, %v6451
      %v6453 = vpop.f32.mrf.mxu0
      %v6454 = vadd.f32 0.0, %v6453
      %6455 = vmatmul.bf16.gmra.mxu0 %v6420
      %v6456 = vpop.f32.mrf.mxu0
      %v6457 = vadd.f32 0.0, %v6456
      %v6458 = vpop.f32.mrf.mxu0
      %v6459 = vadd.f32 0.0, %v6458
      %6460 = vmatmul.bf16.gmra.mxu0 %v6423
      %v6461 = vpop.f32.mrf.mxu0
      %v6462 = vadd.f32 0.0, %v6461
      %v6463 = vpop.f32.mrf.mxu0
      %v6464 = vadd.f32 0.0, %v6463
      %6465 = vmatmul.bf16.gmra.mxu0 %v6426
      %v6466 = vpop.f32.mrf.mxu0
      %v6467 = vadd.f32 0.0, %v6466
      %v6468 = vpop.f32.mrf.mxu0
      %v6469 = vadd.f32 0.0, %v6468
      %6470 = vmatmul.bf16.gmra.mxu0 %v6429
      %v6471 = vpop.f32.mrf.mxu0
      %v6472 = vadd.f32 0.0, %v6471
      %v6473 = vpop.f32.mrf.mxu0
      %v6474 = vadd.f32 0.0, %v6473
      %6475 = vmatmul.bf16.gmra.mxu0 %v6432
      %v6476 = vpop.f32.mrf.mxu0
      %v6477 = vadd.f32 0.0, %v6476
      %v6478 = vpop.f32.mrf.mxu0
      %6479 = vdwg.mxu0
      %v6480 = vpack.c.bf16 %v6447, %v6447
      %v6481 = vpack.c.bf16 %v6449, %v6449
      %v6482 = vpack.c.bf16 %v6452, %v6452
      %v6483 = vpack.c.bf16 %v6454, %v6454
      %v6484 = vpack.c.bf16 %v6457, %v6457
      %v6485 = vpack.c.bf16 %v6459, %v6459
      %v6486 = vpack.c.bf16 %v6462, %v6462
      %v6487 = vpack.c.bf16 %v6464, %v6464
      %v6488 = vpack.c.bf16 %v6467, %v6467
      %v6489 = vpack.c.bf16 %v6469, %v6469
      %v6490 = vpack.c.bf16 %v6472, %v6472
      %v6491 = vpack.c.bf16 %v6474, %v6474
      %v6492 = vpack.c.bf16 %v6477, %v6477
      %v6493 = vld [vmem:[%s17] sm:$0xf]
      %s6494 = scalar_lea.vmem %s17, 4
      %v6495 = vld [vmem:[%s6494] sm:$0xf]
      %v6506 = vunpack.c.l.b16 %v6480
      %v6507 = vunpack.c.l.b16 %v6481
      %v6508 = vunpack.c.l.b16 %v6482
      %v6509 = vunpack.c.l.b16 %v6483
      %v6510 = vunpack.c.l.b16 %v6484
      %v6511 = vunpack.c.l.b16 %v6485
      %v6512 = vunpack.c.l.b16 %v6486
      %v6513 = vunpack.c.l.b16 %v6487
      %v6514 = vunpack.c.l.b16 %v6488
      %v6515 = vunpack.c.l.b16 %v6489
      %v6516 = vpack.c.b16 %v6507, %v6506
      %v6517 = vpack.c.b16 %v6509, %v6508
      %v6518 = vpack.c.b16 %v6511, %v6510
      %v6519 = vpack.c.b16 %v6513, %v6512
      %v6520 = vpack.c.b16 %v6515, %v6514
      %v6522 = vshrl.u32 %v6516, 16
      %v6524 = vshll.u32 %v6516, 16
      %v6526 = vrot.slane %v6524, 1
      %v6527 = vor.u32 %v6522, %v6526
      %v6529 = vshll.u32 %v6517, 16
      %v6531 = vrot.slane %v6529, 1
      %v6532 = vsel %vm1549, %v6527, %v6531
      %v6533 = vshrl.u32 %v6517, 16
      %v6535 = vor.u32 %v6533, %v6531
      %v6537 = vshll.u32 %v6518, 16
      %v6539 = vrot.slane %v6537, 1
      %v6540 = vsel %vm1549, %v6535, %v6539
      %v6541 = vshrl.u32 %v6518, 16
      %v6543 = vor.u32 %v6541, %v6539
      %v6545 = vshll.u32 %v6519, 16
      %v6547 = vrot.slane %v6545, 1
      %v6548 = vsel %vm1549, %v6543, %v6547
      %v6549 = vshrl.u32 %v6519, 16
      %v6551 = vor.u32 %v6549, %v6547
      %v6553 = vshll.u32 %v6520, 16
      %v6555 = vrot.slane %v6553, 1
      %v6556 = vsel %vm1549, %v6551, %v6555
      %v6557 = vshrl.u32 %v6520, 16
      %v6559 = vor.u32 %v6557, %v6555
      %v6561 = vsel %vm5638, %v6532, 0
      %v6564 = vsel %vm5638, %v6540, 0
      %v6567 = vsel %vm5638, %v6548, 0
      %v6570 = vsel %vm5638, %v6556, 0
      %v6573 = vsel %vm5638, %v6559, 0
      %v6576 = vsel %vm4779, %v6495, 0
      %6578 = vmatpush.bf16.msra.mxu0 0
      %6579 = vmatpush.bf16.msra.mxu0 0
      %6580 = vmatpush.bf16.msra.mxu0 0
      %6581 = vmatpush.bf16.msra.mxu0 0
      %6582 = vmatpush.bf16.msra.mxu0 0
      %6583 = vmatpush.bf16.msra.mxu0 0
      %6584 = vmatpush.bf16.msra.mxu0 0
      %6585 = vmatpush.bf16.msra.mxu0 %v6576
      %6586 = vmatmul.bf16.gmra.mxu0 %v6561
      %v6587 = vpop.f32.mrf.mxu0
      %v6588 = vadd.f32 0.0, %v6587
      %v6589 = vpop.f32.mrf.mxu0
      %v6590 = vadd.f32 0.0, %v6589
      %6591 = vmatmul.bf16.gmra.mxu0 %v6564
      %v6592 = vpop.f32.mrf.mxu0
      %v6593 = vadd.f32 0.0, %v6592
      %v6594 = vpop.f32.mrf.mxu0
      %v6595 = vadd.f32 0.0, %v6594
      %6596 = vmatmul.bf16.gmra.mxu0 %v6567
      %v6597 = vpop.f32.mrf.mxu0
      %v6598 = vadd.f32 0.0, %v6597
      %v6599 = vpop.f32.mrf.mxu0
      %v6600 = vadd.f32 0.0, %v6599
      %6601 = vmatmul.bf16.gmra.mxu0 %v6570
      %v6602 = vpop.f32.mrf.mxu0
      %v6603 = vadd.f32 0.0, %v6602
      %v6604 = vpop.f32.mrf.mxu0
      %v6605 = vadd.f32 0.0, %v6604
      %6606 = vmatmul.bf16.gmra.mxu0 %v6573
      %v6607 = vpop.f32.mrf.mxu0
      %v6608 = vadd.f32 0.0, %v6607
      %v6609 = vpop.f32.mrf.mxu0
      %v6610 = vadd.f32 0.0, %v6609
      %6611 = vdwg.mxu0
      %v6612 = vsel %vm5638, %v6516, 0
      %v6614 = vsel %vm5638, %v6517, 0
      %v6616 = vsel %vm5638, %v6518, 0
      %v6618 = vsel %vm5638, %v6519, 0
      %v6620 = vsel %vm5638, %v6520, 0
      %v6623 = vsel %vm4779, %v6493, 0
      %6625 = vmatpush.bf16.msra.mxu0 0
      %6626 = vmatpush.bf16.msra.mxu0 0
      %6627 = vmatpush.bf16.msra.mxu0 0
      %6628 = vmatpush.bf16.msra.mxu0 0
      %6629 = vmatpush.bf16.msra.mxu0 0
      %6630 = vmatpush.bf16.msra.mxu0 0
      %6631 = vmatpush.bf16.msra.mxu0 0
      %6632 = vmatpush.bf16.msra.mxu0 %v6623
      %6633 = vmatmul.bf16.gmra.mxu0 %v6612
      %v6634 = vpop.f32.mrf.mxu0
      %v6635 = vadd.f32 %v6588, %v6634
      %v6636 = vpop.f32.mrf.mxu0
      %v6637 = vadd.f32 %v6590, %v6636
      %6638 = vmatmul.bf16.gmra.mxu0 %v6614
      %v6639 = vpop.f32.mrf.mxu0
      %v6640 = vadd.f32 %v6593, %v6639
      %v6641 = vpop.f32.mrf.mxu0
      %v6642 = vadd.f32 %v6595, %v6641
      %6643 = vmatmul.bf16.gmra.mxu0 %v6616
      %v6644 = vpop.f32.mrf.mxu0
      %v6645 = vadd.f32 %v6598, %v6644
      %v6646 = vpop.f32.mrf.mxu0
      %v6647 = vadd.f32 %v6600, %v6646
      %6648 = vmatmul.bf16.gmra.mxu0 %v6618
      %v6649 = vpop.f32.mrf.mxu0
      %v6650 = vadd.f32 %v6603, %v6649
      %v6651 = vpop.f32.mrf.mxu0
      %v6652 = vadd.f32 %v6605, %v6651
      %6653 = vmatmul.bf16.gmra.mxu0 %v6620
      %v6654 = vpop.f32.mrf.mxu0
      %v6655 = vadd.f32 %v6608, %v6654
      %v6656 = vpop.f32.mrf.mxu0
      %v6657 = vadd.f32 %v6610, %v6656
      %6658 = vdwg.mxu0
      %s6659 = scalar_lea.vmem %s17, 8
      %v6660 = vld [vmem:[%s6659] sm:$0xf]
      %v6661 = vrot.slane %v6516, 1
      %v6662 = vrot.slane %v6517, 1
      %v6663 = vsel %vm3155, %v6661, %v6662
      %v6664 = vrot.slane %v6518, 1
      %v6665 = vsel %vm3155, %v6662, %v6664
      %v6666 = vrot.slane %v6519, 1
      %v6667 = vsel %vm3155, %v6664, %v6666
      %v6668 = vrot.slane %v6520, 1
      %v6669 = vsel %vm3155, %v6666, %v6668
      %v6671 = vsel %vm5638, %v6663, 0
      %v6674 = vsel %vm5638, %v6665, 0
      %v6677 = vsel %vm5638, %v6667, 0
      %v6680 = vsel %vm5638, %v6669, 0
      %v6683 = vsel %vm5638, %v6668, 0
      %v6686 = vsel %vm4779, %v6660, 0
      %6688 = vmatpush.bf16.msra.mxu0 0
      %6689 = vmatpush.bf16.msra.mxu0 0
      %6690 = vmatpush.bf16.msra.mxu0 0
      %6691 = vmatpush.bf16.msra.mxu0 0
      %6692 = vmatpush.bf16.msra.mxu0 0
      %6693 = vmatpush.bf16.msra.mxu0 0
      %6694 = vmatpush.bf16.msra.mxu0 0
      %6695 = vmatpush.bf16.msra.mxu0 %v6686
      %6696 = vmatmul.bf16.gmra.mxu0 %v6671
      %v6697 = vpop.f32.mrf.mxu0
      %v6698 = vadd.f32 0.0, %v6697
      %v6699 = vpop.f32.mrf.mxu0
      %v6700 = vadd.f32 0.0, %v6699
      %6701 = vmatmul.bf16.gmra.mxu0 %v6674
      %v6702 = vpop.f32.mrf.mxu0
      %v6703 = vadd.f32 0.0, %v6702
      %v6704 = vpop.f32.mrf.mxu0
      %v6705 = vadd.f32 0.0, %v6704
      %6706 = vmatmul.bf16.gmra.mxu0 %v6677
      %v6707 = vpop.f32.mrf.mxu0
      %v6708 = vadd.f32 0.0, %v6707
      %v6709 = vpop.f32.mrf.mxu0
      %v6710 = vadd.f32 0.0, %v6709
      %6711 = vmatmul.bf16.gmra.mxu0 %v6680
      %v6712 = vpop.f32.mrf.mxu0
      %v6713 = vadd.f32 0.0, %v6712
      %v6714 = vpop.f32.mrf.mxu0
      %v6715 = vadd.f32 0.0, %v6714
      %6716 = vmatmul.bf16.gmra.mxu0 %v6683
      %v6717 = vpop.f32.mrf.mxu0
      %v6718 = vadd.f32 0.0, %v6717
      %v6719 = vpop.f32.mrf.mxu0
      %v6720 = vadd.f32 0.0, %v6719
      %6721 = vdwg.mxu0
      %v6722 = vadd.f32 %v6635, %v6698
      %v6723 = vadd.f32 %v6637, %v6700
      %v6724 = vadd.f32 %v6640, %v6703
      %v6725 = vadd.f32 %v6642, %v6705
      %v6726 = vadd.f32 %v6645, %v6708
      %v6727 = vadd.f32 %v6647, %v6710
      %v6728 = vadd.f32 %v6650, %v6713
      %v6729 = vadd.f32 %v6652, %v6715
      %v6730 = vadd.f32 %v6655, %v6718
      %v6731 = vadd.f32 %v6657, %v6720
      %s6732 = scalar_lea.vmem %s17, 12
      %v6733 = vld [vmem:[%s6732] sm:$0xf]
      %v6735 = vunpack.c.l.b16 %v6490
      %v6736 = vpack.c.b16 %v6508, %v6507
      %v6737 = vpack.c.b16 %v6510, %v6509
      %v6738 = vpack.c.b16 %v6512, %v6511
      %v6739 = vpack.c.b16 %v6514, %v6513
      %v6740 = vpack.c.b16 %v6735, %v6515
      %v6741 = vrot.slane %v6736, 1
      %v6742 = vrot.slane %v6737, 1
      %v6743 = vsel %vm3155, %v6741, %v6742
      %v6744 = vrot.slane %v6738, 1
      %v6745 = vsel %vm3155, %v6742, %v6744
      %v6746 = vrot.slane %v6739, 1
      %v6747 = vsel %vm3155, %v6744, %v6746
      %v6748 = vrot.slane %v6740, 1
      %v6749 = vsel %vm3155, %v6746, %v6748
      %v6751 = vsel %vm5638, %v6743, 0
      %v6754 = vsel %vm5638, %v6745, 0
      %v6757 = vsel %vm5638, %v6747, 0
      %v6760 = vsel %vm5638, %v6749, 0
      %v6763 = vsel %vm5638, %v6748, 0
      %v6766 = vsel %vm4779, %v6733, 0
      %6768 = vmatpush.bf16.msra.mxu0 0
      %6769 = vmatpush.bf16.msra.mxu0 0
      %6770 = vmatpush.bf16.msra.mxu0 0
      %6771 = vmatpush.bf16.msra.mxu0 0
      %6772 = vmatpush.bf16.msra.mxu0 0
      %6773 = vmatpush.bf16.msra.mxu0 0
      %6774 = vmatpush.bf16.msra.mxu0 0
      %6775 = vmatpush.bf16.msra.mxu0 %v6766
      %6776 = vmatmul.bf16.gmra.mxu0 %v6751
      %v6777 = vpop.f32.mrf.mxu0
      %v6778 = vadd.f32 0.0, %v6777
      %v6779 = vpop.f32.mrf.mxu0
      %v6780 = vadd.f32 0.0, %v6779
      %6781 = vmatmul.bf16.gmra.mxu0 %v6754
      %v6782 = vpop.f32.mrf.mxu0
      %v6783 = vadd.f32 0.0, %v6782
      %v6784 = vpop.f32.mrf.mxu0
      %v6785 = vadd.f32 0.0, %v6784
      %6786 = vmatmul.bf16.gmra.mxu0 %v6757
      %v6787 = vpop.f32.mrf.mxu0
      %v6788 = vadd.f32 0.0, %v6787
      %v6789 = vpop.f32.mrf.mxu0
      %v6790 = vadd.f32 0.0, %v6789
      %6791 = vmatmul.bf16.gmra.mxu0 %v6760
      %v6792 = vpop.f32.mrf.mxu0
      %v6793 = vadd.f32 0.0, %v6792
      %v6794 = vpop.f32.mrf.mxu0
      %v6795 = vadd.f32 0.0, %v6794
      %6796 = vmatmul.bf16.gmra.mxu0 %v6763
      %v6797 = vpop.f32.mrf.mxu0
      %v6798 = vadd.f32 0.0, %v6797
      %v6799 = vpop.f32.mrf.mxu0
      %v6800 = vadd.f32 0.0, %v6799
      %6801 = vdwg.mxu0
      %v6802 = vadd.f32 %v6722, %v6778
      %v6803 = vadd.f32 %v6723, %v6780
      %v6804 = vadd.f32 %v6724, %v6783
      %v6805 = vadd.f32 %v6725, %v6785
      %v6806 = vadd.f32 %v6726, %v6788
      %v6807 = vadd.f32 %v6727, %v6790
      %v6808 = vadd.f32 %v6728, %v6793
      %v6809 = vadd.f32 %v6729, %v6795
      %v6810 = vadd.f32 %v6730, %v6798
      %v6811 = vadd.f32 %v6731, %v6800
      %s6812 = scalar_lea.vmem %s17, 16
      %v6813 = vld [vmem:[%s6812] sm:$0xf]
      %v6815 = vunpack.c.l.b16 %v6491
      %v6816 = vpack.c.b16 %v6815, %v6815
      %v6818 = vshrl.u32 %v6736, 16
      %v6820 = vrot.slane %v6818, 1
      %v6821 = vshll.u32 %v6736, 16
      %v6823 = vrot.slane %v6821, 2
      %v6824 = vor.u32 %v6820, %v6823
      %v6826 = vshrl.u32 %v6737, 16
      %v6828 = vrot.slane %v6826, 1
      %v6829 = vshll.u32 %v6737, 16
      %v6831 = vrot.slane %v6829, 2
      %v6832 = vor.u32 %v6828, %v6831
      %v6833 = vsel %vm5896, %v6824, %v6832
      %v6835 = vshrl.u32 %v6738, 16
      %v6837 = vrot.slane %v6835, 1
      %v6838 = vshll.u32 %v6738, 16
      %v6840 = vrot.slane %v6838, 2
      %v6841 = vor.u32 %v6837, %v6840
      %v6842 = vsel %vm5896, %v6832, %v6841
      %v6844 = vshrl.u32 %v6739, 16
      %v6846 = vrot.slane %v6844, 1
      %v6847 = vshll.u32 %v6739, 16
      %v6849 = vrot.slane %v6847, 2
      %v6850 = vor.u32 %v6846, %v6849
      %v6851 = vsel %vm5896, %v6841, %v6850
      %v6853 = vshrl.u32 %v6740, 16
      %v6855 = vrot.slane %v6853, 1
      %v6856 = vshll.u32 %v6740, 16
      %v6858 = vrot.slane %v6856, 2
      %v6859 = vor.u32 %v6855, %v6858
      %v6860 = vsel %vm5896, %v6850, %v6859
      %v6862 = vshll.u32 %v6816, 16
      %v6864 = vrot.slane %v6862, 2
      %v6865 = vsel %vm5896, %v6859, %v6864
      %v6867 = vsel %vm5638, %v6833, 0
      %v6870 = vsel %vm5638, %v6842, 0
      %v6873 = vsel %vm5638, %v6851, 0
      %v6876 = vsel %vm5638, %v6860, 0
      %v6879 = vsel %vm5638, %v6865, 0
      %v6882 = vsel %vm4779, %v6813, 0
      %6884 = vmatpush.bf16.msra.mxu0 0
      %6885 = vmatpush.bf16.msra.mxu0 0
      %6886 = vmatpush.bf16.msra.mxu0 0
      %6887 = vmatpush.bf16.msra.mxu0 0
      %6888 = vmatpush.bf16.msra.mxu0 0
      %6889 = vmatpush.bf16.msra.mxu0 0
      %6890 = vmatpush.bf16.msra.mxu0 0
      %6891 = vmatpush.bf16.msra.mxu0 %v6882
      %6892 = vmatmul.bf16.gmra.mxu0 %v6867
      %v6893 = vpop.f32.mrf.mxu0
      %v6894 = vadd.f32 0.0, %v6893
      %v6895 = vpop.f32.mrf.mxu0
      %v6896 = vadd.f32 0.0, %v6895
      %6897 = vmatmul.bf16.gmra.mxu0 %v6870
      %v6898 = vpop.f32.mrf.mxu0
      %v6899 = vadd.f32 0.0, %v6898
      %v6900 = vpop.f32.mrf.mxu0
      %v6901 = vadd.f32 0.0, %v6900
      %6902 = vmatmul.bf16.gmra.mxu0 %v6873
      %v6903 = vpop.f32.mrf.mxu0
      %v6904 = vadd.f32 0.0, %v6903
      %v6905 = vpop.f32.mrf.mxu0
      %v6906 = vadd.f32 0.0, %v6905
      %6907 = vmatmul.bf16.gmra.mxu0 %v6876
      %v6908 = vpop.f32.mrf.mxu0
      %v6909 = vadd.f32 0.0, %v6908
      %v6910 = vpop.f32.mrf.mxu0
      %v6911 = vadd.f32 0.0, %v6910
      %6912 = vmatmul.bf16.gmra.mxu0 %v6879
      %v6913 = vpop.f32.mrf.mxu0
      %v6914 = vadd.f32 0.0, %v6913
      %v6915 = vpop.f32.mrf.mxu0
      %v6916 = vadd.f32 0.0, %v6915
      %6917 = vdwg.mxu0
      %v6918 = vadd.f32 %v6802, %v6894
      %v6919 = vadd.f32 %v6803, %v6896
      %v6920 = vadd.f32 %v6804, %v6899
      %v6921 = vadd.f32 %v6805, %v6901
      %v6922 = vadd.f32 %v6806, %v6904
      %v6923 = vadd.f32 %v6807, %v6906
      %v6924 = vadd.f32 %v6808, %v6909
      %v6925 = vadd.f32 %v6809, %v6911
      %v6926 = vadd.f32 %v6810, %v6914
      %v6927 = vadd.f32 %v6811, %v6916
      %s6928 = scalar_lea.vmem %s17, 20
      %v6929 = vld [vmem:[%s6928] sm:$0xf]
      %v6930 = vrot.slane %v6736, 2
      %v6931 = vrot.slane %v6737, 2
      %v6932 = vsel %vm6010, %v6930, %v6931
      %v6933 = vrot.slane %v6738, 2
      %v6934 = vsel %vm6010, %v6931, %v6933
      %v6935 = vrot.slane %v6739, 2
      %v6936 = vsel %vm6010, %v6933, %v6935
      %v6937 = vrot.slane %v6740, 2
      %v6938 = vsel %vm6010, %v6935, %v6937
      %v6939 = vrot.slane %v6816, 2
      %v6940 = vsel %vm6010, %v6937, %v6939
      %v6942 = vsel %vm5638, %v6932, 0
      %v6945 = vsel %vm5638, %v6934, 0
      %v6948 = vsel %vm5638, %v6936, 0
      %v6951 = vsel %vm5638, %v6938, 0
      %v6954 = vsel %vm5638, %v6940, 0
      %v6957 = vsel %vm4779, %v6929, 0
      %6959 = vmatpush.bf16.msra.mxu0 0
      %6960 = vmatpush.bf16.msra.mxu0 0
      %6961 = vmatpush.bf16.msra.mxu0 0
      %6962 = vmatpush.bf16.msra.mxu0 0
      %6963 = vmatpush.bf16.msra.mxu0 0
      %6964 = vmatpush.bf16.msra.mxu0 0
      %6965 = vmatpush.bf16.msra.mxu0 0
      %6966 = vmatpush.bf16.msra.mxu0 %v6957
      %6967 = vmatmul.bf16.gmra.mxu0 %v6942
      %v6968 = vpop.f32.mrf.mxu0
      %v6969 = vadd.f32 0.0, %v6968
      %v6970 = vpop.f32.mrf.mxu0
      %v6971 = vadd.f32 0.0, %v6970
      %6972 = vmatmul.bf16.gmra.mxu0 %v6945
      %v6973 = vpop.f32.mrf.mxu0
      %v6974 = vadd.f32 0.0, %v6973
      %v6975 = vpop.f32.mrf.mxu0
      %v6976 = vadd.f32 0.0, %v6975
      %6977 = vmatmul.bf16.gmra.mxu0 %v6948
      %v6978 = vpop.f32.mrf.mxu0
      %v6979 = vadd.f32 0.0, %v6978
      %v6980 = vpop.f32.mrf.mxu0
      %v6981 = vadd.f32 0.0, %v6980
      %6982 = vmatmul.bf16.gmra.mxu0 %v6951
      %v6983 = vpop.f32.mrf.mxu0
      %v6984 = vadd.f32 0.0, %v6983
      %v6985 = vpop.f32.mrf.mxu0
      %v6986 = vadd.f32 0.0, %v6985
      %6987 = vmatmul.bf16.gmra.mxu0 %v6954
      %v6988 = vpop.f32.mrf.mxu0
      %v6989 = vadd.f32 0.0, %v6988
      %v6990 = vpop.f32.mrf.mxu0
      %v6991 = vadd.f32 0.0, %v6990
      %6992 = vdwg.mxu0
      %v6993 = vadd.f32 %v6918, %v6969
      %v6994 = vadd.f32 %v6919, %v6971
      %v6995 = vadd.f32 %v6920, %v6974
      %v6996 = vadd.f32 %v6921, %v6976
      %v6997 = vadd.f32 %v6922, %v6979
      %v6998 = vadd.f32 %v6923, %v6981
      %v6999 = vadd.f32 %v6924, %v6984
      %v7000 = vadd.f32 %v6925, %v6986
      %v7001 = vadd.f32 %v6926, %v6989
      %v7002 = vadd.f32 %v6927, %v6991
      %s7003 = scalar_lea.vmem %s17, 24
      %v7004 = vld [vmem:[%s7003] sm:$0xf]
      %v7006 = vunpack.c.l.b16 %v6492
      %v7007 = vpack.c.b16 %v6815, %v6735
      %v7008 = vpack.c.b16 %v7006, %v7006
      %v7009 = vrot.slane %v6517, 2
      %v7010 = vrot.slane %v6518, 2
      %v7011 = vsel %vm6010, %v7009, %v7010
      %v7012 = vrot.slane %v6519, 2
      %v7013 = vsel %vm6010, %v7010, %v7012
      %v7014 = vrot.slane %v6520, 2
      %v7015 = vsel %vm6010, %v7012, %v7014
      %v7016 = vrot.slane %v7007, 2
      %v7017 = vsel %vm6010, %v7014, %v7016
      %v7018 = vrot.slane %v7008, 2
      %v7019 = vsel %vm6010, %v7016, %v7018
      %v7021 = vsel %vm5638, %v7011, 0
      %v7024 = vsel %vm5638, %v7013, 0
      %v7027 = vsel %vm5638, %v7015, 0
      %v7030 = vsel %vm5638, %v7017, 0
      %v7033 = vsel %vm5638, %v7019, 0
      %v7036 = vsel %vm4779, %v7004, 0
      %7038 = vmatpush.bf16.msra.mxu0 0
      %7039 = vmatpush.bf16.msra.mxu0 0
      %7040 = vmatpush.bf16.msra.mxu0 0
      %7041 = vmatpush.bf16.msra.mxu0 0
      %7042 = vmatpush.bf16.msra.mxu0 0
      %7043 = vmatpush.bf16.msra.mxu0 0
      %7044 = vmatpush.bf16.msra.mxu0 0
      %7045 = vmatpush.bf16.msra.mxu0 %v7036
      %7046 = vmatmul.bf16.gmra.mxu0 %v7021
      %v7047 = vpop.f32.mrf.mxu0
      %v7048 = vadd.f32 0.0, %v7047
      %v7049 = vpop.f32.mrf.mxu0
      %v7050 = vadd.f32 0.0, %v7049
      %7051 = vmatmul.bf16.gmra.mxu0 %v7024
      %v7052 = vpop.f32.mrf.mxu0
      %v7053 = vadd.f32 0.0, %v7052
      %v7054 = vpop.f32.mrf.mxu0
      %v7055 = vadd.f32 0.0, %v7054
      %7056 = vmatmul.bf16.gmra.mxu0 %v7027
      %v7057 = vpop.f32.mrf.mxu0
      %v7058 = vadd.f32 0.0, %v7057
      %v7059 = vpop.f32.mrf.mxu0
      %v7060 = vadd.f32 0.0, %v7059
      %7061 = vmatmul.bf16.gmra.mxu0 %v7030
      %v7062 = vpop.f32.mrf.mxu0
      %v7063 = vadd.f32 0.0, %v7062
      %v7064 = vpop.f32.mrf.mxu0
      %v7065 = vadd.f32 0.0, %v7064
      %7066 = vmatmul.bf16.gmra.mxu0 %v7033
      %v7067 = vpop.f32.mrf.mxu0
      %v7068 = vadd.f32 0.0, %v7067
      %v7069 = vpop.f32.mrf.mxu0
      %v7070 = vadd.f32 0.0, %v7069
      %7071 = vdwg.mxu0
      %v7072 = vadd.f32 %v6993, %v7048
      %v7073 = vadd.f32 %v6994, %v7050
      %v7074 = vadd.f32 %v6995, %v7053
      %v7075 = vadd.f32 %v6996, %v7055
      %v7076 = vadd.f32 %v6997, %v7058
      %v7077 = vadd.f32 %v6998, %v7060
      %v7078 = vadd.f32 %v6999, %v7063
      %v7079 = vadd.f32 %v7000, %v7065
      %v7080 = vadd.f32 %v7001, %v7068
      %v7081 = vadd.f32 %v7002, %v7070
      %s7082 = scalar_lea.vmem %s17, 28
      %v7083 = vld [vmem:[%s7082] sm:$0xf]
      %v7084 = vrot.slane %v6533, 2
      %v7085 = vrot.slane %v6529, 3
      %v7086 = vor.u32 %v7084, %v7085
      %v7087 = vrot.slane %v6541, 2
      %v7088 = vrot.slane %v6537, 3
      %v7089 = vor.u32 %v7087, %v7088
      %v7090 = vsel %vm6165, %v7086, %v7089
      %v7091 = vrot.slane %v6549, 2
      %v7092 = vrot.slane %v6545, 3
      %v7093 = vor.u32 %v7091, %v7092
      %v7094 = vsel %vm6165, %v7089, %v7093
      %v7095 = vrot.slane %v6557, 2
      %v7096 = vrot.slane %v6553, 3
      %v7097 = vor.u32 %v7095, %v7096
      %v7098 = vsel %vm6165, %v7093, %v7097
      %v7100 = vshrl.u32 %v7007, 16
      %v7102 = vrot.slane %v7100, 2
      %v7103 = vshll.u32 %v7007, 16
      %v7105 = vrot.slane %v7103, 3
      %v7106 = vor.u32 %v7102, %v7105
      %v7107 = vsel %vm6165, %v7097, %v7106
      %v7109 = vshrl.u32 %v7008, 16
      %v7111 = vrot.slane %v7109, 2
      %v7112 = vshll.u32 %v7008, 16
      %v7114 = vrot.slane %v7112, 3
      %v7115 = vor.u32 %v7111, %v7114
      %v7116 = vsel %vm6165, %v7106, %v7115
      %v7118 = vsel %vm5638, %v7090, 0
      %v7121 = vsel %vm5638, %v7094, 0
      %v7124 = vsel %vm5638, %v7098, 0
      %v7127 = vsel %vm5638, %v7107, 0
      %v7130 = vsel %vm5638, %v7116, 0
      %v7133 = vsel %vm4779, %v7083, 0
      %7135 = vmatpush.bf16.msra.mxu0 0
      %7136 = vmatpush.bf16.msra.mxu0 0
      %7137 = vmatpush.bf16.msra.mxu0 0
      %7138 = vmatpush.bf16.msra.mxu0 0
      %7139 = vmatpush.bf16.msra.mxu0 0
      %7140 = vmatpush.bf16.msra.mxu0 0
      %7141 = vmatpush.bf16.msra.mxu0 0
      %7142 = vmatpush.bf16.msra.mxu0 %v7133
      %7143 = vmatmul.bf16.gmra.mxu0 %v7118
      %v7144 = vpop.f32.mrf.mxu0
      %v7145 = vadd.f32 0.0, %v7144
      %v7146 = vpop.f32.mrf.mxu0
      %v7147 = vadd.f32 0.0, %v7146
      %7148 = vmatmul.bf16.gmra.mxu0 %v7121
      %v7149 = vpop.f32.mrf.mxu0
      %v7150 = vadd.f32 0.0, %v7149
      %v7151 = vpop.f32.mrf.mxu0
      %v7152 = vadd.f32 0.0, %v7151
      %7153 = vmatmul.bf16.gmra.mxu0 %v7124
      %v7154 = vpop.f32.mrf.mxu0
      %v7155 = vadd.f32 0.0, %v7154
      %v7156 = vpop.f32.mrf.mxu0
      %v7157 = vadd.f32 0.0, %v7156
      %7158 = vmatmul.bf16.gmra.mxu0 %v7127
      %v7159 = vpop.f32.mrf.mxu0
      %v7160 = vadd.f32 0.0, %v7159
      %v7161 = vpop.f32.mrf.mxu0
      %v7162 = vadd.f32 0.0, %v7161
      %7163 = vmatmul.bf16.gmra.mxu0 %v7130
      %v7164 = vpop.f32.mrf.mxu0
      %v7165 = vadd.f32 0.0, %v7164
      %v7166 = vpop.f32.mrf.mxu0
      %v7167 = vadd.f32 0.0, %v7166
      %7168 = vdwg.mxu0
      %v7169 = vadd.f32 %v7072, %v7145
      %v7170 = vadd.f32 %v7073, %v7147
      %v7171 = vadd.f32 %v7074, %v7150
      %v7172 = vadd.f32 %v7075, %v7152
      %v7173 = vadd.f32 %v7076, %v7155
      %v7174 = vadd.f32 %v7077, %v7157
      %v7175 = vadd.f32 %v7078, %v7160
      %v7176 = vadd.f32 %v7079, %v7162
      %v7177 = vadd.f32 %v7080, %v7165
      %v7178 = vadd.f32 %v7081, %v7167
      %s7179 = scalar_lea.vmem %s17, 32
      %v7180 = vld [vmem:[%s7179] sm:$0xf]
      %v7181 = vrot.slane %v6517, 3
      %v7182 = vrot.slane %v6518, 3
      %v7183 = vsel %vm6263, %v7181, %v7182
      %v7184 = vrot.slane %v6519, 3
      %v7185 = vsel %vm6263, %v7182, %v7184
      %v7186 = vrot.slane %v6520, 3
      %v7187 = vsel %vm6263, %v7184, %v7186
      %v7188 = vrot.slane %v7007, 3
      %v7189 = vsel %vm6263, %v7186, %v7188
      %v7190 = vrot.slane %v7008, 3
      %v7191 = vsel %vm6263, %v7188, %v7190
      %v7193 = vsel %vm5638, %v7183, 0
      %v7196 = vsel %vm5638, %v7185, 0
      %v7199 = vsel %vm5638, %v7187, 0
      %v7202 = vsel %vm5638, %v7189, 0
      %v7205 = vsel %vm5638, %v7191, 0
      %v7208 = vsel %vm4779, %v7180, 0
      %7210 = vmatpush.bf16.msra.mxu0 0
      %7211 = vmatpush.bf16.msra.mxu0 0
      %7212 = vmatpush.bf16.msra.mxu0 0
      %7213 = vmatpush.bf16.msra.mxu0 0
      %7214 = vmatpush.bf16.msra.mxu0 0
      %7215 = vmatpush.bf16.msra.mxu0 0
      %7216 = vmatpush.bf16.msra.mxu0 0
      %7217 = vmatpush.bf16.msra.mxu0 %v7208
      %7218 = vmatmul.bf16.gmra.mxu0 %v7193
      %v7219 = vpop.f32.mrf.mxu0
      %v7220 = vadd.f32 0.0, %v7219
      %v7221 = vpop.f32.mrf.mxu0
      %v7222 = vadd.f32 0.0, %v7221
      %7223 = vmatmul.bf16.gmra.mxu0 %v7196
      %v7224 = vpop.f32.mrf.mxu0
      %v7225 = vadd.f32 0.0, %v7224
      %v7226 = vpop.f32.mrf.mxu0
      %v7227 = vadd.f32 0.0, %v7226
      %7228 = vmatmul.bf16.gmra.mxu0 %v7199
      %v7229 = vpop.f32.mrf.mxu0
      %v7230 = vadd.f32 0.0, %v7229
      %v7231 = vpop.f32.mrf.mxu0
      %v7232 = vadd.f32 0.0, %v7231
      %7233 = vmatmul.bf16.gmra.mxu0 %v7202
      %v7234 = vpop.f32.mrf.mxu0
      %v7235 = vadd.f32 0.0, %v7234
      %v7236 = vpop.f32.mrf.mxu0
      %v7237 = vadd.f32 0.0, %v7236
      %7238 = vmatmul.bf16.gmra.mxu0 %v7205
      %v7239 = vpop.f32.mrf.mxu0
      %v7240 = vadd.f32 0.0, %v7239
      %v7241 = vpop.f32.mrf.mxu0
      %v7242 = vadd.f32 0.0, %v7241
      %7243 = vdwg.mxu0
      %v7244 = vadd.f32 %v7169, %v7220
      %v7245 = vadd.f32 %v7170, %v7222
      %v7246 = vadd.f32 %v7171, %v7225
      %v7247 = vadd.f32 %v7172, %v7227
      %v7248 = vadd.f32 %v7173, %v7230
      %v7249 = vadd.f32 %v7174, %v7232
      %v7250 = vadd.f32 %v7175, %v7235
      %v7251 = vadd.f32 %v7176, %v7237
      %v7252 = vadd.f32 %v7177, %v7240
      %v7253 = vadd.f32 %v7178, %v7242
      %v7254 = vld [vmem:[%s19] sm:$0x1]
      %v7256 = vperm.slane %v7254, 0
      %v7258 = vadd.f32 %v7244, %v7256
      %v7259 = vadd.f32 %v7245, %v7256
      %v7260 = vadd.f32 %v7246, %v7256
      %v7261 = vadd.f32 %v7247, %v7256
      %v7262 = vadd.f32 %v7248, %v7256
      %v7263 = vadd.f32 %v7249, %v7256
      %v7264 = vadd.f32 %v7250, %v7256
      %v7265 = vadd.f32 %v7251, %v7256
      %v7266 = vadd.f32 %v7252, %v7256
      %v7267 = vadd.f32 %v7253, %v7256
      %v7268 = vmax.f32 %v7258, 0.0
      %v7269 = vmax.f32 %v7259, 0.0
      %v7270 = vmax.f32 %v7260, 0.0
      %v7271 = vmax.f32 %v7261, 0.0
      %v7272 = vmax.f32 %v7262, 0.0
      %v7273 = vmax.f32 %v7263, 0.0
      %v7274 = vmax.f32 %v7264, 0.0
      %v7275 = vmax.f32 %v7265, 0.0
      %v7276 = vmax.f32 %v7266, 0.0
      %v7277 = vmax.f32 %v7267, 0.0
      %v7278 = vpack.c.bf16 %v7269, %v7268
      %v7279 = vpack.c.bf16 %v7271, %v7270
      %v7280 = vpack.c.bf16 %v7273, %v7272
      %v7281 = vpack.c.bf16 %v7275, %v7274
      %v7282 = vpack.c.bf16 %v7277, %v7276
      %v7283 = vld [vmem:[%s21] sm:$0xf]
      %v7284 = vld [vmem:[%s21 + $0x4] sm:$0xf]
      %v7285 = vld [vmem:[%s21 + $0x8] sm:$0xf]
      %v7286 = vld [vmem:[%s21 + $0xc] sm:$0xf]
      %v7287 = vld [vmem:[%s21 + $0x10] sm:$0x3]
      %v7293 = vunpack.c.l.b16 %v7283
      %v7294 = vunpack.c.l.b16 %v7284
      %v7295 = vunpack.c.l.b16 %v7285
      %v7296 = vunpack.c.l.b16 %v7286
      %v7297 = vunpack.c.l.b16 %v7287
      %v7298 = vpack.c.b16 %v7294, %v7293
      %v7299 = vpack.c.b16 %v7296, %v7295
      %v7300 = vpack.c.b16 %v7297, %v7297
      %v7302 = vsel %vm6412, %v7298, 0
      %v7305 = vsel %vm6412, %v7299, 0
      %v7308 = vsel %vm6412, %v7300, 0
      %v7311 = vsel %vm3918, %v7282, 0
      %7313 = vmatpush.bf16.msra.mxu0 0
      %7314 = vmatpush.bf16.msra.mxu0 0
      %7315 = vmatpush.bf16.msra.mxu0 0
      %7316 = vmatpush.bf16.msra.mxu0 %v7311
      %7317 = vmatpush.bf16.msra.mxu0 %v7281
      %7318 = vmatpush.bf16.msra.mxu0 %v7280
      %7319 = vmatpush.bf16.msra.mxu0 %v7279
      %7320 = vmatpush.bf16.msra.mxu0 %v7278
      %7321 = vmatmul.bf16.gmra.mxu0 %v7302
      %v7322 = vpop.f32.mrf.mxu0
      %v7323 = vadd.f32 0.0, %v7322
      %v7324 = vpop.f32.mrf.mxu0
      %v7325 = vadd.f32 0.0, %v7324
      %7326 = vmatmul.bf16.gmra.mxu0 %v7305
      %v7327 = vpop.f32.mrf.mxu0
      %v7328 = vadd.f32 0.0, %v7327
      %v7329 = vpop.f32.mrf.mxu0
      %v7330 = vadd.f32 0.0, %v7329
      %7331 = vmatmul.bf16.gmra.mxu0 %v7308
      %v7332 = vpop.f32.mrf.mxu0
      %v7333 = vadd.f32 0.0, %v7332
      %v7334 = vpop.f32.mrf.mxu0
      %7335 = vdwg.mxu0
      %v7336 = vpack.c.bf16 %v7323, %v7323
      %v7337 = vpack.c.bf16 %v7325, %v7325
      %v7338 = vpack.c.bf16 %v7328, %v7328
      %v7339 = vpack.c.bf16 %v7330, %v7330
      %v7340 = vpack.c.bf16 %v7333, %v7333
      %v7341 = vld [vmem:[%s23] sm:$0xf]
      %v7342 = vld [vmem:[%s23 + $0x4] sm:$0xf]
      %s7343 = scalar_lea.vmem %s23, 8
      %v7344 = vld [vmem:[%s7343] sm:$0xf]
      %v7345 = vld [vmem:[%s7343 + $0x4] sm:$0xf]
      %v7349 = vunpack.c.l.b16 %v7336
      %v7350 = vunpack.c.l.b16 %v7337
      %v7351 = vunpack.c.l.b16 %v7338
      %v7352 = vpack.c.b16 %v7350, %v7349
      %v7353 = vpack.c.b16 %v7351, %v7351
      %v7355 = vshrl.u32 %v7352, 16
      %v7357 = vshll.u32 %v7352, 16
      %v7359 = vrot.slane %v7357, 1
      %v7360 = vor.u32 %v7355, %v7359
      %v7362 = vshll.u32 %v7353, 16
      %v7364 = vrot.slane %v7362, 1
      %v7365 = vsel %vm1549, %v7360, %v7364
      %v7366 = vshrl.u32 %v7353, 16
      %v7368 = vor.u32 %v7366, %v7364
      %v7371 = vunpack.c.l.b16 %v7344
      %v7372 = vunpack.c.l.b16 %v7345
      %v7373 = vpack.c.b16 %v7372, %v7371
      %vm7375 = vcmask 130048
      %v7377 = vsel %vm7375, %v7365, 0
      %v7380 = vsel %vm7375, %v7368, 0
      %7382 = vmatpush.bf16.msra.mxu0 0
      %7383 = vmatpush.bf16.msra.mxu0 0
      %7384 = vmatpush.bf16.msra.mxu0 0
      %7385 = vmatpush.bf16.msra.mxu0 0
      %7386 = vmatpush.bf16.msra.mxu0 0
      %7387 = vmatpush.bf16.msra.mxu0 0
      %7388 = vmatpush.bf16.msra.mxu0 0
      %7389 = vmatpush.bf16.msra.mxu0 %v7373
      %7390 = vmatmul.bf16.gmra.mxu0 %v7377
      %v7391 = vpop.f32.mrf.mxu0
      %v7392 = vadd.f32 0.0, %v7391
      %v7393 = vpop.f32.mrf.mxu0
      %v7394 = vadd.f32 0.0, %v7393
      %7395 = vmatmul.bf16.gmra.mxu0 %v7380
      %v7396 = vpop.f32.mrf.mxu0
      %v7397 = vadd.f32 0.0, %v7396
      %v7398 = vpop.f32.mrf.mxu0
      %7399 = vdwg.mxu0
      %v7402 = vunpack.c.l.b16 %v7341
      %v7403 = vunpack.c.l.b16 %v7342
      %v7404 = vpack.c.b16 %v7403, %v7402
      %v7406 = vsel %vm7375, %v7352, 0
      %v7408 = vsel %vm7375, %v7353, 0
      %7410 = vmatpush.bf16.msra.mxu0 0
      %7411 = vmatpush.bf16.msra.mxu0 0
      %7412 = vmatpush.bf16.msra.mxu0 0
      %7413 = vmatpush.bf16.msra.mxu0 0
      %7414 = vmatpush.bf16.msra.mxu0 0
      %7415 = vmatpush.bf16.msra.mxu0 0
      %7416 = vmatpush.bf16.msra.mxu0 0
      %7417 = vmatpush.bf16.msra.mxu0 %v7404
      %7418 = vmatmul.bf16.gmra.mxu0 %v7406
      %v7419 = vpop.f32.mrf.mxu0
      %v7420 = vadd.f32 %v7392, %v7419
      %v7421 = vpop.f32.mrf.mxu0
      %v7422 = vadd.f32 %v7394, %v7421
      %7423 = vmatmul.bf16.gmra.mxu0 %v7408
      %v7424 = vpop.f32.mrf.mxu0
      %v7425 = vadd.f32 %v7397, %v7424
      %v7426 = vpop.f32.mrf.mxu0
      %7427 = vdwg.mxu0
      %s7428 = scalar_lea.vmem %s23, 16
      %v7429 = vld [vmem:[%s7428] sm:$0xf]
      %v7430 = vld [vmem:[%s7428 + $0x4] sm:$0xf]
      %v7431 = vrot.slane %v7352, 1
      %v7432 = vrot.slane %v7353, 1
      %v7433 = vsel %vm3155, %v7431, %v7432
      %v7436 = vunpack.c.l.b16 %v7429
      %v7437 = vunpack.c.l.b16 %v7430
      %v7438 = vpack.c.b16 %v7437, %v7436
      %v7441 = vsel %vm7375, %v7433, 0
      %v7444 = vsel %vm7375, %v7432, 0
      %7446 = vmatpush.bf16.msra.mxu0 0
      %7447 = vmatpush.bf16.msra.mxu0 0
      %7448 = vmatpush.bf16.msra.mxu0 0
      %7449 = vmatpush.bf16.msra.mxu0 0
      %7450 = vmatpush.bf16.msra.mxu0 0
      %7451 = vmatpush.bf16.msra.mxu0 0
      %7452 = vmatpush.bf16.msra.mxu0 0
      %7453 = vmatpush.bf16.msra.mxu0 %v7438
      %7454 = vmatmul.bf16.gmra.mxu0 %v7441
      %v7455 = vpop.f32.mrf.mxu0
      %v7456 = vadd.f32 0.0, %v7455
      %v7457 = vpop.f32.mrf.mxu0
      %v7458 = vadd.f32 0.0, %v7457
      %7459 = vmatmul.bf16.gmra.mxu0 %v7444
      %v7460 = vpop.f32.mrf.mxu0
      %v7461 = vadd.f32 0.0, %v7460
      %v7462 = vpop.f32.mrf.mxu0
      %7463 = vdwg.mxu0
      %v7464 = vadd.f32 %v7420, %v7456
      %v7465 = vadd.f32 %v7422, %v7458
      %v7466 = vadd.f32 %v7425, %v7461
      %s7467 = scalar_lea.vmem %s23, 24
      %v7468 = vld [vmem:[%s7467] sm:$0xf]
      %v7469 = vld [vmem:[%s7467 + $0x4] sm:$0xf]
      %v7471 = vunpack.c.l.b16 %v7339
      %v7472 = vpack.c.b16 %v7471, %v7351
      %v7473 = vrot.slane %v7352, 3
      %v7474 = vrot.slane %v7472, 3
      %v7475 = vsel %vm6263, %v7473, %v7474
      %v7478 = vunpack.c.l.b16 %v7468
      %v7479 = vunpack.c.l.b16 %v7469
      %v7480 = vpack.c.b16 %v7479, %v7478
      %v7483 = vsel %vm7375, %v7475, 0
      %v7486 = vsel %vm7375, %v7474, 0
      %7488 = vmatpush.bf16.msra.mxu0 0
      %7489 = vmatpush.bf16.msra.mxu0 0
      %7490 = vmatpush.bf16.msra.mxu0 0
      %7491 = vmatpush.bf16.msra.mxu0 0
      %7492 = vmatpush.bf16.msra.mxu0 0
      %7493 = vmatpush.bf16.msra.mxu0 0
      %7494 = vmatpush.bf16.msra.mxu0 0
      %7495 = vmatpush.bf16.msra.mxu0 %v7480
      %7496 = vmatmul.bf16.gmra.mxu0 %v7483
      %v7497 = vpop.f32.mrf.mxu0
      %v7498 = vadd.f32 0.0, %v7497
      %v7499 = vpop.f32.mrf.mxu0
      %v7500 = vadd.f32 0.0, %v7499
      %7501 = vmatmul.bf16.gmra.mxu0 %v7486
      %v7502 = vpop.f32.mrf.mxu0
      %v7503 = vadd.f32 0.0, %v7502
      %v7504 = vpop.f32.mrf.mxu0
      %7505 = vdwg.mxu0
      %v7506 = vadd.f32 %v7464, %v7498
      %v7507 = vadd.f32 %v7465, %v7500
      %v7508 = vadd.f32 %v7466, %v7503
      %s7509 = scalar_lea.vmem %s23, 32
      %v7510 = vld [vmem:[%s7509] sm:$0xf]
      %v7511 = vld [vmem:[%s7509 + $0x4] sm:$0xf]
      %vm7512 = vsmask.f32 4352
      %v7513 = vrot.slane %v7355, 3
      %v7514 = vrot.slane %v7357, 4
      %v7515 = vor.u32 %v7513, %v7514
      %v7517 = vshrl.u32 %v7472, 16
      %v7519 = vrot.slane %v7517, 3
      %v7520 = vshll.u32 %v7472, 16
      %v7522 = vrot.slane %v7520, 4
      %v7523 = vor.u32 %v7519, %v7522
      %v7524 = vsel %vm7512, %v7515, %v7523
      %v7527 = vunpack.c.l.b16 %v7510
      %v7528 = vunpack.c.l.b16 %v7511
      %v7529 = vpack.c.b16 %v7528, %v7527
      %v7532 = vsel %vm7375, %v7524, 0
      %v7535 = vsel %vm7375, %v7523, 0
      %7537 = vmatpush.bf16.msra.mxu0 0
      %7538 = vmatpush.bf16.msra.mxu0 0
      %7539 = vmatpush.bf16.msra.mxu0 0
      %7540 = vmatpush.bf16.msra.mxu0 0
      %7541 = vmatpush.bf16.msra.mxu0 0
      %7542 = vmatpush.bf16.msra.mxu0 0
      %7543 = vmatpush.bf16.msra.mxu0 0
      %7544 = vmatpush.bf16.msra.mxu0 %v7529
      %7545 = vmatmul.bf16.gmra.mxu0 %v7532
      %v7546 = vpop.f32.mrf.mxu0
      %v7547 = vadd.f32 0.0, %v7546
      %v7548 = vpop.f32.mrf.mxu0
      %v7549 = vadd.f32 0.0, %v7548
      %7550 = vmatmul.bf16.gmra.mxu0 %v7535
      %v7551 = vpop.f32.mrf.mxu0
      %v7552 = vadd.f32 0.0, %v7551
      %v7553 = vpop.f32.mrf.mxu0
      %7554 = vdwg.mxu0
      %v7555 = vadd.f32 %v7506, %v7547
      %v7556 = vadd.f32 %v7507, %v7549
      %v7557 = vadd.f32 %v7508, %v7552
      %s7558 = scalar_lea.vmem %s23, 40
      %v7559 = vld [vmem:[%s7558] sm:$0xf]
      %v7560 = vld [vmem:[%s7558 + $0x4] sm:$0xf]
      %v7561 = vpack.c.b16 %v7351, %v7350
      %v7562 = vpack.c.b16 %v7471, %v7471
      %v7565 = vunpack.c.l.b16 %v7559
      %v7566 = vunpack.c.l.b16 %v7560
      %v7567 = vpack.c.b16 %v7566, %v7565
      %v7570 = vsel %vm7375, %v7561, 0
      %v7573 = vsel %vm7375, %v7562, 0
      %7575 = vmatpush.bf16.msra.mxu0 0
      %7576 = vmatpush.bf16.msra.mxu0 0
      %7577 = vmatpush.bf16.msra.mxu0 0
      %7578 = vmatpush.bf16.msra.mxu0 0
      %7579 = vmatpush.bf16.msra.mxu0 0
      %7580 = vmatpush.bf16.msra.mxu0 0
      %7581 = vmatpush.bf16.msra.mxu0 0
      %7582 = vmatpush.bf16.msra.mxu0 %v7567
      %7583 = vmatmul.bf16.gmra.mxu0 %v7570
      %v7584 = vpop.f32.mrf.mxu0
      %v7585 = vadd.f32 0.0, %v7584
      %v7586 = vpop.f32.mrf.mxu0
      %v7587 = vadd.f32 0.0, %v7586
      %7588 = vmatmul.bf16.gmra.mxu0 %v7573
      %v7589 = vpop.f32.mrf.mxu0
      %v7590 = vadd.f32 0.0, %v7589
      %v7591 = vpop.f32.mrf.mxu0
      %7592 = vdwg.mxu0
      %v7593 = vadd.f32 %v7555, %v7585
      %v7594 = vadd.f32 %v7556, %v7587
      %v7595 = vadd.f32 %v7557, %v7590
      %s7596 = scalar_lea.vmem %s23, 48
      %v7597 = vld [vmem:[%s7596] sm:$0xf]
      %v7598 = vld [vmem:[%s7596 + $0x4] sm:$0xf]
      %v7600 = vunpack.c.l.b16 %v7340
      %v7601 = vpack.c.b16 %v7600, %v7471
      %v7602 = vrot.slane %v7561, 2
      %v7603 = vrot.slane %v7601, 2
      %v7604 = vsel %vm6010, %v7602, %v7603
      %v7607 = vunpack.c.l.b16 %v7597
      %v7608 = vunpack.c.l.b16 %v7598
      %v7609 = vpack.c.b16 %v7608, %v7607
      %v7612 = vsel %vm7375, %v7604, 0
      %v7615 = vsel %vm7375, %v7603, 0
      %7617 = vmatpush.bf16.msra.mxu0 0
      %7618 = vmatpush.bf16.msra.mxu0 0
      %7619 = vmatpush.bf16.msra.mxu0 0
      %7620 = vmatpush.bf16.msra.mxu0 0
      %7621 = vmatpush.bf16.msra.mxu0 0
      %7622 = vmatpush.bf16.msra.mxu0 0
      %7623 = vmatpush.bf16.msra.mxu0 0
      %7624 = vmatpush.bf16.msra.mxu0 %v7609
      %7625 = vmatmul.bf16.gmra.mxu0 %v7612
      %v7626 = vpop.f32.mrf.mxu0
      %v7627 = vadd.f32 0.0, %v7626
      %v7628 = vpop.f32.mrf.mxu0
      %v7629 = vadd.f32 0.0, %v7628
      %7630 = vmatmul.bf16.gmra.mxu0 %v7615
      %v7631 = vpop.f32.mrf.mxu0
      %v7632 = vadd.f32 0.0, %v7631
      %v7633 = vpop.f32.mrf.mxu0
      %7634 = vdwg.mxu0
      %v7635 = vadd.f32 %v7593, %v7627
      %v7636 = vadd.f32 %v7594, %v7629
      %v7637 = vadd.f32 %v7595, %v7632
      %s7638 = scalar_lea.vmem %s23, 56
      %v7639 = vld [vmem:[%s7638] sm:$0xf]
      %v7640 = vld [vmem:[%s7638 + $0x4] sm:$0xf]
      %v7641 = vshrl.u32 %v7561, 16
      %v7643 = vrot.slane %v7641, 2
      %v7644 = vshll.u32 %v7561, 16
      %v7646 = vrot.slane %v7644, 3
      %v7647 = vor.u32 %v7643, %v7646
      %v7649 = vshrl.u32 %v7601, 16
      %v7651 = vrot.slane %v7649, 2
      %v7652 = vshll.u32 %v7601, 16
      %v7654 = vrot.slane %v7652, 3
      %v7655 = vor.u32 %v7651, %v7654
      %v7656 = vsel %vm6165, %v7647, %v7655
      %v7659 = vunpack.c.l.b16 %v7639
      %v7660 = vunpack.c.l.b16 %v7640
      %v7661 = vpack.c.b16 %v7660, %v7659
      %v7664 = vsel %vm7375, %v7656, 0
      %v7667 = vsel %vm7375, %v7655, 0
      %7669 = vmatpush.bf16.msra.mxu0 0
      %7670 = vmatpush.bf16.msra.mxu0 0
      %7671 = vmatpush.bf16.msra.mxu0 0
      %7672 = vmatpush.bf16.msra.mxu0 0
      %7673 = vmatpush.bf16.msra.mxu0 0
      %7674 = vmatpush.bf16.msra.mxu0 0
      %7675 = vmatpush.bf16.msra.mxu0 0
      %7676 = vmatpush.bf16.msra.mxu0 %v7661
      %7677 = vmatmul.bf16.gmra.mxu0 %v7664
      %v7678 = vpop.f32.mrf.mxu0
      %v7679 = vadd.f32 0.0, %v7678
      %v7680 = vpop.f32.mrf.mxu0
      %v7681 = vadd.f32 0.0, %v7680
      %7682 = vmatmul.bf16.gmra.mxu0 %v7667
      %v7683 = vpop.f32.mrf.mxu0
      %v7684 = vadd.f32 0.0, %v7683
      %v7685 = vpop.f32.mrf.mxu0
      %7686 = vdwg.mxu0
      %v7687 = vadd.f32 %v7635, %v7679
      %v7688 = vadd.f32 %v7636, %v7681
      %v7689 = vadd.f32 %v7637, %v7684
      %s7690 = scalar_lea.vmem %s23, 64
      %v7691 = vld [vmem:[%s7690] sm:$0xf]
      %v7692 = vld [vmem:[%s7690 + $0x4] sm:$0xf]
      %v7693 = vrot.slane %v7561, 3
      %v7694 = vrot.slane %v7601, 3
      %v7695 = vsel %vm6263, %v7693, %v7694
      %v7698 = vunpack.c.l.b16 %v7691
      %v7699 = vunpack.c.l.b16 %v7692
      %v7700 = vpack.c.b16 %v7699, %v7698
      %v7703 = vsel %vm7375, %v7695, 0
      %v7706 = vsel %vm7375, %v7694, 0
      %7708 = vmatpush.bf16.msra.mxu0 0
      %7709 = vmatpush.bf16.msra.mxu0 0
      %7710 = vmatpush.bf16.msra.mxu0 0
      %7711 = vmatpush.bf16.msra.mxu0 0
      %7712 = vmatpush.bf16.msra.mxu0 0
      %7713 = vmatpush.bf16.msra.mxu0 0
      %7714 = vmatpush.bf16.msra.mxu0 0
      %7715 = vmatpush.bf16.msra.mxu0 %v7700
      %7716 = vmatmul.bf16.gmra.mxu0 %v7703
      %v7717 = vpop.f32.mrf.mxu0
      %v7718 = vadd.f32 0.0, %v7717
      %v7719 = vpop.f32.mrf.mxu0
      %v7720 = vadd.f32 0.0, %v7719
      %7721 = vmatmul.bf16.gmra.mxu0 %v7706
      %v7722 = vpop.f32.mrf.mxu0
      %v7723 = vadd.f32 0.0, %v7722
      %v7724 = vpop.f32.mrf.mxu0
      %7725 = vdwg.mxu0
      %v7726 = vadd.f32 %v7687, %v7718
      %v7727 = vadd.f32 %v7688, %v7720
      %v7728 = vadd.f32 %v7689, %v7723
      %v7729 = vld [vmem:[%s25] sm:$0x1]
      %v7731 = vperm.slane %v7729, 0
      %v7733 = vadd.f32 %v7726, %v7731
      %v7734 = vadd.f32 %v7727, %v7731
      %v7735 = vadd.f32 %v7728, %v7731
      %v7736 = vmax.f32 %v7733, 0.0
      %v7737 = vmax.f32 %v7734, 0.0
      %v7738 = vmax.f32 %v7735, 0.0
      %v7739 = vpack.c.bf16 %v7737, %v7736
      %v7740 = vpack.c.bf16 %v7738, %v7738
      %v7741 = vld [vmem:[%s27] sm:$0xf]
      %v7742 = vld [vmem:[%s27 + $0x4] sm:$0xf]
      %v7745 = vunpack.c.l.b16 %v7741
      %v7746 = vunpack.c.l.b16 %v7742
      %v7747 = vpack.c.b16 %v7746, %v7745
      %vm7748 = vcmask 179200
      %v7750 = vsel %vm7748, %v7747, 0
      %v7753 = vsel %vm4969, %v7740, 0
      %7755 = vmatpush.bf16.msra.mxu0 0
      %7756 = vmatpush.bf16.msra.mxu0 0
      %7757 = vmatpush.bf16.msra.mxu0 0
      %7758 = vmatpush.bf16.msra.mxu0 0
      %7759 = vmatpush.bf16.msra.mxu0 0
      %7760 = vmatpush.bf16.msra.mxu0 0
      %7761 = vmatpush.bf16.msra.mxu0 %v7753
      %7762 = vmatpush.bf16.msra.mxu0 %v7739
      %7763 = vmatmul.bf16.gmra.mxu0 %v7750
      %v7764 = vpop.f32.mrf.mxu0
      %v7765 = vadd.f32 0.0, %v7764
      %v7766 = vpop.f32.mrf.mxu0
      %v7767 = vadd.f32 0.0, %v7766
      %7768 = vdwg.mxu0
      %v7769 = vpack.c.bf16 %v7765, %v7765
      %v7770 = vpack.c.bf16 %v7767, %v7767
      %v7771 = vld [vmem:[%s29] sm:$0xf]
      %v7772 = vld [vmem:[%s29 + $0x4] sm:$0xf]
      %v7773 = vld [vmem:[%s29 + $0x8] sm:$0xf]
      %v7774 = vld [vmem:[%s29 + $0xc] sm:$0xf]
      %s7775 = scalar_lea.vmem %s29, 16
      %v7776 = vld [vmem:[%s7775] sm:$0xf]
      %v7777 = vld [vmem:[%s7775 + $0x4] sm:$0xf]
      %v7778 = vld [vmem:[%s7775 + $0x8] sm:$0xf]
      %v7779 = vld [vmem:[%s7775 + $0xc] sm:$0xf]
      %v7781 = vunpack.c.l.b16 %v7769
      %v7782 = vpack.c.b16 %v7781, %v7781
      %v7784 = vshrl.u32 %v7782, 16
      %v7786 = vshll.u32 %v7782, 16
      %v7788 = vrot.slane %v7786, 1
      %v7789 = vor.u32 %v7784, %v7788
      %v7794 = vunpack.c.l.b16 %v7776
      %v7795 = vunpack.c.l.b16 %v7777
      %v7796 = vunpack.c.l.b16 %v7778
      %v7797 = vunpack.c.l.b16 %v7779
      %v7798 = vpack.c.b16 %v7795, %v7794
      %v7799 = vpack.c.b16 %v7797, %v7796
      %vm7802 = vcmask 261120
      %v7804 = vsel %vm7802, %v7789, 0
      %7806 = vmatpush.bf16.msra.mxu0 0
      %7807 = vmatpush.bf16.msra.mxu0 0
      %7808 = vmatpush.bf16.msra.mxu0 0
      %7809 = vmatpush.bf16.msra.mxu0 0
      %7810 = vmatpush.bf16.msra.mxu0 0
      %7811 = vmatpush.bf16.msra.mxu0 0
      %7812 = vmatpush.bf16.msra.mxu0 %v7799
      %7813 = vmatpush.bf16.msra.mxu0 %v7798
      %7814 = vmatmul.bf16.gmra.mxu0 %v7804
      %v7815 = vpop.f32.mrf.mxu0
      %v7816 = vadd.f32 0.0, %v7815
      %v7817 = vpop.f32.mrf.mxu0
      %7818 = vdwg.mxu0
      %v7823 = vunpack.c.l.b16 %v7771
      %v7824 = vunpack.c.l.b16 %v7772
      %v7825 = vunpack.c.l.b16 %v7773
      %v7826 = vunpack.c.l.b16 %v7774
      %v7827 = vpack.c.b16 %v7824, %v7823
      %v7828 = vpack.c.b16 %v7826, %v7825
      %v7832 = vsel %vm7802, %v7769, 0
      %7834 = vmatpush.bf16.msra.mxu0 0
      %7835 = vmatpush.bf16.msra.mxu0 0
      %7836 = vmatpush.bf16.msra.mxu0 0
      %7837 = vmatpush.bf16.msra.mxu0 0
      %7838 = vmatpush.bf16.msra.mxu0 0
      %7839 = vmatpush.bf16.msra.mxu0 0
      %7840 = vmatpush.bf16.msra.mxu0 %v7828
      %7841 = vmatpush.bf16.msra.mxu0 %v7827
      %7842 = vmatmul.bf16.gmra.mxu0 %v7832
      %v7843 = vpop.f32.mrf.mxu0
      %v7844 = vadd.f32 %v7816, %v7843
      %v7845 = vpop.f32.mrf.mxu0
      %7846 = vdwg.mxu0
      %s7847 = scalar_lea.vmem %s29, 32
      %v7848 = vld [vmem:[%s7847] sm:$0xf]
      %v7849 = vld [vmem:[%s7847 + $0x4] sm:$0xf]
      %v7850 = vld [vmem:[%s7847 + $0x8] sm:$0xf]
      %v7851 = vld [vmem:[%s7847 + $0xc] sm:$0xf]
      %v7852 = vrot.slane %v7782, 1
      %v7857 = vunpack.c.l.b16 %v7848
      %v7858 = vunpack.c.l.b16 %v7849
      %v7859 = vunpack.c.l.b16 %v7850
      %v7860 = vunpack.c.l.b16 %v7851
      %v7861 = vpack.c.b16 %v7858, %v7857
      %v7862 = vpack.c.b16 %v7860, %v7859
      %v7866 = vsel %vm7802, %v7852, 0
      %7868 = vmatpush.bf16.msra.mxu0 0
      %7869 = vmatpush.bf16.msra.mxu0 0
      %7870 = vmatpush.bf16.msra.mxu0 0
      %7871 = vmatpush.bf16.msra.mxu0 0
      %7872 = vmatpush.bf16.msra.mxu0 0
      %7873 = vmatpush.bf16.msra.mxu0 0
      %7874 = vmatpush.bf16.msra.mxu0 %v7862
      %7875 = vmatpush.bf16.msra.mxu0 %v7861
      %7876 = vmatmul.bf16.gmra.mxu0 %v7866
      %v7877 = vpop.f32.mrf.mxu0
      %v7878 = vadd.f32 0.0, %v7877
      %v7879 = vpop.f32.mrf.mxu0
      %7880 = vdwg.mxu0
      %v7881 = vadd.f32 %v7844, %v7878
      %s7882 = scalar_lea.vmem %s29, 48
      %v7883 = vld [vmem:[%s7882] sm:$0xf]
      %v7884 = vld [vmem:[%s7882 + $0x4] sm:$0xf]
      %v7885 = vld [vmem:[%s7882 + $0x8] sm:$0xf]
      %v7886 = vld [vmem:[%s7882 + $0xc] sm:$0xf]
      %v7888 = vunpack.c.l.b16 %v7770
      %v7889 = vpack.c.b16 %v7888, %v7781
      %v7890 = vrot.slane %v7889, 2
      %v7895 = vunpack.c.l.b16 %v7883
      %v7896 = vunpack.c.l.b16 %v7884
      %v7897 = vunpack.c.l.b16 %v7885
      %v7898 = vunpack.c.l.b16 %v7886
      %v7899 = vpack.c.b16 %v7896, %v7895
      %v7900 = vpack.c.b16 %v7898, %v7897
      %v7904 = vsel %vm7802, %v7890, 0
      %7906 = vmatpush.bf16.msra.mxu0 0
      %7907 = vmatpush.bf16.msra.mxu0 0
      %7908 = vmatpush.bf16.msra.mxu0 0
      %7909 = vmatpush.bf16.msra.mxu0 0
      %7910 = vmatpush.bf16.msra.mxu0 0
      %7911 = vmatpush.bf16.msra.mxu0 0
      %7912 = vmatpush.bf16.msra.mxu0 %v7900
      %7913 = vmatpush.bf16.msra.mxu0 %v7899
      %7914 = vmatmul.bf16.gmra.mxu0 %v7904
      %v7915 = vpop.f32.mrf.mxu0
      %v7916 = vadd.f32 0.0, %v7915
      %v7917 = vpop.f32.mrf.mxu0
      %7918 = vdwg.mxu0
      %v7919 = vadd.f32 %v7881, %v7916
      %s7920 = scalar_lea.vmem %s29, 64
      %v7921 = vld [vmem:[%s7920] sm:$0xf]
      %v7922 = vld [vmem:[%s7920 + $0x4] sm:$0xf]
      %v7923 = vld [vmem:[%s7920 + $0x8] sm:$0xf]
      %v7924 = vld [vmem:[%s7920 + $0xc] sm:$0xf]
      %v7926 = vshrl.u32 %v7889, 16
      %v7928 = vrot.slane %v7926, 2
      %v7929 = vshll.u32 %v7889, 16
      %v7931 = vrot.slane %v7929, 3
      %v7932 = vor.u32 %v7928, %v7931
      %v7937 = vunpack.c.l.b16 %v7921
      %v7938 = vunpack.c.l.b16 %v7922
      %v7939 = vunpack.c.l.b16 %v7923
      %v7940 = vunpack.c.l.b16 %v7924
      %v7941 = vpack.c.b16 %v7938, %v7937
      %v7942 = vpack.c.b16 %v7940, %v7939
      %v7946 = vsel %vm7802, %v7932, 0
      %7948 = vmatpush.bf16.msra.mxu0 0
      %7949 = vmatpush.bf16.msra.mxu0 0
      %7950 = vmatpush.bf16.msra.mxu0 0
      %7951 = vmatpush.bf16.msra.mxu0 0
      %7952 = vmatpush.bf16.msra.mxu0 0
      %7953 = vmatpush.bf16.msra.mxu0 0
      %7954 = vmatpush.bf16.msra.mxu0 %v7942
      %7955 = vmatpush.bf16.msra.mxu0 %v7941
      %7956 = vmatmul.bf16.gmra.mxu0 %v7946
      %v7957 = vpop.f32.mrf.mxu0
      %v7958 = vadd.f32 0.0, %v7957
      %v7959 = vpop.f32.mrf.mxu0
      %7960 = vdwg.mxu0
      %v7961 = vadd.f32 %v7919, %v7958
      %s7962 = scalar_lea.vmem %s29, 80
      %v7963 = vld [vmem:[%s7962] sm:$0xf]
      %v7964 = vld [vmem:[%s7962 + $0x4] sm:$0xf]
      %v7965 = vld [vmem:[%s7962 + $0x8] sm:$0xf]
      %v7966 = vld [vmem:[%s7962 + $0xc] sm:$0xf]
      %v7967 = vrot.slane %v7889, 3
      %v7972 = vunpack.c.l.b16 %v7963
      %v7973 = vunpack.c.l.b16 %v7964
      %v7974 = vunpack.c.l.b16 %v7965
      %v7975 = vunpack.c.l.b16 %v7966
      %v7976 = vpack.c.b16 %v7973, %v7972
      %v7977 = vpack.c.b16 %v7975, %v7974
      %v7981 = vsel %vm7802, %v7967, 0
      %7983 = vmatpush.bf16.msra.mxu0 0
      %7984 = vmatpush.bf16.msra.mxu0 0
      %7985 = vmatpush.bf16.msra.mxu0 0
      %7986 = vmatpush.bf16.msra.mxu0 0
      %7987 = vmatpush.bf16.msra.mxu0 0
      %7988 = vmatpush.bf16.msra.mxu0 0
      %7989 = vmatpush.bf16.msra.mxu0 %v7977
      %7990 = vmatpush.bf16.msra.mxu0 %v7976
      %7991 = vmatmul.bf16.gmra.mxu0 %v7981
      %v7992 = vpop.f32.mrf.mxu0
      %v7993 = vadd.f32 0.0, %v7992
      %v7994 = vpop.f32.mrf.mxu0
      %7995 = vdwg.mxu0
      %v7996 = vadd.f32 %v7961, %v7993
      %s7997 = scalar_lea.vmem %s29, 96
      %v7998 = vld [vmem:[%s7997] sm:$0xf]
      %v7999 = vld [vmem:[%s7997 + $0x4] sm:$0xf]
      %v8000 = vld [vmem:[%s7997 + $0x8] sm:$0xf]
      %v8001 = vld [vmem:[%s7997 + $0xc] sm:$0xf]
      %v8006 = vunpack.c.l.b16 %v7998
      %v8007 = vunpack.c.l.b16 %v7999
      %v8008 = vunpack.c.l.b16 %v8000
      %v8009 = vunpack.c.l.b16 %v8001
      %v8010 = vpack.c.b16 %v8007, %v8006
      %v8011 = vpack.c.b16 %v8009, %v8008
      %v8015 = vsel %vm7802, %v7770, 0
      %8017 = vmatpush.bf16.msra.mxu0 0
      %8018 = vmatpush.bf16.msra.mxu0 0
      %8019 = vmatpush.bf16.msra.mxu0 0
      %8020 = vmatpush.bf16.msra.mxu0 0
      %8021 = vmatpush.bf16.msra.mxu0 0
      %8022 = vmatpush.bf16.msra.mxu0 0
      %8023 = vmatpush.bf16.msra.mxu0 %v8011
      %8024 = vmatpush.bf16.msra.mxu0 %v8010
      %8025 = vmatmul.bf16.gmra.mxu0 %v8015
      %v8026 = vpop.f32.mrf.mxu0
      %v8027 = vadd.f32 0.0, %v8026
      %v8028 = vpop.f32.mrf.mxu0
      %8029 = vdwg.mxu0
      %v8030 = vadd.f32 %v7996, %v8027
      %s8031 = scalar_lea.vmem %s29, 112
      %v8032 = vld [vmem:[%s8031] sm:$0xf]
      %v8033 = vld [vmem:[%s8031 + $0x4] sm:$0xf]
      %v8034 = vld [vmem:[%s8031 + $0x8] sm:$0xf]
      %v8035 = vld [vmem:[%s8031 + $0xc] sm:$0xf]
      %v8036 = vpack.c.b16 %v7888, %v7888
      %v8038 = vshrl.u32 %v8036, 16
      %v8040 = vshll.u32 %v8036, 16
      %v8042 = vrot.slane %v8040, 1
      %v8043 = vor.u32 %v8038, %v8042
      %v8048 = vunpack.c.l.b16 %v8032
      %v8049 = vunpack.c.l.b16 %v8033
      %v8050 = vunpack.c.l.b16 %v8034
      %v8051 = vunpack.c.l.b16 %v8035
      %v8052 = vpack.c.b16 %v8049, %v8048
      %v8053 = vpack.c.b16 %v8051, %v8050
      %v8057 = vsel %vm7802, %v8043, 0
      %8059 = vmatpush.bf16.msra.mxu0 0
      %8060 = vmatpush.bf16.msra.mxu0 0
      %8061 = vmatpush.bf16.msra.mxu0 0
      %8062 = vmatpush.bf16.msra.mxu0 0
      %8063 = vmatpush.bf16.msra.mxu0 0
      %8064 = vmatpush.bf16.msra.mxu0 0
      %8065 = vmatpush.bf16.msra.mxu0 %v8053
      %8066 = vmatpush.bf16.msra.mxu0 %v8052
      %8067 = vmatmul.bf16.gmra.mxu0 %v8057
      %v8068 = vpop.f32.mrf.mxu0
      %v8069 = vadd.f32 0.0, %v8068
      %v8070 = vpop.f32.mrf.mxu0
      %8071 = vdwg.mxu0
      %v8072 = vadd.f32 %v8030, %v8069
      %s8073 = scalar_lea.vmem %s29, 128
      %v8074 = vld [vmem:[%s8073] sm:$0xf]
      %v8075 = vld [vmem:[%s8073 + $0x4] sm:$0xf]
      %v8076 = vld [vmem:[%s8073 + $0x8] sm:$0xf]
      %v8077 = vld [vmem:[%s8073 + $0xc] sm:$0xf]
      %v8078 = vrot.slane %v8036, 1
      %v8083 = vunpack.c.l.b16 %v8074
      %v8084 = vunpack.c.l.b16 %v8075
      %v8085 = vunpack.c.l.b16 %v8076
      %v8086 = vunpack.c.l.b16 %v8077
      %v8087 = vpack.c.b16 %v8084, %v8083
      %v8088 = vpack.c.b16 %v8086, %v8085
      %v8092 = vsel %vm7802, %v8078, 0
      %8094 = vmatpush.bf16.msra.mxu0 0
      %8095 = vmatpush.bf16.msra.mxu0 0
      %8096 = vmatpush.bf16.msra.mxu0 0
      %8097 = vmatpush.bf16.msra.mxu0 0
      %8098 = vmatpush.bf16.msra.mxu0 0
      %8099 = vmatpush.bf16.msra.mxu0 0
      %8100 = vmatpush.bf16.msra.mxu0 %v8088
      %8101 = vmatpush.bf16.msra.mxu0 %v8087
      %8102 = vmatmul.bf16.gmra.mxu0 %v8092
      %v8103 = vpop.f32.mrf.mxu0
      %v8104 = vadd.f32 0.0, %v8103
      %v8105 = vpop.f32.mrf.mxu0
      %8106 = vdwg.mxu0
      %v8107 = vadd.f32 %v8072, %v8104
      %v8108 = vld [vmem:[%s31] sm:$0x1]
      %v8110 = vperm.slane %v8108, 0
      %v8112 = vadd.f32 %v8107, %v8110
      %v8113 = vmax.f32 %v8112, 0.0
      %v8114 = vpack.c.bf16 %v8113, %v8113
      %v8115 = vld [vmem:[%s33] sm:$0xf]
      %v8116 = vld [vmem:[%s33 + $0x4] sm:$0xf]
      %v8117 = vld [vmem:[%s33 + $0x8] sm:$0xf]
      %v8118 = vld [vmem:[%s33 + $0xc] sm:$0xf]
      %v8119 = vld [vmem:[%s33 + $0x10] sm:$0xf]
      %v8120 = vld [vmem:[%s33 + $0x14] sm:$0xf]
      %v8121 = vld [vmem:[%s33 + $0x18] sm:$0xf]
      %v8122 = vld [vmem:[%s33 + $0x1c] sm:$0xf]
      %v8131 = vunpack.c.l.b16 %v8115
      %v8132 = vunpack.c.l.b16 %v8116
      %v8133 = vunpack.c.l.b16 %v8117
      %v8134 = vunpack.c.l.b16 %v8118
      %v8135 = vunpack.c.l.b16 %v8119
      %v8136 = vunpack.c.l.b16 %v8120
      %v8137 = vunpack.c.l.b16 %v8121
      %v8138 = vunpack.c.l.b16 %v8122
      %v8139 = vpack.c.b16 %v8132, %v8131
      %v8140 = vpack.c.b16 %v8134, %v8133
      %v8141 = vpack.c.b16 %v8136, %v8135
      %v8142 = vpack.c.b16 %v8138, %v8137
      %v8144 = vsel %vm6412, %v8139, 0
      %v8147 = vsel %vm6412, %v8140, 0
      %v8150 = vsel %vm6412, %v8141, 0
      %v8153 = vsel %vm6412, %v8142, 0
      %8155 = vmatpush.bf16.msra.mxu0 0
      %8156 = vmatpush.bf16.msra.mxu0 0
      %8157 = vmatpush.bf16.msra.mxu0 0
      %8158 = vmatpush.bf16.msra.mxu0 %v6435
      %8159 = vmatpush.bf16.msra.mxu0 %v6364
      %8160 = vmatpush.bf16.msra.mxu0 %v6363
      %8161 = vmatpush.bf16.msra.mxu0 %v6362
      %8162 = vmatpush.bf16.msra.mxu0 %v6361
      %8163 = vmatmul.bf16.gmra.mxu0 %v8144
      %v8164 = vpop.f32.mrf.mxu0
      %v8165 = vadd.f32 0.0, %v8164
      %v8166 = vpop.f32.mrf.mxu0
      %v8167 = vadd.f32 0.0, %v8166
      %8168 = vmatmul.bf16.gmra.mxu0 %v8147
      %v8169 = vpop.f32.mrf.mxu0
      %v8170 = vadd.f32 0.0, %v8169
      %v8171 = vpop.f32.mrf.mxu0
      %v8172 = vadd.f32 0.0, %v8171
      %8173 = vmatmul.bf16.gmra.mxu0 %v8150
      %v8174 = vpop.f32.mrf.mxu0
      %v8175 = vadd.f32 0.0, %v8174
      %v8176 = vpop.f32.mrf.mxu0
      %v8177 = vadd.f32 0.0, %v8176
      %8178 = vmatmul.bf16.gmra.mxu0 %v8153
      %v8179 = vpop.f32.mrf.mxu0
      %v8180 = vadd.f32 0.0, %v8179
      %v8181 = vpop.f32.mrf.mxu0
      %v8182 = vadd.f32 0.0, %v8181
      %8183 = vdwg.mxu0
      %v8184 = vpack.c.bf16 %v8167, %v8165
      %v8185 = vpack.c.bf16 %v8172, %v8170
      %v8186 = vpack.c.bf16 %v8177, %v8175
      %v8187 = vpack.c.bf16 %v8182, %v8180
      %v8188 = vld [vmem:[%s41] sm:$0xf]
      %v8189 = vld [vmem:[%s43] sm:$0x1]
      %v8191 = vperm.slane %v8189, 0
      %v8194 = vsel %vm5638, %v8184, 0
      %v8197 = vsel %vm5638, %v8185, 0
      %v8200 = vsel %vm5638, %v8186, 0
      %v8203 = vsel %vm5638, %v8187, 0
      %v8206 = vsel %vm4779, %v8188, 0
      %8208 = vmatpush.bf16.msra.mxu0 0
      %8209 = vmatpush.bf16.msra.mxu0 0
      %8210 = vmatpush.bf16.msra.mxu0 0
      %8211 = vmatpush.bf16.msra.mxu0 0
      %8212 = vmatpush.bf16.msra.mxu0 0
      %8213 = vmatpush.bf16.msra.mxu0 0
      %8214 = vmatpush.bf16.msra.mxu0 0
      %8215 = vmatpush.bf16.msra.mxu0 %v8206
      %8216 = vmatmul.bf16.gmra.mxu0 %v8194
      %v8217 = vpop.f32.mrf.mxu0
      %v8218 = vadd.f32 %v8191, %v8217
      %v8219 = vpop.f32.mrf.mxu0
      %v8220 = vadd.f32 %v8191, %v8219
      %8221 = vmatmul.bf16.gmra.mxu0 %v8197
      %v8222 = vpop.f32.mrf.mxu0
      %v8223 = vadd.f32 %v8191, %v8222
      %v8224 = vpop.f32.mrf.mxu0
      %v8225 = vadd.f32 %v8191, %v8224
      %8226 = vmatmul.bf16.gmra.mxu0 %v8200
      %v8227 = vpop.f32.mrf.mxu0
      %v8228 = vadd.f32 %v8191, %v8227
      %v8229 = vpop.f32.mrf.mxu0
      %v8230 = vadd.f32 %v8191, %v8229
      %8231 = vmatmul.bf16.gmra.mxu0 %v8203
      %v8232 = vpop.f32.mrf.mxu0
      %v8233 = vadd.f32 %v8191, %v8232
      %v8234 = vpop.f32.mrf.mxu0
      %v8235 = vadd.f32 %v8191, %v8234
      %8236 = vdwg.mxu0
      %v8237 = vld [vmem:[%s35] sm:$0xf]
      %v8238 = vld [vmem:[%s35 + $0x4] sm:$0xf]
      %v8239 = vld [vmem:[%s35 + $0x8] sm:$0xf]
      %v8240 = vld [vmem:[%s35 + $0xc] sm:$0xf]
      %v8241 = vld [vmem:[%s35 + $0x10] sm:$0xf]
      %v8242 = vld [vmem:[%s35 + $0x14] sm:$0xf]
      %v8243 = vld [vmem:[%s35 + $0x18] sm:$0xf]
      %v8244 = vld [vmem:[%s35 + $0x1c] sm:$0xf]
      %v8253 = vunpack.c.l.b16 %v8237
      %v8254 = vunpack.c.l.b16 %v8238
      %v8255 = vunpack.c.l.b16 %v8239
      %v8256 = vunpack.c.l.b16 %v8240
      %v8257 = vunpack.c.l.b16 %v8241
      %v8258 = vunpack.c.l.b16 %v8242
      %v8259 = vunpack.c.l.b16 %v8243
      %v8260 = vunpack.c.l.b16 %v8244
      %v8261 = vpack.c.b16 %v8254, %v8253
      %v8262 = vpack.c.b16 %v8256, %v8255
      %v8263 = vpack.c.b16 %v8258, %v8257
      %v8264 = vpack.c.b16 %v8260, %v8259
      %v8266 = vsel %vm6412, %v8261, 0
      %v8269 = vsel %vm6412, %v8262, 0
      %v8272 = vsel %vm6412, %v8263, 0
      %v8275 = vsel %vm6412, %v8264, 0
      %8277 = vmatpush.bf16.msra.mxu0 0
      %8278 = vmatpush.bf16.msra.mxu0 0
      %8279 = vmatpush.bf16.msra.mxu0 0
      %8280 = vmatpush.bf16.msra.mxu0 %v7311
      %8281 = vmatpush.bf16.msra.mxu0 %v7281
      %8282 = vmatpush.bf16.msra.mxu0 %v7280
      %8283 = vmatpush.bf16.msra.mxu0 %v7279
      %8284 = vmatpush.bf16.msra.mxu0 %v7278
      %8285 = vmatmul.bf16.gmra.mxu0 %v8266
      %v8286 = vpop.f32.mrf.mxu0
      %v8287 = vadd.f32 0.0, %v8286
      %v8288 = vpop.f32.mrf.mxu0
      %v8289 = vadd.f32 0.0, %v8288
      %8290 = vmatmul.bf16.gmra.mxu0 %v8269
      %v8291 = vpop.f32.mrf.mxu0
      %v8292 = vadd.f32 0.0, %v8291
      %v8293 = vpop.f32.mrf.mxu0
      %v8294 = vadd.f32 0.0, %v8293
      %8295 = vmatmul.bf16.gmra.mxu0 %v8272
      %v8296 = vpop.f32.mrf.mxu0
      %v8297 = vadd.f32 0.0, %v8296
      %v8298 = vpop.f32.mrf.mxu0
      %v8299 = vadd.f32 0.0, %v8298
      %8300 = vmatmul.bf16.gmra.mxu0 %v8275
      %v8301 = vpop.f32.mrf.mxu0
      %v8302 = vadd.f32 0.0, %v8301
      %v8303 = vpop.f32.mrf.mxu0
      %v8304 = vadd.f32 0.0, %v8303
      %8305 = vdwg.mxu0
      %v8306 = vpack.c.bf16 %v8289, %v8287
      %v8307 = vpack.c.bf16 %v8294, %v8292
      %v8308 = vpack.c.bf16 %v8299, %v8297
      %v8309 = vpack.c.bf16 %v8304, %v8302
      %v8310 = vld [vmem:[%s45] sm:$0xf]
      %v8311 = vld [vmem:[%s45 + $0x4] sm:$0xf]
      %v8312 = vld [vmem:[%s47] sm:$0x1]
      %v8314 = vperm.slane %v8312, 0
      %v8318 = vunpack.c.l.b16 %v8310
      %v8319 = vunpack.c.l.b16 %v8311
      %v8320 = vpack.c.b16 %v8319, %v8318
      %v8323 = vsel %vm7375, %v8306, 0
      %v8326 = vsel %vm7375, %v8307, 0
      %v8329 = vsel %vm7375, %v8308, 0
      %v8332 = vsel %vm7375, %v8309, 0
      %8334 = vmatpush.bf16.msra.mxu0 0
      %8335 = vmatpush.bf16.msra.mxu0 0
      %8336 = vmatpush.bf16.msra.mxu0 0
      %8337 = vmatpush.bf16.msra.mxu0 0
      %8338 = vmatpush.bf16.msra.mxu0 0
      %8339 = vmatpush.bf16.msra.mxu0 0
      %8340 = vmatpush.bf16.msra.mxu0 0
      %8341 = vmatpush.bf16.msra.mxu0 %v8320
      %8342 = vmatmul.bf16.gmra.mxu0 %v8323
      %v8343 = vpop.f32.mrf.mxu0
      %v8344 = vadd.f32 %v8314, %v8343
      %v8345 = vpop.f32.mrf.mxu0
      %v8346 = vadd.f32 %v8314, %v8345
      %8347 = vmatmul.bf16.gmra.mxu0 %v8326
      %v8348 = vpop.f32.mrf.mxu0
      %v8349 = vadd.f32 %v8314, %v8348
      %v8350 = vpop.f32.mrf.mxu0
      %v8351 = vadd.f32 %v8314, %v8350
      %8352 = vmatmul.bf16.gmra.mxu0 %v8329
      %v8353 = vpop.f32.mrf.mxu0
      %v8354 = vadd.f32 %v8314, %v8353
      %v8355 = vpop.f32.mrf.mxu0
      %v8356 = vadd.f32 %v8314, %v8355
      %8357 = vmatmul.bf16.gmra.mxu0 %v8332
      %v8358 = vpop.f32.mrf.mxu0
      %v8359 = vadd.f32 %v8314, %v8358
      %v8360 = vpop.f32.mrf.mxu0
      %v8361 = vadd.f32 %v8314, %v8360
      %8362 = vdwg.mxu0
      %v8363 = vadd.f32 %v8218, %v8344
      %v8364 = vadd.f32 %v8220, %v8346
      %v8365 = vadd.f32 %v8223, %v8349
      %v8366 = vadd.f32 %v8225, %v8351
      %v8367 = vadd.f32 %v8228, %v8354
      %v8368 = vadd.f32 %v8230, %v8356
      %v8369 = vadd.f32 %v8233, %v8359
      %v8370 = vadd.f32 %v8235, %v8361
      %v8371 = vld [vmem:[%s37] sm:$0xf]
      %v8372 = vld [vmem:[%s37 + $0x4] sm:$0xf]
      %v8373 = vld [vmem:[%s37 + $0x8] sm:$0xf]
      %v8374 = vld [vmem:[%s37 + $0xc] sm:$0xf]
      %v8375 = vld [vmem:[%s37 + $0x10] sm:$0xf]
      %v8376 = vld [vmem:[%s37 + $0x14] sm:$0xf]
      %v8377 = vld [vmem:[%s37 + $0x18] sm:$0xf]
      %v8378 = vld [vmem:[%s37 + $0x1c] sm:$0xf]
      %v8387 = vunpack.c.l.b16 %v8371
      %v8388 = vunpack.c.l.b16 %v8372
      %v8389 = vunpack.c.l.b16 %v8373
      %v8390 = vunpack.c.l.b16 %v8374
      %v8391 = vunpack.c.l.b16 %v8375
      %v8392 = vunpack.c.l.b16 %v8376
      %v8393 = vunpack.c.l.b16 %v8377
      %v8394 = vunpack.c.l.b16 %v8378
      %v8395 = vpack.c.b16 %v8388, %v8387
      %v8396 = vpack.c.b16 %v8390, %v8389
      %v8397 = vpack.c.b16 %v8392, %v8391
      %v8398 = vpack.c.b16 %v8394, %v8393
      %v8400 = vsel %vm7748, %v8395, 0
      %v8403 = vsel %vm7748, %v8396, 0
      %v8406 = vsel %vm7748, %v8397, 0
      %v8409 = vsel %vm7748, %v8398, 0
      %8411 = vmatpush.bf16.msra.mxu0 0
      %8412 = vmatpush.bf16.msra.mxu0 0
      %8413 = vmatpush.bf16.msra.mxu0 0
      %8414 = vmatpush.bf16.msra.mxu0 0
      %8415 = vmatpush.bf16.msra.mxu0 0
      %8416 = vmatpush.bf16.msra.mxu0 0
      %8417 = vmatpush.bf16.msra.mxu0 %v7753
      %8418 = vmatpush.bf16.msra.mxu0 %v7739
      %8419 = vmatmul.bf16.gmra.mxu0 %v8400
      %v8420 = vpop.f32.mrf.mxu0
      %v8421 = vadd.f32 0.0, %v8420
      %v8422 = vpop.f32.mrf.mxu0
      %v8423 = vadd.f32 0.0, %v8422
      %8424 = vmatmul.bf16.gmra.mxu0 %v8403
      %v8425 = vpop.f32.mrf.mxu0
      %v8426 = vadd.f32 0.0, %v8425
      %v8427 = vpop.f32.mrf.mxu0
      %v8428 = vadd.f32 0.0, %v8427
      %8429 = vmatmul.bf16.gmra.mxu0 %v8406
      %v8430 = vpop.f32.mrf.mxu0
      %v8431 = vadd.f32 0.0, %v8430
      %v8432 = vpop.f32.mrf.mxu0
      %v8433 = vadd.f32 0.0, %v8432
      %8434 = vmatmul.bf16.gmra.mxu0 %v8409
      %v8435 = vpop.f32.mrf.mxu0
      %v8436 = vadd.f32 0.0, %v8435
      %v8437 = vpop.f32.mrf.mxu0
      %v8438 = vadd.f32 0.0, %v8437
      %8439 = vdwg.mxu0
      %v8440 = vpack.c.bf16 %v8423, %v8421
      %v8441 = vpack.c.bf16 %v8428, %v8426
      %v8442 = vpack.c.bf16 %v8433, %v8431
      %v8443 = vpack.c.bf16 %v8438, %v8436
      %v8444 = vld [vmem:[%s49] sm:$0xf]
      %v8445 = vld [vmem:[%s49 + $0x4] sm:$0xf]
      %v8446 = vld [vmem:[%s49 + $0x8] sm:$0xf]
      %v8447 = vld [vmem:[%s49 + $0xc] sm:$0xf]
      %v8448 = vld [vmem:[%s51] sm:$0x1]
      %v8450 = vperm.slane %v8448, 0
      %v8456 = vunpack.c.l.b16 %v8444
      %v8457 = vunpack.c.l.b16 %v8445
      %v8458 = vunpack.c.l.b16 %v8446
      %v8459 = vunpack.c.l.b16 %v8447
      %v8460 = vpack.c.b16 %v8457, %v8456
      %v8461 = vpack.c.b16 %v8459, %v8458
      %v8465 = vsel %vm7802, %v8440, 0
      %v8468 = vsel %vm7802, %v8441, 0
      %v8471 = vsel %vm7802, %v8442, 0
      %v8474 = vsel %vm7802, %v8443, 0
      %8476 = vmatpush.bf16.msra.mxu0 0
      %8477 = vmatpush.bf16.msra.mxu0 0
      %8478 = vmatpush.bf16.msra.mxu0 0
      %8479 = vmatpush.bf16.msra.mxu0 0
      %8480 = vmatpush.bf16.msra.mxu0 0
      %8481 = vmatpush.bf16.msra.mxu0 0
      %8482 = vmatpush.bf16.msra.mxu0 %v8461
      %8483 = vmatpush.bf16.msra.mxu0 %v8460
      %8484 = vmatmul.bf16.gmra.mxu0 %v8465
      %v8485 = vpop.f32.mrf.mxu0
      %v8486 = vadd.f32 %v8450, %v8485
      %v8487 = vpop.f32.mrf.mxu0
      %v8488 = vadd.f32 %v8450, %v8487
      %8489 = vmatmul.bf16.gmra.mxu0 %v8468
      %v8490 = vpop.f32.mrf.mxu0
      %v8491 = vadd.f32 %v8450, %v8490
      %v8492 = vpop.f32.mrf.mxu0
      %v8493 = vadd.f32 %v8450, %v8492
      %8494 = vmatmul.bf16.gmra.mxu0 %v8471
      %v8495 = vpop.f32.mrf.mxu0
      %v8496 = vadd.f32 %v8450, %v8495
      %v8497 = vpop.f32.mrf.mxu0
      %v8498 = vadd.f32 %v8450, %v8497
      %8499 = vmatmul.bf16.gmra.mxu0 %v8474
      %v8500 = vpop.f32.mrf.mxu0
      %v8501 = vadd.f32 %v8450, %v8500
      %v8502 = vpop.f32.mrf.mxu0
      %v8503 = vadd.f32 %v8450, %v8502
      %8504 = vdwg.mxu0
      %v8505 = vadd.f32 %v8363, %v8486
      %v8506 = vadd.f32 %v8364, %v8488
      %v8507 = vadd.f32 %v8365, %v8491
      %v8508 = vadd.f32 %v8366, %v8493
      %v8509 = vadd.f32 %v8367, %v8496
      %v8510 = vadd.f32 %v8368, %v8498
      %v8511 = vadd.f32 %v8369, %v8501
      %v8512 = vadd.f32 %v8370, %v8503
      %v8513 = vld [vmem:[%s39] sm:$0xf]
      %v8514 = vld [vmem:[%s39 + $0x4] sm:$0xf]
      %v8515 = vld [vmem:[%s39 + $0x8] sm:$0xf]
      %v8516 = vld [vmem:[%s39 + $0xc] sm:$0xf]
      %v8517 = vld [vmem:[%s39 + $0x10] sm:$0xf]
      %v8518 = vld [vmem:[%s39 + $0x14] sm:$0xf]
      %v8519 = vld [vmem:[%s39 + $0x18] sm:$0xf]
      %v8520 = vld [vmem:[%s39 + $0x1c] sm:$0xf]
      %v8529 = vunpack.c.l.b16 %v8513
      %v8530 = vunpack.c.l.b16 %v8514
      %v8531 = vunpack.c.l.b16 %v8515
      %v8532 = vunpack.c.l.b16 %v8516
      %v8533 = vunpack.c.l.b16 %v8517
      %v8534 = vunpack.c.l.b16 %v8518
      %v8535 = vunpack.c.l.b16 %v8519
      %v8536 = vunpack.c.l.b16 %v8520
      %v8537 = vpack.c.b16 %v8530, %v8529
      %v8538 = vpack.c.b16 %v8532, %v8531
      %v8539 = vpack.c.b16 %v8534, %v8533
      %v8540 = vpack.c.b16 %v8536, %v8535
      %vm8541 = vcmask 48128
      %v8543 = vsel %vm8541, %v8537, 0
      %v8546 = vsel %vm8541, %v8538, 0
      %v8549 = vsel %vm8541, %v8539, 0
      %v8552 = vsel %vm8541, %v8540, 0
      %v8555 = vsel %vm4969, %v8114, 0
      %8557 = vmatpush.bf16.msra.mxu0 0
      %8558 = vmatpush.bf16.msra.mxu0 0
      %8559 = vmatpush.bf16.msra.mxu0 0
      %8560 = vmatpush.bf16.msra.mxu0 0
      %8561 = vmatpush.bf16.msra.mxu0 0
      %8562 = vmatpush.bf16.msra.mxu0 0
      %8563 = vmatpush.bf16.msra.mxu0 0
      %8564 = vmatpush.bf16.msra.mxu0 %v8555
      %8565 = vmatmul.bf16.gmra.mxu0 %v8543
      %v8566 = vpop.f32.mrf.mxu0
      %v8567 = vadd.f32 0.0, %v8566
      %v8568 = vpop.f32.mrf.mxu0
      %v8569 = vadd.f32 0.0, %v8568
      %8570 = vmatmul.bf16.gmra.mxu0 %v8546
      %v8571 = vpop.f32.mrf.mxu0
      %v8572 = vadd.f32 0.0, %v8571
      %v8573 = vpop.f32.mrf.mxu0
      %v8574 = vadd.f32 0.0, %v8573
      %8575 = vmatmul.bf16.gmra.mxu0 %v8549
      %v8576 = vpop.f32.mrf.mxu0
      %v8577 = vadd.f32 0.0, %v8576
      %v8578 = vpop.f32.mrf.mxu0
      %v8579 = vadd.f32 0.0, %v8578
      %8580 = vmatmul.bf16.gmra.mxu0 %v8552
      %v8581 = vpop.f32.mrf.mxu0
      %v8582 = vadd.f32 0.0, %v8581
      %v8583 = vpop.f32.mrf.mxu0
      %v8584 = vadd.f32 0.0, %v8583
      %8585 = vdwg.mxu0
      %v8586 = vpack.c.bf16 %v8569, %v8567
      %v8587 = vpack.c.bf16 %v8574, %v8572
      %v8588 = vpack.c.bf16 %v8579, %v8577
      %v8589 = vpack.c.bf16 %v8584, %v8582
      %v8590 = vld [vmem:[%s53] sm:$0xf]
      %v8591 = vld [vmem:[%s53 + $0x4] sm:$0xf]
      %v8592 = vld [vmem:[%s53 + $0x8] sm:$0xf]
      %v8593 = vld [vmem:[%s53 + $0xc] sm:$0xf]
      %v8594 = vld [vmem:[%s53 + $0x10] sm:$0xf]
      %v8595 = vld [vmem:[%s53 + $0x14] sm:$0xf]
      %v8596 = vld [vmem:[%s53 + $0x18] sm:$0xf]
      %v8597 = vld [vmem:[%s53 + $0x1c] sm:$0xf]
      %v8598 = vld [vmem:[%s55] sm:$0x1]
      %v8600 = vperm.slane %v8598, 0
      %v8610 = vunpack.c.l.b16 %v8590
      %v8611 = vunpack.c.l.b16 %v8591
      %v8612 = vunpack.c.l.b16 %v8592
      %v8613 = vunpack.c.l.b16 %v8593
      %v8614 = vunpack.c.l.b16 %v8594
      %v8615 = vunpack.c.l.b16 %v8595
      %v8616 = vunpack.c.l.b16 %v8596
      %v8617 = vunpack.c.l.b16 %v8597
      %v8618 = vpack.c.b16 %v8611, %v8610
      %v8619 = vpack.c.b16 %v8613, %v8612
      %v8620 = vpack.c.b16 %v8615, %v8614
      %v8621 = vpack.c.b16 %v8617, %v8616
      %vm8626 = vcmask 523264
      %v8628 = vsel %vm8626, %v8586, 0
      %v8631 = vsel %vm8626, %v8587, 0
      %v8634 = vsel %vm8626, %v8588, 0
      %v8637 = vsel %vm8626, %v8589, 0
      %8639 = vmatpush.bf16.msra.mxu0 0
      %8640 = vmatpush.bf16.msra.mxu0 0
      %8641 = vmatpush.bf16.msra.mxu0 0
      %8642 = vmatpush.bf16.msra.mxu0 0
      %8643 = vmatpush.bf16.msra.mxu0 %v8621
      %8644 = vmatpush.bf16.msra.mxu0 %v8620
      %8645 = vmatpush.bf16.msra.mxu0 %v8619
      %8646 = vmatpush.bf16.msra.mxu0 %v8618
      %8647 = vmatmul.bf16.gmra.mxu0 %v8628
      %v8648 = vpop.f32.mrf.mxu0
      %v8649 = vadd.f32 %v8600, %v8648
      %v8650 = vpop.f32.mrf.mxu0
      %v8651 = vadd.f32 %v8600, %v8650
      %8652 = vmatmul.bf16.gmra.mxu0 %v8631
      %v8653 = vpop.f32.mrf.mxu0
      %v8654 = vadd.f32 %v8600, %v8653
      %v8655 = vpop.f32.mrf.mxu0
      %v8656 = vadd.f32 %v8600, %v8655
      %8657 = vmatmul.bf16.gmra.mxu0 %v8634
      %v8658 = vpop.f32.mrf.mxu0
      %v8659 = vadd.f32 %v8600, %v8658
      %v8660 = vpop.f32.mrf.mxu0
      %v8661 = vadd.f32 %v8600, %v8660
      %8662 = vmatmul.bf16.gmra.mxu0 %v8637
      %v8663 = vpop.f32.mrf.mxu0
      %v8664 = vadd.f32 %v8600, %v8663
      %v8665 = vpop.f32.mrf.mxu0
      %v8666 = vadd.f32 %v8600, %v8665
      %8667 = vdwg.mxu0
      %v8668 = vadd.f32 %v8505, %v8649
      %v8669 = vadd.f32 %v8506, %v8651
      %v8670 = vadd.f32 %v8507, %v8654
      %v8671 = vadd.f32 %v8508, %v8656
      %v8672 = vadd.f32 %v8509, %v8659
      %v8673 = vadd.f32 %v8510, %v8661
      %v8674 = vadd.f32 %v8511, %v8664
      %v8675 = vadd.f32 %v8512, %v8666
      %v8676 = vmax.f32 %v8668, 0.0
      %v8677 = vmax.f32 %v8669, 0.0
      %v8678 = vmax.f32 %v8670, 0.0
      %v8679 = vmax.f32 %v8671, 0.0
      %v8680 = vmax.f32 %v8672, 0.0
      %v8681 = vmax.f32 %v8673, 0.0
      %v8682 = vmax.f32 %v8674, 0.0
      %v8683 = vmax.f32 %v8675, 0.0
      %v8684 = vpack.c.bf16 %v8677, %v8676
      %v8685 = vpack.c.bf16 %v8679, %v8678
      %v8686 = vpack.c.bf16 %v8681, %v8680
      %v8687 = vpack.c.bf16 %v8683, %v8682
      %v8688 = vld [vmem:[%s57] sm:$0xf]
      %v8689 = vld [vmem:[%s57 + $0x4] sm:$0xf]
      %v8690 = vld [vmem:[%s59] sm:$0x1]
      %v8692 = vperm.slane %v8690, 0
      %v8696 = vunpack.c.l.b16 %v8688
      %v8697 = vunpack.c.l.b16 %v8689
      %v8698 = vpack.c.b16 %v8697, %v8696
      %v8701 = vsel %vm7375, %v8684, 0
      %v8704 = vsel %vm7375, %v8685, 0
      %v8707 = vsel %vm7375, %v8686, 0
      %v8710 = vsel %vm7375, %v8687, 0
      %8712 = vmatpush.bf16.msra.mxu0 0
      %8713 = vmatpush.bf16.msra.mxu0 0
      %8714 = vmatpush.bf16.msra.mxu0 0
      %8715 = vmatpush.bf16.msra.mxu0 0
      %8716 = vmatpush.bf16.msra.mxu0 0
      %8717 = vmatpush.bf16.msra.mxu0 0
      %8718 = vmatpush.bf16.msra.mxu0 0
      %8719 = vmatpush.bf16.msra.mxu0 %v8698
      %8720 = vmatmul.bf16.gmra.mxu0 %v8701
      %v8721 = vpop.f32.mrf.mxu0
      %v8722 = vadd.f32 %v8692, %v8721
      %v8723 = vpop.f32.mrf.mxu0
      %v8724 = vadd.f32 %v8692, %v8723
      %8725 = vmatmul.bf16.gmra.mxu0 %v8704
      %v8726 = vpop.f32.mrf.mxu0
      %v8727 = vadd.f32 %v8692, %v8726
      %v8728 = vpop.f32.mrf.mxu0
      %v8729 = vadd.f32 %v8692, %v8728
      %8730 = vmatmul.bf16.gmra.mxu0 %v8707
      %v8731 = vpop.f32.mrf.mxu0
      %v8732 = vadd.f32 %v8692, %v8731
      %v8733 = vpop.f32.mrf.mxu0
      %v8734 = vadd.f32 %v8692, %v8733
      %8735 = vmatmul.bf16.gmra.mxu0 %v8710
      %v8736 = vpop.f32.mrf.mxu0
      %v8737 = vadd.f32 %v8692, %v8736
      %v8738 = vpop.f32.mrf.mxu0
      %v8739 = vadd.f32 %v8692, %v8738
      %8740 = vdwg.mxu0
      %8741 = vst [vmem:[%s930] sm:$0xff] %v8722
      %8742 = vst [vmem:[%s930 + $0x8] sm:$0xff] %v8724
      %8743 = vst [vmem:[%s930 + $0x10] sm:$0xff] %v8727
      %8744 = vst [vmem:[%s930 + $0x18] sm:$0xff] %v8729
      %8745 = vst [vmem:[%s930 + $0x20] sm:$0xff] %v8732
      %8746 = vst [vmem:[%s930 + $0x28] sm:$0xff] %v8734
      %8747 = vst [vmem:[%s930 + $0x30] sm:$0xff] %v8737
      %8748 = vst [vmem:[%s930 + $0x38] sm:$0xff] %v8739
      %p8749 = scmp.lt.s32.totalorder %s72, 3
      %s8750 = scalar_select %p8749, %s72, 3
      %s8751 = smul.addr %s8750, 8
      %s8752 = smul.addr %s8751, 8
      %s8753 = scalar_lea.vmem %s61, %s8752
      // Predicated region
      $region141: #{forward.1} parent=139 // pred_check
        %p8754 = pneg %p725
      $region142: #{forward.1} parent=139 // pred_check_branch
        %8756 = sbr.rel (%p8754) target = $region144
      $region143: #{forward.1} parent=139 // pred_region
        _
      $region144: #{forward.1} parent=139 // pred_fallthru
        _
    $region140: #{forward.1} parent=5 // pred_fallthru
      _
    %p8757 = scmp.le.s32.totalorder 2, %s67
    // Predicated region
    $region145: #{forward.1} parent=5 // pred_check
      %p8758 = pneg %p8757
    $region146: #{forward.1} parent=5 // pred_check_branch
      %8760 = sbr.rel (%p8758) target = $region148
    $region147: #{forward.1} parent=5 // pred_region
      %s8761 = ssub.s32 %s67, 2
      // Predicated region
      $region149: #{forward.1} parent=147 // pred_check
        %p8762 = pneg %p731
      $region150: #{forward.1} parent=147 // pred_check_branch
        %8764 = sbr.rel (%p8762) target = $region152
      $region151: #{forward.1} parent=147 // pred_region
        %p8765 = scmp.lt.s32.totalorder %s73, 3
        %s8766 = scalar_select %p8765, %s73, 3
        %s8767 = smul.addr %s8766, 8
        %s8768 = smul.addr %s8767, 8
        %s8769 = scalar_lea.vmem %s61, %s8768
      $region152: #{forward.1} parent=147 // pred_fallthru
        _
    $region148: #{forward.1} parent=5 // pred_fallthru
      _
  $region6: #{forward.1} parent=0 // loop_footer
    %s71 = sadd.s32 1, %s67
  $region7: #{forward.1} parent=0 // loop_footer_branch
    %66 = sbr.rel target = $region3
  $region8: #{forward.1} parent=0 // loop_exit
    _

</llo_original>
